<compile_context>
chip_gen: v7x
topology: tpu7x:2x2x1
jax: 0.10.0
libtpu: 0.0.40
codegen_flags: <defaults>
</compile_context>

<pallas_src>
import functools

import numpy as np
import jax
import jax.numpy as jnp
from jax.experimental import pallas as pl
from jax.experimental.pallas import tpu as pltpu

DICTIONARY_SIZE = 64      # Dictionary_size
LSTM_HIDDEN = 32          # LSTM_hidden_size
SEQ_MAX = 8               # Sequence_max_length
WORD_EMB = 16             # word_embedding_size
FEAT_EMB = 8              # word_feature_embedding
LINEAR_OUT = 128          # hard-coded nn.Linear(..., 128) output in the module


# --------------------------------------------------------------------------
# Fused Pallas kernel: 2-layer biLSTM + rep_text + Linear + tanh + MaxPool1d.
# Flat time-major layout: row r of any [L*B, .] array corresponds to
# (t = r // B, b = r % B).
# --------------------------------------------------------------------------
def _scrcnn_fused_kernel(x_ref, len_ref, hf_ref, ist0_ref, islast_ref, brow_ref,
                         pvalid_ref, mrev_ref,
                         wih0_ref, whh0f_ref, whh0b_ref, b0_ref,
                         wih1f_ref, wih1b_ref, whh1f_ref, whh1b_ref, b1_ref,
                         wlf_ref, wlm_ref, wlb_ref, bl_ref,
                         o_ref,
                         fw0_ref, bw0_ref, fw1_ref, bw1_ref,
                         *, seq_len, batch, hidden):
    L, B, H = seq_len, batch, hidden
    H3, H4, H8 = 3 * H, 4 * H, 8 * H
    f32 = jnp.float32

    x = x_ref[...]                           # [L*B, D]
    lens = len_ref[...]                      # [B, 1] int32 (true lengths)
    h_f = hf_ref[...]                        # [1, H]
    h0 = jnp.broadcast_to(h_f, (B, H))       # initial hidden (C0 == H0 in the module)

    def cell(gates, c_prev):
        # gate layout [i | f | o | g]: one sigmoid over 3H lanes, one tanh over H.
        sig = 1.0 / (1.0 + jnp.exp(-gates[:, :H3]))
        i_g = sig[:, 0:H]
        f_g = sig[:, H:2 * H]
        o_g = sig[:, 2 * H:H3]
        g_g = jnp.tanh(gates[:, H3:H4])
        c_new = f_g * c_prev + i_g * g_g
        h_new = o_g * jnp.tanh(c_new)
        return h_new, c_new

    def run_layer(gates_all, whh_fw, whh_bw, out_fw_ref, out_bw_ref):
        # gates_all: [L*B, 8H] hoisted input projection (+bias), cols [fw 4H | bw 4H]
        h_fw, c_fw = h0, h0
        h_bw, c_bw = h0, h0
        for s in range(L):                   # fully unrolled, static indices
            # ---- forward direction at time t = s
            t = s
            m = t < lens                     # [B, 1] bool (packed-sequence mask)
            g_in = gates_all[B * t:B * (t + 1), :H4]
            hn, cn = cell(g_in + jnp.dot(h_fw, whh_fw, preferred_element_type=f32),
                          c_fw)
            h_fw = jnp.where(m, hn, h_fw)
            c_fw = jnp.where(m, cn, c_fw)
            out_fw_ref[pl.ds(B * t, B), :] = jnp.where(m, hn, 0.0)
            # ---- backward direction at time t = L-1-s
            t = L - 1 - s
            m = t < lens
            g_in = gates_all[B * t:B * (t + 1), H4:H8]
            hn, cn = cell(g_in + jnp.dot(h_bw, whh_bw, preferred_element_type=f32),
                          c_bw)
            h_bw = jnp.where(m, hn, h_bw)
            c_bw = jnp.where(m, cn, c_bw)
            out_bw_ref[pl.ds(B * t, B), :] = jnp.where(m, hn, 0.0)

    # ---- Layer 0: hoisted input projection (single 256-lane MXU matmul).
    gates0 = jnp.dot(x, wih0_ref[...], preferred_element_type=f32) + b0_ref[...]
    run_layer(gates0, whh0f_ref[...], whh0b_ref[...], fw0_ref, bw0_ref)

    # ---- Layer 1: hoisted projection of the (fw0 | bw0) features.
    fw0 = fw0_ref[...]
    bw0 = bw0_ref[...]
    gates1 = (jnp.dot(fw0, wih1f_ref[...], preferred_element_type=f32)
              + jnp.dot(bw0, wih1b_ref[...], preferred_element_type=f32)
              + b1_ref[...])
    run_layer(gates1, whh1f_ref[...], whh1b_ref[...], fw1_ref, bw1_ref)

    # ---- rep_text: [mat_FW | embeddings | mat_BW], then Linear + tanh + MaxPool.
    fw1 = fw1_ref[...]                       # [L*B, H], already zero at padded rows
    bw1 = bw1_ref[...]
    mat_fw = jnp.where(ist0_ref[...] > 0, h_f, fw1)
    # per-row time reversal of the backward hidden states as a 0/1 matmul
    bw_rev = jnp.dot(mrev_ref[...], bw1, preferred_element_type=f32)
    mat_bw = jnp.where(islast_ref[...] > 0, h_f, bw_rev)

    y = jnp.tanh(jnp.dot(mat_fw, wlf_ref[...], preferred_element_type=f32)
                 + jnp.dot(x, wlm_ref[...], preferred_element_type=f32)
                 + jnp.dot(mat_bw, wlb_ref[...], preferred_element_type=f32)
                 + bl_ref[...])              # [L*B, 128]

    # MaxPool1d(kernel_size = max length) == max over valid time positions per row.
    brow = brow_ref[...]                     # [L*B, 1] batch index of each flat row
    valid = pvalid_ref[...] > 0              # [L*B, 1] t < l_max
    for b in range(B):
        sel = jnp.logical_and(brow == b, valid)
        o_ref[pl.ds(b, 1), :] = jnp.max(jnp.where(sel, y, -jnp.inf),
                                        axis=0, keepdims=True)


def _fused_forward(x_flat, len_b, h_f, is_t0, is_last, b_row, pool_valid, m_rev, p):
    LB, _ = x_flat.shape
    B = len_b.shape[0]
    H = LSTM_HIDDEN
    L = LB // B

    args = (x_flat, len_b, h_f, is_t0, is_last, b_row, pool_valid, m_rev,
            p["l0_wih"], p["l0_whh_fw"], p["l0_whh_bw"], p["l0_b"],
            p["l1_wih_fwin"], p["l1_wih_bwin"], p["l1_whh_fw"], p["l1_whh_bw"],
            p["l1_b"],
            p["lin_w_fw"], p["lin_w_mid"], p["lin_w_bw"], p["lin_b"])

    def full_spec(a):
        return pl.BlockSpec(a.shape, lambda i: (0,) * a.ndim)

    kernel = functools.partial(_scrcnn_fused_kernel,
                               seq_len=L, batch=B, hidden=H)
    return pl.pallas_call(
        kernel,
        out_shape=jax.ShapeDtypeStruct((B, LINEAR_OUT), jnp.float32),
        grid_spec=pltpu.PrefetchScalarGridSpec(
            num_scalar_prefetch=0,
            grid=(1,),
            in_specs=[full_spec(a) for a in args],
            out_specs=pl.BlockSpec((B, LINEAR_OUT), lambda i: (0, 0)),
            scratch_shapes=[pltpu.VMEM((LB, H), jnp.float32) for _ in range(4)],
        ),
        compiler_params=pltpu.CompilerParams(
            dimension_semantics=("arbitrary",)),
    )(*args)


# --------------------------------------------------------------------------
# Parameter initialization (deterministic; shapes follow the module __init__,
# stored pre-packed for the fused kernel's lane-dense gate layout [i|f|o|g]).
# --------------------------------------------------------------------------
def init_params(key, input_size):
    H = LSTM_HIDDEN
    D = input_size
    keys = iter(jax.random.split(key, 32))

    def uni(shape, bound):
        return jax.random.uniform(next(keys), shape, jnp.float32, -bound, bound)

    p = {}
    e1 = jax.random.normal(next(keys), (DICTIONARY_SIZE, WORD_EMB), jnp.float32)
    p["emb1"] = e1.at[0].set(0.0)            # embedding1, padding_idx=0 (external weight)
    e2 = jax.random.normal(next(keys), (6, FEAT_EMB), jnp.float32)
    p["emb2"] = e2.at[0].set(0.0)            # embedding2, padding_idx=0

    # np.random.seed(1); rand(H) -> deterministic, compute once (same every forward).
    np.random.seed(1)
    p["h_f"] = jnp.asarray(np.random.rand(H), jnp.float32).reshape(1, H)

    kl = 1.0 / np.sqrt(H)

    def lstm_dir(din):
        wih = uni((din, 4 * H), kl)          # gate column order [i, f, o, g]
        whh = uni((H, 4 * H), kl)
        b = uni((1, 4 * H), kl) + uni((1, 4 * H), kl)   # b_ih + b_hh
        return wih, whh, b

    # layer 0 (input D): fuse fw|bw along the gate axis -> [D, 8H]
    wih_f, whh_f, b_f = lstm_dir(D)
    wih_b, whh_b, b_b = lstm_dir(D)
    p["l0_wih"] = jnp.concatenate([wih_f, wih_b], axis=1)
    p["l0_whh_fw"] = whh_f
    p["l0_whh_bw"] = whh_b
    p["l0_b"] = jnp.concatenate([b_f, b_b], axis=1)

    # layer 1 (input 2H = [fw0 | bw0]); split rows by which layer-0 half they multiply
    wih_f, whh_f, b_f = lstm_dir(2 * H)
    wih_b, whh_b, b_b = lstm_dir(2 * H)
    p["l1_wih_fwin"] = jnp.concatenate([wih_f[:H], wih_b[:H]], axis=1)    # [H, 8H]
    p["l1_wih_bwin"] = jnp.concatenate([wih_f[H:], wih_b[H:]], axis=1)    # [H, 8H]
    p["l1_whh_fw"] = whh_f
    p["l1_whh_bw"] = whh_b
    p["l1_b"] = jnp.concatenate([b_f, b_b], axis=1)

    F = D + 2 * H
    klin = 1.0 / np.sqrt(F)
    w = uni((F, LINEAR_OUT), klin)           # rows ordered [mat_FW | embeddings | mat_BW]
    p["lin_w_fw"] = w[:H]
    p["lin_w_mid"] = w[H:H + D]
    p["lin_w_bw"] = w[H + D:]
    p["lin_b"] = uni((1, LINEAR_OUT), klin)
    return p


# --------------------------------------------------------------------------
# Full forward pass: embeddings + index bookkeeping in jitted XLA, everything
# else in the single fused Pallas kernel.
# --------------------------------------------------------------------------
@functools.partial(jax.jit, static_argnames=("add_feature",))
def scrcnn_forward(params, b_x, b_y, add_feature=True):
    B = b_x.shape[0]
    L = SEQ_MAX
    LB = L * B
    H = LSTM_HIDDEN

    # torch.chunk(b_x, 2, 1) + squeeze + embeddings (+ concat when add_feature)
    idx_word = b_x[:, 0, :]
    idx_feat = b_x[:, 1, :]
    x = params["emb1"][idx_word]                                  # [B, L, WORD_EMB]
    if add_feature:
        x = jnp.concatenate([x, params["emb2"][idx_feat]], axis=2)
    D = x.shape[2]

    # packedd(): per-row true length + stable length-descending order.
    # TODO(synk): assumes zero-padding sits at the tail of each sequence, as the
    # original pack_padded_sequence-based code implicitly requires.
    num = jnp.sum(jnp.any(x != 0.0, axis=2), axis=1).astype(jnp.int32)   # [B]
    order = jnp.argsort(-num)                                     # stable: first-max-wins
    lmax = jnp.max(num)

    # Flat time-major layout: row r = t*B + b.
    x_flat = jnp.transpose(x, (1, 0, 2)).reshape(LB, D).astype(jnp.float32)

    r = jnp.arange(LB, dtype=jnp.int32)
    t_r = r // B
    b_r = r % B
    len_r = num[b_r]                                              # length of row r's batch
    len_b = num.reshape(B, 1)
    is_t0 = (t_r == 0).astype(jnp.int32).reshape(LB, 1)
    is_last = (t_r == (len_r - 1)).astype(jnp.int32).reshape(LB, 1)
    b_row = b_r.reshape(LB, 1)
    pool_valid = (t_r < lmax).astype(jnp.int32).reshape(LB, 1)
    # m_rev[r, q] = 1 iff rows r=(t,b), q=(s,b) with s = len_b - 2 - t (rep_text reversal)
    m_rev = ((b_r[:, None] == b_r[None, :]) &
             ((t_r[:, None] + t_r[None, :]) == (len_r[:, None] - 2))
             ).astype(jnp.float32)

    pooled = _fused_forward(x_flat, len_b, params["h_f"], is_t0, is_last,
                            b_row, pool_valid, m_rev, params)      # [B, 128]

    # Rows (and labels) reported in length-descending order, like the module.
    data = pooled[order]
    label = b_y[order]
    return data, label


if __name__ == "__main__":
    key = jax.random.PRNGKey(0)
    B = 2
    k_idx1, k_idx2, k_param = jax.random.split(key, 3)

    true_len = np.array([6, SEQ_MAX])
    pad_mask = jnp.asarray(np.arange(SEQ_MAX)[None, :] < true_len[:, None])
    word_idx = jnp.where(pad_mask,
                         jax.random.randint(k_idx1, (B, SEQ_MAX), 1, DICTIONARY_SIZE),
                         0).astype(jnp.int32)
    feat_idx = jnp.where(pad_mask,
                         jax.random.randint(k_idx2, (B, SEQ_MAX), 1, 6),
                         0).astype(jnp.int32)
    b_x = jnp.stack([word_idx, feat_idx], axis=1)                 # [B, 2, SEQ_MAX] int32
    b_y = jnp.array([3, 1], dtype=jnp.int32)

    input_size = WORD_EMB + FEAT_EMB                              # add_feature=True
    params = init_params(k_param, input_size)

    data, label = scrcnn_forward(params, b_x, b_y, add_feature=True)
    jax.block_until_ready((data, label))

    assert data.shape == (B, LINEAR_OUT) and data.dtype == jnp.float32
    assert label.shape == (B,)
    assert bool(jnp.all(jnp.isfinite(data)))
    assert bool(jnp.all(jnp.abs(data) <= 1.0 + 1e-5))             # tanh range + max pool
    print("KERNEL_OK")
</pallas_src>

<mosaic_0001>
module attributes {stable_mosaic.version = 11 : i64} {
  func.func @_scrcnn_fused_kernel(%arg0: i32, %arg1: memref<16x24xf32, #tpu.memory_space<vmem>>, %arg2: memref<2x1xi32, #tpu.memory_space<vmem>>, %arg3: memref<1x32xf32, #tpu.memory_space<vmem>>, %arg4: memref<16x1xi32, #tpu.memory_space<vmem>>, %arg5: memref<16x1xi32, #tpu.memory_space<vmem>>, %arg6: memref<16x1xi32, #tpu.memory_space<vmem>>, %arg7: memref<16x1xi32, #tpu.memory_space<vmem>>, %arg8: memref<16x16xf32, #tpu.memory_space<vmem>>, %arg9: memref<24x256xf32, #tpu.memory_space<vmem>>, %arg10: memref<32x128xf32, #tpu.memory_space<vmem>>, %arg11: memref<32x128xf32, #tpu.memory_space<vmem>>, %arg12: memref<1x256xf32, #tpu.memory_space<vmem>>, %arg13: memref<32x256xf32, #tpu.memory_space<vmem>>, %arg14: memref<32x256xf32, #tpu.memory_space<vmem>>, %arg15: memref<32x128xf32, #tpu.memory_space<vmem>>, %arg16: memref<32x128xf32, #tpu.memory_space<vmem>>, %arg17: memref<1x256xf32, #tpu.memory_space<vmem>>, %arg18: memref<32x128xf32, #tpu.memory_space<vmem>>, %arg19: memref<24x128xf32, #tpu.memory_space<vmem>>, %arg20: memref<32x128xf32, #tpu.memory_space<vmem>>, %arg21: memref<1x128xf32, #tpu.memory_space<vmem>>, %arg22: memref<2x128xf32, #tpu.memory_space<vmem>>, %arg23: memref<16x32xf32, #tpu.memory_space<vmem>>, %arg24: memref<16x32xf32, #tpu.memory_space<vmem>>, %arg25: memref<16x32xf32, #tpu.memory_space<vmem>>, %arg26: memref<16x32xf32, #tpu.memory_space<vmem>>) attributes {dimension_semantics = [#tpu.dimension_semantics<arbitrary>], iteration_bounds = array<i64: 1>, scalar_prefetch = 0 : i64, scratch_operands = 4 : i64, tpu.core_type = #tpu.core_type<tc>, window_params = [{pipeline_mode = #tpu.pipeline_mode<synchronous>, transform_indices = @transform_0, window_bounds = array<i64: 16, 24>}, {pipeline_mode = #tpu.pipeline_mode<synchronous>, transform_indices = @transform_1, window_bounds = array<i64: 2, 1>}, {pipeline_mode = #tpu.pipeline_mode<synchronous>, transform_indices = @transform_2, window_bounds = array<i64: 1, 32>}, {pipeline_mode = #tpu.pipeline_mode<synchronous>, transform_indices = @transform_3, window_bounds = array<i64: 16, 1>}, {pipeline_mode = #tpu.pipeline_mode<synchronous>, transform_indices = @transform_4, window_bounds = array<i64: 16, 1>}, {pipeline_mode = #tpu.pipeline_mode<synchronous>, transform_indices = @transform_5, window_bounds = array<i64: 16, 1>}, {pipeline_mode = #tpu.pipeline_mode<synchronous>, transform_indices = @transform_6, window_bounds = array<i64: 16, 1>}, {pipeline_mode = #tpu.pipeline_mode<synchronous>, transform_indices = @transform_7, window_bounds = array<i64: 16, 16>}, {pipeline_mode = #tpu.pipeline_mode<synchronous>, transform_indices = @transform_8, window_bounds = array<i64: 24, 256>}, {pipeline_mode = #tpu.pipeline_mode<synchronous>, transform_indices = @transform_9, window_bounds = array<i64: 32, 128>}, {pipeline_mode = #tpu.pipeline_mode<synchronous>, transform_indices = @transform_10, window_bounds = array<i64: 32, 128>}, {pipeline_mode = #tpu.pipeline_mode<synchronous>, transform_indices = @transform_11, window_bounds = array<i64: 1, 256>}, {pipeline_mode = #tpu.pipeline_mode<synchronous>, transform_indices = @transform_12, window_bounds = array<i64: 32, 256>}, {pipeline_mode = #tpu.pipeline_mode<synchronous>, transform_indices = @transform_13, window_bounds = array<i64: 32, 256>}, {pipeline_mode = #tpu.pipeline_mode<synchronous>, transform_indices = @transform_14, window_bounds = array<i64: 32, 128>}, {pipeline_mode = #tpu.pipeline_mode<synchronous>, transform_indices = @transform_15, window_bounds = array<i64: 32, 128>}, {pipeline_mode = #tpu.pipeline_mode<synchronous>, transform_indices = @transform_16, window_bounds = array<i64: 1, 256>}, {pipeline_mode = #tpu.pipeline_mode<synchronous>, transform_indices = @transform_17, window_bounds = array<i64: 32, 128>}, {pipeline_mode = #tpu.pipeline_mode<synchronous>, transform_indices = @transform_18, window_bounds = array<i64: 24, 128>}, {pipeline_mode = #tpu.pipeline_mode<synchronous>, transform_indices = @transform_19, window_bounds = array<i64: 32, 128>}, {pipeline_mode = #tpu.pipeline_mode<synchronous>, transform_indices = @transform_20, window_bounds = array<i64: 1, 128>}, {pipeline_mode = #tpu.pipeline_mode<synchronous>, transform_indices = @transform_21, window_bounds = array<i64: 2, 128>}]} {
    %c0 = arith.constant 0 : index
    %c0_0 = arith.constant 0 : index
    %0 = vector.load %arg1[%c0, %c0_0] : memref<16x24xf32, #tpu.memory_space<vmem>>, vector<16x24xf32>
    %c0_1 = arith.constant 0 : index
    %c0_2 = arith.constant 0 : index
    %1 = vector.load %arg2[%c0_1, %c0_2] : memref<2x1xi32, #tpu.memory_space<vmem>>, vector<2x1xi32>
    %c0_3 = arith.constant 0 : index
    %c0_4 = arith.constant 0 : index
    %2 = vector.load %arg3[%c0_3, %c0_4] : memref<1x32xf32, #tpu.memory_space<vmem>>, vector<1x32xf32>
    %3 = vector.shape_cast %2 : vector<1x32xf32> to vector<1x32xf32>
    %4 = vector.broadcast %3 : vector<1x32xf32> to vector<2x32xf32>
    %c0_5 = arith.constant 0 : index
    %c0_6 = arith.constant 0 : index
    %5 = vector.load %arg9[%c0_5, %c0_6] : memref<24x256xf32, #tpu.memory_space<vmem>>, vector<24x256xf32>
    %cst = arith.constant dense<0.000000e+00> : vector<16x256xf32>
    %6 = tpu.matmul %0, %5, %cst {dimension_numbers = #tpu.dot_dimension_numbers<[1], [0], [0], [1], [0, 0, 1, 1], [], []>} : vector<16x24xf32>, vector<24x256xf32>, vector<16x256xf32> -> vector<16x256xf32>
    %c0_7 = arith.constant 0 : index
    %c0_8 = arith.constant 0 : index
    %7 = vector.load %arg12[%c0_7, %c0_8] : memref<1x256xf32, #tpu.memory_space<vmem>>, vector<1x256xf32>
    %8 = vector.broadcast %7 : vector<1x256xf32> to vector<16x256xf32>
    %9 = arith.addf %6, %8 : vector<16x256xf32>
    %c0_9 = arith.constant 0 : index
    %c0_10 = arith.constant 0 : index
    %10 = vector.load %arg10[%c0_9, %c0_10] : memref<32x128xf32, #tpu.memory_space<vmem>>, vector<32x128xf32>
    %c0_11 = arith.constant 0 : index
    %c0_12 = arith.constant 0 : index
    %11 = vector.load %arg11[%c0_11, %c0_12] : memref<32x128xf32, #tpu.memory_space<vmem>>, vector<32x128xf32>
    %c0_i32 = arith.constant 0 : i32
    %12 = vector.broadcast %c0_i32 : i32 to vector<2x1xi32>
    %13 = arith.cmpi sgt, %1, %12 : vector<2x1xi32>
    %14 = vector.extract_strided_slice %9 {offsets = [0, 0], sizes = [2, 128], strides = [1, 1]} : vector<16x256xf32> to vector<2x128xf32>
    %cst_13 = arith.constant dense<0.000000e+00> : vector<2x128xf32>
    %15 = tpu.matmul %4, %10, %cst_13 {dimension_numbers = #tpu.dot_dimension_numbers<[1], [0], [0], [1], [0, 0, 1, 1], [], []>} : vector<2x32xf32>, vector<32x128xf32>, vector<2x128xf32> -> vector<2x128xf32>
    %16 = arith.addf %14, %15 : vector<2x128xf32>
    %17 = vector.extract_strided_slice %16 {offsets = [0, 0], sizes = [2, 96], strides = [1, 1]} : vector<2x128xf32> to vector<2x96xf32>
    %cst_14 = arith.constant 0.000000e+00 : f32
    %18 = vector.broadcast %cst_14 : f32 to vector<2x96xf32>
    %19 = arith.subf %18, %17 : vector<2x96xf32>
    %20 = math.exp %19 : vector<2x96xf32>
    %cst_15 = arith.constant 1.000000e+00 : f32
    %21 = vector.broadcast %cst_15 : f32 to vector<2x96xf32>
    %22 = arith.addf %21, %20 : vector<2x96xf32>
    %cst_16 = arith.constant 1.000000e+00 : f32
    %23 = vector.broadcast %cst_16 : f32 to vector<2x96xf32>
    %24 = arith.divf %23, %22 : vector<2x96xf32>
    %25 = vector.extract_strided_slice %24 {offsets = [0, 0], sizes = [2, 32], strides = [1, 1]} : vector<2x96xf32> to vector<2x32xf32>
    %26 = vector.extract_strided_slice %24 {offsets = [0, 32], sizes = [2, 32], strides = [1, 1]} : vector<2x96xf32> to vector<2x32xf32>
    %27 = vector.extract_strided_slice %24 {offsets = [0, 64], sizes = [2, 32], strides = [1, 1]} : vector<2x96xf32> to vector<2x32xf32>
    %28 = vector.extract_strided_slice %16 {offsets = [0, 96], sizes = [2, 32], strides = [1, 1]} : vector<2x128xf32> to vector<2x32xf32>
    %29 = math.tanh %28 : vector<2x32xf32>
    %30 = arith.mulf %26, %4 : vector<2x32xf32>
    %31 = arith.mulf %25, %29 : vector<2x32xf32>
    %32 = arith.addf %30, %31 : vector<2x32xf32>
    %33 = math.tanh %32 : vector<2x32xf32>
    %34 = arith.mulf %27, %33 : vector<2x32xf32>
    %35 = vector.shape_cast %13 : vector<2x1xi1> to vector<2x1xi1>
    %36 = vector.broadcast %35 : vector<2x1xi1> to vector<2x32xi1>
    %37 = arith.select %36, %34, %4 : vector<2x32xi1>, vector<2x32xf32>
    %38 = vector.shape_cast %13 : vector<2x1xi1> to vector<2x1xi1>
    %39 = vector.broadcast %38 : vector<2x1xi1> to vector<2x32xi1>
    %40 = arith.select %39, %32, %4 : vector<2x32xi1>, vector<2x32xf32>
    %cst_17 = arith.constant 0.000000e+00 : f32
    %41 = vector.shape_cast %13 : vector<2x1xi1> to vector<2x1xi1>
    %42 = vector.broadcast %41 : vector<2x1xi1> to vector<2x32xi1>
    %43 = vector.broadcast %cst_17 : f32 to vector<2x32xf32>
    %44 = arith.select %42, %34, %43 : vector<2x32xi1>, vector<2x32xf32>
    %c0_18 = arith.constant 0 : index
    %c0_19 = arith.constant 0 : index
    %45 = vector.load %arg23[%c0_18, %c0_19] : memref<16x32xf32, #tpu.memory_space<vmem>>, vector<2x32xf32>
    tpu.vector_store %arg23[%c0_18, %c0_19], %44 {strides = array<i32>} : memref<16x32xf32, #tpu.memory_space<vmem>>, vector<2x32xf32>,
    %c7_i32 = arith.constant 7 : i32
    %46 = vector.broadcast %c7_i32 : i32 to vector<2x1xi32>
    %47 = arith.cmpi sgt, %1, %46 : vector<2x1xi32>
    %48 = vector.extract_strided_slice %9 {offsets = [14, 128], sizes = [2, 128], strides = [1, 1]} : vector<16x256xf32> to vector<2x128xf32>
    %cst_20 = arith.constant dense<0.000000e+00> : vector<2x128xf32>
    %49 = tpu.matmul %4, %11, %cst_20 {dimension_numbers = #tpu.dot_dimension_numbers<[1], [0], [0], [1], [0, 0, 1, 1], [], []>} : vector<2x32xf32>, vector<32x128xf32>, vector<2x128xf32> -> vector<2x128xf32>
    %50 = arith.addf %48, %49 : vector<2x128xf32>
    %51 = vector.extract_strided_slice %50 {offsets = [0, 0], sizes = [2, 96], strides = [1, 1]} : vector<2x128xf32> to vector<2x96xf32>
    %cst_21 = arith.constant 0.000000e+00 : f32
    %52 = vector.broadcast %cst_21 : f32 to vector<2x96xf32>
    %53 = arith.subf %52, %51 : vector<2x96xf32>
    %54 = math.exp %53 : vector<2x96xf32>
    %cst_22 = arith.constant 1.000000e+00 : f32
    %55 = vector.broadcast %cst_22 : f32 to vector<2x96xf32>
    %56 = arith.addf %55, %54 : vector<2x96xf32>
    %cst_23 = arith.constant 1.000000e+00 : f32
    %57 = vector.broadcast %cst_23 : f32 to vector<2x96xf32>
    %58 = arith.divf %57, %56 : vector<2x96xf32>
    %59 = vector.extract_strided_slice %58 {offsets = [0, 0], sizes = [2, 32], strides = [1, 1]} : vector<2x96xf32> to vector<2x32xf32>
    %60 = vector.extract_strided_slice %58 {offsets = [0, 32], sizes = [2, 32], strides = [1, 1]} : vector<2x96xf32> to vector<2x32xf32>
    %61 = vector.extract_strided_slice %58 {offsets = [0, 64], sizes = [2, 32], strides = [1, 1]} : vector<2x96xf32> to vector<2x32xf32>
    %62 = vector.extract_strided_slice %50 {offsets = [0, 96], sizes = [2, 32], strides = [1, 1]} : vector<2x128xf32> to vector<2x32xf32>
    %63 = math.tanh %62 : vector<2x32xf32>
    %64 = arith.mulf %60, %4 : vector<2x32xf32>
    %65 = arith.mulf %59, %63 : vector<2x32xf32>
    %66 = arith.addf %64, %65 : vector<2x32xf32>
    %67 = math.tanh %66 : vector<2x32xf32>
    %68 = arith.mulf %61, %67 : vector<2x32xf32>
    %69 = vector.shape_cast %47 : vector<2x1xi1> to vector<2x1xi1>
    %70 = vector.broadcast %69 : vector<2x1xi1> to vector<2x32xi1>
    %71 = arith.select %70, %68, %4 : vector<2x32xi1>, vector<2x32xf32>
    %72 = vector.shape_cast %47 : vector<2x1xi1> to vector<2x1xi1>
    %73 = vector.broadcast %72 : vector<2x1xi1> to vector<2x32xi1>
    %74 = arith.select %73, %66, %4 : vector<2x32xi1>, vector<2x32xf32>
    %cst_24 = arith.constant 0.000000e+00 : f32
    %75 = vector.shape_cast %47 : vector<2x1xi1> to vector<2x1xi1>
    %76 = vector.broadcast %75 : vector<2x1xi1> to vector<2x32xi1>
    %77 = vector.broadcast %cst_24 : f32 to vector<2x32xf32>
    %78 = arith.select %76, %68, %77 : vector<2x32xi1>, vector<2x32xf32>
    %c14 = arith.constant 14 : index
    %c0_25 = arith.constant 0 : index
    %79 = vector.load %arg24[%c14, %c0_25] : memref<16x32xf32, #tpu.memory_space<vmem>>, vector<2x32xf32>
    tpu.vector_store %arg24[%c14, %c0_25], %78 {strides = array<i32>} : memref<16x32xf32, #tpu.memory_space<vmem>>, vector<2x32xf32>,
    %c1_i32 = arith.constant 1 : i32
    %80 = vector.broadcast %c1_i32 : i32 to vector<2x1xi32>
    %81 = arith.cmpi sgt, %1, %80 : vector<2x1xi32>
    %82 = vector.extract_strided_slice %9 {offsets = [2, 0], sizes = [2, 128], strides = [1, 1]} : vector<16x256xf32> to vector<2x128xf32>
    %cst_26 = arith.constant dense<0.000000e+00> : vector<2x128xf32>
    %83 = tpu.matmul %37, %10, %cst_26 {dimension_numbers = #tpu.dot_dimension_numbers<[1], [0], [0], [1], [0, 0, 1, 1], [], []>} : vector<2x32xf32>, vector<32x128xf32>, vector<2x128xf32> -> vector<2x128xf32>
    %84 = arith.addf %82, %83 : vector<2x128xf32>
    %85 = vector.extract_strided_slice %84 {offsets = [0, 0], sizes = [2, 96], strides = [1, 1]} : vector<2x128xf32> to vector<2x96xf32>
    %cst_27 = arith.constant 0.000000e+00 : f32
    %86 = vector.broadcast %cst_27 : f32 to vector<2x96xf32>
    %87 = arith.subf %86, %85 : vector<2x96xf32>
    %88 = math.exp %87 : vector<2x96xf32>
    %cst_28 = arith.constant 1.000000e+00 : f32
    %89 = vector.broadcast %cst_28 : f32 to vector<2x96xf32>
    %90 = arith.addf %89, %88 : vector<2x96xf32>
    %cst_29 = arith.constant 1.000000e+00 : f32
    %91 = vector.broadcast %cst_29 : f32 to vector<2x96xf32>
    %92 = arith.divf %91, %90 : vector<2x96xf32>
    %93 = vector.extract_strided_slice %92 {offsets = [0, 0], sizes = [2, 32], strides = [1, 1]} : vector<2x96xf32> to vector<2x32xf32>
    %94 = vector.extract_strided_slice %92 {offsets = [0, 32], sizes = [2, 32], strides = [1, 1]} : vector<2x96xf32> to vector<2x32xf32>
    %95 = vector.extract_strided_slice %92 {offsets = [0, 64], sizes = [2, 32], strides = [1, 1]} : vector<2x96xf32> to vector<2x32xf32>
    %96 = vector.extract_strided_slice %84 {offsets = [0, 96], sizes = [2, 32], strides = [1, 1]} : vector<2x128xf32> to vector<2x32xf32>
    %97 = math.tanh %96 : vector<2x32xf32>
    %98 = arith.mulf %94, %40 : vector<2x32xf32>
    %99 = arith.mulf %93, %97 : vector<2x32xf32>
    %100 = arith.addf %98, %99 : vector<2x32xf32>
    %101 = math.tanh %100 : vector<2x32xf32>
    %102 = arith.mulf %95, %101 : vector<2x32xf32>
    %103 = vector.shape_cast %81 : vector<2x1xi1> to vector<2x1xi1>
    %104 = vector.broadcast %103 : vector<2x1xi1> to vector<2x32xi1>
    %105 = arith.select %104, %102, %37 : vector<2x32xi1>, vector<2x32xf32>
    %106 = vector.shape_cast %81 : vector<2x1xi1> to vector<2x1xi1>
    %107 = vector.broadcast %106 : vector<2x1xi1> to vector<2x32xi1>
    %108 = arith.select %107, %100, %40 : vector<2x32xi1>, vector<2x32xf32>
    %cst_30 = arith.constant 0.000000e+00 : f32
    %109 = vector.shape_cast %81 : vector<2x1xi1> to vector<2x1xi1>
    %110 = vector.broadcast %109 : vector<2x1xi1> to vector<2x32xi1>
    %111 = vector.broadcast %cst_30 : f32 to vector<2x32xf32>
    %112 = arith.select %110, %102, %111 : vector<2x32xi1>, vector<2x32xf32>
    %c2 = arith.constant 2 : index
    %c0_31 = arith.constant 0 : index
    %113 = vector.load %arg23[%c2, %c0_31] : memref<16x32xf32, #tpu.memory_space<vmem>>, vector<2x32xf32>
    tpu.vector_store %arg23[%c2, %c0_31], %112 {strides = array<i32>} : memref<16x32xf32, #tpu.memory_space<vmem>>, vector<2x32xf32>,
    %c6_i32 = arith.constant 6 : i32
    %114 = vector.broadcast %c6_i32 : i32 to vector<2x1xi32>
    %115 = arith.cmpi sgt, %1, %114 : vector<2x1xi32>
    %116 = vector.extract_strided_slice %9 {offsets = [12, 128], sizes = [2, 128], strides = [1, 1]} : vector<16x256xf32> to vector<2x128xf32>
    %cst_32 = arith.constant dense<0.000000e+00> : vector<2x128xf32>
    %117 = tpu.matmul %71, %11, %cst_32 {dimension_numbers = #tpu.dot_dimension_numbers<[1], [0], [0], [1], [0, 0, 1, 1], [], []>} : vector<2x32xf32>, vector<32x128xf32>, vector<2x128xf32> -> vector<2x128xf32>
    %118 = arith.addf %116, %117 : vector<2x128xf32>
    %119 = vector.extract_strided_slice %118 {offsets = [0, 0], sizes = [2, 96], strides = [1, 1]} : vector<2x128xf32> to vector<2x96xf32>
    %cst_33 = arith.constant 0.000000e+00 : f32
    %120 = vector.broadcast %cst_33 : f32 to vector<2x96xf32>
    %121 = arith.subf %120, %119 : vector<2x96xf32>
    %122 = math.exp %121 : vector<2x96xf32>
    %cst_34 = arith.constant 1.000000e+00 : f32
    %123 = vector.broadcast %cst_34 : f32 to vector<2x96xf32>
    %124 = arith.addf %123, %122 : vector<2x96xf32>
    %cst_35 = arith.constant 1.000000e+00 : f32
    %125 = vector.broadcast %cst_35 : f32 to vector<2x96xf32>
    %126 = arith.divf %125, %124 : vector<2x96xf32>
    %127 = vector.extract_strided_slice %126 {offsets = [0, 0], sizes = [2, 32], strides = [1, 1]} : vector<2x96xf32> to vector<2x32xf32>
    %128 = vector.extract_strided_slice %126 {offsets = [0, 32], sizes = [2, 32], strides = [1, 1]} : vector<2x96xf32> to vector<2x32xf32>
    %129 = vector.extract_strided_slice %126 {offsets = [0, 64], sizes = [2, 32], strides = [1, 1]} : vector<2x96xf32> to vector<2x32xf32>
    %130 = vector.extract_strided_slice %118 {offsets = [0, 96], sizes = [2, 32], strides = [1, 1]} : vector<2x128xf32> to vector<2x32xf32>
    %131 = math.tanh %130 : vector<2x32xf32>
    %132 = arith.mulf %128, %74 : vector<2x32xf32>
    %133 = arith.mulf %127, %131 : vector<2x32xf32>
    %134 = arith.addf %132, %133 : vector<2x32xf32>
    %135 = math.tanh %134 : vector<2x32xf32>
    %136 = arith.mulf %129, %135 : vector<2x32xf32>
    %137 = vector.shape_cast %115 : vector<2x1xi1> to vector<2x1xi1>
    %138 = vector.broadcast %137 : vector<2x1xi1> to vector<2x32xi1>
    %139 = arith.select %138, %136, %71 : vector<2x32xi1>, vector<2x32xf32>
    %140 = vector.shape_cast %115 : vector<2x1xi1> to vector<2x1xi1>
    %141 = vector.broadcast %140 : vector<2x1xi1> to vector<2x32xi1>
    %142 = arith.select %141, %134, %74 : vector<2x32xi1>, vector<2x32xf32>
    %cst_36 = arith.constant 0.000000e+00 : f32
    %143 = vector.shape_cast %115 : vector<2x1xi1> to vector<2x1xi1>
    %144 = vector.broadcast %143 : vector<2x1xi1> to vector<2x32xi1>
    %145 = vector.broadcast %cst_36 : f32 to vector<2x32xf32>
    %146 = arith.select %144, %136, %145 : vector<2x32xi1>, vector<2x32xf32>
    %c12 = arith.constant 12 : index
    %c0_37 = arith.constant 0 : index
    %147 = vector.load %arg24[%c12, %c0_37] : memref<16x32xf32, #tpu.memory_space<vmem>>, vector<2x32xf32>
    tpu.vector_store %arg24[%c12, %c0_37], %146 {strides = array<i32>} : memref<16x32xf32, #tpu.memory_space<vmem>>, vector<2x32xf32>,
    %c2_i32 = arith.constant 2 : i32
    %148 = vector.broadcast %c2_i32 : i32 to vector<2x1xi32>
    %149 = arith.cmpi sgt, %1, %148 : vector<2x1xi32>
    %150 = vector.extract_strided_slice %9 {offsets = [4, 0], sizes = [2, 128], strides = [1, 1]} : vector<16x256xf32> to vector<2x128xf32>
    %cst_38 = arith.constant dense<0.000000e+00> : vector<2x128xf32>
    %151 = tpu.matmul %105, %10, %cst_38 {dimension_numbers = #tpu.dot_dimension_numbers<[1], [0], [0], [1], [0, 0, 1, 1], [], []>} : vector<2x32xf32>, vector<32x128xf32>, vector<2x128xf32> -> vector<2x128xf32>
    %152 = arith.addf %150, %151 : vector<2x128xf32>
    %153 = vector.extract_strided_slice %152 {offsets = [0, 0], sizes = [2, 96], strides = [1, 1]} : vector<2x128xf32> to vector<2x96xf32>
    %cst_39 = arith.constant 0.000000e+00 : f32
    %154 = vector.broadcast %cst_39 : f32 to vector<2x96xf32>
    %155 = arith.subf %154, %153 : vector<2x96xf32>
    %156 = math.exp %155 : vector<2x96xf32>
    %cst_40 = arith.constant 1.000000e+00 : f32
    %157 = vector.broadcast %cst_40 : f32 to vector<2x96xf32>
    %158 = arith.addf %157, %156 : vector<2x96xf32>
    %cst_41 = arith.constant 1.000000e+00 : f32
    %159 = vector.broadcast %cst_41 : f32 to vector<2x96xf32>
    %160 = arith.divf %159, %158 : vector<2x96xf32>
    %161 = vector.extract_strided_slice %160 {offsets = [0, 0], sizes = [2, 32], strides = [1, 1]} : vector<2x96xf32> to vector<2x32xf32>
    %162 = vector.extract_strided_slice %160 {offsets = [0, 32], sizes = [2, 32], strides = [1, 1]} : vector<2x96xf32> to vector<2x32xf32>
    %163 = vector.extract_strided_slice %160 {offsets = [0, 64], sizes = [2, 32], strides = [1, 1]} : vector<2x96xf32> to vector<2x32xf32>
    %164 = vector.extract_strided_slice %152 {offsets = [0, 96], sizes = [2, 32], strides = [1, 1]} : vector<2x128xf32> to vector<2x32xf32>
    %165 = math.tanh %164 : vector<2x32xf32>
    %166 = arith.mulf %162, %108 : vector<2x32xf32>
    %167 = arith.mulf %161, %165 : vector<2x32xf32>
    %168 = arith.addf %166, %167 : vector<2x32xf32>
    %169 = math.tanh %168 : vector<2x32xf32>
    %170 = arith.mulf %163, %169 : vector<2x32xf32>
    %171 = vector.shape_cast %149 : vector<2x1xi1> to vector<2x1xi1>
    %172 = vector.broadcast %171 : vector<2x1xi1> to vector<2x32xi1>
    %173 = arith.select %172, %170, %105 : vector<2x32xi1>, vector<2x32xf32>
    %174 = vector.shape_cast %149 : vector<2x1xi1> to vector<2x1xi1>
    %175 = vector.broadcast %174 : vector<2x1xi1> to vector<2x32xi1>
    %176 = arith.select %175, %168, %108 : vector<2x32xi1>, vector<2x32xf32>
    %cst_42 = arith.constant 0.000000e+00 : f32
    %177 = vector.shape_cast %149 : vector<2x1xi1> to vector<2x1xi1>
    %178 = vector.broadcast %177 : vector<2x1xi1> to vector<2x32xi1>
    %179 = vector.broadcast %cst_42 : f32 to vector<2x32xf32>
    %180 = arith.select %178, %170, %179 : vector<2x32xi1>, vector<2x32xf32>
    %c4 = arith.constant 4 : index
    %c0_43 = arith.constant 0 : index
    %181 = vector.load %arg23[%c4, %c0_43] : memref<16x32xf32, #tpu.memory_space<vmem>>, vector<2x32xf32>
    tpu.vector_store %arg23[%c4, %c0_43], %180 {strides = array<i32>} : memref<16x32xf32, #tpu.memory_space<vmem>>, vector<2x32xf32>,
    %c5_i32 = arith.constant 5 : i32
    %182 = vector.broadcast %c5_i32 : i32 to vector<2x1xi32>
    %183 = arith.cmpi sgt, %1, %182 : vector<2x1xi32>
    %184 = vector.extract_strided_slice %9 {offsets = [10, 128], sizes = [2, 128], strides = [1, 1]} : vector<16x256xf32> to vector<2x128xf32>
    %cst_44 = arith.constant dense<0.000000e+00> : vector<2x128xf32>
    %185 = tpu.matmul %139, %11, %cst_44 {dimension_numbers = #tpu.dot_dimension_numbers<[1], [0], [0], [1], [0, 0, 1, 1], [], []>} : vector<2x32xf32>, vector<32x128xf32>, vector<2x128xf32> -> vector<2x128xf32>
    %186 = arith.addf %184, %185 : vector<2x128xf32>
    %187 = vector.extract_strided_slice %186 {offsets = [0, 0], sizes = [2, 96], strides = [1, 1]} : vector<2x128xf32> to vector<2x96xf32>
    %cst_45 = arith.constant 0.000000e+00 : f32
    %188 = vector.broadcast %cst_45 : f32 to vector<2x96xf32>
    %189 = arith.subf %188, %187 : vector<2x96xf32>
    %190 = math.exp %189 : vector<2x96xf32>
    %cst_46 = arith.constant 1.000000e+00 : f32
    %191 = vector.broadcast %cst_46 : f32 to vector<2x96xf32>
    %192 = arith.addf %191, %190 : vector<2x96xf32>
    %cst_47 = arith.constant 1.000000e+00 : f32
    %193 = vector.broadcast %cst_47 : f32 to vector<2x96xf32>
    %194 = arith.divf %193, %192 : vector<2x96xf32>
    %195 = vector.extract_strided_slice %194 {offsets = [0, 0], sizes = [2, 32], strides = [1, 1]} : vector<2x96xf32> to vector<2x32xf32>
    %196 = vector.extract_strided_slice %194 {offsets = [0, 32], sizes = [2, 32], strides = [1, 1]} : vector<2x96xf32> to vector<2x32xf32>
    %197 = vector.extract_strided_slice %194 {offsets = [0, 64], sizes = [2, 32], strides = [1, 1]} : vector<2x96xf32> to vector<2x32xf32>
    %198 = vector.extract_strided_slice %186 {offsets = [0, 96], sizes = [2, 32], strides = [1, 1]} : vector<2x128xf32> to vector<2x32xf32>
    %199 = math.tanh %198 : vector<2x32xf32>
    %200 = arith.mulf %196, %142 : vector<2x32xf32>
    %201 = arith.mulf %195, %199 : vector<2x32xf32>
    %202 = arith.addf %200, %201 : vector<2x32xf32>
    %203 = math.tanh %202 : vector<2x32xf32>
    %204 = arith.mulf %197, %203 : vector<2x32xf32>
    %205 = vector.shape_cast %183 : vector<2x1xi1> to vector<2x1xi1>
    %206 = vector.broadcast %205 : vector<2x1xi1> to vector<2x32xi1>
    %207 = arith.select %206, %204, %139 : vector<2x32xi1>, vector<2x32xf32>
    %208 = vector.shape_cast %183 : vector<2x1xi1> to vector<2x1xi1>
    %209 = vector.broadcast %208 : vector<2x1xi1> to vector<2x32xi1>
    %210 = arith.select %209, %202, %142 : vector<2x32xi1>, vector<2x32xf32>
    %cst_48 = arith.constant 0.000000e+00 : f32
    %211 = vector.shape_cast %183 : vector<2x1xi1> to vector<2x1xi1>
    %212 = vector.broadcast %211 : vector<2x1xi1> to vector<2x32xi1>
    %213 = vector.broadcast %cst_48 : f32 to vector<2x32xf32>
    %214 = arith.select %212, %204, %213 : vector<2x32xi1>, vector<2x32xf32>
    %c10 = arith.constant 10 : index
    %c0_49 = arith.constant 0 : index
    %215 = vector.load %arg24[%c10, %c0_49] : memref<16x32xf32, #tpu.memory_space<vmem>>, vector<2x32xf32>
    tpu.vector_store %arg24[%c10, %c0_49], %214 {strides = array<i32>} : memref<16x32xf32, #tpu.memory_space<vmem>>, vector<2x32xf32>,
    %c3_i32 = arith.constant 3 : i32
    %216 = vector.broadcast %c3_i32 : i32 to vector<2x1xi32>
    %217 = arith.cmpi sgt, %1, %216 : vector<2x1xi32>
    %218 = vector.extract_strided_slice %9 {offsets = [6, 0], sizes = [2, 128], strides = [1, 1]} : vector<16x256xf32> to vector<2x128xf32>
    %cst_50 = arith.constant dense<0.000000e+00> : vector<2x128xf32>
    %219 = tpu.matmul %173, %10, %cst_50 {dimension_numbers = #tpu.dot_dimension_numbers<[1], [0], [0], [1], [0, 0, 1, 1], [], []>} : vector<2x32xf32>, vector<32x128xf32>, vector<2x128xf32> -> vector<2x128xf32>
    %220 = arith.addf %218, %219 : vector<2x128xf32>
    %221 = vector.extract_strided_slice %220 {offsets = [0, 0], sizes = [2, 96], strides = [1, 1]} : vector<2x128xf32> to vector<2x96xf32>
    %cst_51 = arith.constant 0.000000e+00 : f32
    %222 = vector.broadcast %cst_51 : f32 to vector<2x96xf32>
    %223 = arith.subf %222, %221 : vector<2x96xf32>
    %224 = math.exp %223 : vector<2x96xf32>
    %cst_52 = arith.constant 1.000000e+00 : f32
    %225 = vector.broadcast %cst_52 : f32 to vector<2x96xf32>
    %226 = arith.addf %225, %224 : vector<2x96xf32>
    %cst_53 = arith.constant 1.000000e+00 : f32
    %227 = vector.broadcast %cst_53 : f32 to vector<2x96xf32>
    %228 = arith.divf %227, %226 : vector<2x96xf32>
    %229 = vector.extract_strided_slice %228 {offsets = [0, 0], sizes = [2, 32], strides = [1, 1]} : vector<2x96xf32> to vector<2x32xf32>
    %230 = vector.extract_strided_slice %228 {offsets = [0, 32], sizes = [2, 32], strides = [1, 1]} : vector<2x96xf32> to vector<2x32xf32>
    %231 = vector.extract_strided_slice %228 {offsets = [0, 64], sizes = [2, 32], strides = [1, 1]} : vector<2x96xf32> to vector<2x32xf32>
    %232 = vector.extract_strided_slice %220 {offsets = [0, 96], sizes = [2, 32], strides = [1, 1]} : vector<2x128xf32> to vector<2x32xf32>
    %233 = math.tanh %232 : vector<2x32xf32>
    %234 = arith.mulf %230, %176 : vector<2x32xf32>
    %235 = arith.mulf %229, %233 : vector<2x32xf32>
    %236 = arith.addf %234, %235 : vector<2x32xf32>
    %237 = math.tanh %236 : vector<2x32xf32>
    %238 = arith.mulf %231, %237 : vector<2x32xf32>
    %239 = vector.shape_cast %217 : vector<2x1xi1> to vector<2x1xi1>
    %240 = vector.broadcast %239 : vector<2x1xi1> to vector<2x32xi1>
    %241 = arith.select %240, %238, %173 : vector<2x32xi1>, vector<2x32xf32>
    %242 = vector.shape_cast %217 : vector<2x1xi1> to vector<2x1xi1>
    %243 = vector.broadcast %242 : vector<2x1xi1> to vector<2x32xi1>
    %244 = arith.select %243, %236, %176 : vector<2x32xi1>, vector<2x32xf32>
    %cst_54 = arith.constant 0.000000e+00 : f32
    %245 = vector.shape_cast %217 : vector<2x1xi1> to vector<2x1xi1>
    %246 = vector.broadcast %245 : vector<2x1xi1> to vector<2x32xi1>
    %247 = vector.broadcast %cst_54 : f32 to vector<2x32xf32>
    %248 = arith.select %246, %238, %247 : vector<2x32xi1>, vector<2x32xf32>
    %c6 = arith.constant 6 : index
    %c0_55 = arith.constant 0 : index
    %249 = vector.load %arg23[%c6, %c0_55] : memref<16x32xf32, #tpu.memory_space<vmem>>, vector<2x32xf32>
    tpu.vector_store %arg23[%c6, %c0_55], %248 {strides = array<i32>} : memref<16x32xf32, #tpu.memory_space<vmem>>, vector<2x32xf32>,
    %c4_i32 = arith.constant 4 : i32
    %250 = vector.broadcast %c4_i32 : i32 to vector<2x1xi32>
    %251 = arith.cmpi sgt, %1, %250 : vector<2x1xi32>
    %252 = vector.extract_strided_slice %9 {offsets = [8, 128], sizes = [2, 128], strides = [1, 1]} : vector<16x256xf32> to vector<2x128xf32>
    %cst_56 = arith.constant dense<0.000000e+00> : vector<2x128xf32>
    %253 = tpu.matmul %207, %11, %cst_56 {dimension_numbers = #tpu.dot_dimension_numbers<[1], [0], [0], [1], [0, 0, 1, 1], [], []>} : vector<2x32xf32>, vector<32x128xf32>, vector<2x128xf32> -> vector<2x128xf32>
    %254 = arith.addf %252, %253 : vector<2x128xf32>
    %255 = vector.extract_strided_slice %254 {offsets = [0, 0], sizes = [2, 96], strides = [1, 1]} : vector<2x128xf32> to vector<2x96xf32>
    %cst_57 = arith.constant 0.000000e+00 : f32
    %256 = vector.broadcast %cst_57 : f32 to vector<2x96xf32>
    %257 = arith.subf %256, %255 : vector<2x96xf32>
    %258 = math.exp %257 : vector<2x96xf32>
    %cst_58 = arith.constant 1.000000e+00 : f32
    %259 = vector.broadcast %cst_58 : f32 to vector<2x96xf32>
    %260 = arith.addf %259, %258 : vector<2x96xf32>
    %cst_59 = arith.constant 1.000000e+00 : f32
    %261 = vector.broadcast %cst_59 : f32 to vector<2x96xf32>
    %262 = arith.divf %261, %260 : vector<2x96xf32>
    %263 = vector.extract_strided_slice %262 {offsets = [0, 0], sizes = [2, 32], strides = [1, 1]} : vector<2x96xf32> to vector<2x32xf32>
    %264 = vector.extract_strided_slice %262 {offsets = [0, 32], sizes = [2, 32], strides = [1, 1]} : vector<2x96xf32> to vector<2x32xf32>
    %265 = vector.extract_strided_slice %262 {offsets = [0, 64], sizes = [2, 32], strides = [1, 1]} : vector<2x96xf32> to vector<2x32xf32>
    %266 = vector.extract_strided_slice %254 {offsets = [0, 96], sizes = [2, 32], strides = [1, 1]} : vector<2x128xf32> to vector<2x32xf32>
    %267 = math.tanh %266 : vector<2x32xf32>
    %268 = arith.mulf %264, %210 : vector<2x32xf32>
    %269 = arith.mulf %263, %267 : vector<2x32xf32>
    %270 = arith.addf %268, %269 : vector<2x32xf32>
    %271 = math.tanh %270 : vector<2x32xf32>
    %272 = arith.mulf %265, %271 : vector<2x32xf32>
    %273 = vector.shape_cast %251 : vector<2x1xi1> to vector<2x1xi1>
    %274 = vector.broadcast %273 : vector<2x1xi1> to vector<2x32xi1>
    %275 = arith.select %274, %272, %207 : vector<2x32xi1>, vector<2x32xf32>
    %276 = vector.shape_cast %251 : vector<2x1xi1> to vector<2x1xi1>
    %277 = vector.broadcast %276 : vector<2x1xi1> to vector<2x32xi1>
    %278 = arith.select %277, %270, %210 : vector<2x32xi1>, vector<2x32xf32>
    %cst_60 = arith.constant 0.000000e+00 : f32
    %279 = vector.shape_cast %251 : vector<2x1xi1> to vector<2x1xi1>
    %280 = vector.broadcast %279 : vector<2x1xi1> to vector<2x32xi1>
    %281 = vector.broadcast %cst_60 : f32 to vector<2x32xf32>
    %282 = arith.select %280, %272, %281 : vector<2x32xi1>, vector<2x32xf32>
    %c8 = arith.constant 8 : index
    %c0_61 = arith.constant 0 : index
    %283 = vector.load %arg24[%c8, %c0_61] : memref<16x32xf32, #tpu.memory_space<vmem>>, vector<2x32xf32>
    tpu.vector_store %arg24[%c8, %c0_61], %282 {strides = array<i32>} : memref<16x32xf32, #tpu.memory_space<vmem>>, vector<2x32xf32>,
    %c4_i32_62 = arith.constant 4 : i32
    %284 = vector.broadcast %c4_i32_62 : i32 to vector<2x1xi32>
    %285 = arith.cmpi sgt, %1, %284 : vector<2x1xi32>
    %286 = vector.extract_strided_slice %9 {offsets = [8, 0], sizes = [2, 128], strides = [1, 1]} : vector<16x256xf32> to vector<2x128xf32>
    %cst_63 = arith.constant dense<0.000000e+00> : vector<2x128xf32>
    %287 = tpu.matmul %241, %10, %cst_63 {dimension_numbers = #tpu.dot_dimension_numbers<[1], [0], [0], [1], [0, 0, 1, 1], [], []>} : vector<2x32xf32>, vector<32x128xf32>, vector<2x128xf32> -> vector<2x128xf32>
    %288 = arith.addf %286, %287 : vector<2x128xf32>
    %289 = vector.extract_strided_slice %288 {offsets = [0, 0], sizes = [2, 96], strides = [1, 1]} : vector<2x128xf32> to vector<2x96xf32>
    %cst_64 = arith.constant 0.000000e+00 : f32
    %290 = vector.broadcast %cst_64 : f32 to vector<2x96xf32>
    %291 = arith.subf %290, %289 : vector<2x96xf32>
    %292 = math.exp %291 : vector<2x96xf32>
    %cst_65 = arith.constant 1.000000e+00 : f32
    %293 = vector.broadcast %cst_65 : f32 to vector<2x96xf32>
    %294 = arith.addf %293, %292 : vector<2x96xf32>
    %cst_66 = arith.constant 1.000000e+00 : f32
    %295 = vector.broadcast %cst_66 : f32 to vector<2x96xf32>
    %296 = arith.divf %295, %294 : vector<2x96xf32>
    %297 = vector.extract_strided_slice %296 {offsets = [0, 0], sizes = [2, 32], strides = [1, 1]} : vector<2x96xf32> to vector<2x32xf32>
    %298 = vector.extract_strided_slice %296 {offsets = [0, 32], sizes = [2, 32], strides = [1, 1]} : vector<2x96xf32> to vector<2x32xf32>
    %299 = vector.extract_strided_slice %296 {offsets = [0, 64], sizes = [2, 32], strides = [1, 1]} : vector<2x96xf32> to vector<2x32xf32>
    %300 = vector.extract_strided_slice %288 {offsets = [0, 96], sizes = [2, 32], strides = [1, 1]} : vector<2x128xf32> to vector<2x32xf32>
    %301 = math.tanh %300 : vector<2x32xf32>
    %302 = arith.mulf %298, %244 : vector<2x32xf32>
    %303 = arith.mulf %297, %301 : vector<2x32xf32>
    %304 = arith.addf %302, %303 : vector<2x32xf32>
    %305 = math.tanh %304 : vector<2x32xf32>
    %306 = arith.mulf %299, %305 : vector<2x32xf32>
    %307 = vector.shape_cast %285 : vector<2x1xi1> to vector<2x1xi1>
    %308 = vector.broadcast %307 : vector<2x1xi1> to vector<2x32xi1>
    %309 = arith.select %308, %306, %241 : vector<2x32xi1>, vector<2x32xf32>
    %310 = vector.shape_cast %285 : vector<2x1xi1> to vector<2x1xi1>
    %311 = vector.broadcast %310 : vector<2x1xi1> to vector<2x32xi1>
    %312 = arith.select %311, %304, %244 : vector<2x32xi1>, vector<2x32xf32>
    %cst_67 = arith.constant 0.000000e+00 : f32
    %313 = vector.shape_cast %285 : vector<2x1xi1> to vector<2x1xi1>
    %314 = vector.broadcast %313 : vector<2x1xi1> to vector<2x32xi1>
    %315 = vector.broadcast %cst_67 : f32 to vector<2x32xf32>
    %316 = arith.select %314, %306, %315 : vector<2x32xi1>, vector<2x32xf32>
    %c8_68 = arith.constant 8 : index
    %c0_69 = arith.constant 0 : index
    %317 = vector.load %arg23[%c8_68, %c0_69] : memref<16x32xf32, #tpu.memory_space<vmem>>, vector<2x32xf32>
    tpu.vector_store %arg23[%c8_68, %c0_69], %316 {strides = array<i32>} : memref<16x32xf32, #tpu.memory_space<vmem>>, vector<2x32xf32>,
    %c3_i32_70 = arith.constant 3 : i32
    %318 = vector.broadcast %c3_i32_70 : i32 to vector<2x1xi32>
    %319 = arith.cmpi sgt, %1, %318 : vector<2x1xi32>
    %320 = vector.extract_strided_slice %9 {offsets = [6, 128], sizes = [2, 128], strides = [1, 1]} : vector<16x256xf32> to vector<2x128xf32>
    %cst_71 = arith.constant dense<0.000000e+00> : vector<2x128xf32>
    %321 = tpu.matmul %275, %11, %cst_71 {dimension_numbers = #tpu.dot_dimension_numbers<[1], [0], [0], [1], [0, 0, 1, 1], [], []>} : vector<2x32xf32>, vector<32x128xf32>, vector<2x128xf32> -> vector<2x128xf32>
    %322 = arith.addf %320, %321 : vector<2x128xf32>
    %323 = vector.extract_strided_slice %322 {offsets = [0, 0], sizes = [2, 96], strides = [1, 1]} : vector<2x128xf32> to vector<2x96xf32>
    %cst_72 = arith.constant 0.000000e+00 : f32
    %324 = vector.broadcast %cst_72 : f32 to vector<2x96xf32>
    %325 = arith.subf %324, %323 : vector<2x96xf32>
    %326 = math.exp %325 : vector<2x96xf32>
    %cst_73 = arith.constant 1.000000e+00 : f32
    %327 = vector.broadcast %cst_73 : f32 to vector<2x96xf32>
    %328 = arith.addf %327, %326 : vector<2x96xf32>
    %cst_74 = arith.constant 1.000000e+00 : f32
    %329 = vector.broadcast %cst_74 : f32 to vector<2x96xf32>
    %330 = arith.divf %329, %328 : vector<2x96xf32>
    %331 = vector.extract_strided_slice %330 {offsets = [0, 0], sizes = [2, 32], strides = [1, 1]} : vector<2x96xf32> to vector<2x32xf32>
    %332 = vector.extract_strided_slice %330 {offsets = [0, 32], sizes = [2, 32], strides = [1, 1]} : vector<2x96xf32> to vector<2x32xf32>
    %333 = vector.extract_strided_slice %330 {offsets = [0, 64], sizes = [2, 32], strides = [1, 1]} : vector<2x96xf32> to vector<2x32xf32>
    %334 = vector.extract_strided_slice %322 {offsets = [0, 96], sizes = [2, 32], strides = [1, 1]} : vector<2x128xf32> to vector<2x32xf32>
    %335 = math.tanh %334 : vector<2x32xf32>
    %336 = arith.mulf %332, %278 : vector<2x32xf32>
    %337 = arith.mulf %331, %335 : vector<2x32xf32>
    %338 = arith.addf %336, %337 : vector<2x32xf32>
    %339 = math.tanh %338 : vector<2x32xf32>
    %340 = arith.mulf %333, %339 : vector<2x32xf32>
    %341 = vector.shape_cast %319 : vector<2x1xi1> to vector<2x1xi1>
    %342 = vector.broadcast %341 : vector<2x1xi1> to vector<2x32xi1>
    %343 = arith.select %342, %340, %275 : vector<2x32xi1>, vector<2x32xf32>
    %344 = vector.shape_cast %319 : vector<2x1xi1> to vector<2x1xi1>
    %345 = vector.broadcast %344 : vector<2x1xi1> to vector<2x32xi1>
    %346 = arith.select %345, %338, %278 : vector<2x32xi1>, vector<2x32xf32>
    %cst_75 = arith.constant 0.000000e+00 : f32
    %347 = vector.shape_cast %319 : vector<2x1xi1> to vector<2x1xi1>
    %348 = vector.broadcast %347 : vector<2x1xi1> to vector<2x32xi1>
    %349 = vector.broadcast %cst_75 : f32 to vector<2x32xf32>
    %350 = arith.select %348, %340, %349 : vector<2x32xi1>, vector<2x32xf32>
    %c6_76 = arith.constant 6 : index
    %c0_77 = arith.constant 0 : index
    %351 = vector.load %arg24[%c6_76, %c0_77] : memref<16x32xf32, #tpu.memory_space<vmem>>, vector<2x32xf32>
    tpu.vector_store %arg24[%c6_76, %c0_77], %350 {strides = array<i32>} : memref<16x32xf32, #tpu.memory_space<vmem>>, vector<2x32xf32>,
    %c5_i32_78 = arith.constant 5 : i32
    %352 = vector.broadcast %c5_i32_78 : i32 to vector<2x1xi32>
    %353 = arith.cmpi sgt, %1, %352 : vector<2x1xi32>
    %354 = vector.extract_strided_slice %9 {offsets = [10, 0], sizes = [2, 128], strides = [1, 1]} : vector<16x256xf32> to vector<2x128xf32>
    %cst_79 = arith.constant dense<0.000000e+00> : vector<2x128xf32>
    %355 = tpu.matmul %309, %10, %cst_79 {dimension_numbers = #tpu.dot_dimension_numbers<[1], [0], [0], [1], [0, 0, 1, 1], [], []>} : vector<2x32xf32>, vector<32x128xf32>, vector<2x128xf32> -> vector<2x128xf32>
    %356 = arith.addf %354, %355 : vector<2x128xf32>
    %357 = vector.extract_strided_slice %356 {offsets = [0, 0], sizes = [2, 96], strides = [1, 1]} : vector<2x128xf32> to vector<2x96xf32>
    %cst_80 = arith.constant 0.000000e+00 : f32
    %358 = vector.broadcast %cst_80 : f32 to vector<2x96xf32>
    %359 = arith.subf %358, %357 : vector<2x96xf32>
    %360 = math.exp %359 : vector<2x96xf32>
    %cst_81 = arith.constant 1.000000e+00 : f32
    %361 = vector.broadcast %cst_81 : f32 to vector<2x96xf32>
    %362 = arith.addf %361, %360 : vector<2x96xf32>
    %cst_82 = arith.constant 1.000000e+00 : f32
    %363 = vector.broadcast %cst_82 : f32 to vector<2x96xf32>
    %364 = arith.divf %363, %362 : vector<2x96xf32>
    %365 = vector.extract_strided_slice %364 {offsets = [0, 0], sizes = [2, 32], strides = [1, 1]} : vector<2x96xf32> to vector<2x32xf32>
    %366 = vector.extract_strided_slice %364 {offsets = [0, 32], sizes = [2, 32], strides = [1, 1]} : vector<2x96xf32> to vector<2x32xf32>
    %367 = vector.extract_strided_slice %364 {offsets = [0, 64], sizes = [2, 32], strides = [1, 1]} : vector<2x96xf32> to vector<2x32xf32>
    %368 = vector.extract_strided_slice %356 {offsets = [0, 96], sizes = [2, 32], strides = [1, 1]} : vector<2x128xf32> to vector<2x32xf32>
    %369 = math.tanh %368 : vector<2x32xf32>
    %370 = arith.mulf %366, %312 : vector<2x32xf32>
    %371 = arith.mulf %365, %369 : vector<2x32xf32>
    %372 = arith.addf %370, %371 : vector<2x32xf32>
    %373 = math.tanh %372 : vector<2x32xf32>
    %374 = arith.mulf %367, %373 : vector<2x32xf32>
    %375 = vector.shape_cast %353 : vector<2x1xi1> to vector<2x1xi1>
    %376 = vector.broadcast %375 : vector<2x1xi1> to vector<2x32xi1>
    %377 = arith.select %376, %374, %309 : vector<2x32xi1>, vector<2x32xf32>
    %378 = vector.shape_cast %353 : vector<2x1xi1> to vector<2x1xi1>
    %379 = vector.broadcast %378 : vector<2x1xi1> to vector<2x32xi1>
    %380 = arith.select %379, %372, %312 : vector<2x32xi1>, vector<2x32xf32>
    %cst_83 = arith.constant 0.000000e+00 : f32
    %381 = vector.shape_cast %353 : vector<2x1xi1> to vector<2x1xi1>
    %382 = vector.broadcast %381 : vector<2x1xi1> to vector<2x32xi1>
    %383 = vector.broadcast %cst_83 : f32 to vector<2x32xf32>
    %384 = arith.select %382, %374, %383 : vector<2x32xi1>, vector<2x32xf32>
    %c10_84 = arith.constant 10 : index
    %c0_85 = arith.constant 0 : index
    %385 = vector.load %arg23[%c10_84, %c0_85] : memref<16x32xf32, #tpu.memory_space<vmem>>, vector<2x32xf32>
    tpu.vector_store %arg23[%c10_84, %c0_85], %384 {strides = array<i32>} : memref<16x32xf32, #tpu.memory_space<vmem>>, vector<2x32xf32>,
    %c2_i32_86 = arith.constant 2 : i32
    %386 = vector.broadcast %c2_i32_86 : i32 to vector<2x1xi32>
    %387 = arith.cmpi sgt, %1, %386 : vector<2x1xi32>
    %388 = vector.extract_strided_slice %9 {offsets = [4, 128], sizes = [2, 128], strides = [1, 1]} : vector<16x256xf32> to vector<2x128xf32>
    %cst_87 = arith.constant dense<0.000000e+00> : vector<2x128xf32>
    %389 = tpu.matmul %343, %11, %cst_87 {dimension_numbers = #tpu.dot_dimension_numbers<[1], [0], [0], [1], [0, 0, 1, 1], [], []>} : vector<2x32xf32>, vector<32x128xf32>, vector<2x128xf32> -> vector<2x128xf32>
    %390 = arith.addf %388, %389 : vector<2x128xf32>
    %391 = vector.extract_strided_slice %390 {offsets = [0, 0], sizes = [2, 96], strides = [1, 1]} : vector<2x128xf32> to vector<2x96xf32>
    %cst_88 = arith.constant 0.000000e+00 : f32
    %392 = vector.broadcast %cst_88 : f32 to vector<2x96xf32>
    %393 = arith.subf %392, %391 : vector<2x96xf32>
    %394 = math.exp %393 : vector<2x96xf32>
    %cst_89 = arith.constant 1.000000e+00 : f32
    %395 = vector.broadcast %cst_89 : f32 to vector<2x96xf32>
    %396 = arith.addf %395, %394 : vector<2x96xf32>
    %cst_90 = arith.constant 1.000000e+00 : f32
    %397 = vector.broadcast %cst_90 : f32 to vector<2x96xf32>
    %398 = arith.divf %397, %396 : vector<2x96xf32>
    %399 = vector.extract_strided_slice %398 {offsets = [0, 0], sizes = [2, 32], strides = [1, 1]} : vector<2x96xf32> to vector<2x32xf32>
    %400 = vector.extract_strided_slice %398 {offsets = [0, 32], sizes = [2, 32], strides = [1, 1]} : vector<2x96xf32> to vector<2x32xf32>
    %401 = vector.extract_strided_slice %398 {offsets = [0, 64], sizes = [2, 32], strides = [1, 1]} : vector<2x96xf32> to vector<2x32xf32>
    %402 = vector.extract_strided_slice %390 {offsets = [0, 96], sizes = [2, 32], strides = [1, 1]} : vector<2x128xf32> to vector<2x32xf32>
    %403 = math.tanh %402 : vector<2x32xf32>
    %404 = arith.mulf %400, %346 : vector<2x32xf32>
    %405 = arith.mulf %399, %403 : vector<2x32xf32>
    %406 = arith.addf %404, %405 : vector<2x32xf32>
    %407 = math.tanh %406 : vector<2x32xf32>
    %408 = arith.mulf %401, %407 : vector<2x32xf32>
    %409 = vector.shape_cast %387 : vector<2x1xi1> to vector<2x1xi1>
    %410 = vector.broadcast %409 : vector<2x1xi1> to vector<2x32xi1>
    %411 = arith.select %410, %408, %343 : vector<2x32xi1>, vector<2x32xf32>
    %412 = vector.shape_cast %387 : vector<2x1xi1> to vector<2x1xi1>
    %413 = vector.broadcast %412 : vector<2x1xi1> to vector<2x32xi1>
    %414 = arith.select %413, %406, %346 : vector<2x32xi1>, vector<2x32xf32>
    %cst_91 = arith.constant 0.000000e+00 : f32
    %415 = vector.shape_cast %387 : vector<2x1xi1> to vector<2x1xi1>
    %416 = vector.broadcast %415 : vector<2x1xi1> to vector<2x32xi1>
    %417 = vector.broadcast %cst_91 : f32 to vector<2x32xf32>
    %418 = arith.select %416, %408, %417 : vector<2x32xi1>, vector<2x32xf32>
    %c4_92 = arith.constant 4 : index
    %c0_93 = arith.constant 0 : index
    %419 = vector.load %arg24[%c4_92, %c0_93] : memref<16x32xf32, #tpu.memory_space<vmem>>, vector<2x32xf32>
    tpu.vector_store %arg24[%c4_92, %c0_93], %418 {strides = array<i32>} : memref<16x32xf32, #tpu.memory_space<vmem>>, vector<2x32xf32>,
    %c6_i32_94 = arith.constant 6 : i32
    %420 = vector.broadcast %c6_i32_94 : i32 to vector<2x1xi32>
    %421 = arith.cmpi sgt, %1, %420 : vector<2x1xi32>
    %422 = vector.extract_strided_slice %9 {offsets = [12, 0], sizes = [2, 128], strides = [1, 1]} : vector<16x256xf32> to vector<2x128xf32>
    %cst_95 = arith.constant dense<0.000000e+00> : vector<2x128xf32>
    %423 = tpu.matmul %377, %10, %cst_95 {dimension_numbers = #tpu.dot_dimension_numbers<[1], [0], [0], [1], [0, 0, 1, 1], [], []>} : vector<2x32xf32>, vector<32x128xf32>, vector<2x128xf32> -> vector<2x128xf32>
    %424 = arith.addf %422, %423 : vector<2x128xf32>
    %425 = vector.extract_strided_slice %424 {offsets = [0, 0], sizes = [2, 96], strides = [1, 1]} : vector<2x128xf32> to vector<2x96xf32>
    %cst_96 = arith.constant 0.000000e+00 : f32
    %426 = vector.broadcast %cst_96 : f32 to vector<2x96xf32>
    %427 = arith.subf %426, %425 : vector<2x96xf32>
    %428 = math.exp %427 : vector<2x96xf32>
    %cst_97 = arith.constant 1.000000e+00 : f32
    %429 = vector.broadcast %cst_97 : f32 to vector<2x96xf32>
    %430 = arith.addf %429, %428 : vector<2x96xf32>
    %cst_98 = arith.constant 1.000000e+00 : f32
    %431 = vector.broadcast %cst_98 : f32 to vector<2x96xf32>
    %432 = arith.divf %431, %430 : vector<2x96xf32>
    %433 = vector.extract_strided_slice %432 {offsets = [0, 0], sizes = [2, 32], strides = [1, 1]} : vector<2x96xf32> to vector<2x32xf32>
    %434 = vector.extract_strided_slice %432 {offsets = [0, 32], sizes = [2, 32], strides = [1, 1]} : vector<2x96xf32> to vector<2x32xf32>
    %435 = vector.extract_strided_slice %432 {offsets = [0, 64], sizes = [2, 32], strides = [1, 1]} : vector<2x96xf32> to vector<2x32xf32>
    %436 = vector.extract_strided_slice %424 {offsets = [0, 96], sizes = [2, 32], strides = [1, 1]} : vector<2x128xf32> to vector<2x32xf32>
    %437 = math.tanh %436 : vector<2x32xf32>
    %438 = arith.mulf %434, %380 : vector<2x32xf32>
    %439 = arith.mulf %433, %437 : vector<2x32xf32>
    %440 = arith.addf %438, %439 : vector<2x32xf32>
    %441 = math.tanh %440 : vector<2x32xf32>
    %442 = arith.mulf %435, %441 : vector<2x32xf32>
    %443 = vector.shape_cast %421 : vector<2x1xi1> to vector<2x1xi1>
    %444 = vector.broadcast %443 : vector<2x1xi1> to vector<2x32xi1>
    %445 = arith.select %444, %442, %377 : vector<2x32xi1>, vector<2x32xf32>
    %446 = vector.shape_cast %421 : vector<2x1xi1> to vector<2x1xi1>
    %447 = vector.broadcast %446 : vector<2x1xi1> to vector<2x32xi1>
    %448 = arith.select %447, %440, %380 : vector<2x32xi1>, vector<2x32xf32>
    %cst_99 = arith.constant 0.000000e+00 : f32
    %449 = vector.shape_cast %421 : vector<2x1xi1> to vector<2x1xi1>
    %450 = vector.broadcast %449 : vector<2x1xi1> to vector<2x32xi1>
    %451 = vector.broadcast %cst_99 : f32 to vector<2x32xf32>
    %452 = arith.select %450, %442, %451 : vector<2x32xi1>, vector<2x32xf32>
    %c12_100 = arith.constant 12 : index
    %c0_101 = arith.constant 0 : index
    %453 = vector.load %arg23[%c12_100, %c0_101] : memref<16x32xf32, #tpu.memory_space<vmem>>, vector<2x32xf32>
    tpu.vector_store %arg23[%c12_100, %c0_101], %452 {strides = array<i32>} : memref<16x32xf32, #tpu.memory_space<vmem>>, vector<2x32xf32>,
    %c1_i32_102 = arith.constant 1 : i32
    %454 = vector.broadcast %c1_i32_102 : i32 to vector<2x1xi32>
    %455 = arith.cmpi sgt, %1, %454 : vector<2x1xi32>
    %456 = vector.extract_strided_slice %9 {offsets = [2, 128], sizes = [2, 128], strides = [1, 1]} : vector<16x256xf32> to vector<2x128xf32>
    %cst_103 = arith.constant dense<0.000000e+00> : vector<2x128xf32>
    %457 = tpu.matmul %411, %11, %cst_103 {dimension_numbers = #tpu.dot_dimension_numbers<[1], [0], [0], [1], [0, 0, 1, 1], [], []>} : vector<2x32xf32>, vector<32x128xf32>, vector<2x128xf32> -> vector<2x128xf32>
    %458 = arith.addf %456, %457 : vector<2x128xf32>
    %459 = vector.extract_strided_slice %458 {offsets = [0, 0], sizes = [2, 96], strides = [1, 1]} : vector<2x128xf32> to vector<2x96xf32>
    %cst_104 = arith.constant 0.000000e+00 : f32
    %460 = vector.broadcast %cst_104 : f32 to vector<2x96xf32>
    %461 = arith.subf %460, %459 : vector<2x96xf32>
    %462 = math.exp %461 : vector<2x96xf32>
    %cst_105 = arith.constant 1.000000e+00 : f32
    %463 = vector.broadcast %cst_105 : f32 to vector<2x96xf32>
    %464 = arith.addf %463, %462 : vector<2x96xf32>
    %cst_106 = arith.constant 1.000000e+00 : f32
    %465 = vector.broadcast %cst_106 : f32 to vector<2x96xf32>
    %466 = arith.divf %465, %464 : vector<2x96xf32>
    %467 = vector.extract_strided_slice %466 {offsets = [0, 0], sizes = [2, 32], strides = [1, 1]} : vector<2x96xf32> to vector<2x32xf32>
    %468 = vector.extract_strided_slice %466 {offsets = [0, 32], sizes = [2, 32], strides = [1, 1]} : vector<2x96xf32> to vector<2x32xf32>
    %469 = vector.extract_strided_slice %466 {offsets = [0, 64], sizes = [2, 32], strides = [1, 1]} : vector<2x96xf32> to vector<2x32xf32>
    %470 = vector.extract_strided_slice %458 {offsets = [0, 96], sizes = [2, 32], strides = [1, 1]} : vector<2x128xf32> to vector<2x32xf32>
    %471 = math.tanh %470 : vector<2x32xf32>
    %472 = arith.mulf %468, %414 : vector<2x32xf32>
    %473 = arith.mulf %467, %471 : vector<2x32xf32>
    %474 = arith.addf %472, %473 : vector<2x32xf32>
    %475 = math.tanh %474 : vector<2x32xf32>
    %476 = arith.mulf %469, %475 : vector<2x32xf32>
    %477 = vector.shape_cast %455 : vector<2x1xi1> to vector<2x1xi1>
    %478 = vector.broadcast %477 : vector<2x1xi1> to vector<2x32xi1>
    %479 = arith.select %478, %476, %411 : vector<2x32xi1>, vector<2x32xf32>
    %480 = vector.shape_cast %455 : vector<2x1xi1> to vector<2x1xi1>
    %481 = vector.broadcast %480 : vector<2x1xi1> to vector<2x32xi1>
    %482 = arith.select %481, %474, %414 : vector<2x32xi1>, vector<2x32xf32>
    %cst_107 = arith.constant 0.000000e+00 : f32
    %483 = vector.shape_cast %455 : vector<2x1xi1> to vector<2x1xi1>
    %484 = vector.broadcast %483 : vector<2x1xi1> to vector<2x32xi1>
    %485 = vector.broadcast %cst_107 : f32 to vector<2x32xf32>
    %486 = arith.select %484, %476, %485 : vector<2x32xi1>, vector<2x32xf32>
    %c2_108 = arith.constant 2 : index
    %c0_109 = arith.constant 0 : index
    %487 = vector.load %arg24[%c2_108, %c0_109] : memref<16x32xf32, #tpu.memory_space<vmem>>, vector<2x32xf32>
    tpu.vector_store %arg24[%c2_108, %c0_109], %486 {strides = array<i32>} : memref<16x32xf32, #tpu.memory_space<vmem>>, vector<2x32xf32>,
    %c7_i32_110 = arith.constant 7 : i32
    %488 = vector.broadcast %c7_i32_110 : i32 to vector<2x1xi32>
    %489 = arith.cmpi sgt, %1, %488 : vector<2x1xi32>
    %490 = vector.extract_strided_slice %9 {offsets = [14, 0], sizes = [2, 128], strides = [1, 1]} : vector<16x256xf32> to vector<2x128xf32>
    %cst_111 = arith.constant dense<0.000000e+00> : vector<2x128xf32>
    %491 = tpu.matmul %445, %10, %cst_111 {dimension_numbers = #tpu.dot_dimension_numbers<[1], [0], [0], [1], [0, 0, 1, 1], [], []>} : vector<2x32xf32>, vector<32x128xf32>, vector<2x128xf32> -> vector<2x128xf32>
    %492 = arith.addf %490, %491 : vector<2x128xf32>
    %493 = vector.extract_strided_slice %492 {offsets = [0, 0], sizes = [2, 96], strides = [1, 1]} : vector<2x128xf32> to vector<2x96xf32>
    %cst_112 = arith.constant 0.000000e+00 : f32
    %494 = vector.broadcast %cst_112 : f32 to vector<2x96xf32>
    %495 = arith.subf %494, %493 : vector<2x96xf32>
    %496 = math.exp %495 : vector<2x96xf32>
    %cst_113 = arith.constant 1.000000e+00 : f32
    %497 = vector.broadcast %cst_113 : f32 to vector<2x96xf32>
    %498 = arith.addf %497, %496 : vector<2x96xf32>
    %cst_114 = arith.constant 1.000000e+00 : f32
    %499 = vector.broadcast %cst_114 : f32 to vector<2x96xf32>
    %500 = arith.divf %499, %498 : vector<2x96xf32>
    %501 = vector.extract_strided_slice %500 {offsets = [0, 0], sizes = [2, 32], strides = [1, 1]} : vector<2x96xf32> to vector<2x32xf32>
    %502 = vector.extract_strided_slice %500 {offsets = [0, 32], sizes = [2, 32], strides = [1, 1]} : vector<2x96xf32> to vector<2x32xf32>
    %503 = vector.extract_strided_slice %500 {offsets = [0, 64], sizes = [2, 32], strides = [1, 1]} : vector<2x96xf32> to vector<2x32xf32>
    %504 = vector.extract_strided_slice %492 {offsets = [0, 96], sizes = [2, 32], strides = [1, 1]} : vector<2x128xf32> to vector<2x32xf32>
    %505 = math.tanh %504 : vector<2x32xf32>
    %506 = arith.mulf %502, %448 : vector<2x32xf32>
    %507 = arith.mulf %501, %505 : vector<2x32xf32>
    %508 = arith.addf %506, %507 : vector<2x32xf32>
    %509 = math.tanh %508 : vector<2x32xf32>
    %510 = arith.mulf %503, %509 : vector<2x32xf32>
    %cst_115 = arith.constant 0.000000e+00 : f32
    %511 = vector.shape_cast %489 : vector<2x1xi1> to vector<2x1xi1>
    %512 = vector.broadcast %511 : vector<2x1xi1> to vector<2x32xi1>
    %513 = vector.broadcast %cst_115 : f32 to vector<2x32xf32>
    %514 = arith.select %512, %510, %513 : vector<2x32xi1>, vector<2x32xf32>
    %c14_116 = arith.constant 14 : index
    %c0_117 = arith.constant 0 : index
    %515 = vector.load %arg23[%c14_116, %c0_117] : memref<16x32xf32, #tpu.memory_space<vmem>>, vector<2x32xf32>
    tpu.vector_store %arg23[%c14_116, %c0_117], %514 {strides = array<i32>} : memref<16x32xf32, #tpu.memory_space<vmem>>, vector<2x32xf32>,
    %c0_i32_118 = arith.constant 0 : i32
    %516 = vector.broadcast %c0_i32_118 : i32 to vector<2x1xi32>
    %517 = arith.cmpi sgt, %1, %516 : vector<2x1xi32>
    %518 = vector.extract_strided_slice %9 {offsets = [0, 128], sizes = [2, 128], strides = [1, 1]} : vector<16x256xf32> to vector<2x128xf32>
    %cst_119 = arith.constant dense<0.000000e+00> : vector<2x128xf32>
    %519 = tpu.matmul %479, %11, %cst_119 {dimension_numbers = #tpu.dot_dimension_numbers<[1], [0], [0], [1], [0, 0, 1, 1], [], []>} : vector<2x32xf32>, vector<32x128xf32>, vector<2x128xf32> -> vector<2x128xf32>
    %520 = arith.addf %518, %519 : vector<2x128xf32>
    %521 = vector.extract_strided_slice %520 {offsets = [0, 0], sizes = [2, 96], strides = [1, 1]} : vector<2x128xf32> to vector<2x96xf32>
    %cst_120 = arith.constant 0.000000e+00 : f32
    %522 = vector.broadcast %cst_120 : f32 to vector<2x96xf32>
    %523 = arith.subf %522, %521 : vector<2x96xf32>
    %524 = math.exp %523 : vector<2x96xf32>
    %cst_121 = arith.constant 1.000000e+00 : f32
    %525 = vector.broadcast %cst_121 : f32 to vector<2x96xf32>
    %526 = arith.addf %525, %524 : vector<2x96xf32>
    %cst_122 = arith.constant 1.000000e+00 : f32
    %527 = vector.broadcast %cst_122 : f32 to vector<2x96xf32>
    %528 = arith.divf %527, %526 : vector<2x96xf32>
    %529 = vector.extract_strided_slice %528 {offsets = [0, 0], sizes = [2, 32], strides = [1, 1]} : vector<2x96xf32> to vector<2x32xf32>
    %530 = vector.extract_strided_slice %528 {offsets = [0, 32], sizes = [2, 32], strides = [1, 1]} : vector<2x96xf32> to vector<2x32xf32>
    %531 = vector.extract_strided_slice %528 {offsets = [0, 64], sizes = [2, 32], strides = [1, 1]} : vector<2x96xf32> to vector<2x32xf32>
    %532 = vector.extract_strided_slice %520 {offsets = [0, 96], sizes = [2, 32], strides = [1, 1]} : vector<2x128xf32> to vector<2x32xf32>
    %533 = math.tanh %532 : vector<2x32xf32>
    %534 = arith.mulf %530, %482 : vector<2x32xf32>
    %535 = arith.mulf %529, %533 : vector<2x32xf32>
    %536 = arith.addf %534, %535 : vector<2x32xf32>
    %537 = math.tanh %536 : vector<2x32xf32>
    %538 = arith.mulf %531, %537 : vector<2x32xf32>
    %cst_123 = arith.constant 0.000000e+00 : f32
    %539 = vector.shape_cast %517 : vector<2x1xi1> to vector<2x1xi1>
    %540 = vector.broadcast %539 : vector<2x1xi1> to vector<2x32xi1>
    %541 = vector.broadcast %cst_123 : f32 to vector<2x32xf32>
    %542 = arith.select %540, %538, %541 : vector<2x32xi1>, vector<2x32xf32>
    %c0_124 = arith.constant 0 : index
    %c0_125 = arith.constant 0 : index
    %543 = vector.load %arg24[%c0_124, %c0_125] : memref<16x32xf32, #tpu.memory_space<vmem>>, vector<2x32xf32>
    tpu.vector_store %arg24[%c0_124, %c0_125], %542 {strides = array<i32>} : memref<16x32xf32, #tpu.memory_space<vmem>>, vector<2x32xf32>,
    %c0_126 = arith.constant 0 : index
    %c0_127 = arith.constant 0 : index
    %544 = vector.load %arg23[%c0_126, %c0_127] : memref<16x32xf32, #tpu.memory_space<vmem>>, vector<16x32xf32>
    %c0_128 = arith.constant 0 : index
    %c0_129 = arith.constant 0 : index
    %545 = vector.load %arg24[%c0_128, %c0_129] : memref<16x32xf32, #tpu.memory_space<vmem>>, vector<16x32xf32>
    %c0_130 = arith.constant 0 : index
    %c0_131 = arith.constant 0 : index
    %546 = vector.load %arg13[%c0_130, %c0_131] : memref<32x256xf32, #tpu.memory_space<vmem>>, vector<32x256xf32>
    %cst_132 = arith.constant dense<0.000000e+00> : vector<16x256xf32>
    %547 = tpu.matmul %544, %546, %cst_132 {dimension_numbers = #tpu.dot_dimension_numbers<[1], [0], [0], [1], [0, 0, 1, 1], [], []>} : vector<16x32xf32>, vector<32x256xf32>, vector<16x256xf32> -> vector<16x256xf32>
    %c0_133 = arith.constant 0 : index
    %c0_134 = arith.constant 0 : index
    %548 = vector.load %arg14[%c0_133, %c0_134] : memref<32x256xf32, #tpu.memory_space<vmem>>, vector<32x256xf32>
    %cst_135 = arith.constant dense<0.000000e+00> : vector<16x256xf32>
    %549 = tpu.matmul %545, %548, %cst_135 {dimension_numbers = #tpu.dot_dimension_numbers<[1], [0], [0], [1], [0, 0, 1, 1], [], []>} : vector<16x32xf32>, vector<32x256xf32>, vector<16x256xf32> -> vector<16x256xf32>
    %550 = arith.addf %547, %549 : vector<16x256xf32>
    %c0_136 = arith.constant 0 : index
    %c0_137 = arith.constant 0 : index
    %551 = vector.load %arg17[%c0_136, %c0_137] : memref<1x256xf32, #tpu.memory_space<vmem>>, vector<1x256xf32>
    %552 = vector.broadcast %551 : vector<1x256xf32> to vector<16x256xf32>
    %553 = arith.addf %550, %552 : vector<16x256xf32>
    %c0_138 = arith.constant 0 : index
    %c0_139 = arith.constant 0 : index
    %554 = vector.load %arg15[%c0_138, %c0_139] : memref<32x128xf32, #tpu.memory_space<vmem>>, vector<32x128xf32>
    %c0_140 = arith.constant 0 : index
    %c0_141 = arith.constant 0 : index
    %555 = vector.load %arg16[%c0_140, %c0_141] : memref<32x128xf32, #tpu.memory_space<vmem>>, vector<32x128xf32>
    %c0_i32_142 = arith.constant 0 : i32
    %556 = vector.broadcast %c0_i32_142 : i32 to vector<2x1xi32>
    %557 = arith.cmpi sgt, %1, %556 : vector<2x1xi32>
    %558 = vector.extract_strided_slice %553 {offsets = [0, 0], sizes = [2, 128], strides = [1, 1]} : vector<16x256xf32> to vector<2x128xf32>
    %cst_143 = arith.constant dense<0.000000e+00> : vector<2x128xf32>
    %559 = tpu.matmul %4, %554, %cst_143 {dimension_numbers = #tpu.dot_dimension_numbers<[1], [0], [0], [1], [0, 0, 1, 1], [], []>} : vector<2x32xf32>, vector<32x128xf32>, vector<2x128xf32> -> vector<2x128xf32>
    %560 = arith.addf %558, %559 : vector<2x128xf32>
    %561 = vector.extract_strided_slice %560 {offsets = [0, 0], sizes = [2, 96], strides = [1, 1]} : vector<2x128xf32> to vector<2x96xf32>
    %cst_144 = arith.constant 0.000000e+00 : f32
    %562 = vector.broadcast %cst_144 : f32 to vector<2x96xf32>
    %563 = arith.subf %562, %561 : vector<2x96xf32>
    %564 = math.exp %563 : vector<2x96xf32>
    %cst_145 = arith.constant 1.000000e+00 : f32
    %565 = vector.broadcast %cst_145 : f32 to vector<2x96xf32>
    %566 = arith.addf %565, %564 : vector<2x96xf32>
    %cst_146 = arith.constant 1.000000e+00 : f32
    %567 = vector.broadcast %cst_146 : f32 to vector<2x96xf32>
    %568 = arith.divf %567, %566 : vector<2x96xf32>
    %569 = vector.extract_strided_slice %568 {offsets = [0, 0], sizes = [2, 32], strides = [1, 1]} : vector<2x96xf32> to vector<2x32xf32>
    %570 = vector.extract_strided_slice %568 {offsets = [0, 32], sizes = [2, 32], strides = [1, 1]} : vector<2x96xf32> to vector<2x32xf32>
    %571 = vector.extract_strided_slice %568 {offsets = [0, 64], sizes = [2, 32], strides = [1, 1]} : vector<2x96xf32> to vector<2x32xf32>
    %572 = vector.extract_strided_slice %560 {offsets = [0, 96], sizes = [2, 32], strides = [1, 1]} : vector<2x128xf32> to vector<2x32xf32>
    %573 = math.tanh %572 : vector<2x32xf32>
    %574 = arith.mulf %570, %4 : vector<2x32xf32>
    %575 = arith.mulf %569, %573 : vector<2x32xf32>
    %576 = arith.addf %574, %575 : vector<2x32xf32>
    %577 = math.tanh %576 : vector<2x32xf32>
    %578 = arith.mulf %571, %577 : vector<2x32xf32>
    %579 = vector.shape_cast %557 : vector<2x1xi1> to vector<2x1xi1>
    %580 = vector.broadcast %579 : vector<2x1xi1> to vector<2x32xi1>
    %581 = arith.select %580, %578, %4 : vector<2x32xi1>, vector<2x32xf32>
    %582 = vector.shape_cast %557 : vector<2x1xi1> to vector<2x1xi1>
    %583 = vector.broadcast %582 : vector<2x1xi1> to vector<2x32xi1>
    %584 = arith.select %583, %576, %4 : vector<2x32xi1>, vector<2x32xf32>
    %cst_147 = arith.constant 0.000000e+00 : f32
    %585 = vector.shape_cast %557 : vector<2x1xi1> to vector<2x1xi1>
    %586 = vector.broadcast %585 : vector<2x1xi1> to vector<2x32xi1>
    %587 = vector.broadcast %cst_147 : f32 to vector<2x32xf32>
    %588 = arith.select %586, %578, %587 : vector<2x32xi1>, vector<2x32xf32>
    %c0_148 = arith.constant 0 : index
    %c0_149 = arith.constant 0 : index
    %589 = vector.load %arg25[%c0_148, %c0_149] : memref<16x32xf32, #tpu.memory_space<vmem>>, vector<2x32xf32>
    tpu.vector_store %arg25[%c0_148, %c0_149], %588 {strides = array<i32>} : memref<16x32xf32, #tpu.memory_space<vmem>>, vector<2x32xf32>,
    %c7_i32_150 = arith.constant 7 : i32
    %590 = vector.broadcast %c7_i32_150 : i32 to vector<2x1xi32>
    %591 = arith.cmpi sgt, %1, %590 : vector<2x1xi32>
    %592 = vector.extract_strided_slice %553 {offsets = [14, 128], sizes = [2, 128], strides = [1, 1]} : vector<16x256xf32> to vector<2x128xf32>
    %cst_151 = arith.constant dense<0.000000e+00> : vector<2x128xf32>
    %593 = tpu.matmul %4, %555, %cst_151 {dimension_numbers = #tpu.dot_dimension_numbers<[1], [0], [0], [1], [0, 0, 1, 1], [], []>} : vector<2x32xf32>, vector<32x128xf32>, vector<2x128xf32> -> vector<2x128xf32>
    %594 = arith.addf %592, %593 : vector<2x128xf32>
    %595 = vector.extract_strided_slice %594 {offsets = [0, 0], sizes = [2, 96], strides = [1, 1]} : vector<2x128xf32> to vector<2x96xf32>
    %cst_152 = arith.constant 0.000000e+00 : f32
    %596 = vector.broadcast %cst_152 : f32 to vector<2x96xf32>
    %597 = arith.subf %596, %595 : vector<2x96xf32>
    %598 = math.exp %597 : vector<2x96xf32>
    %cst_153 = arith.constant 1.000000e+00 : f32
    %599 = vector.broadcast %cst_153 : f32 to vector<2x96xf32>
    %600 = arith.addf %599, %598 : vector<2x96xf32>
    %cst_154 = arith.constant 1.000000e+00 : f32
    %601 = vector.broadcast %cst_154 : f32 to vector<2x96xf32>
    %602 = arith.divf %601, %600 : vector<2x96xf32>
    %603 = vector.extract_strided_slice %602 {offsets = [0, 0], sizes = [2, 32], strides = [1, 1]} : vector<2x96xf32> to vector<2x32xf32>
    %604 = vector.extract_strided_slice %602 {offsets = [0, 32], sizes = [2, 32], strides = [1, 1]} : vector<2x96xf32> to vector<2x32xf32>
    %605 = vector.extract_strided_slice %602 {offsets = [0, 64], sizes = [2, 32], strides = [1, 1]} : vector<2x96xf32> to vector<2x32xf32>
    %606 = vector.extract_strided_slice %594 {offsets = [0, 96], sizes = [2, 32], strides = [1, 1]} : vector<2x128xf32> to vector<2x32xf32>
    %607 = math.tanh %606 : vector<2x32xf32>
    %608 = arith.mulf %604, %4 : vector<2x32xf32>
    %609 = arith.mulf %603, %607 : vector<2x32xf32>
    %610 = arith.addf %608, %609 : vector<2x32xf32>
    %611 = math.tanh %610 : vector<2x32xf32>
    %612 = arith.mulf %605, %611 : vector<2x32xf32>
    %613 = vector.shape_cast %591 : vector<2x1xi1> to vector<2x1xi1>
    %614 = vector.broadcast %613 : vector<2x1xi1> to vector<2x32xi1>
    %615 = arith.select %614, %612, %4 : vector<2x32xi1>, vector<2x32xf32>
    %616 = vector.shape_cast %591 : vector<2x1xi1> to vector<2x1xi1>
    %617 = vector.broadcast %616 : vector<2x1xi1> to vector<2x32xi1>
    %618 = arith.select %617, %610, %4 : vector<2x32xi1>, vector<2x32xf32>
    %cst_155 = arith.constant 0.000000e+00 : f32
    %619 = vector.shape_cast %591 : vector<2x1xi1> to vector<2x1xi1>
    %620 = vector.broadcast %619 : vector<2x1xi1> to vector<2x32xi1>
    %621 = vector.broadcast %cst_155 : f32 to vector<2x32xf32>
    %622 = arith.select %620, %612, %621 : vector<2x32xi1>, vector<2x32xf32>
    %c14_156 = arith.constant 14 : index
    %c0_157 = arith.constant 0 : index
    %623 = vector.load %arg26[%c14_156, %c0_157] : memref<16x32xf32, #tpu.memory_space<vmem>>, vector<2x32xf32>
    tpu.vector_store %arg26[%c14_156, %c0_157], %622 {strides = array<i32>} : memref<16x32xf32, #tpu.memory_space<vmem>>, vector<2x32xf32>,
    %c1_i32_158 = arith.constant 1 : i32
    %624 = vector.broadcast %c1_i32_158 : i32 to vector<2x1xi32>
    %625 = arith.cmpi sgt, %1, %624 : vector<2x1xi32>
    %626 = vector.extract_strided_slice %553 {offsets = [2, 0], sizes = [2, 128], strides = [1, 1]} : vector<16x256xf32> to vector<2x128xf32>
    %cst_159 = arith.constant dense<0.000000e+00> : vector<2x128xf32>
    %627 = tpu.matmul %581, %554, %cst_159 {dimension_numbers = #tpu.dot_dimension_numbers<[1], [0], [0], [1], [0, 0, 1, 1], [], []>} : vector<2x32xf32>, vector<32x128xf32>, vector<2x128xf32> -> vector<2x128xf32>
    %628 = arith.addf %626, %627 : vector<2x128xf32>
    %629 = vector.extract_strided_slice %628 {offsets = [0, 0], sizes = [2, 96], strides = [1, 1]} : vector<2x128xf32> to vector<2x96xf32>
    %cst_160 = arith.constant 0.000000e+00 : f32
    %630 = vector.broadcast %cst_160 : f32 to vector<2x96xf32>
    %631 = arith.subf %630, %629 : vector<2x96xf32>
    %632 = math.exp %631 : vector<2x96xf32>
    %cst_161 = arith.constant 1.000000e+00 : f32
    %633 = vector.broadcast %cst_161 : f32 to vector<2x96xf32>
    %634 = arith.addf %633, %632 : vector<2x96xf32>
    %cst_162 = arith.constant 1.000000e+00 : f32
    %635 = vector.broadcast %cst_162 : f32 to vector<2x96xf32>
    %636 = arith.divf %635, %634 : vector<2x96xf32>
    %637 = vector.extract_strided_slice %636 {offsets = [0, 0], sizes = [2, 32], strides = [1, 1]} : vector<2x96xf32> to vector<2x32xf32>
    %638 = vector.extract_strided_slice %636 {offsets = [0, 32], sizes = [2, 32], strides = [1, 1]} : vector<2x96xf32> to vector<2x32xf32>
    %639 = vector.extract_strided_slice %636 {offsets = [0, 64], sizes = [2, 32], strides = [1, 1]} : vector<2x96xf32> to vector<2x32xf32>
    %640 = vector.extract_strided_slice %628 {offsets = [0, 96], sizes = [2, 32], strides = [1, 1]} : vector<2x128xf32> to vector<2x32xf32>
    %641 = math.tanh %640 : vector<2x32xf32>
    %642 = arith.mulf %638, %584 : vector<2x32xf32>
    %643 = arith.mulf %637, %641 : vector<2x32xf32>
    %644 = arith.addf %642, %643 : vector<2x32xf32>
    %645 = math.tanh %644 : vector<2x32xf32>
    %646 = arith.mulf %639, %645 : vector<2x32xf32>
    %647 = vector.shape_cast %625 : vector<2x1xi1> to vector<2x1xi1>
    %648 = vector.broadcast %647 : vector<2x1xi1> to vector<2x32xi1>
    %649 = arith.select %648, %646, %581 : vector<2x32xi1>, vector<2x32xf32>
    %650 = vector.shape_cast %625 : vector<2x1xi1> to vector<2x1xi1>
    %651 = vector.broadcast %650 : vector<2x1xi1> to vector<2x32xi1>
    %652 = arith.select %651, %644, %584 : vector<2x32xi1>, vector<2x32xf32>
    %cst_163 = arith.constant 0.000000e+00 : f32
    %653 = vector.shape_cast %625 : vector<2x1xi1> to vector<2x1xi1>
    %654 = vector.broadcast %653 : vector<2x1xi1> to vector<2x32xi1>
    %655 = vector.broadcast %cst_163 : f32 to vector<2x32xf32>
    %656 = arith.select %654, %646, %655 : vector<2x32xi1>, vector<2x32xf32>
    %c2_164 = arith.constant 2 : index
    %c0_165 = arith.constant 0 : index
    %657 = vector.load %arg25[%c2_164, %c0_165] : memref<16x32xf32, #tpu.memory_space<vmem>>, vector<2x32xf32>
    tpu.vector_store %arg25[%c2_164, %c0_165], %656 {strides = array<i32>} : memref<16x32xf32, #tpu.memory_space<vmem>>, vector<2x32xf32>,
    %c6_i32_166 = arith.constant 6 : i32
    %658 = vector.broadcast %c6_i32_166 : i32 to vector<2x1xi32>
    %659 = arith.cmpi sgt, %1, %658 : vector<2x1xi32>
    %660 = vector.extract_strided_slice %553 {offsets = [12, 128], sizes = [2, 128], strides = [1, 1]} : vector<16x256xf32> to vector<2x128xf32>
    %cst_167 = arith.constant dense<0.000000e+00> : vector<2x128xf32>
    %661 = tpu.matmul %615, %555, %cst_167 {dimension_numbers = #tpu.dot_dimension_numbers<[1], [0], [0], [1], [0, 0, 1, 1], [], []>} : vector<2x32xf32>, vector<32x128xf32>, vector<2x128xf32> -> vector<2x128xf32>
    %662 = arith.addf %660, %661 : vector<2x128xf32>
    %663 = vector.extract_strided_slice %662 {offsets = [0, 0], sizes = [2, 96], strides = [1, 1]} : vector<2x128xf32> to vector<2x96xf32>
    %cst_168 = arith.constant 0.000000e+00 : f32
    %664 = vector.broadcast %cst_168 : f32 to vector<2x96xf32>
    %665 = arith.subf %664, %663 : vector<2x96xf32>
    %666 = math.exp %665 : vector<2x96xf32>
    %cst_169 = arith.constant 1.000000e+00 : f32
    %667 = vector.broadcast %cst_169 : f32 to vector<2x96xf32>
    %668 = arith.addf %667, %666 : vector<2x96xf32>
    %cst_170 = arith.constant 1.000000e+00 : f32
    %669 = vector.broadcast %cst_170 : f32 to vector<2x96xf32>
    %670 = arith.divf %669, %668 : vector<2x96xf32>
    %671 = vector.extract_strided_slice %670 {offsets = [0, 0], sizes = [2, 32], strides = [1, 1]} : vector<2x96xf32> to vector<2x32xf32>
    %672 = vector.extract_strided_slice %670 {offsets = [0, 32], sizes = [2, 32], strides = [1, 1]} : vector<2x96xf32> to vector<2x32xf32>
    %673 = vector.extract_strided_slice %670 {offsets = [0, 64], sizes = [2, 32], strides = [1, 1]} : vector<2x96xf32> to vector<2x32xf32>
    %674 = vector.extract_strided_slice %662 {offsets = [0, 96], sizes = [2, 32], strides = [1, 1]} : vector<2x128xf32> to vector<2x32xf32>
    %675 = math.tanh %674 : vector<2x32xf32>
    %676 = arith.mulf %672, %618 : vector<2x32xf32>
    %677 = arith.mulf %671, %675 : vector<2x32xf32>
    %678 = arith.addf %676, %677 : vector<2x32xf32>
    %679 = math.tanh %678 : vector<2x32xf32>
    %680 = arith.mulf %673, %679 : vector<2x32xf32>
    %681 = vector.shape_cast %659 : vector<2x1xi1> to vector<2x1xi1>
    %682 = vector.broadcast %681 : vector<2x1xi1> to vector<2x32xi1>
    %683 = arith.select %682, %680, %615 : vector<2x32xi1>, vector<2x32xf32>
    %684 = vector.shape_cast %659 : vector<2x1xi1> to vector<2x1xi1>
    %685 = vector.broadcast %684 : vector<2x1xi1> to vector<2x32xi1>
    %686 = arith.select %685, %678, %618 : vector<2x32xi1>, vector<2x32xf32>
    %cst_171 = arith.constant 0.000000e+00 : f32
    %687 = vector.shape_cast %659 : vector<2x1xi1> to vector<2x1xi1>
    %688 = vector.broadcast %687 : vector<2x1xi1> to vector<2x32xi1>
    %689 = vector.broadcast %cst_171 : f32 to vector<2x32xf32>
    %690 = arith.select %688, %680, %689 : vector<2x32xi1>, vector<2x32xf32>
    %c12_172 = arith.constant 12 : index
    %c0_173 = arith.constant 0 : index
    %691 = vector.load %arg26[%c12_172, %c0_173] : memref<16x32xf32, #tpu.memory_space<vmem>>, vector<2x32xf32>
    tpu.vector_store %arg26[%c12_172, %c0_173], %690 {strides = array<i32>} : memref<16x32xf32, #tpu.memory_space<vmem>>, vector<2x32xf32>,
    %c2_i32_174 = arith.constant 2 : i32
    %692 = vector.broadcast %c2_i32_174 : i32 to vector<2x1xi32>
    %693 = arith.cmpi sgt, %1, %692 : vector<2x1xi32>
    %694 = vector.extract_strided_slice %553 {offsets = [4, 0], sizes = [2, 128], strides = [1, 1]} : vector<16x256xf32> to vector<2x128xf32>
    %cst_175 = arith.constant dense<0.000000e+00> : vector<2x128xf32>
    %695 = tpu.matmul %649, %554, %cst_175 {dimension_numbers = #tpu.dot_dimension_numbers<[1], [0], [0], [1], [0, 0, 1, 1], [], []>} : vector<2x32xf32>, vector<32x128xf32>, vector<2x128xf32> -> vector<2x128xf32>
    %696 = arith.addf %694, %695 : vector<2x128xf32>
    %697 = vector.extract_strided_slice %696 {offsets = [0, 0], sizes = [2, 96], strides = [1, 1]} : vector<2x128xf32> to vector<2x96xf32>
    %cst_176 = arith.constant 0.000000e+00 : f32
    %698 = vector.broadcast %cst_176 : f32 to vector<2x96xf32>
    %699 = arith.subf %698, %697 : vector<2x96xf32>
    %700 = math.exp %699 : vector<2x96xf32>
    %cst_177 = arith.constant 1.000000e+00 : f32
    %701 = vector.broadcast %cst_177 : f32 to vector<2x96xf32>
    %702 = arith.addf %701, %700 : vector<2x96xf32>
    %cst_178 = arith.constant 1.000000e+00 : f32
    %703 = vector.broadcast %cst_178 : f32 to vector<2x96xf32>
    %704 = arith.divf %703, %702 : vector<2x96xf32>
    %705 = vector.extract_strided_slice %704 {offsets = [0, 0], sizes = [2, 32], strides = [1, 1]} : vector<2x96xf32> to vector<2x32xf32>
    %706 = vector.extract_strided_slice %704 {offsets = [0, 32], sizes = [2, 32], strides = [1, 1]} : vector<2x96xf32> to vector<2x32xf32>
    %707 = vector.extract_strided_slice %704 {offsets = [0, 64], sizes = [2, 32], strides = [1, 1]} : vector<2x96xf32> to vector<2x32xf32>
    %708 = vector.extract_strided_slice %696 {offsets = [0, 96], sizes = [2, 32], strides = [1, 1]} : vector<2x128xf32> to vector<2x32xf32>
    %709 = math.tanh %708 : vector<2x32xf32>
    %710 = arith.mulf %706, %652 : vector<2x32xf32>
    %711 = arith.mulf %705, %709 : vector<2x32xf32>
    %712 = arith.addf %710, %711 : vector<2x32xf32>
    %713 = math.tanh %712 : vector<2x32xf32>
    %714 = arith.mulf %707, %713 : vector<2x32xf32>
    %715 = vector.shape_cast %693 : vector<2x1xi1> to vector<2x1xi1>
    %716 = vector.broadcast %715 : vector<2x1xi1> to vector<2x32xi1>
    %717 = arith.select %716, %714, %649 : vector<2x32xi1>, vector<2x32xf32>
    %718 = vector.shape_cast %693 : vector<2x1xi1> to vector<2x1xi1>
    %719 = vector.broadcast %718 : vector<2x1xi1> to vector<2x32xi1>
    %720 = arith.select %719, %712, %652 : vector<2x32xi1>, vector<2x32xf32>
    %cst_179 = arith.constant 0.000000e+00 : f32
    %721 = vector.shape_cast %693 : vector<2x1xi1> to vector<2x1xi1>
    %722 = vector.broadcast %721 : vector<2x1xi1> to vector<2x32xi1>
    %723 = vector.broadcast %cst_179 : f32 to vector<2x32xf32>
    %724 = arith.select %722, %714, %723 : vector<2x32xi1>, vector<2x32xf32>
    %c4_180 = arith.constant 4 : index
    %c0_181 = arith.constant 0 : index
    %725 = vector.load %arg25[%c4_180, %c0_181] : memref<16x32xf32, #tpu.memory_space<vmem>>, vector<2x32xf32>
    tpu.vector_store %arg25[%c4_180, %c0_181], %724 {strides = array<i32>} : memref<16x32xf32, #tpu.memory_space<vmem>>, vector<2x32xf32>,
    %c5_i32_182 = arith.constant 5 : i32
    %726 = vector.broadcast %c5_i32_182 : i32 to vector<2x1xi32>
    %727 = arith.cmpi sgt, %1, %726 : vector<2x1xi32>
    %728 = vector.extract_strided_slice %553 {offsets = [10, 128], sizes = [2, 128], strides = [1, 1]} : vector<16x256xf32> to vector<2x128xf32>
    %cst_183 = arith.constant dense<0.000000e+00> : vector<2x128xf32>
    %729 = tpu.matmul %683, %555, %cst_183 {dimension_numbers = #tpu.dot_dimension_numbers<[1], [0], [0], [1], [0, 0, 1, 1], [], []>} : vector<2x32xf32>, vector<32x128xf32>, vector<2x128xf32> -> vector<2x128xf32>
    %730 = arith.addf %728, %729 : vector<2x128xf32>
    %731 = vector.extract_strided_slice %730 {offsets = [0, 0], sizes = [2, 96], strides = [1, 1]} : vector<2x128xf32> to vector<2x96xf32>
    %cst_184 = arith.constant 0.000000e+00 : f32
    %732 = vector.broadcast %cst_184 : f32 to vector<2x96xf32>
    %733 = arith.subf %732, %731 : vector<2x96xf32>
    %734 = math.exp %733 : vector<2x96xf32>
    %cst_185 = arith.constant 1.000000e+00 : f32
    %735 = vector.broadcast %cst_185 : f32 to vector<2x96xf32>
    %736 = arith.addf %735, %734 : vector<2x96xf32>
    %cst_186 = arith.constant 1.000000e+00 : f32
    %737 = vector.broadcast %cst_186 : f32 to vector<2x96xf32>
    %738 = arith.divf %737, %736 : vector<2x96xf32>
    %739 = vector.extract_strided_slice %738 {offsets = [0, 0], sizes = [2, 32], strides = [1, 1]} : vector<2x96xf32> to vector<2x32xf32>
    %740 = vector.extract_strided_slice %738 {offsets = [0, 32], sizes = [2, 32], strides = [1, 1]} : vector<2x96xf32> to vector<2x32xf32>
    %741 = vector.extract_strided_slice %738 {offsets = [0, 64], sizes = [2, 32], strides = [1, 1]} : vector<2x96xf32> to vector<2x32xf32>
    %742 = vector.extract_strided_slice %730 {offsets = [0, 96], sizes = [2, 32], strides = [1, 1]} : vector<2x128xf32> to vector<2x32xf32>
    %743 = math.tanh %742 : vector<2x32xf32>
    %744 = arith.mulf %740, %686 : vector<2x32xf32>
    %745 = arith.mulf %739, %743 : vector<2x32xf32>
    %746 = arith.addf %744, %745 : vector<2x32xf32>
    %747 = math.tanh %746 : vector<2x32xf32>
    %748 = arith.mulf %741, %747 : vector<2x32xf32>
    %749 = vector.shape_cast %727 : vector<2x1xi1> to vector<2x1xi1>
    %750 = vector.broadcast %749 : vector<2x1xi1> to vector<2x32xi1>
    %751 = arith.select %750, %748, %683 : vector<2x32xi1>, vector<2x32xf32>
    %752 = vector.shape_cast %727 : vector<2x1xi1> to vector<2x1xi1>
    %753 = vector.broadcast %752 : vector<2x1xi1> to vector<2x32xi1>
    %754 = arith.select %753, %746, %686 : vector<2x32xi1>, vector<2x32xf32>
    %cst_187 = arith.constant 0.000000e+00 : f32
    %755 = vector.shape_cast %727 : vector<2x1xi1> to vector<2x1xi1>
    %756 = vector.broadcast %755 : vector<2x1xi1> to vector<2x32xi1>
    %757 = vector.broadcast %cst_187 : f32 to vector<2x32xf32>
    %758 = arith.select %756, %748, %757 : vector<2x32xi1>, vector<2x32xf32>
    %c10_188 = arith.constant 10 : index
    %c0_189 = arith.constant 0 : index
    %759 = vector.load %arg26[%c10_188, %c0_189] : memref<16x32xf32, #tpu.memory_space<vmem>>, vector<2x32xf32>
    tpu.vector_store %arg26[%c10_188, %c0_189], %758 {strides = array<i32>} : memref<16x32xf32, #tpu.memory_space<vmem>>, vector<2x32xf32>,
    %c3_i32_190 = arith.constant 3 : i32
    %760 = vector.broadcast %c3_i32_190 : i32 to vector<2x1xi32>
    %761 = arith.cmpi sgt, %1, %760 : vector<2x1xi32>
    %762 = vector.extract_strided_slice %553 {offsets = [6, 0], sizes = [2, 128], strides = [1, 1]} : vector<16x256xf32> to vector<2x128xf32>
    %cst_191 = arith.constant dense<0.000000e+00> : vector<2x128xf32>
    %763 = tpu.matmul %717, %554, %cst_191 {dimension_numbers = #tpu.dot_dimension_numbers<[1], [0], [0], [1], [0, 0, 1, 1], [], []>} : vector<2x32xf32>, vector<32x128xf32>, vector<2x128xf32> -> vector<2x128xf32>
    %764 = arith.addf %762, %763 : vector<2x128xf32>
    %765 = vector.extract_strided_slice %764 {offsets = [0, 0], sizes = [2, 96], strides = [1, 1]} : vector<2x128xf32> to vector<2x96xf32>
    %cst_192 = arith.constant 0.000000e+00 : f32
    %766 = vector.broadcast %cst_192 : f32 to vector<2x96xf32>
    %767 = arith.subf %766, %765 : vector<2x96xf32>
    %768 = math.exp %767 : vector<2x96xf32>
    %cst_193 = arith.constant 1.000000e+00 : f32
    %769 = vector.broadcast %cst_193 : f32 to vector<2x96xf32>
    %770 = arith.addf %769, %768 : vector<2x96xf32>
    %cst_194 = arith.constant 1.000000e+00 : f32
    %771 = vector.broadcast %cst_194 : f32 to vector<2x96xf32>
    %772 = arith.divf %771, %770 : vector<2x96xf32>
    %773 = vector.extract_strided_slice %772 {offsets = [0, 0], sizes = [2, 32], strides = [1, 1]} : vector<2x96xf32> to vector<2x32xf32>
    %774 = vector.extract_strided_slice %772 {offsets = [0, 32], sizes = [2, 32], strides = [1, 1]} : vector<2x96xf32> to vector<2x32xf32>
    %775 = vector.extract_strided_slice %772 {offsets = [0, 64], sizes = [2, 32], strides = [1, 1]} : vector<2x96xf32> to vector<2x32xf32>
    %776 = vector.extract_strided_slice %764 {offsets = [0, 96], sizes = [2, 32], strides = [1, 1]} : vector<2x128xf32> to vector<2x32xf32>
    %777 = math.tanh %776 : vector<2x32xf32>
    %778 = arith.mulf %774, %720 : vector<2x32xf32>
    %779 = arith.mulf %773, %777 : vector<2x32xf32>
    %780 = arith.addf %778, %779 : vector<2x32xf32>
    %781 = math.tanh %780 : vector<2x32xf32>
    %782 = arith.mulf %775, %781 : vector<2x32xf32>
    %783 = vector.shape_cast %761 : vector<2x1xi1> to vector<2x1xi1>
    %784 = vector.broadcast %783 : vector<2x1xi1> to vector<2x32xi1>
    %785 = arith.select %784, %782, %717 : vector<2x32xi1>, vector<2x32xf32>
    %786 = vector.shape_cast %761 : vector<2x1xi1> to vector<2x1xi1>
    %787 = vector.broadcast %786 : vector<2x1xi1> to vector<2x32xi1>
    %788 = arith.select %787, %780, %720 : vector<2x32xi1>, vector<2x32xf32>
    %cst_195 = arith.constant 0.000000e+00 : f32
    %789 = vector.shape_cast %761 : vector<2x1xi1> to vector<2x1xi1>
    %790 = vector.broadcast %789 : vector<2x1xi1> to vector<2x32xi1>
    %791 = vector.broadcast %cst_195 : f32 to vector<2x32xf32>
    %792 = arith.select %790, %782, %791 : vector<2x32xi1>, vector<2x32xf32>
    %c6_196 = arith.constant 6 : index
    %c0_197 = arith.constant 0 : index
    %793 = vector.load %arg25[%c6_196, %c0_197] : memref<16x32xf32, #tpu.memory_space<vmem>>, vector<2x32xf32>
    tpu.vector_store %arg25[%c6_196, %c0_197], %792 {strides = array<i32>} : memref<16x32xf32, #tpu.memory_space<vmem>>, vector<2x32xf32>,
    %c4_i32_198 = arith.constant 4 : i32
    %794 = vector.broadcast %c4_i32_198 : i32 to vector<2x1xi32>
    %795 = arith.cmpi sgt, %1, %794 : vector<2x1xi32>
    %796 = vector.extract_strided_slice %553 {offsets = [8, 128], sizes = [2, 128], strides = [1, 1]} : vector<16x256xf32> to vector<2x128xf32>
    %cst_199 = arith.constant dense<0.000000e+00> : vector<2x128xf32>
    %797 = tpu.matmul %751, %555, %cst_199 {dimension_numbers = #tpu.dot_dimension_numbers<[1], [0], [0], [1], [0, 0, 1, 1], [], []>} : vector<2x32xf32>, vector<32x128xf32>, vector<2x128xf32> -> vector<2x128xf32>
    %798 = arith.addf %796, %797 : vector<2x128xf32>
    %799 = vector.extract_strided_slice %798 {offsets = [0, 0], sizes = [2, 96], strides = [1, 1]} : vector<2x128xf32> to vector<2x96xf32>
    %cst_200 = arith.constant 0.000000e+00 : f32
    %800 = vector.broadcast %cst_200 : f32 to vector<2x96xf32>
    %801 = arith.subf %800, %799 : vector<2x96xf32>
    %802 = math.exp %801 : vector<2x96xf32>
    %cst_201 = arith.constant 1.000000e+00 : f32
    %803 = vector.broadcast %cst_201 : f32 to vector<2x96xf32>
    %804 = arith.addf %803, %802 : vector<2x96xf32>
    %cst_202 = arith.constant 1.000000e+00 : f32
    %805 = vector.broadcast %cst_202 : f32 to vector<2x96xf32>
    %806 = arith.divf %805, %804 : vector<2x96xf32>
    %807 = vector.extract_strided_slice %806 {offsets = [0, 0], sizes = [2, 32], strides = [1, 1]} : vector<2x96xf32> to vector<2x32xf32>
    %808 = vector.extract_strided_slice %806 {offsets = [0, 32], sizes = [2, 32], strides = [1, 1]} : vector<2x96xf32> to vector<2x32xf32>
    %809 = vector.extract_strided_slice %806 {offsets = [0, 64], sizes = [2, 32], strides = [1, 1]} : vector<2x96xf32> to vector<2x32xf32>
    %810 = vector.extract_strided_slice %798 {offsets = [0, 96], sizes = [2, 32], strides = [1, 1]} : vector<2x128xf32> to vector<2x32xf32>
    %811 = math.tanh %810 : vector<2x32xf32>
    %812 = arith.mulf %808, %754 : vector<2x32xf32>
    %813 = arith.mulf %807, %811 : vector<2x32xf32>
    %814 = arith.addf %812, %813 : vector<2x32xf32>
    %815 = math.tanh %814 : vector<2x32xf32>
    %816 = arith.mulf %809, %815 : vector<2x32xf32>
    %817 = vector.shape_cast %795 : vector<2x1xi1> to vector<2x1xi1>
    %818 = vector.broadcast %817 : vector<2x1xi1> to vector<2x32xi1>
    %819 = arith.select %818, %816, %751 : vector<2x32xi1>, vector<2x32xf32>
    %820 = vector.shape_cast %795 : vector<2x1xi1> to vector<2x1xi1>
    %821 = vector.broadcast %820 : vector<2x1xi1> to vector<2x32xi1>
    %822 = arith.select %821, %814, %754 : vector<2x32xi1>, vector<2x32xf32>
    %cst_203 = arith.constant 0.000000e+00 : f32
    %823 = vector.shape_cast %795 : vector<2x1xi1> to vector<2x1xi1>
    %824 = vector.broadcast %823 : vector<2x1xi1> to vector<2x32xi1>
    %825 = vector.broadcast %cst_203 : f32 to vector<2x32xf32>
    %826 = arith.select %824, %816, %825 : vector<2x32xi1>, vector<2x32xf32>
    %c8_204 = arith.constant 8 : index
    %c0_205 = arith.constant 0 : index
    %827 = vector.load %arg26[%c8_204, %c0_205] : memref<16x32xf32, #tpu.memory_space<vmem>>, vector<2x32xf32>
    tpu.vector_store %arg26[%c8_204, %c0_205], %826 {strides = array<i32>} : memref<16x32xf32, #tpu.memory_space<vmem>>, vector<2x32xf32>,
    %c4_i32_206 = arith.constant 4 : i32
    %828 = vector.broadcast %c4_i32_206 : i32 to vector<2x1xi32>
    %829 = arith.cmpi sgt, %1, %828 : vector<2x1xi32>
    %830 = vector.extract_strided_slice %553 {offsets = [8, 0], sizes = [2, 128], strides = [1, 1]} : vector<16x256xf32> to vector<2x128xf32>
    %cst_207 = arith.constant dense<0.000000e+00> : vector<2x128xf32>
    %831 = tpu.matmul %785, %554, %cst_207 {dimension_numbers = #tpu.dot_dimension_numbers<[1], [0], [0], [1], [0, 0, 1, 1], [], []>} : vector<2x32xf32>, vector<32x128xf32>, vector<2x128xf32> -> vector<2x128xf32>
    %832 = arith.addf %830, %831 : vector<2x128xf32>
    %833 = vector.extract_strided_slice %832 {offsets = [0, 0], sizes = [2, 96], strides = [1, 1]} : vector<2x128xf32> to vector<2x96xf32>
    %cst_208 = arith.constant 0.000000e+00 : f32
    %834 = vector.broadcast %cst_208 : f32 to vector<2x96xf32>
    %835 = arith.subf %834, %833 : vector<2x96xf32>
    %836 = math.exp %835 : vector<2x96xf32>
    %cst_209 = arith.constant 1.000000e+00 : f32
    %837 = vector.broadcast %cst_209 : f32 to vector<2x96xf32>
    %838 = arith.addf %837, %836 : vector<2x96xf32>
    %cst_210 = arith.constant 1.000000e+00 : f32
    %839 = vector.broadcast %cst_210 : f32 to vector<2x96xf32>
    %840 = arith.divf %839, %838 : vector<2x96xf32>
    %841 = vector.extract_strided_slice %840 {offsets = [0, 0], sizes = [2, 32], strides = [1, 1]} : vector<2x96xf32> to vector<2x32xf32>
    %842 = vector.extract_strided_slice %840 {offsets = [0, 32], sizes = [2, 32], strides = [1, 1]} : vector<2x96xf32> to vector<2x32xf32>
    %843 = vector.extract_strided_slice %840 {offsets = [0, 64], sizes = [2, 32], strides = [1, 1]} : vector<2x96xf32> to vector<2x32xf32>
    %844 = vector.extract_strided_slice %832 {offsets = [0, 96], sizes = [2, 32], strides = [1, 1]} : vector<2x128xf32> to vector<2x32xf32>
    %845 = math.tanh %844 : vector<2x32xf32>
    %846 = arith.mulf %842, %788 : vector<2x32xf32>
    %847 = arith.mulf %841, %845 : vector<2x32xf32>
    %848 = arith.addf %846, %847 : vector<2x32xf32>
    %849 = math.tanh %848 : vector<2x32xf32>
    %850 = arith.mulf %843, %849 : vector<2x32xf32>
    %851 = vector.shape_cast %829 : vector<2x1xi1> to vector<2x1xi1>
    %852 = vector.broadcast %851 : vector<2x1xi1> to vector<2x32xi1>
    %853 = arith.select %852, %850, %785 : vector<2x32xi1>, vector<2x32xf32>
    %854 = vector.shape_cast %829 : vector<2x1xi1> to vector<2x1xi1>
    %855 = vector.broadcast %854 : vector<2x1xi1> to vector<2x32xi1>
    %856 = arith.select %855, %848, %788 : vector<2x32xi1>, vector<2x32xf32>
    %cst_211 = arith.constant 0.000000e+00 : f32
    %857 = vector.shape_cast %829 : vector<2x1xi1> to vector<2x1xi1>
    %858 = vector.broadcast %857 : vector<2x1xi1> to vector<2x32xi1>
    %859 = vector.broadcast %cst_211 : f32 to vector<2x32xf32>
    %860 = arith.select %858, %850, %859 : vector<2x32xi1>, vector<2x32xf32>
    %c8_212 = arith.constant 8 : index
    %c0_213 = arith.constant 0 : index
    %861 = vector.load %arg25[%c8_212, %c0_213] : memref<16x32xf32, #tpu.memory_space<vmem>>, vector<2x32xf32>
    tpu.vector_store %arg25[%c8_212, %c0_213], %860 {strides = array<i32>} : memref<16x32xf32, #tpu.memory_space<vmem>>, vector<2x32xf32>,
    %c3_i32_214 = arith.constant 3 : i32
    %862 = vector.broadcast %c3_i32_214 : i32 to vector<2x1xi32>
    %863 = arith.cmpi sgt, %1, %862 : vector<2x1xi32>
    %864 = vector.extract_strided_slice %553 {offsets = [6, 128], sizes = [2, 128], strides = [1, 1]} : vector<16x256xf32> to vector<2x128xf32>
    %cst_215 = arith.constant dense<0.000000e+00> : vector<2x128xf32>
    %865 = tpu.matmul %819, %555, %cst_215 {dimension_numbers = #tpu.dot_dimension_numbers<[1], [0], [0], [1], [0, 0, 1, 1], [], []>} : vector<2x32xf32>, vector<32x128xf32>, vector<2x128xf32> -> vector<2x128xf32>
    %866 = arith.addf %864, %865 : vector<2x128xf32>
    %867 = vector.extract_strided_slice %866 {offsets = [0, 0], sizes = [2, 96], strides = [1, 1]} : vector<2x128xf32> to vector<2x96xf32>
    %cst_216 = arith.constant 0.000000e+00 : f32
    %868 = vector.broadcast %cst_216 : f32 to vector<2x96xf32>
    %869 = arith.subf %868, %867 : vector<2x96xf32>
    %870 = math.exp %869 : vector<2x96xf32>
    %cst_217 = arith.constant 1.000000e+00 : f32
    %871 = vector.broadcast %cst_217 : f32 to vector<2x96xf32>
    %872 = arith.addf %871, %870 : vector<2x96xf32>
    %cst_218 = arith.constant 1.000000e+00 : f32
    %873 = vector.broadcast %cst_218 : f32 to vector<2x96xf32>
    %874 = arith.divf %873, %872 : vector<2x96xf32>
    %875 = vector.extract_strided_slice %874 {offsets = [0, 0], sizes = [2, 32], strides = [1, 1]} : vector<2x96xf32> to vector<2x32xf32>
    %876 = vector.extract_strided_slice %874 {offsets = [0, 32], sizes = [2, 32], strides = [1, 1]} : vector<2x96xf32> to vector<2x32xf32>
    %877 = vector.extract_strided_slice %874 {offsets = [0, 64], sizes = [2, 32], strides = [1, 1]} : vector<2x96xf32> to vector<2x32xf32>
    %878 = vector.extract_strided_slice %866 {offsets = [0, 96], sizes = [2, 32], strides = [1, 1]} : vector<2x128xf32> to vector<2x32xf32>
    %879 = math.tanh %878 : vector<2x32xf32>
    %880 = arith.mulf %876, %822 : vector<2x32xf32>
    %881 = arith.mulf %875, %879 : vector<2x32xf32>
    %882 = arith.addf %880, %881 : vector<2x32xf32>
    %883 = math.tanh %882 : vector<2x32xf32>
    %884 = arith.mulf %877, %883 : vector<2x32xf32>
    %885 = vector.shape_cast %863 : vector<2x1xi1> to vector<2x1xi1>
    %886 = vector.broadcast %885 : vector<2x1xi1> to vector<2x32xi1>
    %887 = arith.select %886, %884, %819 : vector<2x32xi1>, vector<2x32xf32>
    %888 = vector.shape_cast %863 : vector<2x1xi1> to vector<2x1xi1>
    %889 = vector.broadcast %888 : vector<2x1xi1> to vector<2x32xi1>
    %890 = arith.select %889, %882, %822 : vector<2x32xi1>, vector<2x32xf32>
    %cst_219 = arith.constant 0.000000e+00 : f32
    %891 = vector.shape_cast %863 : vector<2x1xi1> to vector<2x1xi1>
    %892 = vector.broadcast %891 : vector<2x1xi1> to vector<2x32xi1>
    %893 = vector.broadcast %cst_219 : f32 to vector<2x32xf32>
    %894 = arith.select %892, %884, %893 : vector<2x32xi1>, vector<2x32xf32>
    %c6_220 = arith.constant 6 : index
    %c0_221 = arith.constant 0 : index
    %895 = vector.load %arg26[%c6_220, %c0_221] : memref<16x32xf32, #tpu.memory_space<vmem>>, vector<2x32xf32>
    tpu.vector_store %arg26[%c6_220, %c0_221], %894 {strides = array<i32>} : memref<16x32xf32, #tpu.memory_space<vmem>>, vector<2x32xf32>,
    %c5_i32_222 = arith.constant 5 : i32
    %896 = vector.broadcast %c5_i32_222 : i32 to vector<2x1xi32>
    %897 = arith.cmpi sgt, %1, %896 : vector<2x1xi32>
    %898 = vector.extract_strided_slice %553 {offsets = [10, 0], sizes = [2, 128], strides = [1, 1]} : vector<16x256xf32> to vector<2x128xf32>
    %cst_223 = arith.constant dense<0.000000e+00> : vector<2x128xf32>
    %899 = tpu.matmul %853, %554, %cst_223 {dimension_numbers = #tpu.dot_dimension_numbers<[1], [0], [0], [1], [0, 0, 1, 1], [], []>} : vector<2x32xf32>, vector<32x128xf32>, vector<2x128xf32> -> vector<2x128xf32>
    %900 = arith.addf %898, %899 : vector<2x128xf32>
    %901 = vector.extract_strided_slice %900 {offsets = [0, 0], sizes = [2, 96], strides = [1, 1]} : vector<2x128xf32> to vector<2x96xf32>
    %cst_224 = arith.constant 0.000000e+00 : f32
    %902 = vector.broadcast %cst_224 : f32 to vector<2x96xf32>
    %903 = arith.subf %902, %901 : vector<2x96xf32>
    %904 = math.exp %903 : vector<2x96xf32>
    %cst_225 = arith.constant 1.000000e+00 : f32
    %905 = vector.broadcast %cst_225 : f32 to vector<2x96xf32>
    %906 = arith.addf %905, %904 : vector<2x96xf32>
    %cst_226 = arith.constant 1.000000e+00 : f32
    %907 = vector.broadcast %cst_226 : f32 to vector<2x96xf32>
    %908 = arith.divf %907, %906 : vector<2x96xf32>
    %909 = vector.extract_strided_slice %908 {offsets = [0, 0], sizes = [2, 32], strides = [1, 1]} : vector<2x96xf32> to vector<2x32xf32>
    %910 = vector.extract_strided_slice %908 {offsets = [0, 32], sizes = [2, 32], strides = [1, 1]} : vector<2x96xf32> to vector<2x32xf32>
    %911 = vector.extract_strided_slice %908 {offsets = [0, 64], sizes = [2, 32], strides = [1, 1]} : vector<2x96xf32> to vector<2x32xf32>
    %912 = vector.extract_strided_slice %900 {offsets = [0, 96], sizes = [2, 32], strides = [1, 1]} : vector<2x128xf32> to vector<2x32xf32>
    %913 = math.tanh %912 : vector<2x32xf32>
    %914 = arith.mulf %910, %856 : vector<2x32xf32>
    %915 = arith.mulf %909, %913 : vector<2x32xf32>
    %916 = arith.addf %914, %915 : vector<2x32xf32>
    %917 = math.tanh %916 : vector<2x32xf32>
    %918 = arith.mulf %911, %917 : vector<2x32xf32>
    %919 = vector.shape_cast %897 : vector<2x1xi1> to vector<2x1xi1>
    %920 = vector.broadcast %919 : vector<2x1xi1> to vector<2x32xi1>
    %921 = arith.select %920, %918, %853 : vector<2x32xi1>, vector<2x32xf32>
    %922 = vector.shape_cast %897 : vector<2x1xi1> to vector<2x1xi1>
    %923 = vector.broadcast %922 : vector<2x1xi1> to vector<2x32xi1>
    %924 = arith.select %923, %916, %856 : vector<2x32xi1>, vector<2x32xf32>
    %cst_227 = arith.constant 0.000000e+00 : f32
    %925 = vector.shape_cast %897 : vector<2x1xi1> to vector<2x1xi1>
    %926 = vector.broadcast %925 : vector<2x1xi1> to vector<2x32xi1>
    %927 = vector.broadcast %cst_227 : f32 to vector<2x32xf32>
    %928 = arith.select %926, %918, %927 : vector<2x32xi1>, vector<2x32xf32>
    %c10_228 = arith.constant 10 : index
    %c0_229 = arith.constant 0 : index
    %929 = vector.load %arg25[%c10_228, %c0_229] : memref<16x32xf32, #tpu.memory_space<vmem>>, vector<2x32xf32>
    tpu.vector_store %arg25[%c10_228, %c0_229], %928 {strides = array<i32>} : memref<16x32xf32, #tpu.memory_space<vmem>>, vector<2x32xf32>,
    %c2_i32_230 = arith.constant 2 : i32
    %930 = vector.broadcast %c2_i32_230 : i32 to vector<2x1xi32>
    %931 = arith.cmpi sgt, %1, %930 : vector<2x1xi32>
    %932 = vector.extract_strided_slice %553 {offsets = [4, 128], sizes = [2, 128], strides = [1, 1]} : vector<16x256xf32> to vector<2x128xf32>
    %cst_231 = arith.constant dense<0.000000e+00> : vector<2x128xf32>
    %933 = tpu.matmul %887, %555, %cst_231 {dimension_numbers = #tpu.dot_dimension_numbers<[1], [0], [0], [1], [0, 0, 1, 1], [], []>} : vector<2x32xf32>, vector<32x128xf32>, vector<2x128xf32> -> vector<2x128xf32>
    %934 = arith.addf %932, %933 : vector<2x128xf32>
    %935 = vector.extract_strided_slice %934 {offsets = [0, 0], sizes = [2, 96], strides = [1, 1]} : vector<2x128xf32> to vector<2x96xf32>
    %cst_232 = arith.constant 0.000000e+00 : f32
    %936 = vector.broadcast %cst_232 : f32 to vector<2x96xf32>
    %937 = arith.subf %936, %935 : vector<2x96xf32>
    %938 = math.exp %937 : vector<2x96xf32>
    %cst_233 = arith.constant 1.000000e+00 : f32
    %939 = vector.broadcast %cst_233 : f32 to vector<2x96xf32>
    %940 = arith.addf %939, %938 : vector<2x96xf32>
    %cst_234 = arith.constant 1.000000e+00 : f32
    %941 = vector.broadcast %cst_234 : f32 to vector<2x96xf32>
    %942 = arith.divf %941, %940 : vector<2x96xf32>
    %943 = vector.extract_strided_slice %942 {offsets = [0, 0], sizes = [2, 32], strides = [1, 1]} : vector<2x96xf32> to vector<2x32xf32>
    %944 = vector.extract_strided_slice %942 {offsets = [0, 32], sizes = [2, 32], strides = [1, 1]} : vector<2x96xf32> to vector<2x32xf32>
    %945 = vector.extract_strided_slice %942 {offsets = [0, 64], sizes = [2, 32], strides = [1, 1]} : vector<2x96xf32> to vector<2x32xf32>
    %946 = vector.extract_strided_slice %934 {offsets = [0, 96], sizes = [2, 32], strides = [1, 1]} : vector<2x128xf32> to vector<2x32xf32>
    %947 = math.tanh %946 : vector<2x32xf32>
    %948 = arith.mulf %944, %890 : vector<2x32xf32>
    %949 = arith.mulf %943, %947 : vector<2x32xf32>
    %950 = arith.addf %948, %949 : vector<2x32xf32>
    %951 = math.tanh %950 : vector<2x32xf32>
    %952 = arith.mulf %945, %951 : vector<2x32xf32>
    %953 = vector.shape_cast %931 : vector<2x1xi1> to vector<2x1xi1>
    %954 = vector.broadcast %953 : vector<2x1xi1> to vector<2x32xi1>
    %955 = arith.select %954, %952, %887 : vector<2x32xi1>, vector<2x32xf32>
    %956 = vector.shape_cast %931 : vector<2x1xi1> to vector<2x1xi1>
    %957 = vector.broadcast %956 : vector<2x1xi1> to vector<2x32xi1>
    %958 = arith.select %957, %950, %890 : vector<2x32xi1>, vector<2x32xf32>
    %cst_235 = arith.constant 0.000000e+00 : f32
    %959 = vector.shape_cast %931 : vector<2x1xi1> to vector<2x1xi1>
    %960 = vector.broadcast %959 : vector<2x1xi1> to vector<2x32xi1>
    %961 = vector.broadcast %cst_235 : f32 to vector<2x32xf32>
    %962 = arith.select %960, %952, %961 : vector<2x32xi1>, vector<2x32xf32>
    %c4_236 = arith.constant 4 : index
    %c0_237 = arith.constant 0 : index
    %963 = vector.load %arg26[%c4_236, %c0_237] : memref<16x32xf32, #tpu.memory_space<vmem>>, vector<2x32xf32>
    tpu.vector_store %arg26[%c4_236, %c0_237], %962 {strides = array<i32>} : memref<16x32xf32, #tpu.memory_space<vmem>>, vector<2x32xf32>,
    %c6_i32_238 = arith.constant 6 : i32
    %964 = vector.broadcast %c6_i32_238 : i32 to vector<2x1xi32>
    %965 = arith.cmpi sgt, %1, %964 : vector<2x1xi32>
    %966 = vector.extract_strided_slice %553 {offsets = [12, 0], sizes = [2, 128], strides = [1, 1]} : vector<16x256xf32> to vector<2x128xf32>
    %cst_239 = arith.constant dense<0.000000e+00> : vector<2x128xf32>
    %967 = tpu.matmul %921, %554, %cst_239 {dimension_numbers = #tpu.dot_dimension_numbers<[1], [0], [0], [1], [0, 0, 1, 1], [], []>} : vector<2x32xf32>, vector<32x128xf32>, vector<2x128xf32> -> vector<2x128xf32>
    %968 = arith.addf %966, %967 : vector<2x128xf32>
    %969 = vector.extract_strided_slice %968 {offsets = [0, 0], sizes = [2, 96], strides = [1, 1]} : vector<2x128xf32> to vector<2x96xf32>
    %cst_240 = arith.constant 0.000000e+00 : f32
    %970 = vector.broadcast %cst_240 : f32 to vector<2x96xf32>
    %971 = arith.subf %970, %969 : vector<2x96xf32>
    %972 = math.exp %971 : vector<2x96xf32>
    %cst_241 = arith.constant 1.000000e+00 : f32
    %973 = vector.broadcast %cst_241 : f32 to vector<2x96xf32>
    %974 = arith.addf %973, %972 : vector<2x96xf32>
    %cst_242 = arith.constant 1.000000e+00 : f32
    %975 = vector.broadcast %cst_242 : f32 to vector<2x96xf32>
    %976 = arith.divf %975, %974 : vector<2x96xf32>
    %977 = vector.extract_strided_slice %976 {offsets = [0, 0], sizes = [2, 32], strides = [1, 1]} : vector<2x96xf32> to vector<2x32xf32>
    %978 = vector.extract_strided_slice %976 {offsets = [0, 32], sizes = [2, 32], strides = [1, 1]} : vector<2x96xf32> to vector<2x32xf32>
    %979 = vector.extract_strided_slice %976 {offsets = [0, 64], sizes = [2, 32], strides = [1, 1]} : vector<2x96xf32> to vector<2x32xf32>
    %980 = vector.extract_strided_slice %968 {offsets = [0, 96], sizes = [2, 32], strides = [1, 1]} : vector<2x128xf32> to vector<2x32xf32>
    %981 = math.tanh %980 : vector<2x32xf32>
    %982 = arith.mulf %978, %924 : vector<2x32xf32>
    %983 = arith.mulf %977, %981 : vector<2x32xf32>
    %984 = arith.addf %982, %983 : vector<2x32xf32>
    %985 = math.tanh %984 : vector<2x32xf32>
    %986 = arith.mulf %979, %985 : vector<2x32xf32>
    %987 = vector.shape_cast %965 : vector<2x1xi1> to vector<2x1xi1>
    %988 = vector.broadcast %987 : vector<2x1xi1> to vector<2x32xi1>
    %989 = arith.select %988, %986, %921 : vector<2x32xi1>, vector<2x32xf32>
    %990 = vector.shape_cast %965 : vector<2x1xi1> to vector<2x1xi1>
    %991 = vector.broadcast %990 : vector<2x1xi1> to vector<2x32xi1>
    %992 = arith.select %991, %984, %924 : vector<2x32xi1>, vector<2x32xf32>
    %cst_243 = arith.constant 0.000000e+00 : f32
    %993 = vector.shape_cast %965 : vector<2x1xi1> to vector<2x1xi1>
    %994 = vector.broadcast %993 : vector<2x1xi1> to vector<2x32xi1>
    %995 = vector.broadcast %cst_243 : f32 to vector<2x32xf32>
    %996 = arith.select %994, %986, %995 : vector<2x32xi1>, vector<2x32xf32>
    %c12_244 = arith.constant 12 : index
    %c0_245 = arith.constant 0 : index
    %997 = vector.load %arg25[%c12_244, %c0_245] : memref<16x32xf32, #tpu.memory_space<vmem>>, vector<2x32xf32>
    tpu.vector_store %arg25[%c12_244, %c0_245], %996 {strides = array<i32>} : memref<16x32xf32, #tpu.memory_space<vmem>>, vector<2x32xf32>,
    %c1_i32_246 = arith.constant 1 : i32
    %998 = vector.broadcast %c1_i32_246 : i32 to vector<2x1xi32>
    %999 = arith.cmpi sgt, %1, %998 : vector<2x1xi32>
    %1000 = vector.extract_strided_slice %553 {offsets = [2, 128], sizes = [2, 128], strides = [1, 1]} : vector<16x256xf32> to vector<2x128xf32>
    %cst_247 = arith.constant dense<0.000000e+00> : vector<2x128xf32>
    %1001 = tpu.matmul %955, %555, %cst_247 {dimension_numbers = #tpu.dot_dimension_numbers<[1], [0], [0], [1], [0, 0, 1, 1], [], []>} : vector<2x32xf32>, vector<32x128xf32>, vector<2x128xf32> -> vector<2x128xf32>
    %1002 = arith.addf %1000, %1001 : vector<2x128xf32>
    %1003 = vector.extract_strided_slice %1002 {offsets = [0, 0], sizes = [2, 96], strides = [1, 1]} : vector<2x128xf32> to vector<2x96xf32>
    %cst_248 = arith.constant 0.000000e+00 : f32
    %1004 = vector.broadcast %cst_248 : f32 to vector<2x96xf32>
    %1005 = arith.subf %1004, %1003 : vector<2x96xf32>
    %1006 = math.exp %1005 : vector<2x96xf32>
    %cst_249 = arith.constant 1.000000e+00 : f32
    %1007 = vector.broadcast %cst_249 : f32 to vector<2x96xf32>
    %1008 = arith.addf %1007, %1006 : vector<2x96xf32>
    %cst_250 = arith.constant 1.000000e+00 : f32
    %1009 = vector.broadcast %cst_250 : f32 to vector<2x96xf32>
    %1010 = arith.divf %1009, %1008 : vector<2x96xf32>
    %1011 = vector.extract_strided_slice %1010 {offsets = [0, 0], sizes = [2, 32], strides = [1, 1]} : vector<2x96xf32> to vector<2x32xf32>
    %1012 = vector.extract_strided_slice %1010 {offsets = [0, 32], sizes = [2, 32], strides = [1, 1]} : vector<2x96xf32> to vector<2x32xf32>
    %1013 = vector.extract_strided_slice %1010 {offsets = [0, 64], sizes = [2, 32], strides = [1, 1]} : vector<2x96xf32> to vector<2x32xf32>
    %1014 = vector.extract_strided_slice %1002 {offsets = [0, 96], sizes = [2, 32], strides = [1, 1]} : vector<2x128xf32> to vector<2x32xf32>
    %1015 = math.tanh %1014 : vector<2x32xf32>
    %1016 = arith.mulf %1012, %958 : vector<2x32xf32>
    %1017 = arith.mulf %1011, %1015 : vector<2x32xf32>
    %1018 = arith.addf %1016, %1017 : vector<2x32xf32>
    %1019 = math.tanh %1018 : vector<2x32xf32>
    %1020 = arith.mulf %1013, %1019 : vector<2x32xf32>
    %1021 = vector.shape_cast %999 : vector<2x1xi1> to vector<2x1xi1>
    %1022 = vector.broadcast %1021 : vector<2x1xi1> to vector<2x32xi1>
    %1023 = arith.select %1022, %1020, %955 : vector<2x32xi1>, vector<2x32xf32>
    %1024 = vector.shape_cast %999 : vector<2x1xi1> to vector<2x1xi1>
    %1025 = vector.broadcast %1024 : vector<2x1xi1> to vector<2x32xi1>
    %1026 = arith.select %1025, %1018, %958 : vector<2x32xi1>, vector<2x32xf32>
    %cst_251 = arith.constant 0.000000e+00 : f32
    %1027 = vector.shape_cast %999 : vector<2x1xi1> to vector<2x1xi1>
    %1028 = vector.broadcast %1027 : vector<2x1xi1> to vector<2x32xi1>
    %1029 = vector.broadcast %cst_251 : f32 to vector<2x32xf32>
    %1030 = arith.select %1028, %1020, %1029 : vector<2x32xi1>, vector<2x32xf32>
    %c2_252 = arith.constant 2 : index
    %c0_253 = arith.constant 0 : index
    %1031 = vector.load %arg26[%c2_252, %c0_253] : memref<16x32xf32, #tpu.memory_space<vmem>>, vector<2x32xf32>
    tpu.vector_store %arg26[%c2_252, %c0_253], %1030 {strides = array<i32>} : memref<16x32xf32, #tpu.memory_space<vmem>>, vector<2x32xf32>,
    %c7_i32_254 = arith.constant 7 : i32
    %1032 = vector.broadcast %c7_i32_254 : i32 to vector<2x1xi32>
    %1033 = arith.cmpi sgt, %1, %1032 : vector<2x1xi32>
    %1034 = vector.extract_strided_slice %553 {offsets = [14, 0], sizes = [2, 128], strides = [1, 1]} : vector<16x256xf32> to vector<2x128xf32>
    %cst_255 = arith.constant dense<0.000000e+00> : vector<2x128xf32>
    %1035 = tpu.matmul %989, %554, %cst_255 {dimension_numbers = #tpu.dot_dimension_numbers<[1], [0], [0], [1], [0, 0, 1, 1], [], []>} : vector<2x32xf32>, vector<32x128xf32>, vector<2x128xf32> -> vector<2x128xf32>
    %1036 = arith.addf %1034, %1035 : vector<2x128xf32>
    %1037 = vector.extract_strided_slice %1036 {offsets = [0, 0], sizes = [2, 96], strides = [1, 1]} : vector<2x128xf32> to vector<2x96xf32>
    %cst_256 = arith.constant 0.000000e+00 : f32
    %1038 = vector.broadcast %cst_256 : f32 to vector<2x96xf32>
    %1039 = arith.subf %1038, %1037 : vector<2x96xf32>
    %1040 = math.exp %1039 : vector<2x96xf32>
    %cst_257 = arith.constant 1.000000e+00 : f32
    %1041 = vector.broadcast %cst_257 : f32 to vector<2x96xf32>
    %1042 = arith.addf %1041, %1040 : vector<2x96xf32>
    %cst_258 = arith.constant 1.000000e+00 : f32
    %1043 = vector.broadcast %cst_258 : f32 to vector<2x96xf32>
    %1044 = arith.divf %1043, %1042 : vector<2x96xf32>
    %1045 = vector.extract_strided_slice %1044 {offsets = [0, 0], sizes = [2, 32], strides = [1, 1]} : vector<2x96xf32> to vector<2x32xf32>
    %1046 = vector.extract_strided_slice %1044 {offsets = [0, 32], sizes = [2, 32], strides = [1, 1]} : vector<2x96xf32> to vector<2x32xf32>
    %1047 = vector.extract_strided_slice %1044 {offsets = [0, 64], sizes = [2, 32], strides = [1, 1]} : vector<2x96xf32> to vector<2x32xf32>
    %1048 = vector.extract_strided_slice %1036 {offsets = [0, 96], sizes = [2, 32], strides = [1, 1]} : vector<2x128xf32> to vector<2x32xf32>
    %1049 = math.tanh %1048 : vector<2x32xf32>
    %1050 = arith.mulf %1046, %992 : vector<2x32xf32>
    %1051 = arith.mulf %1045, %1049 : vector<2x32xf32>
    %1052 = arith.addf %1050, %1051 : vector<2x32xf32>
    %1053 = math.tanh %1052 : vector<2x32xf32>
    %1054 = arith.mulf %1047, %1053 : vector<2x32xf32>
    %cst_259 = arith.constant 0.000000e+00 : f32
    %1055 = vector.shape_cast %1033 : vector<2x1xi1> to vector<2x1xi1>
    %1056 = vector.broadcast %1055 : vector<2x1xi1> to vector<2x32xi1>
    %1057 = vector.broadcast %cst_259 : f32 to vector<2x32xf32>
    %1058 = arith.select %1056, %1054, %1057 : vector<2x32xi1>, vector<2x32xf32>
    %c14_260 = arith.constant 14 : index
    %c0_261 = arith.constant 0 : index
    %1059 = vector.load %arg25[%c14_260, %c0_261] : memref<16x32xf32, #tpu.memory_space<vmem>>, vector<2x32xf32>
    tpu.vector_store %arg25[%c14_260, %c0_261], %1058 {strides = array<i32>} : memref<16x32xf32, #tpu.memory_space<vmem>>, vector<2x32xf32>,
    %c0_i32_262 = arith.constant 0 : i32
    %1060 = vector.broadcast %c0_i32_262 : i32 to vector<2x1xi32>
    %1061 = arith.cmpi sgt, %1, %1060 : vector<2x1xi32>
    %1062 = vector.extract_strided_slice %553 {offsets = [0, 128], sizes = [2, 128], strides = [1, 1]} : vector<16x256xf32> to vector<2x128xf32>
    %cst_263 = arith.constant dense<0.000000e+00> : vector<2x128xf32>
    %1063 = tpu.matmul %1023, %555, %cst_263 {dimension_numbers = #tpu.dot_dimension_numbers<[1], [0], [0], [1], [0, 0, 1, 1], [], []>} : vector<2x32xf32>, vector<32x128xf32>, vector<2x128xf32> -> vector<2x128xf32>
    %1064 = arith.addf %1062, %1063 : vector<2x128xf32>
    %1065 = vector.extract_strided_slice %1064 {offsets = [0, 0], sizes = [2, 96], strides = [1, 1]} : vector<2x128xf32> to vector<2x96xf32>
    %cst_264 = arith.constant 0.000000e+00 : f32
    %1066 = vector.broadcast %cst_264 : f32 to vector<2x96xf32>
    %1067 = arith.subf %1066, %1065 : vector<2x96xf32>
    %1068 = math.exp %1067 : vector<2x96xf32>
    %cst_265 = arith.constant 1.000000e+00 : f32
    %1069 = vector.broadcast %cst_265 : f32 to vector<2x96xf32>
    %1070 = arith.addf %1069, %1068 : vector<2x96xf32>
    %cst_266 = arith.constant 1.000000e+00 : f32
    %1071 = vector.broadcast %cst_266 : f32 to vector<2x96xf32>
    %1072 = arith.divf %1071, %1070 : vector<2x96xf32>
    %1073 = vector.extract_strided_slice %1072 {offsets = [0, 0], sizes = [2, 32], strides = [1, 1]} : vector<2x96xf32> to vector<2x32xf32>
    %1074 = vector.extract_strided_slice %1072 {offsets = [0, 32], sizes = [2, 32], strides = [1, 1]} : vector<2x96xf32> to vector<2x32xf32>
    %1075 = vector.extract_strided_slice %1072 {offsets = [0, 64], sizes = [2, 32], strides = [1, 1]} : vector<2x96xf32> to vector<2x32xf32>
    %1076 = vector.extract_strided_slice %1064 {offsets = [0, 96], sizes = [2, 32], strides = [1, 1]} : vector<2x128xf32> to vector<2x32xf32>
    %1077 = math.tanh %1076 : vector<2x32xf32>
    %1078 = arith.mulf %1074, %1026 : vector<2x32xf32>
    %1079 = arith.mulf %1073, %1077 : vector<2x32xf32>
    %1080 = arith.addf %1078, %1079 : vector<2x32xf32>
    %1081 = math.tanh %1080 : vector<2x32xf32>
    %1082 = arith.mulf %1075, %1081 : vector<2x32xf32>
    %cst_267 = arith.constant 0.000000e+00 : f32
    %1083 = vector.shape_cast %1061 : vector<2x1xi1> to vector<2x1xi1>
    %1084 = vector.broadcast %1083 : vector<2x1xi1> to vector<2x32xi1>
    %1085 = vector.broadcast %cst_267 : f32 to vector<2x32xf32>
    %1086 = arith.select %1084, %1082, %1085 : vector<2x32xi1>, vector<2x32xf32>
    %c0_268 = arith.constant 0 : index
    %c0_269 = arith.constant 0 : index
    %1087 = vector.load %arg26[%c0_268, %c0_269] : memref<16x32xf32, #tpu.memory_space<vmem>>, vector<2x32xf32>
    tpu.vector_store %arg26[%c0_268, %c0_269], %1086 {strides = array<i32>} : memref<16x32xf32, #tpu.memory_space<vmem>>, vector<2x32xf32>,
    %c0_270 = arith.constant 0 : index
    %c0_271 = arith.constant 0 : index
    %1088 = vector.load %arg25[%c0_270, %c0_271] : memref<16x32xf32, #tpu.memory_space<vmem>>, vector<16x32xf32>
    %c0_272 = arith.constant 0 : index
    %c0_273 = arith.constant 0 : index
    %1089 = vector.load %arg26[%c0_272, %c0_273] : memref<16x32xf32, #tpu.memory_space<vmem>>, vector<16x32xf32>
    %c0_274 = arith.constant 0 : index
    %c0_275 = arith.constant 0 : index
    %1090 = vector.load %arg4[%c0_274, %c0_275] : memref<16x1xi32, #tpu.memory_space<vmem>>, vector<16x1xi32>
    %c0_i32_276 = arith.constant 0 : i32
    %1091 = vector.broadcast %c0_i32_276 : i32 to vector<16x1xi32>
    %1092 = arith.cmpi sgt, %1090, %1091 : vector<16x1xi32>
    %1093 = vector.shape_cast %1092 : vector<16x1xi1> to vector<16x1xi1>
    %1094 = vector.broadcast %1093 : vector<16x1xi1> to vector<16x32xi1>
    %1095 = vector.shape_cast %2 : vector<1x32xf32> to vector<1x32xf32>
    %1096 = vector.broadcast %1095 : vector<1x32xf32> to vector<16x32xf32>
    %1097 = arith.select %1094, %1096, %1088 : vector<16x32xi1>, vector<16x32xf32>
    %c0_277 = arith.constant 0 : index
    %c0_278 = arith.constant 0 : index
    %1098 = vector.load %arg8[%c0_277, %c0_278] : memref<16x16xf32, #tpu.memory_space<vmem>>, vector<16x16xf32>
    %cst_279 = arith.constant dense<0.000000e+00> : vector<16x32xf32>
    %1099 = tpu.matmul %1098, %1089, %cst_279 {dimension_numbers = #tpu.dot_dimension_numbers<[1], [0], [0], [1], [0, 0, 1, 1], [], []>} : vector<16x16xf32>, vector<16x32xf32>, vector<16x32xf32> -> vector<16x32xf32>
    %c0_280 = arith.constant 0 : index
    %c0_281 = arith.constant 0 : index
    %1100 = vector.load %arg5[%c0_280, %c0_281] : memref<16x1xi32, #tpu.memory_space<vmem>>, vector<16x1xi32>
    %c0_i32_282 = arith.constant 0 : i32
    %1101 = vector.broadcast %c0_i32_282 : i32 to vector<16x1xi32>
    %1102 = arith.cmpi sgt, %1100, %1101 : vector<16x1xi32>
    %1103 = vector.shape_cast %1102 : vector<16x1xi1> to vector<16x1xi1>
    %1104 = vector.broadcast %1103 : vector<16x1xi1> to vector<16x32xi1>
    %1105 = vector.shape_cast %2 : vector<1x32xf32> to vector<1x32xf32>
    %1106 = vector.broadcast %1105 : vector<1x32xf32> to vector<16x32xf32>
    %1107 = arith.select %1104, %1106, %1099 : vector<16x32xi1>, vector<16x32xf32>
    %c0_283 = arith.constant 0 : index
    %c0_284 = arith.constant 0 : index
    %1108 = vector.load %arg18[%c0_283, %c0_284] : memref<32x128xf32, #tpu.memory_space<vmem>>, vector<32x128xf32>
    %cst_285 = arith.constant dense<0.000000e+00> : vector<16x128xf32>
    %1109 = tpu.matmul %1097, %1108, %cst_285 {dimension_numbers = #tpu.dot_dimension_numbers<[1], [0], [0], [1], [0, 0, 1, 1], [], []>} : vector<16x32xf32>, vector<32x128xf32>, vector<16x128xf32> -> vector<16x128xf32>
    %c0_286 = arith.constant 0 : index
    %c0_287 = arith.constant 0 : index
    %1110 = vector.load %arg19[%c0_286, %c0_287] : memref<24x128xf32, #tpu.memory_space<vmem>>, vector<24x128xf32>
    %cst_288 = arith.constant dense<0.000000e+00> : vector<16x128xf32>
    %1111 = tpu.matmul %0, %1110, %cst_288 {dimension_numbers = #tpu.dot_dimension_numbers<[1], [0], [0], [1], [0, 0, 1, 1], [], []>} : vector<16x24xf32>, vector<24x128xf32>, vector<16x128xf32> -> vector<16x128xf32>
    %1112 = arith.addf %1109, %1111 : vector<16x128xf32>
    %c0_289 = arith.constant 0 : index
    %c0_290 = arith.constant 0 : index
    %1113 = vector.load %arg20[%c0_289, %c0_290] : memref<32x128xf32, #tpu.memory_space<vmem>>, vector<32x128xf32>
    %cst_291 = arith.constant dense<0.000000e+00> : vector<16x128xf32>
    %1114 = tpu.matmul %1107, %1113, %cst_291 {dimension_numbers = #tpu.dot_dimension_numbers<[1], [0], [0], [1], [0, 0, 1, 1], [], []>} : vector<16x32xf32>, vector<32x128xf32>, vector<16x128xf32> -> vector<16x128xf32>
    %1115 = arith.addf %1112, %1114 : vector<16x128xf32>
    %c0_292 = arith.constant 0 : index
    %c0_293 = arith.constant 0 : index
    %1116 = vector.load %arg21[%c0_292, %c0_293] : memref<1x128xf32, #tpu.memory_space<vmem>>, vector<1x128xf32>
    %1117 = vector.broadcast %1116 : vector<1x128xf32> to vector<16x128xf32>
    %1118 = arith.addf %1115, %1117 : vector<16x128xf32>
    %1119 = math.tanh %1118 : vector<16x128xf32>
    %c0_294 = arith.constant 0 : index
    %c0_295 = arith.constant 0 : index
    %1120 = vector.load %arg6[%c0_294, %c0_295] : memref<16x1xi32, #tpu.memory_space<vmem>>, vector<16x1xi32>
    %c0_296 = arith.constant 0 : index
    %c0_297 = arith.constant 0 : index
    %1121 = vector.load %arg7[%c0_296, %c0_297] : memref<16x1xi32, #tpu.memory_space<vmem>>, vector<16x1xi32>
    %c0_i32_298 = arith.constant 0 : i32
    %1122 = vector.broadcast %c0_i32_298 : i32 to vector<16x1xi32>
    %1123 = arith.cmpi sgt, %1121, %1122 : vector<16x1xi32>
    %c0_i32_299 = arith.constant 0 : i32
    %1124 = vector.broadcast %c0_i32_299 : i32 to vector<16x1xi32>
    %1125 = arith.cmpi eq, %1120, %1124 : vector<16x1xi32>
    %1126 = arith.andi %1125, %1123 : vector<16x1xi1>
    %cst_300 = arith.constant 0xFF800000 : f32
    %1127 = vector.shape_cast %1126 : vector<16x1xi1> to vector<16x1xi1>
    %1128 = vector.broadcast %1127 : vector<16x1xi1> to vector<16x128xi1>
    %1129 = vector.broadcast %cst_300 : f32 to vector<16x128xf32>
    %1130 = arith.select %1128, %1119, %1129 : vector<16x128xi1>, vector<16x128xf32>
    %cst_301 = arith.constant dense<0xFF800000> : vector<128xf32>
    %1131 = vector.multi_reduction <maximumf>, %1130, %cst_301 [0] : vector<16x128xf32> to vector<128xf32>
    %1132 = vector.shape_cast %1131 : vector<128xf32> to vector<1x128xf32>
    %c0_302 = arith.constant 0 : index
    %c0_303 = arith.constant 0 : index
    %1133 = vector.load %arg22[%c0_302, %c0_303] : memref<2x128xf32, #tpu.memory_space<vmem>>, vector<1x128xf32>
    tpu.vector_store %arg22[%c0_302, %c0_303], %1132 {strides = array<i32>} : memref<2x128xf32, #tpu.memory_space<vmem>>, vector<1x128xf32>,
    %c1_i32_304 = arith.constant 1 : i32
    %1134 = vector.broadcast %c1_i32_304 : i32 to vector<16x1xi32>
    %1135 = arith.cmpi eq, %1120, %1134 : vector<16x1xi32>
    %1136 = arith.andi %1135, %1123 : vector<16x1xi1>
    %cst_305 = arith.constant 0xFF800000 : f32
    %1137 = vector.shape_cast %1136 : vector<16x1xi1> to vector<16x1xi1>
    %1138 = vector.broadcast %1137 : vector<16x1xi1> to vector<16x128xi1>
    %1139 = vector.broadcast %cst_305 : f32 to vector<16x128xf32>
    %1140 = arith.select %1138, %1119, %1139 : vector<16x128xi1>, vector<16x128xf32>
    %cst_306 = arith.constant dense<0xFF800000> : vector<128xf32>
    %1141 = vector.multi_reduction <maximumf>, %1140, %cst_306 [0] : vector<16x128xf32> to vector<128xf32>
    %1142 = vector.shape_cast %1141 : vector<128xf32> to vector<1x128xf32>
    %c1 = arith.constant 1 : index
    %c0_307 = arith.constant 0 : index
    %1143 = vector.load %arg22[%c1, %c0_307] : memref<2x128xf32, #tpu.memory_space<vmem>>, vector<1x128xf32>
    tpu.vector_store %arg22[%c1, %c0_307], %1142 {strides = array<i32>} : memref<2x128xf32, #tpu.memory_space<vmem>>, vector<1x128xf32>,
    return
  }
  func.func @transform_0(%arg0: i32) -> (i32, i32) {
    %c0_i32 = arith.constant 0 : i32
    %c0_i32_0 = arith.constant 0 : i32
    %c0_i32_1 = arith.constant 0 : i32
    return %c0_i32, %c0_i32_0 : i32, i32
  }
  func.func @transform_1(%arg0: i32) -> (i32, i32) {
    %c0_i32 = arith.constant 0 : i32
    %c0_i32_0 = arith.constant 0 : i32
    %c0_i32_1 = arith.constant 0 : i32
    return %c0_i32, %c0_i32_0 : i32, i32
  }
  func.func @transform_2(%arg0: i32) -> (i32, i32) {
    %c0_i32 = arith.constant 0 : i32
    %c0_i32_0 = arith.constant 0 : i32
    %c0_i32_1 = arith.constant 0 : i32
    return %c0_i32, %c0_i32_0 : i32, i32
  }
  func.func @transform_3(%arg0: i32) -> (i32, i32) {
    %c0_i32 = arith.constant 0 : i32
    %c0_i32_0 = arith.constant 0 : i32
    %c0_i32_1 = arith.constant 0 : i32
    return %c0_i32, %c0_i32_0 : i32, i32
  }
  func.func @transform_4(%arg0: i32) -> (i32, i32) {
    %c0_i32 = arith.constant 0 : i32
    %c0_i32_0 = arith.constant 0 : i32
    %c0_i32_1 = arith.constant 0 : i32
    return %c0_i32, %c0_i32_0 : i32, i32
  }
  func.func @transform_5(%arg0: i32) -> (i32, i32) {
    %c0_i32 = arith.constant 0 : i32
    %c0_i32_0 = arith.constant 0 : i32
    %c0_i32_1 = arith.constant 0 : i32
    return %c0_i32, %c0_i32_0 : i32, i32
  }
  func.func @transform_6(%arg0: i32) -> (i32, i32) {
    %c0_i32 = arith.constant 0 : i32
    %c0_i32_0 = arith.constant 0 : i32
    %c0_i32_1 = arith.constant 0 : i32
    return %c0_i32, %c0_i32_0 : i32, i32
  }
  func.func @transform_7(%arg0: i32) -> (i32, i32) {
    %c0_i32 = arith.constant 0 : i32
    %c0_i32_0 = arith.constant 0 : i32
    %c0_i32_1 = arith.constant 0 : i32
    return %c0_i32, %c0_i32_0 : i32, i32
  }
  func.func @transform_8(%arg0: i32) -> (i32, i32) {
    %c0_i32 = arith.constant 0 : i32
    %c0_i32_0 = arith.constant 0 : i32
    %c0_i32_1 = arith.constant 0 : i32
    return %c0_i32, %c0_i32_0 : i32, i32
  }
  func.func @transform_9(%arg0: i32) -> (i32, i32) {
    %c0_i32 = arith.constant 0 : i32
    %c0_i32_0 = arith.constant 0 : i32
    %c0_i32_1 = arith.constant 0 : i32
    return %c0_i32, %c0_i32_0 : i32, i32
  }
  func.func @transform_10(%arg0: i32) -> (i32, i32) {
    %c0_i32 = arith.constant 0 : i32
    %c0_i32_0 = arith.constant 0 : i32
    %c0_i32_1 = arith.constant 0 : i32
    return %c0_i32, %c0_i32_0 : i32, i32
  }
  func.func @transform_11(%arg0: i32) -> (i32, i32) {
    %c0_i32 = arith.constant 0 : i32
    %c0_i32_0 = arith.constant 0 : i32
    %c0_i32_1 = arith.constant 0 : i32
    return %c0_i32, %c0_i32_0 : i32, i32
  }
  func.func @transform_12(%arg0: i32) -> (i32, i32) {
    %c0_i32 = arith.constant 0 : i32
    %c0_i32_0 = arith.constant 0 : i32
    %c0_i32_1 = arith.constant 0 : i32
    return %c0_i32, %c0_i32_0 : i32, i32
  }
  func.func @transform_13(%arg0: i32) -> (i32, i32) {
    %c0_i32 = arith.constant 0 : i32
    %c0_i32_0 = arith.constant 0 : i32
    %c0_i32_1 = arith.constant 0 : i32
    return %c0_i32, %c0_i32_0 : i32, i32
  }
  func.func @transform_14(%arg0: i32) -> (i32, i32) {
    %c0_i32 = arith.constant 0 : i32
    %c0_i32_0 = arith.constant 0 : i32
    %c0_i32_1 = arith.constant 0 : i32
    return %c0_i32, %c0_i32_0 : i32, i32
  }
  func.func @transform_15(%arg0: i32) -> (i32, i32) {
    %c0_i32 = arith.constant 0 : i32
    %c0_i32_0 = arith.constant 0 : i32
    %c0_i32_1 = arith.constant 0 : i32
    return %c0_i32, %c0_i32_0 : i32, i32
  }
  func.func @transform_16(%arg0: i32) -> (i32, i32) {
    %c0_i32 = arith.constant 0 : i32
    %c0_i32_0 = arith.constant 0 : i32
    %c0_i32_1 = arith.constant 0 : i32
    return %c0_i32, %c0_i32_0 : i32, i32
  }
  func.func @transform_17(%arg0: i32) -> (i32, i32) {
    %c0_i32 = arith.constant 0 : i32
    %c0_i32_0 = arith.constant 0 : i32
    %c0_i32_1 = arith.constant 0 : i32
    return %c0_i32, %c0_i32_0 : i32, i32
  }
  func.func @transform_18(%arg0: i32) -> (i32, i32) {
    %c0_i32 = arith.constant 0 : i32
    %c0_i32_0 = arith.constant 0 : i32
    %c0_i32_1 = arith.constant 0 : i32
    return %c0_i32, %c0_i32_0 : i32, i32
  }
  func.func @transform_19(%arg0: i32) -> (i32, i32) {
    %c0_i32 = arith.constant 0 : i32
    %c0_i32_0 = arith.constant 0 : i32
    %c0_i32_1 = arith.constant 0 : i32
    return %c0_i32, %c0_i32_0 : i32, i32
  }
  func.func @transform_20(%arg0: i32) -> (i32, i32) {
    %c0_i32 = arith.constant 0 : i32
    %c0_i32_0 = arith.constant 0 : i32
    %c0_i32_1 = arith.constant 0 : i32
    return %c0_i32, %c0_i32_0 : i32, i32
  }
  func.func @transform_21(%arg0: i32) -> (i32, i32) {
    %c0_i32 = arith.constant 0 : i32
    %c0_i32_0 = arith.constant 0 : i32
    %c0_i32_1 = arith.constant 0 : i32
    return %c0_i32, %c0_i32_0 : i32, i32
  }
}

</mosaic_0001>

<llo_original>
// kernel: scrcnn_forward.1
$region0: #{scrcnn_forward.1}
  #allocation0 [shape = 'u32[]', space=smem, size = 0x4, offset = 0x4, fixed_abs, tag = 'smem constant byte address 0x4 - core index']
  #allocation1 [shape = 'u32[144,128]{1,0:T(1,128)}', space=vmem, size = 0x12000, scoped, tag = 'internal scratch']
  #allocation2 [shape = 'f32[16,32]{1,0:T(8,128)}', space=vmem, size = 0x2000, scoped, tag = 'scratch operand']
  #allocation3 [shape = 'f32[16,32]{1,0:T(8,128)}', space=vmem, size = 0x2000, scoped, tag = 'scratch operand']
  #allocation4 [shape = 'f32[16,32]{1,0:T(8,128)}', space=vmem, size = 0x2000, scoped, tag = 'scratch operand']
  #allocation5 [shape = 'f32[16,32]{1,0:T(8,128)}', space=vmem, size = 0x2000, scoped, tag = 'scratch operand']
  %s0 = inlined_call_operand.vmem [shape: f32[16,24], index: 0, kind: input, shape index: {}]
  %s1 = inlined_call_operand.vmem [shape: s32[2,1], index: 1, kind: input, shape index: {}]
  %s2 = inlined_call_operand.vmem [shape: f32[1,32], index: 2, kind: input, shape index: {}]
  %s3 = inlined_call_operand.vmem [shape: s32[16,1], index: 3, kind: input, shape index: {}]
  %s4 = inlined_call_operand.vmem [shape: s32[16,1], index: 4, kind: input, shape index: {}]
  %s5 = inlined_call_operand.vmem [shape: s32[16,1], index: 5, kind: input, shape index: {}]
  %s6 = inlined_call_operand.vmem [shape: s32[16,1], index: 6, kind: input, shape index: {}]
  %s7 = inlined_call_operand.vmem [shape: f32[16,16], index: 7, kind: input, shape index: {}]
  %s8 = inlined_call_operand.vmem [shape: f32[24,256], index: 8, kind: input, shape index: {}]
  %s9 = inlined_call_operand.vmem [shape: f32[32,128], index: 9, kind: input, shape index: {}]
  %s10 = inlined_call_operand.vmem [shape: f32[32,128], index: 10, kind: input, shape index: {}]
  %s11 = inlined_call_operand.vmem [shape: f32[1,256], index: 11, kind: input, shape index: {}]
  %s12 = inlined_call_operand.vmem [shape: f32[32,256], index: 12, kind: input, shape index: {}]
  %s13 = inlined_call_operand.vmem [shape: f32[32,256], index: 13, kind: input, shape index: {}]
  %s14 = inlined_call_operand.vmem [shape: f32[32,128], index: 14, kind: input, shape index: {}]
  %s15 = inlined_call_operand.vmem [shape: f32[32,128], index: 15, kind: input, shape index: {}]
  %s16 = inlined_call_operand.vmem [shape: f32[1,256], index: 16, kind: input, shape index: {}]
  %s17 = inlined_call_operand.vmem [shape: f32[32,128], index: 17, kind: input, shape index: {}]
  %s18 = inlined_call_operand.vmem [shape: f32[24,128], index: 18, kind: input, shape index: {}]
  %s19 = inlined_call_operand.vmem [shape: f32[32,128], index: 19, kind: input, shape index: {}]
  %s20 = inlined_call_operand.vmem [shape: f32[1,128], index: 20, kind: input, shape index: {}]
  %s21 = inlined_call_operand.vmem [shape: f32[2,128], index: 21, kind: output, shape index: {}]
  %s22 = sld [smem:[#allocation0]]
  $region94: #{scrcnn_forward.1} parent=0
    _
  %s24 = ssub.s32 1, %s22
  %s25 = scalar_select 0, %s24, %s22
  // Predicated region
  $region2: #{scrcnn_forward.1} parent=0 // pred_check
    _
  $region3: #{scrcnn_forward.1} parent=0 // pred_check_branch
    %27 = sbr.rel (0) target = $region5
  $region4: #{scrcnn_forward.1} parent=0 // pred_region
    _
  $region5: #{scrcnn_forward.1} parent=0 // pred_fallthru
    _
  // Predicated region
  $region6: #{scrcnn_forward.1} parent=0 // pred_check
    _
  $region7: #{scrcnn_forward.1} parent=0 // pred_check_branch
    %29 = sbr.rel (0) target = $region9
  $region8: #{scrcnn_forward.1} parent=0 // pred_region
    _
  $region9: #{scrcnn_forward.1} parent=0 // pred_fallthru
    _
  // Predicated region
  $region10: #{scrcnn_forward.1} parent=0 // pred_check
    _
  $region11: #{scrcnn_forward.1} parent=0 // pred_check_branch
    %31 = sbr.rel (0) target = $region13
  $region12: #{scrcnn_forward.1} parent=0 // pred_region
    _
  $region13: #{scrcnn_forward.1} parent=0 // pred_fallthru
    _
  // Predicated region
  $region14: #{scrcnn_forward.1} parent=0 // pred_check
    _
  $region15: #{scrcnn_forward.1} parent=0 // pred_check_branch
    %33 = sbr.rel (0) target = $region17
  $region16: #{scrcnn_forward.1} parent=0 // pred_region
    _
  $region17: #{scrcnn_forward.1} parent=0 // pred_fallthru
    _
  // Predicated region
  $region18: #{scrcnn_forward.1} parent=0 // pred_check
    _
  $region19: #{scrcnn_forward.1} parent=0 // pred_check_branch
    %35 = sbr.rel (0) target = $region21
  $region20: #{scrcnn_forward.1} parent=0 // pred_region
    _
  $region21: #{scrcnn_forward.1} parent=0 // pred_fallthru
    _
  // Predicated region
  $region22: #{scrcnn_forward.1} parent=0 // pred_check
    _
  $region23: #{scrcnn_forward.1} parent=0 // pred_check_branch
    %37 = sbr.rel (0) target = $region25
  $region24: #{scrcnn_forward.1} parent=0 // pred_region
    _
  $region25: #{scrcnn_forward.1} parent=0 // pred_fallthru
    _
  // Predicated region
  $region26: #{scrcnn_forward.1} parent=0 // pred_check
    _
  $region27: #{scrcnn_forward.1} parent=0 // pred_check_branch
    %39 = sbr.rel (0) target = $region29
  $region28: #{scrcnn_forward.1} parent=0 // pred_region
    _
  $region29: #{scrcnn_forward.1} parent=0 // pred_fallthru
    _
  // Predicated region
  $region30: #{scrcnn_forward.1} parent=0 // pred_check
    _
  $region31: #{scrcnn_forward.1} parent=0 // pred_check_branch
    %41 = sbr.rel (0) target = $region33
  $region32: #{scrcnn_forward.1} parent=0 // pred_region
    _
  $region33: #{scrcnn_forward.1} parent=0 // pred_fallthru
    _
  // Predicated region
  $region34: #{scrcnn_forward.1} parent=0 // pred_check
    _
  $region35: #{scrcnn_forward.1} parent=0 // pred_check_branch
    %43 = sbr.rel (0) target = $region37
  $region36: #{scrcnn_forward.1} parent=0 // pred_region
    _
  $region37: #{scrcnn_forward.1} parent=0 // pred_fallthru
    _
  // Predicated region
  $region38: #{scrcnn_forward.1} parent=0 // pred_check
    _
  $region39: #{scrcnn_forward.1} parent=0 // pred_check_branch
    %45 = sbr.rel (0) target = $region41
  $region40: #{scrcnn_forward.1} parent=0 // pred_region
    _
  $region41: #{scrcnn_forward.1} parent=0 // pred_fallthru
    _
  // Predicated region
  $region42: #{scrcnn_forward.1} parent=0 // pred_check
    _
  $region43: #{scrcnn_forward.1} parent=0 // pred_check_branch
    %47 = sbr.rel (0) target = $region45
  $region44: #{scrcnn_forward.1} parent=0 // pred_region
    _
  $region45: #{scrcnn_forward.1} parent=0 // pred_fallthru
    _
  // Predicated region
  $region46: #{scrcnn_forward.1} parent=0 // pred_check
    _
  $region47: #{scrcnn_forward.1} parent=0 // pred_check_branch
    %49 = sbr.rel (0) target = $region49
  $region48: #{scrcnn_forward.1} parent=0 // pred_region
    _
  $region49: #{scrcnn_forward.1} parent=0 // pred_fallthru
    _
  // Predicated region
  $region50: #{scrcnn_forward.1} parent=0 // pred_check
    _
  $region51: #{scrcnn_forward.1} parent=0 // pred_check_branch
    %51 = sbr.rel (0) target = $region53
  $region52: #{scrcnn_forward.1} parent=0 // pred_region
    _
  $region53: #{scrcnn_forward.1} parent=0 // pred_fallthru
    _
  // Predicated region
  $region54: #{scrcnn_forward.1} parent=0 // pred_check
    _
  $region55: #{scrcnn_forward.1} parent=0 // pred_check_branch
    %53 = sbr.rel (0) target = $region57
  $region56: #{scrcnn_forward.1} parent=0 // pred_region
    _
  $region57: #{scrcnn_forward.1} parent=0 // pred_fallthru
    _
  // Predicated region
  $region58: #{scrcnn_forward.1} parent=0 // pred_check
    _
  $region59: #{scrcnn_forward.1} parent=0 // pred_check_branch
    %55 = sbr.rel (0) target = $region61
  $region60: #{scrcnn_forward.1} parent=0 // pred_region
    _
  $region61: #{scrcnn_forward.1} parent=0 // pred_fallthru
    _
  // Predicated region
  $region62: #{scrcnn_forward.1} parent=0 // pred_check
    _
  $region63: #{scrcnn_forward.1} parent=0 // pred_check_branch
    %57 = sbr.rel (0) target = $region65
  $region64: #{scrcnn_forward.1} parent=0 // pred_region
    _
  $region65: #{scrcnn_forward.1} parent=0 // pred_fallthru
    _
  // Predicated region
  $region66: #{scrcnn_forward.1} parent=0 // pred_check
    _
  $region67: #{scrcnn_forward.1} parent=0 // pred_check_branch
    %59 = sbr.rel (0) target = $region69
  $region68: #{scrcnn_forward.1} parent=0 // pred_region
    _
  $region69: #{scrcnn_forward.1} parent=0 // pred_fallthru
    _
  // Predicated region
  $region70: #{scrcnn_forward.1} parent=0 // pred_check
    _
  $region71: #{scrcnn_forward.1} parent=0 // pred_check_branch
    %61 = sbr.rel (0) target = $region73
  $region72: #{scrcnn_forward.1} parent=0 // pred_region
    _
  $region73: #{scrcnn_forward.1} parent=0 // pred_fallthru
    _
  // Predicated region
  $region74: #{scrcnn_forward.1} parent=0 // pred_check
    _
  $region75: #{scrcnn_forward.1} parent=0 // pred_check_branch
    %63 = sbr.rel (0) target = $region77
  $region76: #{scrcnn_forward.1} parent=0 // pred_region
    _
  $region77: #{scrcnn_forward.1} parent=0 // pred_fallthru
    _
  // Predicated region
  $region78: #{scrcnn_forward.1} parent=0 // pred_check
    _
  $region79: #{scrcnn_forward.1} parent=0 // pred_check_branch
    %65 = sbr.rel (0) target = $region81
  $region80: #{scrcnn_forward.1} parent=0 // pred_region
    _
  $region81: #{scrcnn_forward.1} parent=0 // pred_fallthru
    _
  // Predicated region
  $region82: #{scrcnn_forward.1} parent=0 // pred_check
    _
  $region83: #{scrcnn_forward.1} parent=0 // pred_check_branch
    %67 = sbr.rel (0) target = $region85
  $region84: #{scrcnn_forward.1} parent=0 // pred_region
    _
  $region85: #{scrcnn_forward.1} parent=0 // pred_fallthru
    _
  %v68 = vld [vmem:[%s0] sm:$0xff]
  %v69 = vld [vmem:[%s0 + $0x8] sm:$0xff]
  %v70 = vld [vmem:[%s1] sm:$0x3]
  %v71 = vld [vmem:[%s2] sm:$0x1]
  %v73 = vlaneseq
  %v74 = vshrl.u32 %v73, 7
  %v75 = vsub.s32 0, %v74
  %v76 = vrot.slane %v71, %v75
  %v78 = vld [vmem:[%s8] sm:$0xff]
  %v79 = vld [vmem:[%s8 + $0x8] sm:$0xff]
  %v80 = vld [vmem:[%s8 + $0x10] sm:$0xff]
  %v81 = vld [vmem:[%s8 + $0x18] sm:$0xff]
  %v82 = vld [vmem:[%s8 + $0x20] sm:$0xff]
  %v83 = vld [vmem:[%s8 + $0x28] sm:$0xff]
  %v84 = vld [vmem:[%s11] sm:$0x3]
  %v86 = vlaneseq
  %v87 = vshrl.u32 %v86, 7
  %v88 = vsub.s32 0, %v87
  %v89 = vrot.slane %v84, %v88
  %v90 = vlaneseq
  %v91 = vshrl.u32 %v90, 7
  %v92 = vsub.s32 1, %v91
  %v93 = vrot.slane %v84, %v92
  %vm96 = vcmask 195584
  %v98 = vsel %vm96, %v68, 0
  %v101 = vsel %vm96, %v69, 0
  %103 = vmatprep.subr.mxu0 %v79
  %104 = vmatpush1.msra.mxu0 %v78
  %105 = vmatprep.subr.mxu0 %v81
  %106 = vmatpush1.msra.mxu0 %v80
  %107 = vmatprep.subr.mxu0 %v83
  %108 = vmatpush1.msra.mxu0 %v82
  %109 = vmatprep.subr.mxu0 0.0
  %110 = vmatpush1.msra.mxu0 0.0
  %111 = vmatprep.subr.mxu0 0.0
  %112 = vmatpush1.msra.mxu0 0.0
  %113 = vmatprep.subr.mxu0 0.0
  %114 = vmatpush1.msra.mxu0 0.0
  %115 = vmatprep.subr.mxu0 0.0
  %116 = vmatpush1.msra.mxu0 0.0
  %117 = vmatprep.subr.mxu0 0.0
  %118 = vmatpush1.msra.mxu0 0.0
  %119 = vmatprep.subr.mxu0 0.0
  %120 = vmatpush1.msra.mxu0 0.0
  %121 = vmatprep.subr.mxu0 0.0
  %122 = vmatpush1.msra.mxu0 0.0
  %123 = vmatprep.subr.mxu0 0.0
  %124 = vmatpush1.msra.mxu0 0.0
  %125 = vmatprep.subr.mxu0 0.0
  %126 = vmatpush1.msra.mxu0 0.0
  %127 = vmatprep.subr.mxu0 0.0
  %128 = vmatpush1.msra.mxu0 0.0
  %129 = vmatprep.subr.mxu0 0.0
  %130 = vmatpush1.msra.mxu0 0.0
  %131 = vmatprep.subr.mxu0 0.0
  %132 = vmatpush1.msra.mxu0 0.0
  %133 = vmatprep.subr.mxu0 0.0
  %134 = vmatpush1.msra.mxu0 0.0
  %135 = vmatprep.subr.mxu0 0.0
  %136 = vmatpush1.msra.mxu0 0.0
  %137 = vmatprep.subr.mxu0 0.0
  %138 = vmatpush1.msra.mxu0 0.0
  %139 = vmatprep.subr.mxu0 0.0
  %140 = vmatpush1.msra.mxu0 0.0
  %141 = vmatprep.subr.mxu0 0.0
  %142 = vmatpush1.msra.mxu0 0.0
  %143 = vmatprep.subr.mxu0 0.0
  %144 = vmatpush1.msra.mxu0 0.0
  %145 = vmatprep.subr.mxu0 0.0
  %146 = vmatpush1.msra.mxu0 0.0
  %147 = vmatprep.subr.mxu0 0.0
  %148 = vmatpush1.msra.mxu0 0.0
  %149 = vmatprep.subr.mxu0 0.0
  %150 = vmatpush1.msra.mxu0 0.0
  %151 = vmatprep.subr.mxu0 0.0
  %152 = vmatpush1.msra.mxu0 0.0
  %153 = vmatprep.subr.mxu0 0.0
  %154 = vmatpush1.msra.mxu0 0.0
  %155 = vmatprep.subr.mxu0 0.0
  %156 = vmatpush1.msra.mxu0 0.0
  %157 = vmatprep.subr.mxu0 0.0
  %158 = vmatpush1.msra.mxu0 0.0
  %159 = vmatprep.subr.mxu0 0.0
  %160 = vmatpush1.msra.mxu0 0.0
  %161 = vmatprep.subr.mxu0 0.0
  %162 = vmatpush1.msra.mxu0 0.0
  %163 = vmatprep.subr.mxu0 0.0
  %164 = vmatpush1.msra.mxu0 0.0
  %165 = vmatprep.subr.mxu0 0.0
  %166 = vmatpush1.msra.mxu0 0.0
  %167 = vmatprep.mubr.f32.mxu0 0.0
  %168 = vmatmul.mubr.f32.gmra.mrb[0].mxu0 %v98
  %v169 = vpop.f32.mrb[0].mxu0
  %v170 = vadd.f32 %v89, %v169
  %v171 = vpop.f32.mrb[0].mxu0
  %v172 = vadd.f32 %v93, %v171
  %173 = vmatprep.mubr.f32.mxu0 0.0
  %174 = vmatmul.mubr.f32.gmra.mrb[0].mxu0 %v101
  %v175 = vpop.f32.mrb[0].mxu0
  %v176 = vadd.f32 %v89, %v175
  %v177 = vpop.f32.mrb[0].mxu0
  %v178 = vadd.f32 %v93, %v177
  %179 = vdwg.mxu0
  %v180 = vld [vmem:[%s9] sm:$0xff]
  %v181 = vld [vmem:[%s9 + $0x8] sm:$0xff]
  %v182 = vld [vmem:[%s9 + $0x10] sm:$0xff]
  %v183 = vld [vmem:[%s9 + $0x18] sm:$0xff]
  %v184 = vld [vmem:[%s10] sm:$0xff]
  %v185 = vld [vmem:[%s10 + $0x8] sm:$0xff]
  %v186 = vld [vmem:[%s10 + $0x10] sm:$0xff]
  %v187 = vld [vmem:[%s10 + $0x18] sm:$0xff]
  %vm188 = vcmp.gt.s32.totalorder %v70, 0
  %vm189 = vcmask 261120
  %v190 = vsel %vm189, %v76, 0
  %192 = vmatprep.subr.mxu0 0.0
  %193 = vmatpush1.msra.mxu0 %v180
  %194 = vmatprep.subr.mxu0 0.0
  %195 = vmatpush1.msra.mxu0 %v181
  %196 = vmatprep.subr.mxu0 0.0
  %197 = vmatpush1.msra.mxu0 %v182
  %198 = vmatprep.subr.mxu0 0.0
  %199 = vmatpush1.msra.mxu0 %v183
  %200 = vmatprep.subr.mxu0 0.0
  %201 = vmatpush1.msra.mxu0 0.0
  %202 = vmatprep.subr.mxu0 0.0
  %203 = vmatpush1.msra.mxu0 0.0
  %204 = vmatprep.subr.mxu0 0.0
  %205 = vmatpush1.msra.mxu0 0.0
  %206 = vmatprep.subr.mxu0 0.0
  %207 = vmatpush1.msra.mxu0 0.0
  %208 = vmatprep.subr.mxu0 0.0
  %209 = vmatpush1.msra.mxu0 0.0
  %210 = vmatprep.subr.mxu0 0.0
  %211 = vmatpush1.msra.mxu0 0.0
  %212 = vmatprep.subr.mxu0 0.0
  %213 = vmatpush1.msra.mxu0 0.0
  %214 = vmatprep.subr.mxu0 0.0
  %215 = vmatpush1.msra.mxu0 0.0
  %216 = vmatprep.subr.mxu0 0.0
  %217 = vmatpush1.msra.mxu0 0.0
  %218 = vmatprep.subr.mxu0 0.0
  %219 = vmatpush1.msra.mxu0 0.0
  %220 = vmatprep.subr.mxu0 0.0
  %221 = vmatpush1.msra.mxu0 0.0
  %222 = vmatprep.subr.mxu0 0.0
  %223 = vmatpush1.msra.mxu0 0.0
  %224 = vmatprep.subr.mxu0 0.0
  %225 = vmatpush1.msra.mxu0 0.0
  %226 = vmatprep.subr.mxu0 0.0
  %227 = vmatpush1.msra.mxu0 0.0
  %228 = vmatprep.subr.mxu0 0.0
  %229 = vmatpush1.msra.mxu0 0.0
  %230 = vmatprep.subr.mxu0 0.0
  %231 = vmatpush1.msra.mxu0 0.0
  %232 = vmatprep.subr.mxu0 0.0
  %233 = vmatpush1.msra.mxu0 0.0
  %234 = vmatprep.subr.mxu0 0.0
  %235 = vmatpush1.msra.mxu0 0.0
  %236 = vmatprep.subr.mxu0 0.0
  %237 = vmatpush1.msra.mxu0 0.0
  %238 = vmatprep.subr.mxu0 0.0
  %239 = vmatpush1.msra.mxu0 0.0
  %240 = vmatprep.subr.mxu0 0.0
  %241 = vmatpush1.msra.mxu0 0.0
  %242 = vmatprep.subr.mxu0 0.0
  %243 = vmatpush1.msra.mxu0 0.0
  %244 = vmatprep.subr.mxu0 0.0
  %245 = vmatpush1.msra.mxu0 0.0
  %246 = vmatprep.subr.mxu0 0.0
  %247 = vmatpush1.msra.mxu0 0.0
  %248 = vmatprep.subr.mxu0 0.0
  %249 = vmatpush1.msra.mxu0 0.0
  %250 = vmatprep.subr.mxu0 0.0
  %251 = vmatpush1.msra.mxu0 0.0
  %252 = vmatprep.subr.mxu0 0.0
  %253 = vmatpush1.msra.mxu0 0.0
  %254 = vmatprep.subr.mxu0 0.0
  %255 = vmatpush1.msra.mxu0 0.0
  %256 = vmatprep.mubr.f32.mxu0 0.0
  %257 = vmatmul.mubr.f32.gmra.mrb[0].mxu0 %v190
  %v258 = vpop.f32.mrb[0].mxu0
  %v259 = vadd.f32 0.0, %v258
  %v260 = vpop.f32.mrb[0].mxu0
  %261 = vdwg.mxu0
  %v262 = vadd.f32 %v170, %v259
  %v263 = vsub.f32 0.0, %v262
  %v264 = vmul.f32 %v263, 1.442695
  %v265 = vpow.pop %v264
  %v266 = vadd.f32 %v265, 1.0
  %v267 = vrcp.pop %v266
  %v268 = vmul.f32 1.0, %v267
  %v269 = vtanh.pop %v262
  %270 = vrot.lane.b32.xlu0 %v76, 32
  %v271 = vpop.permute.xlu0 %270
  %v273 = vmul.f32 %v268, %v271
  %275 = vrot.lane.b32.xlu0 %v269, 32
  %v276 = vpop.permute.xlu0 %275
  %v278 = vmul.f32 %v268, %v276
  %280 = vrot.lane.b32.xlu0 %v278, 32
  %v281 = vpop.permute.xlu0 %280
  %v283 = vadd.f32 %v273, %v281
  %v284 = vtanh.pop %v283
  %286 = vrot.lane.b32.xlu0 %v284, 32
  %v287 = vpop.permute.xlu0 %286
  %v289 = vmul.f32 %v268, %v287
  %v290 = vsel %vm188, 1, 0
  %291 = vset.pattern.permute.xlu0 0
  %292 = vperm.xlu0 %291, %v290
  %v293 = vpop.permute.xlu0 %292
  %vm294 = vcmp.eq.s32.totalorder %v293, 1
  %295 = vrot.lane.b32.xlu0 %v76, 64
  %v296 = vpop.permute.xlu0 %295
  %v298 = vsel %vm294, %v289, %v296
  %v299 = vsel %vm294, %v283, %v271
  %v300 = vsel %vm294, %v289, 0.0
  %302 = vrot.lane.b32.xlu0 %v300, 64
  %v303 = vpop.permute.xlu0 %302
  %vm305 = vcmask 254976
  %306 = vst.msk [vmem:[#allocation2] sm:$0x3] %vm305, %v303
  %vm307 = vcmp.gt.s32.totalorder %v70, 7
  %308 = vmatprep.subr.mxu0 0.0
  %309 = vmatpush1.msra.mxu0 %v184
  %310 = vmatprep.subr.mxu0 0.0
  %311 = vmatpush1.msra.mxu0 %v185
  %312 = vmatprep.subr.mxu0 0.0
  %313 = vmatpush1.msra.mxu0 %v186
  %314 = vmatprep.subr.mxu0 0.0
  %315 = vmatpush1.msra.mxu0 %v187
  %316 = vmatprep.subr.mxu0 0.0
  %317 = vmatpush1.msra.mxu0 0.0
  %318 = vmatprep.subr.mxu0 0.0
  %319 = vmatpush1.msra.mxu0 0.0
  %320 = vmatprep.subr.mxu0 0.0
  %321 = vmatpush1.msra.mxu0 0.0
  %322 = vmatprep.subr.mxu0 0.0
  %323 = vmatpush1.msra.mxu0 0.0
  %324 = vmatprep.subr.mxu0 0.0
  %325 = vmatpush1.msra.mxu0 0.0
  %326 = vmatprep.subr.mxu0 0.0
  %327 = vmatpush1.msra.mxu0 0.0
  %328 = vmatprep.subr.mxu0 0.0
  %329 = vmatpush1.msra.mxu0 0.0
  %330 = vmatprep.subr.mxu0 0.0
  %331 = vmatpush1.msra.mxu0 0.0
  %332 = vmatprep.subr.mxu0 0.0
  %333 = vmatpush1.msra.mxu0 0.0
  %334 = vmatprep.subr.mxu0 0.0
  %335 = vmatpush1.msra.mxu0 0.0
  %336 = vmatprep.subr.mxu0 0.0
  %337 = vmatpush1.msra.mxu0 0.0
  %338 = vmatprep.subr.mxu0 0.0
  %339 = vmatpush1.msra.mxu0 0.0
  %340 = vmatprep.subr.mxu0 0.0
  %341 = vmatpush1.msra.mxu0 0.0
  %342 = vmatprep.subr.mxu0 0.0
  %343 = vmatpush1.msra.mxu0 0.0
  %344 = vmatprep.subr.mxu0 0.0
  %345 = vmatpush1.msra.mxu0 0.0
  %346 = vmatprep.subr.mxu0 0.0
  %347 = vmatpush1.msra.mxu0 0.0
  %348 = vmatprep.subr.mxu0 0.0
  %349 = vmatpush1.msra.mxu0 0.0
  %350 = vmatprep.subr.mxu0 0.0
  %351 = vmatpush1.msra.mxu0 0.0
  %352 = vmatprep.subr.mxu0 0.0
  %353 = vmatpush1.msra.mxu0 0.0
  %354 = vmatprep.subr.mxu0 0.0
  %355 = vmatpush1.msra.mxu0 0.0
  %356 = vmatprep.subr.mxu0 0.0
  %357 = vmatpush1.msra.mxu0 0.0
  %358 = vmatprep.subr.mxu0 0.0
  %359 = vmatpush1.msra.mxu0 0.0
  %360 = vmatprep.subr.mxu0 0.0
  %361 = vmatpush1.msra.mxu0 0.0
  %362 = vmatprep.subr.mxu0 0.0
  %363 = vmatpush1.msra.mxu0 0.0
  %364 = vmatprep.subr.mxu0 0.0
  %365 = vmatpush1.msra.mxu0 0.0
  %366 = vmatprep.subr.mxu0 0.0
  %367 = vmatpush1.msra.mxu0 0.0
  %368 = vmatprep.subr.mxu0 0.0
  %369 = vmatpush1.msra.mxu0 0.0
  %370 = vmatprep.subr.mxu0 0.0
  %371 = vmatpush1.msra.mxu0 0.0
  %372 = vmatprep.mubr.f32.mxu0 0.0
  %373 = vmatmul.mubr.f32.gmra.mrb[0].mxu0 %v190
  %v374 = vpop.f32.mrb[0].mxu0
  %v375 = vadd.f32 0.0, %v374
  %v376 = vpop.f32.mrb[0].mxu0
  %377 = vdwg.mxu0
  %v379 = vrot.slane %v375, 2
  %v381 = vadd.f32 %v178, %v379
  %v382 = vsub.f32 0.0, %v381
  %v383 = vmul.f32 %v382, 1.442695
  %v384 = vpow.pop %v383
  %v385 = vadd.f32 %v384, 1.0
  %v386 = vrcp.pop %v385
  %v387 = vmul.f32 1.0, %v386
  %v388 = vtanh.pop %v381
  %v389 = vmul.f32 %v387, %v271
  %391 = vrot.lane.b32.xlu0 %v388, 32
  %v392 = vpop.permute.xlu0 %391
  %v394 = vmul.f32 %v387, %v392
  %396 = vrot.lane.b32.xlu0 %v394, 32
  %v397 = vpop.permute.xlu0 %396
  %v399 = vadd.f32 %v389, %v397
  %v400 = vtanh.pop %v399
  %402 = vrot.lane.b32.xlu0 %v400, 32
  %v403 = vpop.permute.xlu0 %402
  %v405 = vmul.f32 %v387, %v403
  %v406 = vsel %vm307, 1, 0
  %407 = vset.pattern.permute.xlu0 0
  %408 = vperm.xlu0 %407, %v406
  %v409 = vpop.permute.xlu0 %408
  %vm410 = vcmp.eq.s32.totalorder %v409, 1
  %v412 = vrot.slane %v405, 6
  %413 = vrot.lane.b32.xlu0 %v412, 64
  %v414 = vpop.permute.xlu0 %413
  %v416 = vsel %vm410, %v414, %v76
  %v418 = vrot.slane %v399, 6
  %419 = vrot.lane.b32.xlu0 %v418, 96
  %v420 = vpop.permute.xlu0 %419
  %v422 = vsel %vm410, %v420, %v76
  %v423 = vsel %vm410, %v414, 0.0
  %424 = vst.msk [vmem:[#allocation3 + $0xe] sm:$0x3] %vm305, %v423
  %vm425 = vcmp.gt.s32.totalorder %v70, 1
  %427 = vrot.lane.b32.xlu0 %v298, 64
  %v428 = vpop.permute.xlu0 %427
  %v429 = vsel %vm189, %v428, 0
  %431 = vmatprep.subr.mxu0 0.0
  %432 = vmatpush1.msra.mxu0 %v180
  %433 = vmatprep.subr.mxu0 0.0
  %434 = vmatpush1.msra.mxu0 %v181
  %435 = vmatprep.subr.mxu0 0.0
  %436 = vmatpush1.msra.mxu0 %v182
  %437 = vmatprep.subr.mxu0 0.0
  %438 = vmatpush1.msra.mxu0 %v183
  %439 = vmatprep.subr.mxu0 0.0
  %440 = vmatpush1.msra.mxu0 0.0
  %441 = vmatprep.subr.mxu0 0.0
  %442 = vmatpush1.msra.mxu0 0.0
  %443 = vmatprep.subr.mxu0 0.0
  %444 = vmatpush1.msra.mxu0 0.0
  %445 = vmatprep.subr.mxu0 0.0
  %446 = vmatpush1.msra.mxu0 0.0
  %447 = vmatprep.subr.mxu0 0.0
  %448 = vmatpush1.msra.mxu0 0.0
  %449 = vmatprep.subr.mxu0 0.0
  %450 = vmatpush1.msra.mxu0 0.0
  %451 = vmatprep.subr.mxu0 0.0
  %452 = vmatpush1.msra.mxu0 0.0
  %453 = vmatprep.subr.mxu0 0.0
  %454 = vmatpush1.msra.mxu0 0.0
  %455 = vmatprep.subr.mxu0 0.0
  %456 = vmatpush1.msra.mxu0 0.0
  %457 = vmatprep.subr.mxu0 0.0
  %458 = vmatpush1.msra.mxu0 0.0
  %459 = vmatprep.subr.mxu0 0.0
  %460 = vmatpush1.msra.mxu0 0.0
  %461 = vmatprep.subr.mxu0 0.0
  %462 = vmatpush1.msra.mxu0 0.0
  %463 = vmatprep.subr.mxu0 0.0
  %464 = vmatpush1.msra.mxu0 0.0
  %465 = vmatprep.subr.mxu0 0.0
  %466 = vmatpush1.msra.mxu0 0.0
  %467 = vmatprep.subr.mxu0 0.0
  %468 = vmatpush1.msra.mxu0 0.0
  %469 = vmatprep.subr.mxu0 0.0
  %470 = vmatpush1.msra.mxu0 0.0
  %471 = vmatprep.subr.mxu0 0.0
  %472 = vmatpush1.msra.mxu0 0.0
  %473 = vmatprep.subr.mxu0 0.0
  %474 = vmatpush1.msra.mxu0 0.0
  %475 = vmatprep.subr.mxu0 0.0
  %476 = vmatpush1.msra.mxu0 0.0
  %477 = vmatprep.subr.mxu0 0.0
  %478 = vmatpush1.msra.mxu0 0.0
  %479 = vmatprep.subr.mxu0 0.0
  %480 = vmatpush1.msra.mxu0 0.0
  %481 = vmatprep.subr.mxu0 0.0
  %482 = vmatpush1.msra.mxu0 0.0
  %483 = vmatprep.subr.mxu0 0.0
  %484 = vmatpush1.msra.mxu0 0.0
  %485 = vmatprep.subr.mxu0 0.0
  %486 = vmatpush1.msra.mxu0 0.0
  %487 = vmatprep.subr.mxu0 0.0
  %488 = vmatpush1.msra.mxu0 0.0
  %489 = vmatprep.subr.mxu0 0.0
  %490 = vmatpush1.msra.mxu0 0.0
  %491 = vmatprep.subr.mxu0 0.0
  %492 = vmatpush1.msra.mxu0 0.0
  %493 = vmatprep.subr.mxu0 0.0
  %494 = vmatpush1.msra.mxu0 0.0
  %495 = vmatprep.mubr.f32.mxu0 0.0
  %496 = vmatmul.mubr.f32.gmra.mrb[0].mxu0 %v429
  %v497 = vpop.f32.mrb[0].mxu0
  %v498 = vadd.f32 0.0, %v497
  %v499 = vpop.f32.mrb[0].mxu0
  %500 = vdwg.mxu0
  %v502 = vrot.slane %v498, 6
  %v504 = vadd.f32 %v170, %v502
  %v505 = vsub.f32 0.0, %v504
  %v506 = vmul.f32 %v505, 1.442695
  %v507 = vpow.pop %v506
  %v508 = vadd.f32 %v507, 1.0
  %v509 = vrcp.pop %v508
  %v510 = vmul.f32 1.0, %v509
  %v511 = vtanh.pop %v504
  %v513 = vrot.slane %v299, 6
  %v515 = vmul.f32 %v510, %v513
  %517 = vrot.lane.b32.xlu0 %v511, 32
  %v518 = vpop.permute.xlu0 %517
  %v520 = vmul.f32 %v510, %v518
  %522 = vrot.lane.b32.xlu0 %v520, 32
  %v523 = vpop.permute.xlu0 %522
  %v525 = vadd.f32 %v515, %v523
  %v526 = vtanh.pop %v525
  %528 = vrot.lane.b32.xlu0 %v526, 32
  %v529 = vpop.permute.xlu0 %528
  %v531 = vmul.f32 %v510, %v529
  %v532 = vsel %vm425, 1, 0
  %533 = vset.pattern.permute.xlu0 0
  %534 = vperm.xlu0 %533, %v532
  %v535 = vpop.permute.xlu0 %534
  %vm536 = vcmp.eq.s32.totalorder %v535, 1
  %v538 = vrot.slane %v531, 2
  %539 = vrot.lane.b32.xlu0 %v538, 64
  %v540 = vpop.permute.xlu0 %539
  %v543 = vsel %vm536, %v540, %v428
  %v545 = vrot.slane %v525, 2
  %546 = vrot.lane.b32.xlu0 %v545, 96
  %v547 = vpop.permute.xlu0 %546
  %549 = vrot.lane.b32.xlu0 %v299, 96
  %v550 = vpop.permute.xlu0 %549
  %v552 = vsel %vm536, %v547, %v550
  %v553 = vsel %vm536, %v540, 0.0
  %554 = vst.msk [vmem:[#allocation2 + $0x2] sm:$0x3] %vm305, %v553
  %vm555 = vcmp.gt.s32.totalorder %v70, 6
  %v557 = vsel %vm189, %v416, 0
  %559 = vmatprep.subr.mxu0 0.0
  %560 = vmatpush1.msra.mxu0 %v184
  %561 = vmatprep.subr.mxu0 0.0
  %562 = vmatpush1.msra.mxu0 %v185
  %563 = vmatprep.subr.mxu0 0.0
  %564 = vmatpush1.msra.mxu0 %v186
  %565 = vmatprep.subr.mxu0 0.0
  %566 = vmatpush1.msra.mxu0 %v187
  %567 = vmatprep.subr.mxu0 0.0
  %568 = vmatpush1.msra.mxu0 0.0
  %569 = vmatprep.subr.mxu0 0.0
  %570 = vmatpush1.msra.mxu0 0.0
  %571 = vmatprep.subr.mxu0 0.0
  %572 = vmatpush1.msra.mxu0 0.0
  %573 = vmatprep.subr.mxu0 0.0
  %574 = vmatpush1.msra.mxu0 0.0
  %575 = vmatprep.subr.mxu0 0.0
  %576 = vmatpush1.msra.mxu0 0.0
  %577 = vmatprep.subr.mxu0 0.0
  %578 = vmatpush1.msra.mxu0 0.0
  %579 = vmatprep.subr.mxu0 0.0
  %580 = vmatpush1.msra.mxu0 0.0
  %581 = vmatprep.subr.mxu0 0.0
  %582 = vmatpush1.msra.mxu0 0.0
  %583 = vmatprep.subr.mxu0 0.0
  %584 = vmatpush1.msra.mxu0 0.0
  %585 = vmatprep.subr.mxu0 0.0
  %586 = vmatpush1.msra.mxu0 0.0
  %587 = vmatprep.subr.mxu0 0.0
  %588 = vmatpush1.msra.mxu0 0.0
  %589 = vmatprep.subr.mxu0 0.0
  %590 = vmatpush1.msra.mxu0 0.0
  %591 = vmatprep.subr.mxu0 0.0
  %592 = vmatpush1.msra.mxu0 0.0
  %593 = vmatprep.subr.mxu0 0.0
  %594 = vmatpush1.msra.mxu0 0.0
  %595 = vmatprep.subr.mxu0 0.0
  %596 = vmatpush1.msra.mxu0 0.0
  %597 = vmatprep.subr.mxu0 0.0
  %598 = vmatpush1.msra.mxu0 0.0
  %599 = vmatprep.subr.mxu0 0.0
  %600 = vmatpush1.msra.mxu0 0.0
  %601 = vmatprep.subr.mxu0 0.0
  %602 = vmatpush1.msra.mxu0 0.0
  %603 = vmatprep.subr.mxu0 0.0
  %604 = vmatpush1.msra.mxu0 0.0
  %605 = vmatprep.subr.mxu0 0.0
  %606 = vmatpush1.msra.mxu0 0.0
  %607 = vmatprep.subr.mxu0 0.0
  %608 = vmatpush1.msra.mxu0 0.0
  %609 = vmatprep.subr.mxu0 0.0
  %610 = vmatpush1.msra.mxu0 0.0
  %611 = vmatprep.subr.mxu0 0.0
  %612 = vmatpush1.msra.mxu0 0.0
  %613 = vmatprep.subr.mxu0 0.0
  %614 = vmatpush1.msra.mxu0 0.0
  %615 = vmatprep.subr.mxu0 0.0
  %616 = vmatpush1.msra.mxu0 0.0
  %617 = vmatprep.subr.mxu0 0.0
  %618 = vmatpush1.msra.mxu0 0.0
  %619 = vmatprep.subr.mxu0 0.0
  %620 = vmatpush1.msra.mxu0 0.0
  %621 = vmatprep.subr.mxu0 0.0
  %622 = vmatpush1.msra.mxu0 0.0
  %623 = vmatprep.mubr.f32.mxu0 0.0
  %624 = vmatmul.mubr.f32.gmra.mrb[0].mxu0 %v557
  %v625 = vpop.f32.mrb[0].mxu0
  %v626 = vadd.f32 0.0, %v625
  %v627 = vpop.f32.mrb[0].mxu0
  %628 = vdwg.mxu0
  %v630 = vrot.slane %v626, 4
  %v632 = vadd.f32 %v178, %v630
  %v633 = vsub.f32 0.0, %v632
  %v634 = vmul.f32 %v633, 1.442695
  %v635 = vpow.pop %v634
  %v636 = vadd.f32 %v635, 1.0
  %v637 = vrcp.pop %v636
  %v638 = vmul.f32 1.0, %v637
  %v639 = vtanh.pop %v632
  %v641 = vrot.slane %v422, 4
  %642 = vrot.lane.b32.xlu0 %v641, 32
  %v643 = vpop.permute.xlu0 %642
  %v645 = vmul.f32 %v638, %v643
  %647 = vrot.lane.b32.xlu0 %v639, 32
  %v648 = vpop.permute.xlu0 %647
  %v650 = vmul.f32 %v638, %v648
  %652 = vrot.lane.b32.xlu0 %v650, 32
  %v653 = vpop.permute.xlu0 %652
  %v655 = vadd.f32 %v645, %v653
  %v656 = vtanh.pop %v655
  %658 = vrot.lane.b32.xlu0 %v656, 32
  %v659 = vpop.permute.xlu0 %658
  %v661 = vmul.f32 %v638, %v659
  %v662 = vsel %vm555, 1, 0
  %663 = vset.pattern.permute.xlu0 0
  %664 = vperm.xlu0 %663, %v662
  %v665 = vpop.permute.xlu0 %664
  %vm666 = vcmp.eq.s32.totalorder %v665, 1
  %v668 = vrot.slane %v661, 4
  %669 = vrot.lane.b32.xlu0 %v668, 64
  %v670 = vpop.permute.xlu0 %669
  %v672 = vsel %vm666, %v670, %v416
  %v674 = vrot.slane %v655, 4
  %675 = vrot.lane.b32.xlu0 %v674, 96
  %v676 = vpop.permute.xlu0 %675
  %v678 = vsel %vm666, %v676, %v422
  %v679 = vsel %vm666, %v670, 0.0
  %680 = vst.msk [vmem:[#allocation3 + $0xc] sm:$0x3] %vm305, %v679
  %vm681 = vcmp.gt.s32.totalorder %v70, 2
  %v683 = vsel %vm189, %v543, 0
  %685 = vmatprep.subr.mxu0 0.0
  %686 = vmatpush1.msra.mxu0 %v180
  %687 = vmatprep.subr.mxu0 0.0
  %688 = vmatpush1.msra.mxu0 %v181
  %689 = vmatprep.subr.mxu0 0.0
  %690 = vmatpush1.msra.mxu0 %v182
  %691 = vmatprep.subr.mxu0 0.0
  %692 = vmatpush1.msra.mxu0 %v183
  %693 = vmatprep.subr.mxu0 0.0
  %694 = vmatpush1.msra.mxu0 0.0
  %695 = vmatprep.subr.mxu0 0.0
  %696 = vmatpush1.msra.mxu0 0.0
  %697 = vmatprep.subr.mxu0 0.0
  %698 = vmatpush1.msra.mxu0 0.0
  %699 = vmatprep.subr.mxu0 0.0
  %700 = vmatpush1.msra.mxu0 0.0
  %701 = vmatprep.subr.mxu0 0.0
  %702 = vmatpush1.msra.mxu0 0.0
  %703 = vmatprep.subr.mxu0 0.0
  %704 = vmatpush1.msra.mxu0 0.0
  %705 = vmatprep.subr.mxu0 0.0
  %706 = vmatpush1.msra.mxu0 0.0
  %707 = vmatprep.subr.mxu0 0.0
  %708 = vmatpush1.msra.mxu0 0.0
  %709 = vmatprep.subr.mxu0 0.0
  %710 = vmatpush1.msra.mxu0 0.0
  %711 = vmatprep.subr.mxu0 0.0
  %712 = vmatpush1.msra.mxu0 0.0
  %713 = vmatprep.subr.mxu0 0.0
  %714 = vmatpush1.msra.mxu0 0.0
  %715 = vmatprep.subr.mxu0 0.0
  %716 = vmatpush1.msra.mxu0 0.0
  %717 = vmatprep.subr.mxu0 0.0
  %718 = vmatpush1.msra.mxu0 0.0
  %719 = vmatprep.subr.mxu0 0.0
  %720 = vmatpush1.msra.mxu0 0.0
  %721 = vmatprep.subr.mxu0 0.0
  %722 = vmatpush1.msra.mxu0 0.0
  %723 = vmatprep.subr.mxu0 0.0
  %724 = vmatpush1.msra.mxu0 0.0
  %725 = vmatprep.subr.mxu0 0.0
  %726 = vmatpush1.msra.mxu0 0.0
  %727 = vmatprep.subr.mxu0 0.0
  %728 = vmatpush1.msra.mxu0 0.0
  %729 = vmatprep.subr.mxu0 0.0
  %730 = vmatpush1.msra.mxu0 0.0
  %731 = vmatprep.subr.mxu0 0.0
  %732 = vmatpush1.msra.mxu0 0.0
  %733 = vmatprep.subr.mxu0 0.0
  %734 = vmatpush1.msra.mxu0 0.0
  %735 = vmatprep.subr.mxu0 0.0
  %736 = vmatpush1.msra.mxu0 0.0
  %737 = vmatprep.subr.mxu0 0.0
  %738 = vmatpush1.msra.mxu0 0.0
  %739 = vmatprep.subr.mxu0 0.0
  %740 = vmatpush1.msra.mxu0 0.0
  %741 = vmatprep.subr.mxu0 0.0
  %742 = vmatpush1.msra.mxu0 0.0
  %743 = vmatprep.subr.mxu0 0.0
  %744 = vmatpush1.msra.mxu0 0.0
  %745 = vmatprep.subr.mxu0 0.0
  %746 = vmatpush1.msra.mxu0 0.0
  %747 = vmatprep.subr.mxu0 0.0
  %748 = vmatpush1.msra.mxu0 0.0
  %749 = vmatprep.mubr.f32.mxu0 0.0
  %750 = vmatmul.mubr.f32.gmra.mrb[0].mxu0 %v683
  %v751 = vpop.f32.mrb[0].mxu0
  %v752 = vadd.f32 0.0, %v751
  %v753 = vpop.f32.mrb[0].mxu0
  %754 = vdwg.mxu0
  %v756 = vrot.slane %v752, 4
  %v758 = vadd.f32 %v170, %v756
  %v759 = vsub.f32 0.0, %v758
  %v760 = vmul.f32 %v759, 1.442695
  %v761 = vpow.pop %v760
  %v762 = vadd.f32 %v761, 1.0
  %v763 = vrcp.pop %v762
  %v764 = vmul.f32 1.0, %v763
  %v765 = vtanh.pop %v758
  %v767 = vrot.slane %v552, 4
  %768 = vrot.lane.b32.xlu0 %v767, 32
  %v769 = vpop.permute.xlu0 %768
  %v771 = vmul.f32 %v764, %v769
  %773 = vrot.lane.b32.xlu0 %v765, 32
  %v774 = vpop.permute.xlu0 %773
  %v776 = vmul.f32 %v764, %v774
  %778 = vrot.lane.b32.xlu0 %v776, 32
  %v779 = vpop.permute.xlu0 %778
  %v781 = vadd.f32 %v771, %v779
  %v782 = vtanh.pop %v781
  %784 = vrot.lane.b32.xlu0 %v782, 32
  %v785 = vpop.permute.xlu0 %784
  %v787 = vmul.f32 %v764, %v785
  %v788 = vsel %vm681, 1, 0
  %789 = vset.pattern.permute.xlu0 0
  %790 = vperm.xlu0 %789, %v788
  %v791 = vpop.permute.xlu0 %790
  %vm792 = vcmp.eq.s32.totalorder %v791, 1
  %v794 = vrot.slane %v787, 4
  %795 = vrot.lane.b32.xlu0 %v794, 64
  %v796 = vpop.permute.xlu0 %795
  %v798 = vsel %vm792, %v796, %v543
  %v800 = vrot.slane %v781, 4
  %801 = vrot.lane.b32.xlu0 %v800, 96
  %v802 = vpop.permute.xlu0 %801
  %v804 = vsel %vm792, %v802, %v552
  %v805 = vsel %vm792, %v796, 0.0
  %806 = vst.msk [vmem:[#allocation2 + $0x4] sm:$0x3] %vm305, %v805
  %vm807 = vcmp.gt.s32.totalorder %v70, 5
  %v809 = vsel %vm189, %v672, 0
  %811 = vmatprep.subr.mxu0 0.0
  %812 = vmatpush1.msra.mxu0 %v184
  %813 = vmatprep.subr.mxu0 0.0
  %814 = vmatpush1.msra.mxu0 %v185
  %815 = vmatprep.subr.mxu0 0.0
  %816 = vmatpush1.msra.mxu0 %v186
  %817 = vmatprep.subr.mxu0 0.0
  %818 = vmatpush1.msra.mxu0 %v187
  %819 = vmatprep.subr.mxu0 0.0
  %820 = vmatpush1.msra.mxu0 0.0
  %821 = vmatprep.subr.mxu0 0.0
  %822 = vmatpush1.msra.mxu0 0.0
  %823 = vmatprep.subr.mxu0 0.0
  %824 = vmatpush1.msra.mxu0 0.0
  %825 = vmatprep.subr.mxu0 0.0
  %826 = vmatpush1.msra.mxu0 0.0
  %827 = vmatprep.subr.mxu0 0.0
  %828 = vmatpush1.msra.mxu0 0.0
  %829 = vmatprep.subr.mxu0 0.0
  %830 = vmatpush1.msra.mxu0 0.0
  %831 = vmatprep.subr.mxu0 0.0
  %832 = vmatpush1.msra.mxu0 0.0
  %833 = vmatprep.subr.mxu0 0.0
  %834 = vmatpush1.msra.mxu0 0.0
  %835 = vmatprep.subr.mxu0 0.0
  %836 = vmatpush1.msra.mxu0 0.0
  %837 = vmatprep.subr.mxu0 0.0
  %838 = vmatpush1.msra.mxu0 0.0
  %839 = vmatprep.subr.mxu0 0.0
  %840 = vmatpush1.msra.mxu0 0.0
  %841 = vmatprep.subr.mxu0 0.0
  %842 = vmatpush1.msra.mxu0 0.0
  %843 = vmatprep.subr.mxu0 0.0
  %844 = vmatpush1.msra.mxu0 0.0
  %845 = vmatprep.subr.mxu0 0.0
  %846 = vmatpush1.msra.mxu0 0.0
  %847 = vmatprep.subr.mxu0 0.0
  %848 = vmatpush1.msra.mxu0 0.0
  %849 = vmatprep.subr.mxu0 0.0
  %850 = vmatpush1.msra.mxu0 0.0
  %851 = vmatprep.subr.mxu0 0.0
  %852 = vmatpush1.msra.mxu0 0.0
  %853 = vmatprep.subr.mxu0 0.0
  %854 = vmatpush1.msra.mxu0 0.0
  %855 = vmatprep.subr.mxu0 0.0
  %856 = vmatpush1.msra.mxu0 0.0
  %857 = vmatprep.subr.mxu0 0.0
  %858 = vmatpush1.msra.mxu0 0.0
  %859 = vmatprep.subr.mxu0 0.0
  %860 = vmatpush1.msra.mxu0 0.0
  %861 = vmatprep.subr.mxu0 0.0
  %862 = vmatpush1.msra.mxu0 0.0
  %863 = vmatprep.subr.mxu0 0.0
  %864 = vmatpush1.msra.mxu0 0.0
  %865 = vmatprep.subr.mxu0 0.0
  %866 = vmatpush1.msra.mxu0 0.0
  %867 = vmatprep.subr.mxu0 0.0
  %868 = vmatpush1.msra.mxu0 0.0
  %869 = vmatprep.subr.mxu0 0.0
  %870 = vmatpush1.msra.mxu0 0.0
  %871 = vmatprep.subr.mxu0 0.0
  %872 = vmatpush1.msra.mxu0 0.0
  %873 = vmatprep.subr.mxu0 0.0
  %874 = vmatpush1.msra.mxu0 0.0
  %875 = vmatprep.mubr.f32.mxu0 0.0
  %876 = vmatmul.mubr.f32.gmra.mrb[0].mxu0 %v809
  %v877 = vpop.f32.mrb[0].mxu0
  %v878 = vadd.f32 0.0, %v877
  %v879 = vpop.f32.mrb[0].mxu0
  %880 = vdwg.mxu0
  %v882 = vrot.slane %v878, 6
  %v884 = vadd.f32 %v178, %v882
  %v885 = vsub.f32 0.0, %v884
  %v886 = vmul.f32 %v885, 1.442695
  %v887 = vpow.pop %v886
  %v888 = vadd.f32 %v887, 1.0
  %v889 = vrcp.pop %v888
  %v890 = vmul.f32 1.0, %v889
  %v891 = vtanh.pop %v884
  %v893 = vrot.slane %v678, 6
  %894 = vrot.lane.b32.xlu0 %v893, 32
  %v895 = vpop.permute.xlu0 %894
  %v897 = vmul.f32 %v890, %v895
  %899 = vrot.lane.b32.xlu0 %v891, 32
  %v900 = vpop.permute.xlu0 %899
  %v902 = vmul.f32 %v890, %v900
  %904 = vrot.lane.b32.xlu0 %v902, 32
  %v905 = vpop.permute.xlu0 %904
  %v907 = vadd.f32 %v897, %v905
  %v908 = vtanh.pop %v907
  %910 = vrot.lane.b32.xlu0 %v908, 32
  %v911 = vpop.permute.xlu0 %910
  %v913 = vmul.f32 %v890, %v911
  %v914 = vsel %vm807, 1, 0
  %915 = vset.pattern.permute.xlu0 0
  %916 = vperm.xlu0 %915, %v914
  %v917 = vpop.permute.xlu0 %916
  %vm918 = vcmp.eq.s32.totalorder %v917, 1
  %v920 = vrot.slane %v913, 2
  %921 = vrot.lane.b32.xlu0 %v920, 64
  %v922 = vpop.permute.xlu0 %921
  %v924 = vsel %vm918, %v922, %v672
  %v926 = vrot.slane %v907, 2
  %927 = vrot.lane.b32.xlu0 %v926, 96
  %v928 = vpop.permute.xlu0 %927
  %v930 = vsel %vm918, %v928, %v678
  %v931 = vsel %vm918, %v922, 0.0
  %932 = vst.msk [vmem:[#allocation3 + $0xa] sm:$0x3] %vm305, %v931
  %vm933 = vcmp.gt.s32.totalorder %v70, 3
  %v935 = vsel %vm189, %v798, 0
  %937 = vmatprep.subr.mxu0 0.0
  %938 = vmatpush1.msra.mxu0 %v180
  %939 = vmatprep.subr.mxu0 0.0
  %940 = vmatpush1.msra.mxu0 %v181
  %941 = vmatprep.subr.mxu0 0.0
  %942 = vmatpush1.msra.mxu0 %v182
  %943 = vmatprep.subr.mxu0 0.0
  %944 = vmatpush1.msra.mxu0 %v183
  %945 = vmatprep.subr.mxu0 0.0
  %946 = vmatpush1.msra.mxu0 0.0
  %947 = vmatprep.subr.mxu0 0.0
  %948 = vmatpush1.msra.mxu0 0.0
  %949 = vmatprep.subr.mxu0 0.0
  %950 = vmatpush1.msra.mxu0 0.0
  %951 = vmatprep.subr.mxu0 0.0
  %952 = vmatpush1.msra.mxu0 0.0
  %953 = vmatprep.subr.mxu0 0.0
  %954 = vmatpush1.msra.mxu0 0.0
  %955 = vmatprep.subr.mxu0 0.0
  %956 = vmatpush1.msra.mxu0 0.0
  %957 = vmatprep.subr.mxu0 0.0
  %958 = vmatpush1.msra.mxu0 0.0
  %959 = vmatprep.subr.mxu0 0.0
  %960 = vmatpush1.msra.mxu0 0.0
  %961 = vmatprep.subr.mxu0 0.0
  %962 = vmatpush1.msra.mxu0 0.0
  %963 = vmatprep.subr.mxu0 0.0
  %964 = vmatpush1.msra.mxu0 0.0
  %965 = vmatprep.subr.mxu0 0.0
  %966 = vmatpush1.msra.mxu0 0.0
  %967 = vmatprep.subr.mxu0 0.0
  %968 = vmatpush1.msra.mxu0 0.0
  %969 = vmatprep.subr.mxu0 0.0
  %970 = vmatpush1.msra.mxu0 0.0
  %971 = vmatprep.subr.mxu0 0.0
  %972 = vmatpush1.msra.mxu0 0.0
  %973 = vmatprep.subr.mxu0 0.0
  %974 = vmatpush1.msra.mxu0 0.0
  %975 = vmatprep.subr.mxu0 0.0
  %976 = vmatpush1.msra.mxu0 0.0
  %977 = vmatprep.subr.mxu0 0.0
  %978 = vmatpush1.msra.mxu0 0.0
  %979 = vmatprep.subr.mxu0 0.0
  %980 = vmatpush1.msra.mxu0 0.0
  %981 = vmatprep.subr.mxu0 0.0
  %982 = vmatpush1.msra.mxu0 0.0
  %983 = vmatprep.subr.mxu0 0.0
  %984 = vmatpush1.msra.mxu0 0.0
  %985 = vmatprep.subr.mxu0 0.0
  %986 = vmatpush1.msra.mxu0 0.0
  %987 = vmatprep.subr.mxu0 0.0
  %988 = vmatpush1.msra.mxu0 0.0
  %989 = vmatprep.subr.mxu0 0.0
  %990 = vmatpush1.msra.mxu0 0.0
  %991 = vmatprep.subr.mxu0 0.0
  %992 = vmatpush1.msra.mxu0 0.0
  %993 = vmatprep.subr.mxu0 0.0
  %994 = vmatpush1.msra.mxu0 0.0
  %995 = vmatprep.subr.mxu0 0.0
  %996 = vmatpush1.msra.mxu0 0.0
  %997 = vmatprep.subr.mxu0 0.0
  %998 = vmatpush1.msra.mxu0 0.0
  %999 = vmatprep.subr.mxu0 0.0
  %1000 = vmatpush1.msra.mxu0 0.0
  %1001 = vmatprep.mubr.f32.mxu0 0.0
  %1002 = vmatmul.mubr.f32.gmra.mrb[0].mxu0 %v935
  %v1003 = vpop.f32.mrb[0].mxu0
  %v1004 = vadd.f32 0.0, %v1003
  %v1005 = vpop.f32.mrb[0].mxu0
  %1006 = vdwg.mxu0
  %v1008 = vrot.slane %v1004, 2
  %v1010 = vadd.f32 %v170, %v1008
  %v1011 = vsub.f32 0.0, %v1010
  %v1012 = vmul.f32 %v1011, 1.442695
  %v1013 = vpow.pop %v1012
  %v1014 = vadd.f32 %v1013, 1.0
  %v1015 = vrcp.pop %v1014
  %v1016 = vmul.f32 1.0, %v1015
  %v1017 = vtanh.pop %v1010
  %v1019 = vrot.slane %v804, 2
  %1020 = vrot.lane.b32.xlu0 %v1019, 32
  %v1021 = vpop.permute.xlu0 %1020
  %v1023 = vmul.f32 %v1016, %v1021
  %1025 = vrot.lane.b32.xlu0 %v1017, 32
  %v1026 = vpop.permute.xlu0 %1025
  %v1028 = vmul.f32 %v1016, %v1026
  %1030 = vrot.lane.b32.xlu0 %v1028, 32
  %v1031 = vpop.permute.xlu0 %1030
  %v1033 = vadd.f32 %v1023, %v1031
  %v1034 = vtanh.pop %v1033
  %1036 = vrot.lane.b32.xlu0 %v1034, 32
  %v1037 = vpop.permute.xlu0 %1036
  %v1039 = vmul.f32 %v1016, %v1037
  %v1040 = vsel %vm933, 1, 0
  %1041 = vset.pattern.permute.xlu0 0
  %1042 = vperm.xlu0 %1041, %v1040
  %v1043 = vpop.permute.xlu0 %1042
  %vm1044 = vcmp.eq.s32.totalorder %v1043, 1
  %v1046 = vrot.slane %v1039, 6
  %1047 = vrot.lane.b32.xlu0 %v1046, 64
  %v1048 = vpop.permute.xlu0 %1047
  %v1050 = vsel %vm1044, %v1048, %v798
  %v1052 = vrot.slane %v1033, 6
  %1053 = vrot.lane.b32.xlu0 %v1052, 96
  %v1054 = vpop.permute.xlu0 %1053
  %v1056 = vsel %vm1044, %v1054, %v804
  %v1057 = vsel %vm1044, %v1048, 0.0
  %1058 = vst.msk [vmem:[#allocation2 + $0x6] sm:$0x3] %vm305, %v1057
  %vm1059 = vcmp.gt.s32.totalorder %v70, 4
  %v1061 = vsel %vm189, %v924, 0
  %1063 = vmatprep.subr.mxu0 0.0
  %1064 = vmatpush1.msra.mxu0 %v184
  %1065 = vmatprep.subr.mxu0 0.0
  %1066 = vmatpush1.msra.mxu0 %v185
  %1067 = vmatprep.subr.mxu0 0.0
  %1068 = vmatpush1.msra.mxu0 %v186
  %1069 = vmatprep.subr.mxu0 0.0
  %1070 = vmatpush1.msra.mxu0 %v187
  %1071 = vmatprep.subr.mxu0 0.0
  %1072 = vmatpush1.msra.mxu0 0.0
  %1073 = vmatprep.subr.mxu0 0.0
  %1074 = vmatpush1.msra.mxu0 0.0
  %1075 = vmatprep.subr.mxu0 0.0
  %1076 = vmatpush1.msra.mxu0 0.0
  %1077 = vmatprep.subr.mxu0 0.0
  %1078 = vmatpush1.msra.mxu0 0.0
  %1079 = vmatprep.subr.mxu0 0.0
  %1080 = vmatpush1.msra.mxu0 0.0
  %1081 = vmatprep.subr.mxu0 0.0
  %1082 = vmatpush1.msra.mxu0 0.0
  %1083 = vmatprep.subr.mxu0 0.0
  %1084 = vmatpush1.msra.mxu0 0.0
  %1085 = vmatprep.subr.mxu0 0.0
  %1086 = vmatpush1.msra.mxu0 0.0
  %1087 = vmatprep.subr.mxu0 0.0
  %1088 = vmatpush1.msra.mxu0 0.0
  %1089 = vmatprep.subr.mxu0 0.0
  %1090 = vmatpush1.msra.mxu0 0.0
  %1091 = vmatprep.subr.mxu0 0.0
  %1092 = vmatpush1.msra.mxu0 0.0
  %1093 = vmatprep.subr.mxu0 0.0
  %1094 = vmatpush1.msra.mxu0 0.0
  %1095 = vmatprep.subr.mxu0 0.0
  %1096 = vmatpush1.msra.mxu0 0.0
  %1097 = vmatprep.subr.mxu0 0.0
  %1098 = vmatpush1.msra.mxu0 0.0
  %1099 = vmatprep.subr.mxu0 0.0
  %1100 = vmatpush1.msra.mxu0 0.0
  %1101 = vmatprep.subr.mxu0 0.0
  %1102 = vmatpush1.msra.mxu0 0.0
  %1103 = vmatprep.subr.mxu0 0.0
  %1104 = vmatpush1.msra.mxu0 0.0
  %1105 = vmatprep.subr.mxu0 0.0
  %1106 = vmatpush1.msra.mxu0 0.0
  %1107 = vmatprep.subr.mxu0 0.0
  %1108 = vmatpush1.msra.mxu0 0.0
  %1109 = vmatprep.subr.mxu0 0.0
  %1110 = vmatpush1.msra.mxu0 0.0
  %1111 = vmatprep.subr.mxu0 0.0
  %1112 = vmatpush1.msra.mxu0 0.0
  %1113 = vmatprep.subr.mxu0 0.0
  %1114 = vmatpush1.msra.mxu0 0.0
  %1115 = vmatprep.subr.mxu0 0.0
  %1116 = vmatpush1.msra.mxu0 0.0
  %1117 = vmatprep.subr.mxu0 0.0
  %1118 = vmatpush1.msra.mxu0 0.0
  %1119 = vmatprep.subr.mxu0 0.0
  %1120 = vmatpush1.msra.mxu0 0.0
  %1121 = vmatprep.subr.mxu0 0.0
  %1122 = vmatpush1.msra.mxu0 0.0
  %1123 = vmatprep.subr.mxu0 0.0
  %1124 = vmatpush1.msra.mxu0 0.0
  %1125 = vmatprep.subr.mxu0 0.0
  %1126 = vmatpush1.msra.mxu0 0.0
  %1127 = vmatprep.mubr.f32.mxu0 0.0
  %1128 = vmatmul.mubr.f32.gmra.mrb[0].mxu0 %v1061
  %v1129 = vpop.f32.mrb[0].mxu0
  %v1130 = vadd.f32 0.0, %v1129
  %v1131 = vpop.f32.mrb[0].mxu0
  %1132 = vdwg.mxu0
  %v1133 = vadd.f32 %v178, %v1130
  %v1134 = vsub.f32 0.0, %v1133
  %v1135 = vmul.f32 %v1134, 1.442695
  %v1136 = vpow.pop %v1135
  %v1137 = vadd.f32 %v1136, 1.0
  %v1138 = vrcp.pop %v1137
  %v1139 = vmul.f32 1.0, %v1138
  %v1140 = vtanh.pop %v1133
  %1142 = vrot.lane.b32.xlu0 %v930, 32
  %v1143 = vpop.permute.xlu0 %1142
  %v1145 = vmul.f32 %v1139, %v1143
  %1147 = vrot.lane.b32.xlu0 %v1140, 32
  %v1148 = vpop.permute.xlu0 %1147
  %v1150 = vmul.f32 %v1139, %v1148
  %1152 = vrot.lane.b32.xlu0 %v1150, 32
  %v1153 = vpop.permute.xlu0 %1152
  %v1155 = vadd.f32 %v1145, %v1153
  %v1156 = vtanh.pop %v1155
  %1158 = vrot.lane.b32.xlu0 %v1156, 32
  %v1159 = vpop.permute.xlu0 %1158
  %v1161 = vmul.f32 %v1139, %v1159
  %v1162 = vsel %vm1059, 1, 0
  %1163 = vset.pattern.permute.xlu0 0
  %1164 = vperm.xlu0 %1163, %v1162
  %v1165 = vpop.permute.xlu0 %1164
  %vm1166 = vcmp.eq.s32.totalorder %v1165, 1
  %1167 = vrot.lane.b32.xlu0 %v924, 64
  %v1168 = vpop.permute.xlu0 %1167
  %v1170 = vsel %vm1166, %v1161, %v1168
  %v1171 = vsel %vm1166, %v1155, %v1143
  %v1172 = vsel %vm1166, %v1161, 0.0
  %1174 = vrot.lane.b32.xlu0 %v1172, 64
  %v1175 = vpop.permute.xlu0 %1174
  %1177 = vst.msk [vmem:[#allocation3 + $0x8] sm:$0x3] %vm305, %v1175
  %v1179 = vsel %vm189, %v1050, 0
  %1181 = vmatprep.subr.mxu0 0.0
  %1182 = vmatpush1.msra.mxu0 %v180
  %1183 = vmatprep.subr.mxu0 0.0
  %1184 = vmatpush1.msra.mxu0 %v181
  %1185 = vmatprep.subr.mxu0 0.0
  %1186 = vmatpush1.msra.mxu0 %v182
  %1187 = vmatprep.subr.mxu0 0.0
  %1188 = vmatpush1.msra.mxu0 %v183
  %1189 = vmatprep.subr.mxu0 0.0
  %1190 = vmatpush1.msra.mxu0 0.0
  %1191 = vmatprep.subr.mxu0 0.0
  %1192 = vmatpush1.msra.mxu0 0.0
  %1193 = vmatprep.subr.mxu0 0.0
  %1194 = vmatpush1.msra.mxu0 0.0
  %1195 = vmatprep.subr.mxu0 0.0
  %1196 = vmatpush1.msra.mxu0 0.0
  %1197 = vmatprep.subr.mxu0 0.0
  %1198 = vmatpush1.msra.mxu0 0.0
  %1199 = vmatprep.subr.mxu0 0.0
  %1200 = vmatpush1.msra.mxu0 0.0
  %1201 = vmatprep.subr.mxu0 0.0
  %1202 = vmatpush1.msra.mxu0 0.0
  %1203 = vmatprep.subr.mxu0 0.0
  %1204 = vmatpush1.msra.mxu0 0.0
  %1205 = vmatprep.subr.mxu0 0.0
  %1206 = vmatpush1.msra.mxu0 0.0
  %1207 = vmatprep.subr.mxu0 0.0
  %1208 = vmatpush1.msra.mxu0 0.0
  %1209 = vmatprep.subr.mxu0 0.0
  %1210 = vmatpush1.msra.mxu0 0.0
  %1211 = vmatprep.subr.mxu0 0.0
  %1212 = vmatpush1.msra.mxu0 0.0
  %1213 = vmatprep.subr.mxu0 0.0
  %1214 = vmatpush1.msra.mxu0 0.0
  %1215 = vmatprep.subr.mxu0 0.0
  %1216 = vmatpush1.msra.mxu0 0.0
  %1217 = vmatprep.subr.mxu0 0.0
  %1218 = vmatpush1.msra.mxu0 0.0
  %1219 = vmatprep.subr.mxu0 0.0
  %1220 = vmatpush1.msra.mxu0 0.0
  %1221 = vmatprep.subr.mxu0 0.0
  %1222 = vmatpush1.msra.mxu0 0.0
  %1223 = vmatprep.subr.mxu0 0.0
  %1224 = vmatpush1.msra.mxu0 0.0
  %1225 = vmatprep.subr.mxu0 0.0
  %1226 = vmatpush1.msra.mxu0 0.0
  %1227 = vmatprep.subr.mxu0 0.0
  %1228 = vmatpush1.msra.mxu0 0.0
  %1229 = vmatprep.subr.mxu0 0.0
  %1230 = vmatpush1.msra.mxu0 0.0
  %1231 = vmatprep.subr.mxu0 0.0
  %1232 = vmatpush1.msra.mxu0 0.0
  %1233 = vmatprep.subr.mxu0 0.0
  %1234 = vmatpush1.msra.mxu0 0.0
  %1235 = vmatprep.subr.mxu0 0.0
  %1236 = vmatpush1.msra.mxu0 0.0
  %1237 = vmatprep.subr.mxu0 0.0
  %1238 = vmatpush1.msra.mxu0 0.0
  %1239 = vmatprep.subr.mxu0 0.0
  %1240 = vmatpush1.msra.mxu0 0.0
  %1241 = vmatprep.subr.mxu0 0.0
  %1242 = vmatpush1.msra.mxu0 0.0
  %1243 = vmatprep.subr.mxu0 0.0
  %1244 = vmatpush1.msra.mxu0 0.0
  %1245 = vmatprep.mubr.f32.mxu0 0.0
  %1246 = vmatmul.mubr.f32.gmra.mrb[0].mxu0 %v1179
  %v1247 = vpop.f32.mrb[0].mxu0
  %v1248 = vadd.f32 0.0, %v1247
  %v1249 = vpop.f32.mrb[0].mxu0
  %1250 = vdwg.mxu0
  %v1251 = vadd.f32 %v176, %v1248
  %v1252 = vsub.f32 0.0, %v1251
  %v1253 = vmul.f32 %v1252, 1.442695
  %v1254 = vpow.pop %v1253
  %v1255 = vadd.f32 %v1254, 1.0
  %v1256 = vrcp.pop %v1255
  %v1257 = vmul.f32 1.0, %v1256
  %v1258 = vtanh.pop %v1251
  %1260 = vrot.lane.b32.xlu0 %v1056, 32
  %v1261 = vpop.permute.xlu0 %1260
  %v1263 = vmul.f32 %v1257, %v1261
  %1265 = vrot.lane.b32.xlu0 %v1258, 32
  %v1266 = vpop.permute.xlu0 %1265
  %v1268 = vmul.f32 %v1257, %v1266
  %1270 = vrot.lane.b32.xlu0 %v1268, 32
  %v1271 = vpop.permute.xlu0 %1270
  %v1273 = vadd.f32 %v1263, %v1271
  %v1274 = vtanh.pop %v1273
  %1276 = vrot.lane.b32.xlu0 %v1274, 32
  %v1277 = vpop.permute.xlu0 %1276
  %v1279 = vmul.f32 %v1257, %v1277
  %1280 = vrot.lane.b32.xlu0 %v1050, 64
  %v1281 = vpop.permute.xlu0 %1280
  %v1283 = vsel %vm1166, %v1279, %v1281
  %v1284 = vsel %vm1166, %v1273, %v1261
  %v1285 = vsel %vm1166, %v1279, 0.0
  %1287 = vrot.lane.b32.xlu0 %v1285, 64
  %v1288 = vpop.permute.xlu0 %1287
  %1290 = vst.msk [vmem:[#allocation2 + $0x8] sm:$0x3] %vm305, %v1288
  %1292 = vrot.lane.b32.xlu0 %v1170, 64
  %v1293 = vpop.permute.xlu0 %1292
  %v1294 = vsel %vm189, %v1293, 0
  %1296 = vmatprep.subr.mxu0 0.0
  %1297 = vmatpush1.msra.mxu0 %v184
  %1298 = vmatprep.subr.mxu0 0.0
  %1299 = vmatpush1.msra.mxu0 %v185
  %1300 = vmatprep.subr.mxu0 0.0
  %1301 = vmatpush1.msra.mxu0 %v186
  %1302 = vmatprep.subr.mxu0 0.0
  %1303 = vmatpush1.msra.mxu0 %v187
  %1304 = vmatprep.subr.mxu0 0.0
  %1305 = vmatpush1.msra.mxu0 0.0
  %1306 = vmatprep.subr.mxu0 0.0
  %1307 = vmatpush1.msra.mxu0 0.0
  %1308 = vmatprep.subr.mxu0 0.0
  %1309 = vmatpush1.msra.mxu0 0.0
  %1310 = vmatprep.subr.mxu0 0.0
  %1311 = vmatpush1.msra.mxu0 0.0
  %1312 = vmatprep.subr.mxu0 0.0
  %1313 = vmatpush1.msra.mxu0 0.0
  %1314 = vmatprep.subr.mxu0 0.0
  %1315 = vmatpush1.msra.mxu0 0.0
  %1316 = vmatprep.subr.mxu0 0.0
  %1317 = vmatpush1.msra.mxu0 0.0
  %1318 = vmatprep.subr.mxu0 0.0
  %1319 = vmatpush1.msra.mxu0 0.0
  %1320 = vmatprep.subr.mxu0 0.0
  %1321 = vmatpush1.msra.mxu0 0.0
  %1322 = vmatprep.subr.mxu0 0.0
  %1323 = vmatpush1.msra.mxu0 0.0
  %1324 = vmatprep.subr.mxu0 0.0
  %1325 = vmatpush1.msra.mxu0 0.0
  %1326 = vmatprep.subr.mxu0 0.0
  %1327 = vmatpush1.msra.mxu0 0.0
  %1328 = vmatprep.subr.mxu0 0.0
  %1329 = vmatpush1.msra.mxu0 0.0
  %1330 = vmatprep.subr.mxu0 0.0
  %1331 = vmatpush1.msra.mxu0 0.0
  %1332 = vmatprep.subr.mxu0 0.0
  %1333 = vmatpush1.msra.mxu0 0.0
  %1334 = vmatprep.subr.mxu0 0.0
  %1335 = vmatpush1.msra.mxu0 0.0
  %1336 = vmatprep.subr.mxu0 0.0
  %1337 = vmatpush1.msra.mxu0 0.0
  %1338 = vmatprep.subr.mxu0 0.0
  %1339 = vmatpush1.msra.mxu0 0.0
  %1340 = vmatprep.subr.mxu0 0.0
  %1341 = vmatpush1.msra.mxu0 0.0
  %1342 = vmatprep.subr.mxu0 0.0
  %1343 = vmatpush1.msra.mxu0 0.0
  %1344 = vmatprep.subr.mxu0 0.0
  %1345 = vmatpush1.msra.mxu0 0.0
  %1346 = vmatprep.subr.mxu0 0.0
  %1347 = vmatpush1.msra.mxu0 0.0
  %1348 = vmatprep.subr.mxu0 0.0
  %1349 = vmatpush1.msra.mxu0 0.0
  %1350 = vmatprep.subr.mxu0 0.0
  %1351 = vmatpush1.msra.mxu0 0.0
  %1352 = vmatprep.subr.mxu0 0.0
  %1353 = vmatpush1.msra.mxu0 0.0
  %1354 = vmatprep.subr.mxu0 0.0
  %1355 = vmatpush1.msra.mxu0 0.0
  %1356 = vmatprep.subr.mxu0 0.0
  %1357 = vmatpush1.msra.mxu0 0.0
  %1358 = vmatprep.subr.mxu0 0.0
  %1359 = vmatpush1.msra.mxu0 0.0
  %1360 = vmatprep.mubr.f32.mxu0 0.0
  %1361 = vmatmul.mubr.f32.gmra.mrb[0].mxu0 %v1294
  %v1362 = vpop.f32.mrb[0].mxu0
  %v1363 = vadd.f32 0.0, %v1362
  %v1364 = vpop.f32.mrb[0].mxu0
  %1365 = vdwg.mxu0
  %v1367 = vrot.slane %v1363, 2
  %v1369 = vadd.f32 %v172, %v1367
  %v1370 = vsub.f32 0.0, %v1369
  %v1371 = vmul.f32 %v1370, 1.442695
  %v1372 = vpow.pop %v1371
  %v1373 = vadd.f32 %v1372, 1.0
  %v1374 = vrcp.pop %v1373
  %v1375 = vmul.f32 1.0, %v1374
  %v1376 = vtanh.pop %v1369
  %v1378 = vrot.slane %v1171, 2
  %v1380 = vmul.f32 %v1375, %v1378
  %1382 = vrot.lane.b32.xlu0 %v1376, 32
  %v1383 = vpop.permute.xlu0 %1382
  %v1385 = vmul.f32 %v1375, %v1383
  %1387 = vrot.lane.b32.xlu0 %v1385, 32
  %v1388 = vpop.permute.xlu0 %1387
  %v1390 = vadd.f32 %v1380, %v1388
  %v1391 = vtanh.pop %v1390
  %1393 = vrot.lane.b32.xlu0 %v1391, 32
  %v1394 = vpop.permute.xlu0 %1393
  %v1396 = vmul.f32 %v1375, %v1394
  %v1398 = vrot.slane %v1396, 6
  %1399 = vrot.lane.b32.xlu0 %v1398, 64
  %v1400 = vpop.permute.xlu0 %1399
  %v1403 = vsel %vm1044, %v1400, %v1293
  %v1405 = vrot.slane %v1390, 6
  %1406 = vrot.lane.b32.xlu0 %v1405, 96
  %v1407 = vpop.permute.xlu0 %1406
  %1409 = vrot.lane.b32.xlu0 %v1171, 96
  %v1410 = vpop.permute.xlu0 %1409
  %v1412 = vsel %vm1044, %v1407, %v1410
  %v1413 = vsel %vm1044, %v1400, 0.0
  %1414 = vst.msk [vmem:[#allocation3 + $0x6] sm:$0x3] %vm305, %v1413
  %1416 = vrot.lane.b32.xlu0 %v1283, 64
  %v1417 = vpop.permute.xlu0 %1416
  %v1418 = vsel %vm189, %v1417, 0
  %1420 = vmatprep.subr.mxu0 0.0
  %1421 = vmatpush1.msra.mxu0 %v180
  %1422 = vmatprep.subr.mxu0 0.0
  %1423 = vmatpush1.msra.mxu0 %v181
  %1424 = vmatprep.subr.mxu0 0.0
  %1425 = vmatpush1.msra.mxu0 %v182
  %1426 = vmatprep.subr.mxu0 0.0
  %1427 = vmatpush1.msra.mxu0 %v183
  %1428 = vmatprep.subr.mxu0 0.0
  %1429 = vmatpush1.msra.mxu0 0.0
  %1430 = vmatprep.subr.mxu0 0.0
  %1431 = vmatpush1.msra.mxu0 0.0
  %1432 = vmatprep.subr.mxu0 0.0
  %1433 = vmatpush1.msra.mxu0 0.0
  %1434 = vmatprep.subr.mxu0 0.0
  %1435 = vmatpush1.msra.mxu0 0.0
  %1436 = vmatprep.subr.mxu0 0.0
  %1437 = vmatpush1.msra.mxu0 0.0
  %1438 = vmatprep.subr.mxu0 0.0
  %1439 = vmatpush1.msra.mxu0 0.0
  %1440 = vmatprep.subr.mxu0 0.0
  %1441 = vmatpush1.msra.mxu0 0.0
  %1442 = vmatprep.subr.mxu0 0.0
  %1443 = vmatpush1.msra.mxu0 0.0
  %1444 = vmatprep.subr.mxu0 0.0
  %1445 = vmatpush1.msra.mxu0 0.0
  %1446 = vmatprep.subr.mxu0 0.0
  %1447 = vmatpush1.msra.mxu0 0.0
  %1448 = vmatprep.subr.mxu0 0.0
  %1449 = vmatpush1.msra.mxu0 0.0
  %1450 = vmatprep.subr.mxu0 0.0
  %1451 = vmatpush1.msra.mxu0 0.0
  %1452 = vmatprep.subr.mxu0 0.0
  %1453 = vmatpush1.msra.mxu0 0.0
  %1454 = vmatprep.subr.mxu0 0.0
  %1455 = vmatpush1.msra.mxu0 0.0
  %1456 = vmatprep.subr.mxu0 0.0
  %1457 = vmatpush1.msra.mxu0 0.0
  %1458 = vmatprep.subr.mxu0 0.0
  %1459 = vmatpush1.msra.mxu0 0.0
  %1460 = vmatprep.subr.mxu0 0.0
  %1461 = vmatpush1.msra.mxu0 0.0
  %1462 = vmatprep.subr.mxu0 0.0
  %1463 = vmatpush1.msra.mxu0 0.0
  %1464 = vmatprep.subr.mxu0 0.0
  %1465 = vmatpush1.msra.mxu0 0.0
  %1466 = vmatprep.subr.mxu0 0.0
  %1467 = vmatpush1.msra.mxu0 0.0
  %1468 = vmatprep.subr.mxu0 0.0
  %1469 = vmatpush1.msra.mxu0 0.0
  %1470 = vmatprep.subr.mxu0 0.0
  %1471 = vmatpush1.msra.mxu0 0.0
  %1472 = vmatprep.subr.mxu0 0.0
  %1473 = vmatpush1.msra.mxu0 0.0
  %1474 = vmatprep.subr.mxu0 0.0
  %1475 = vmatpush1.msra.mxu0 0.0
  %1476 = vmatprep.subr.mxu0 0.0
  %1477 = vmatpush1.msra.mxu0 0.0
  %1478 = vmatprep.subr.mxu0 0.0
  %1479 = vmatpush1.msra.mxu0 0.0
  %1480 = vmatprep.subr.mxu0 0.0
  %1481 = vmatpush1.msra.mxu0 0.0
  %1482 = vmatprep.subr.mxu0 0.0
  %1483 = vmatpush1.msra.mxu0 0.0
  %1484 = vmatprep.mubr.f32.mxu0 0.0
  %1485 = vmatmul.mubr.f32.gmra.mrb[0].mxu0 %v1418
  %v1486 = vpop.f32.mrb[0].mxu0
  %v1487 = vadd.f32 0.0, %v1486
  %v1488 = vpop.f32.mrb[0].mxu0
  %1489 = vdwg.mxu0
  %v1491 = vrot.slane %v1487, 6
  %v1493 = vadd.f32 %v176, %v1491
  %v1494 = vsub.f32 0.0, %v1493
  %v1495 = vmul.f32 %v1494, 1.442695
  %v1496 = vpow.pop %v1495
  %v1497 = vadd.f32 %v1496, 1.0
  %v1498 = vrcp.pop %v1497
  %v1499 = vmul.f32 1.0, %v1498
  %v1500 = vtanh.pop %v1493
  %v1502 = vrot.slane %v1284, 6
  %v1504 = vmul.f32 %v1499, %v1502
  %1506 = vrot.lane.b32.xlu0 %v1500, 32
  %v1507 = vpop.permute.xlu0 %1506
  %v1509 = vmul.f32 %v1499, %v1507
  %1511 = vrot.lane.b32.xlu0 %v1509, 32
  %v1512 = vpop.permute.xlu0 %1511
  %v1514 = vadd.f32 %v1504, %v1512
  %v1515 = vtanh.pop %v1514
  %1517 = vrot.lane.b32.xlu0 %v1515, 32
  %v1518 = vpop.permute.xlu0 %1517
  %v1520 = vmul.f32 %v1499, %v1518
  %v1522 = vrot.slane %v1520, 2
  %1523 = vrot.lane.b32.xlu0 %v1522, 64
  %v1524 = vpop.permute.xlu0 %1523
  %v1527 = vsel %vm918, %v1524, %v1417
  %v1529 = vrot.slane %v1514, 2
  %1530 = vrot.lane.b32.xlu0 %v1529, 96
  %v1531 = vpop.permute.xlu0 %1530
  %1533 = vrot.lane.b32.xlu0 %v1284, 96
  %v1534 = vpop.permute.xlu0 %1533
  %v1536 = vsel %vm918, %v1531, %v1534
  %v1537 = vsel %vm918, %v1524, 0.0
  %1538 = vst.msk [vmem:[#allocation2 + $0xa] sm:$0x3] %vm305, %v1537
  %v1540 = vsel %vm189, %v1403, 0
  %1542 = vmatprep.subr.mxu0 0.0
  %1543 = vmatpush1.msra.mxu0 %v184
  %1544 = vmatprep.subr.mxu0 0.0
  %1545 = vmatpush1.msra.mxu0 %v185
  %1546 = vmatprep.subr.mxu0 0.0
  %1547 = vmatpush1.msra.mxu0 %v186
  %1548 = vmatprep.subr.mxu0 0.0
  %1549 = vmatpush1.msra.mxu0 %v187
  %1550 = vmatprep.subr.mxu0 0.0
  %1551 = vmatpush1.msra.mxu0 0.0
  %1552 = vmatprep.subr.mxu0 0.0
  %1553 = vmatpush1.msra.mxu0 0.0
  %1554 = vmatprep.subr.mxu0 0.0
  %1555 = vmatpush1.msra.mxu0 0.0
  %1556 = vmatprep.subr.mxu0 0.0
  %1557 = vmatpush1.msra.mxu0 0.0
  %1558 = vmatprep.subr.mxu0 0.0
  %1559 = vmatpush1.msra.mxu0 0.0
  %1560 = vmatprep.subr.mxu0 0.0
  %1561 = vmatpush1.msra.mxu0 0.0
  %1562 = vmatprep.subr.mxu0 0.0
  %1563 = vmatpush1.msra.mxu0 0.0
  %1564 = vmatprep.subr.mxu0 0.0
  %1565 = vmatpush1.msra.mxu0 0.0
  %1566 = vmatprep.subr.mxu0 0.0
  %1567 = vmatpush1.msra.mxu0 0.0
  %1568 = vmatprep.subr.mxu0 0.0
  %1569 = vmatpush1.msra.mxu0 0.0
  %1570 = vmatprep.subr.mxu0 0.0
  %1571 = vmatpush1.msra.mxu0 0.0
  %1572 = vmatprep.subr.mxu0 0.0
  %1573 = vmatpush1.msra.mxu0 0.0
  %1574 = vmatprep.subr.mxu0 0.0
  %1575 = vmatpush1.msra.mxu0 0.0
  %1576 = vmatprep.subr.mxu0 0.0
  %1577 = vmatpush1.msra.mxu0 0.0
  %1578 = vmatprep.subr.mxu0 0.0
  %1579 = vmatpush1.msra.mxu0 0.0
  %1580 = vmatprep.subr.mxu0 0.0
  %1581 = vmatpush1.msra.mxu0 0.0
  %1582 = vmatprep.subr.mxu0 0.0
  %1583 = vmatpush1.msra.mxu0 0.0
  %1584 = vmatprep.subr.mxu0 0.0
  %1585 = vmatpush1.msra.mxu0 0.0
  %1586 = vmatprep.subr.mxu0 0.0
  %1587 = vmatpush1.msra.mxu0 0.0
  %1588 = vmatprep.subr.mxu0 0.0
  %1589 = vmatpush1.msra.mxu0 0.0
  %1590 = vmatprep.subr.mxu0 0.0
  %1591 = vmatpush1.msra.mxu0 0.0
  %1592 = vmatprep.subr.mxu0 0.0
  %1593 = vmatpush1.msra.mxu0 0.0
  %1594 = vmatprep.subr.mxu0 0.0
  %1595 = vmatpush1.msra.mxu0 0.0
  %1596 = vmatprep.subr.mxu0 0.0
  %1597 = vmatpush1.msra.mxu0 0.0
  %1598 = vmatprep.subr.mxu0 0.0
  %1599 = vmatpush1.msra.mxu0 0.0
  %1600 = vmatprep.subr.mxu0 0.0
  %1601 = vmatpush1.msra.mxu0 0.0
  %1602 = vmatprep.subr.mxu0 0.0
  %1603 = vmatpush1.msra.mxu0 0.0
  %1604 = vmatprep.subr.mxu0 0.0
  %1605 = vmatpush1.msra.mxu0 0.0
  %1606 = vmatprep.mubr.f32.mxu0 0.0
  %1607 = vmatmul.mubr.f32.gmra.mrb[0].mxu0 %v1540
  %v1608 = vpop.f32.mrb[0].mxu0
  %v1609 = vadd.f32 0.0, %v1608
  %v1610 = vpop.f32.mrb[0].mxu0
  %1611 = vdwg.mxu0
  %v1613 = vrot.slane %v1609, 4
  %v1615 = vadd.f32 %v172, %v1613
  %v1616 = vsub.f32 0.0, %v1615
  %v1617 = vmul.f32 %v1616, 1.442695
  %v1618 = vpow.pop %v1617
  %v1619 = vadd.f32 %v1618, 1.0
  %v1620 = vrcp.pop %v1619
  %v1621 = vmul.f32 1.0, %v1620
  %v1622 = vtanh.pop %v1615
  %v1624 = vrot.slane %v1412, 4
  %1625 = vrot.lane.b32.xlu0 %v1624, 32
  %v1626 = vpop.permute.xlu0 %1625
  %v1628 = vmul.f32 %v1621, %v1626
  %1630 = vrot.lane.b32.xlu0 %v1622, 32
  %v1631 = vpop.permute.xlu0 %1630
  %v1633 = vmul.f32 %v1621, %v1631
  %1635 = vrot.lane.b32.xlu0 %v1633, 32
  %v1636 = vpop.permute.xlu0 %1635
  %v1638 = vadd.f32 %v1628, %v1636
  %v1639 = vtanh.pop %v1638
  %1641 = vrot.lane.b32.xlu0 %v1639, 32
  %v1642 = vpop.permute.xlu0 %1641
  %v1644 = vmul.f32 %v1621, %v1642
  %v1646 = vrot.slane %v1644, 4
  %1647 = vrot.lane.b32.xlu0 %v1646, 64
  %v1648 = vpop.permute.xlu0 %1647
  %v1650 = vsel %vm792, %v1648, %v1403
  %v1652 = vrot.slane %v1638, 4
  %1653 = vrot.lane.b32.xlu0 %v1652, 96
  %v1654 = vpop.permute.xlu0 %1653
  %v1656 = vsel %vm792, %v1654, %v1412
  %v1657 = vsel %vm792, %v1648, 0.0
  %1658 = vst.msk [vmem:[#allocation3 + $0x4] sm:$0x3] %vm305, %v1657
  %v1660 = vsel %vm189, %v1527, 0
  %1662 = vmatprep.subr.mxu0 0.0
  %1663 = vmatpush1.msra.mxu0 %v180
  %1664 = vmatprep.subr.mxu0 0.0
  %1665 = vmatpush1.msra.mxu0 %v181
  %1666 = vmatprep.subr.mxu0 0.0
  %1667 = vmatpush1.msra.mxu0 %v182
  %1668 = vmatprep.subr.mxu0 0.0
  %1669 = vmatpush1.msra.mxu0 %v183
  %1670 = vmatprep.subr.mxu0 0.0
  %1671 = vmatpush1.msra.mxu0 0.0
  %1672 = vmatprep.subr.mxu0 0.0
  %1673 = vmatpush1.msra.mxu0 0.0
  %1674 = vmatprep.subr.mxu0 0.0
  %1675 = vmatpush1.msra.mxu0 0.0
  %1676 = vmatprep.subr.mxu0 0.0
  %1677 = vmatpush1.msra.mxu0 0.0
  %1678 = vmatprep.subr.mxu0 0.0
  %1679 = vmatpush1.msra.mxu0 0.0
  %1680 = vmatprep.subr.mxu0 0.0
  %1681 = vmatpush1.msra.mxu0 0.0
  %1682 = vmatprep.subr.mxu0 0.0
  %1683 = vmatpush1.msra.mxu0 0.0
  %1684 = vmatprep.subr.mxu0 0.0
  %1685 = vmatpush1.msra.mxu0 0.0
  %1686 = vmatprep.subr.mxu0 0.0
  %1687 = vmatpush1.msra.mxu0 0.0
  %1688 = vmatprep.subr.mxu0 0.0
  %1689 = vmatpush1.msra.mxu0 0.0
  %1690 = vmatprep.subr.mxu0 0.0
  %1691 = vmatpush1.msra.mxu0 0.0
  %1692 = vmatprep.subr.mxu0 0.0
  %1693 = vmatpush1.msra.mxu0 0.0
  %1694 = vmatprep.subr.mxu0 0.0
  %1695 = vmatpush1.msra.mxu0 0.0
  %1696 = vmatprep.subr.mxu0 0.0
  %1697 = vmatpush1.msra.mxu0 0.0
  %1698 = vmatprep.subr.mxu0 0.0
  %1699 = vmatpush1.msra.mxu0 0.0
  %1700 = vmatprep.subr.mxu0 0.0
  %1701 = vmatpush1.msra.mxu0 0.0
  %1702 = vmatprep.subr.mxu0 0.0
  %1703 = vmatpush1.msra.mxu0 0.0
  %1704 = vmatprep.subr.mxu0 0.0
  %1705 = vmatpush1.msra.mxu0 0.0
  %1706 = vmatprep.subr.mxu0 0.0
  %1707 = vmatpush1.msra.mxu0 0.0
  %1708 = vmatprep.subr.mxu0 0.0
  %1709 = vmatpush1.msra.mxu0 0.0
  %1710 = vmatprep.subr.mxu0 0.0
  %1711 = vmatpush1.msra.mxu0 0.0
  %1712 = vmatprep.subr.mxu0 0.0
  %1713 = vmatpush1.msra.mxu0 0.0
  %1714 = vmatprep.subr.mxu0 0.0
  %1715 = vmatpush1.msra.mxu0 0.0
  %1716 = vmatprep.subr.mxu0 0.0
  %1717 = vmatpush1.msra.mxu0 0.0
  %1718 = vmatprep.subr.mxu0 0.0
  %1719 = vmatpush1.msra.mxu0 0.0
  %1720 = vmatprep.subr.mxu0 0.0
  %1721 = vmatpush1.msra.mxu0 0.0
  %1722 = vmatprep.subr.mxu0 0.0
  %1723 = vmatpush1.msra.mxu0 0.0
  %1724 = vmatprep.subr.mxu0 0.0
  %1725 = vmatpush1.msra.mxu0 0.0
  %1726 = vmatprep.mubr.f32.mxu0 0.0
  %1727 = vmatmul.mubr.f32.gmra.mrb[0].mxu0 %v1660
  %v1728 = vpop.f32.mrb[0].mxu0
  %v1729 = vadd.f32 0.0, %v1728
  %v1730 = vpop.f32.mrb[0].mxu0
  %1731 = vdwg.mxu0
  %v1733 = vrot.slane %v1729, 4
  %v1735 = vadd.f32 %v176, %v1733
  %v1736 = vsub.f32 0.0, %v1735
  %v1737 = vmul.f32 %v1736, 1.442695
  %v1738 = vpow.pop %v1737
  %v1739 = vadd.f32 %v1738, 1.0
  %v1740 = vrcp.pop %v1739
  %v1741 = vmul.f32 1.0, %v1740
  %v1742 = vtanh.pop %v1735
  %v1744 = vrot.slane %v1536, 4
  %1745 = vrot.lane.b32.xlu0 %v1744, 32
  %v1746 = vpop.permute.xlu0 %1745
  %v1748 = vmul.f32 %v1741, %v1746
  %1750 = vrot.lane.b32.xlu0 %v1742, 32
  %v1751 = vpop.permute.xlu0 %1750
  %v1753 = vmul.f32 %v1741, %v1751
  %1755 = vrot.lane.b32.xlu0 %v1753, 32
  %v1756 = vpop.permute.xlu0 %1755
  %v1758 = vadd.f32 %v1748, %v1756
  %v1759 = vtanh.pop %v1758
  %1761 = vrot.lane.b32.xlu0 %v1759, 32
  %v1762 = vpop.permute.xlu0 %1761
  %v1764 = vmul.f32 %v1741, %v1762
  %v1766 = vrot.slane %v1764, 4
  %1767 = vrot.lane.b32.xlu0 %v1766, 64
  %v1768 = vpop.permute.xlu0 %1767
  %v1770 = vsel %vm666, %v1768, %v1527
  %v1772 = vrot.slane %v1758, 4
  %1773 = vrot.lane.b32.xlu0 %v1772, 96
  %v1774 = vpop.permute.xlu0 %1773
  %v1776 = vsel %vm666, %v1774, %v1536
  %v1777 = vsel %vm666, %v1768, 0.0
  %1778 = vst.msk [vmem:[#allocation2 + $0xc] sm:$0x3] %vm305, %v1777
  %v1780 = vsel %vm189, %v1650, 0
  %1782 = vmatprep.subr.mxu0 0.0
  %1783 = vmatpush1.msra.mxu0 %v184
  %1784 = vmatprep.subr.mxu0 0.0
  %1785 = vmatpush1.msra.mxu0 %v185
  %1786 = vmatprep.subr.mxu0 0.0
  %1787 = vmatpush1.msra.mxu0 %v186
  %1788 = vmatprep.subr.mxu0 0.0
  %1789 = vmatpush1.msra.mxu0 %v187
  %1790 = vmatprep.subr.mxu0 0.0
  %1791 = vmatpush1.msra.mxu0 0.0
  %1792 = vmatprep.subr.mxu0 0.0
  %1793 = vmatpush1.msra.mxu0 0.0
  %1794 = vmatprep.subr.mxu0 0.0
  %1795 = vmatpush1.msra.mxu0 0.0
  %1796 = vmatprep.subr.mxu0 0.0
  %1797 = vmatpush1.msra.mxu0 0.0
  %1798 = vmatprep.subr.mxu0 0.0
  %1799 = vmatpush1.msra.mxu0 0.0
  %1800 = vmatprep.subr.mxu0 0.0
  %1801 = vmatpush1.msra.mxu0 0.0
  %1802 = vmatprep.subr.mxu0 0.0
  %1803 = vmatpush1.msra.mxu0 0.0
  %1804 = vmatprep.subr.mxu0 0.0
  %1805 = vmatpush1.msra.mxu0 0.0
  %1806 = vmatprep.subr.mxu0 0.0
  %1807 = vmatpush1.msra.mxu0 0.0
  %1808 = vmatprep.subr.mxu0 0.0
  %1809 = vmatpush1.msra.mxu0 0.0
  %1810 = vmatprep.subr.mxu0 0.0
  %1811 = vmatpush1.msra.mxu0 0.0
  %1812 = vmatprep.subr.mxu0 0.0
  %1813 = vmatpush1.msra.mxu0 0.0
  %1814 = vmatprep.subr.mxu0 0.0
  %1815 = vmatpush1.msra.mxu0 0.0
  %1816 = vmatprep.subr.mxu0 0.0
  %1817 = vmatpush1.msra.mxu0 0.0
  %1818 = vmatprep.subr.mxu0 0.0
  %1819 = vmatpush1.msra.mxu0 0.0
  %1820 = vmatprep.subr.mxu0 0.0
  %1821 = vmatpush1.msra.mxu0 0.0
  %1822 = vmatprep.subr.mxu0 0.0
  %1823 = vmatpush1.msra.mxu0 0.0
  %1824 = vmatprep.subr.mxu0 0.0
  %1825 = vmatpush1.msra.mxu0 0.0
  %1826 = vmatprep.subr.mxu0 0.0
  %1827 = vmatpush1.msra.mxu0 0.0
  %1828 = vmatprep.subr.mxu0 0.0
  %1829 = vmatpush1.msra.mxu0 0.0
  %1830 = vmatprep.subr.mxu0 0.0
  %1831 = vmatpush1.msra.mxu0 0.0
  %1832 = vmatprep.subr.mxu0 0.0
  %1833 = vmatpush1.msra.mxu0 0.0
  %1834 = vmatprep.subr.mxu0 0.0
  %1835 = vmatpush1.msra.mxu0 0.0
  %1836 = vmatprep.subr.mxu0 0.0
  %1837 = vmatpush1.msra.mxu0 0.0
  %1838 = vmatprep.subr.mxu0 0.0
  %1839 = vmatpush1.msra.mxu0 0.0
  %1840 = vmatprep.subr.mxu0 0.0
  %1841 = vmatpush1.msra.mxu0 0.0
  %1842 = vmatprep.subr.mxu0 0.0
  %1843 = vmatpush1.msra.mxu0 0.0
  %1844 = vmatprep.subr.mxu0 0.0
  %1845 = vmatpush1.msra.mxu0 0.0
  %1846 = vmatprep.mubr.f32.mxu0 0.0
  %1847 = vmatmul.mubr.f32.gmra.mrb[0].mxu0 %v1780
  %v1848 = vpop.f32.mrb[0].mxu0
  %v1849 = vadd.f32 0.0, %v1848
  %v1850 = vpop.f32.mrb[0].mxu0
  %1851 = vdwg.mxu0
  %v1853 = vrot.slane %v1849, 6
  %v1855 = vadd.f32 %v172, %v1853
  %v1856 = vsub.f32 0.0, %v1855
  %v1857 = vmul.f32 %v1856, 1.442695
  %v1858 = vpow.pop %v1857
  %v1859 = vadd.f32 %v1858, 1.0
  %v1860 = vrcp.pop %v1859
  %v1861 = vmul.f32 1.0, %v1860
  %v1862 = vtanh.pop %v1855
  %v1864 = vrot.slane %v1656, 6
  %1865 = vrot.lane.b32.xlu0 %v1864, 32
  %v1866 = vpop.permute.xlu0 %1865
  %v1868 = vmul.f32 %v1861, %v1866
  %1870 = vrot.lane.b32.xlu0 %v1862, 32
  %v1871 = vpop.permute.xlu0 %1870
  %v1873 = vmul.f32 %v1861, %v1871
  %1875 = vrot.lane.b32.xlu0 %v1873, 32
  %v1876 = vpop.permute.xlu0 %1875
  %v1878 = vadd.f32 %v1868, %v1876
  %v1879 = vtanh.pop %v1878
  %1881 = vrot.lane.b32.xlu0 %v1879, 32
  %v1882 = vpop.permute.xlu0 %1881
  %v1884 = vmul.f32 %v1861, %v1882
  %v1886 = vrot.slane %v1884, 2
  %1887 = vrot.lane.b32.xlu0 %v1886, 64
  %v1888 = vpop.permute.xlu0 %1887
  %v1890 = vsel %vm536, %v1888, %v1650
  %v1892 = vrot.slane %v1878, 2
  %1893 = vrot.lane.b32.xlu0 %v1892, 96
  %v1894 = vpop.permute.xlu0 %1893
  %v1896 = vsel %vm536, %v1894, %v1656
  %v1897 = vsel %vm536, %v1888, 0.0
  %1898 = vst.msk [vmem:[#allocation3 + $0x2] sm:$0x3] %vm305, %v1897
  %v1900 = vsel %vm189, %v1770, 0
  %1902 = vmatprep.subr.mxu0 0.0
  %1903 = vmatpush1.msra.mxu0 %v180
  %1904 = vmatprep.subr.mxu0 0.0
  %1905 = vmatpush1.msra.mxu0 %v181
  %1906 = vmatprep.subr.mxu0 0.0
  %1907 = vmatpush1.msra.mxu0 %v182
  %1908 = vmatprep.subr.mxu0 0.0
  %1909 = vmatpush1.msra.mxu0 %v183
  %1910 = vmatprep.subr.mxu0 0.0
  %1911 = vmatpush1.msra.mxu0 0.0
  %1912 = vmatprep.subr.mxu0 0.0
  %1913 = vmatpush1.msra.mxu0 0.0
  %1914 = vmatprep.subr.mxu0 0.0
  %1915 = vmatpush1.msra.mxu0 0.0
  %1916 = vmatprep.subr.mxu0 0.0
  %1917 = vmatpush1.msra.mxu0 0.0
  %1918 = vmatprep.subr.mxu0 0.0
  %1919 = vmatpush1.msra.mxu0 0.0
  %1920 = vmatprep.subr.mxu0 0.0
  %1921 = vmatpush1.msra.mxu0 0.0
  %1922 = vmatprep.subr.mxu0 0.0
  %1923 = vmatpush1.msra.mxu0 0.0
  %1924 = vmatprep.subr.mxu0 0.0
  %1925 = vmatpush1.msra.mxu0 0.0
  %1926 = vmatprep.subr.mxu0 0.0
  %1927 = vmatpush1.msra.mxu0 0.0
  %1928 = vmatprep.subr.mxu0 0.0
  %1929 = vmatpush1.msra.mxu0 0.0
  %1930 = vmatprep.subr.mxu0 0.0
  %1931 = vmatpush1.msra.mxu0 0.0
  %1932 = vmatprep.subr.mxu0 0.0
  %1933 = vmatpush1.msra.mxu0 0.0
  %1934 = vmatprep.subr.mxu0 0.0
  %1935 = vmatpush1.msra.mxu0 0.0
  %1936 = vmatprep.subr.mxu0 0.0
  %1937 = vmatpush1.msra.mxu0 0.0
  %1938 = vmatprep.subr.mxu0 0.0
  %1939 = vmatpush1.msra.mxu0 0.0
  %1940 = vmatprep.subr.mxu0 0.0
  %1941 = vmatpush1.msra.mxu0 0.0
  %1942 = vmatprep.subr.mxu0 0.0
  %1943 = vmatpush1.msra.mxu0 0.0
  %1944 = vmatprep.subr.mxu0 0.0
  %1945 = vmatpush1.msra.mxu0 0.0
  %1946 = vmatprep.subr.mxu0 0.0
  %1947 = vmatpush1.msra.mxu0 0.0
  %1948 = vmatprep.subr.mxu0 0.0
  %1949 = vmatpush1.msra.mxu0 0.0
  %1950 = vmatprep.subr.mxu0 0.0
  %1951 = vmatpush1.msra.mxu0 0.0
  %1952 = vmatprep.subr.mxu0 0.0
  %1953 = vmatpush1.msra.mxu0 0.0
  %1954 = vmatprep.subr.mxu0 0.0
  %1955 = vmatpush1.msra.mxu0 0.0
  %1956 = vmatprep.subr.mxu0 0.0
  %1957 = vmatpush1.msra.mxu0 0.0
  %1958 = vmatprep.subr.mxu0 0.0
  %1959 = vmatpush1.msra.mxu0 0.0
  %1960 = vmatprep.subr.mxu0 0.0
  %1961 = vmatpush1.msra.mxu0 0.0
  %1962 = vmatprep.subr.mxu0 0.0
  %1963 = vmatpush1.msra.mxu0 0.0
  %1964 = vmatprep.subr.mxu0 0.0
  %1965 = vmatpush1.msra.mxu0 0.0
  %1966 = vmatprep.mubr.f32.mxu0 0.0
  %1967 = vmatmul.mubr.f32.gmra.mrb[0].mxu0 %v1900
  %v1968 = vpop.f32.mrb[0].mxu0
  %v1969 = vadd.f32 0.0, %v1968
  %v1970 = vpop.f32.mrb[0].mxu0
  %1971 = vdwg.mxu0
  %v1973 = vrot.slane %v1969, 2
  %v1975 = vadd.f32 %v176, %v1973
  %v1976 = vsub.f32 0.0, %v1975
  %v1977 = vmul.f32 %v1976, 1.442695
  %v1978 = vpow.pop %v1977
  %v1979 = vadd.f32 %v1978, 1.0
  %v1980 = vrcp.pop %v1979
  %v1981 = vmul.f32 1.0, %v1980
  %v1982 = vtanh.pop %v1975
  %v1984 = vrot.slane %v1776, 2
  %1985 = vrot.lane.b32.xlu0 %v1984, 32
  %v1986 = vpop.permute.xlu0 %1985
  %v1988 = vmul.f32 %v1981, %v1986
  %1990 = vrot.lane.b32.xlu0 %v1982, 32
  %v1991 = vpop.permute.xlu0 %1990
  %v1993 = vmul.f32 %v1981, %v1991
  %1995 = vrot.lane.b32.xlu0 %v1993, 32
  %v1996 = vpop.permute.xlu0 %1995
  %v1998 = vadd.f32 %v1988, %v1996
  %v1999 = vtanh.pop %v1998
  %2001 = vrot.lane.b32.xlu0 %v1999, 32
  %v2002 = vpop.permute.xlu0 %2001
  %v2004 = vmul.f32 %v1981, %v2002
  %v2006 = vrot.slane %v2004, 6
  %2007 = vrot.lane.b32.xlu0 %v2006, 64
  %v2008 = vpop.permute.xlu0 %2007
  %v2010 = vsel %vm410, %v2008, 0.0
  %2011 = vst.msk [vmem:[#allocation2 + $0xe] sm:$0x3] %vm305, %v2010
  %v2013 = vsel %vm189, %v1890, 0
  %2015 = vmatprep.subr.mxu0 0.0
  %2016 = vmatpush1.msra.mxu0 %v184
  %2017 = vmatprep.subr.mxu0 0.0
  %2018 = vmatpush1.msra.mxu0 %v185
  %2019 = vmatprep.subr.mxu0 0.0
  %2020 = vmatpush1.msra.mxu0 %v186
  %2021 = vmatprep.subr.mxu0 0.0
  %2022 = vmatpush1.msra.mxu0 %v187
  %2023 = vmatprep.subr.mxu0 0.0
  %2024 = vmatpush1.msra.mxu0 0.0
  %2025 = vmatprep.subr.mxu0 0.0
  %2026 = vmatpush1.msra.mxu0 0.0
  %2027 = vmatprep.subr.mxu0 0.0
  %2028 = vmatpush1.msra.mxu0 0.0
  %2029 = vmatprep.subr.mxu0 0.0
  %2030 = vmatpush1.msra.mxu0 0.0
  %2031 = vmatprep.subr.mxu0 0.0
  %2032 = vmatpush1.msra.mxu0 0.0
  %2033 = vmatprep.subr.mxu0 0.0
  %2034 = vmatpush1.msra.mxu0 0.0
  %2035 = vmatprep.subr.mxu0 0.0
  %2036 = vmatpush1.msra.mxu0 0.0
  %2037 = vmatprep.subr.mxu0 0.0
  %2038 = vmatpush1.msra.mxu0 0.0
  %2039 = vmatprep.subr.mxu0 0.0
  %2040 = vmatpush1.msra.mxu0 0.0
  %2041 = vmatprep.subr.mxu0 0.0
  %2042 = vmatpush1.msra.mxu0 0.0
  %2043 = vmatprep.subr.mxu0 0.0
  %2044 = vmatpush1.msra.mxu0 0.0
  %2045 = vmatprep.subr.mxu0 0.0
  %2046 = vmatpush1.msra.mxu0 0.0
  %2047 = vmatprep.subr.mxu0 0.0
  %2048 = vmatpush1.msra.mxu0 0.0
  %2049 = vmatprep.subr.mxu0 0.0
  %2050 = vmatpush1.msra.mxu0 0.0
  %2051 = vmatprep.subr.mxu0 0.0
  %2052 = vmatpush1.msra.mxu0 0.0
  %2053 = vmatprep.subr.mxu0 0.0
  %2054 = vmatpush1.msra.mxu0 0.0
  %2055 = vmatprep.subr.mxu0 0.0
  %2056 = vmatpush1.msra.mxu0 0.0
  %2057 = vmatprep.subr.mxu0 0.0
  %2058 = vmatpush1.msra.mxu0 0.0
  %2059 = vmatprep.subr.mxu0 0.0
  %2060 = vmatpush1.msra.mxu0 0.0
  %2061 = vmatprep.subr.mxu0 0.0
  %2062 = vmatpush1.msra.mxu0 0.0
  %2063 = vmatprep.subr.mxu0 0.0
  %2064 = vmatpush1.msra.mxu0 0.0
  %2065 = vmatprep.subr.mxu0 0.0
  %2066 = vmatpush1.msra.mxu0 0.0
  %2067 = vmatprep.subr.mxu0 0.0
  %2068 = vmatpush1.msra.mxu0 0.0
  %2069 = vmatprep.subr.mxu0 0.0
  %2070 = vmatpush1.msra.mxu0 0.0
  %2071 = vmatprep.subr.mxu0 0.0
  %2072 = vmatpush1.msra.mxu0 0.0
  %2073 = vmatprep.subr.mxu0 0.0
  %2074 = vmatpush1.msra.mxu0 0.0
  %2075 = vmatprep.subr.mxu0 0.0
  %2076 = vmatpush1.msra.mxu0 0.0
  %2077 = vmatprep.subr.mxu0 0.0
  %2078 = vmatpush1.msra.mxu0 0.0
  %2079 = vmatprep.mubr.f32.mxu0 0.0
  %2080 = vmatmul.mubr.f32.gmra.mrb[0].mxu0 %v2013
  %v2081 = vpop.f32.mrb[0].mxu0
  %v2082 = vadd.f32 0.0, %v2081
  %v2083 = vpop.f32.mrb[0].mxu0
  %2084 = vdwg.mxu0
  %v2085 = vadd.f32 %v172, %v2082
  %v2086 = vsub.f32 0.0, %v2085
  %v2087 = vmul.f32 %v2086, 1.442695
  %v2088 = vpow.pop %v2087
  %v2089 = vadd.f32 %v2088, 1.0
  %v2090 = vrcp.pop %v2089
  %v2091 = vmul.f32 1.0, %v2090
  %v2092 = vtanh.pop %v2085
  %2094 = vrot.lane.b32.xlu0 %v1896, 32
  %v2095 = vpop.permute.xlu0 %2094
  %v2097 = vmul.f32 %v2091, %v2095
  %2099 = vrot.lane.b32.xlu0 %v2092, 32
  %v2100 = vpop.permute.xlu0 %2099
  %v2102 = vmul.f32 %v2091, %v2100
  %2104 = vrot.lane.b32.xlu0 %v2102, 32
  %v2105 = vpop.permute.xlu0 %2104
  %v2107 = vadd.f32 %v2097, %v2105
  %v2108 = vtanh.pop %v2107
  %2110 = vrot.lane.b32.xlu0 %v2108, 32
  %v2111 = vpop.permute.xlu0 %2110
  %v2113 = vmul.f32 %v2091, %v2111
  %v2114 = vsel %vm294, %v2113, 0.0
  %2116 = vrot.lane.b32.xlu0 %v2114, 64
  %v2117 = vpop.permute.xlu0 %2116
  %2119 = vst.msk [vmem:[#allocation3] sm:$0x3] %vm305, %v2117
  %v2120 = vld [vmem:[#allocation2] sm:$0xff]
  %v2121 = vld [vmem:[#allocation2 + $0x8] sm:$0xff]
  %v2122 = vld [vmem:[#allocation3] sm:$0xff]
  %v2123 = vld [vmem:[#allocation3 + $0x8] sm:$0xff]
  %v2124 = vld [vmem:[%s12] sm:$0xff]
  %v2125 = vld [vmem:[%s12 + $0x8] sm:$0xff]
  %v2126 = vld [vmem:[%s12 + $0x10] sm:$0xff]
  %v2127 = vld [vmem:[%s12 + $0x18] sm:$0xff]
  %v2128 = vld [vmem:[%s12 + $0x20] sm:$0xff]
  %v2129 = vld [vmem:[%s12 + $0x28] sm:$0xff]
  %v2130 = vld [vmem:[%s12 + $0x30] sm:$0xff]
  %v2131 = vld [vmem:[%s12 + $0x38] sm:$0xff]
  %v2132 = vld [vmem:[%s13] sm:$0xff]
  %v2133 = vld [vmem:[%s13 + $0x8] sm:$0xff]
  %v2134 = vld [vmem:[%s13 + $0x10] sm:$0xff]
  %v2135 = vld [vmem:[%s13 + $0x18] sm:$0xff]
  %v2136 = vld [vmem:[%s13 + $0x20] sm:$0xff]
  %v2137 = vld [vmem:[%s13 + $0x28] sm:$0xff]
  %v2138 = vld [vmem:[%s13 + $0x30] sm:$0xff]
  %v2139 = vld [vmem:[%s13 + $0x38] sm:$0xff]
  %v2141 = vsel %vm189, %v2122, 0
  %v2144 = vsel %vm189, %v2123, 0
  %2146 = vmatprep.subr.mxu0 %v2133
  %2147 = vmatpush1.msra.mxu0 %v2132
  %2148 = vmatprep.subr.mxu0 %v2135
  %2149 = vmatpush1.msra.mxu0 %v2134
  %2150 = vmatprep.subr.mxu0 %v2137
  %2151 = vmatpush1.msra.mxu0 %v2136
  %2152 = vmatprep.subr.mxu0 %v2139
  %2153 = vmatpush1.msra.mxu0 %v2138
  %2154 = vmatprep.subr.mxu0 0.0
  %2155 = vmatpush1.msra.mxu0 0.0
  %2156 = vmatprep.subr.mxu0 0.0
  %2157 = vmatpush1.msra.mxu0 0.0
  %2158 = vmatprep.subr.mxu0 0.0
  %2159 = vmatpush1.msra.mxu0 0.0
  %2160 = vmatprep.subr.mxu0 0.0
  %2161 = vmatpush1.msra.mxu0 0.0
  %2162 = vmatprep.subr.mxu0 0.0
  %2163 = vmatpush1.msra.mxu0 0.0
  %2164 = vmatprep.subr.mxu0 0.0
  %2165 = vmatpush1.msra.mxu0 0.0
  %2166 = vmatprep.subr.mxu0 0.0
  %2167 = vmatpush1.msra.mxu0 0.0
  %2168 = vmatprep.subr.mxu0 0.0
  %2169 = vmatpush1.msra.mxu0 0.0
  %2170 = vmatprep.subr.mxu0 0.0
  %2171 = vmatpush1.msra.mxu0 0.0
  %2172 = vmatprep.subr.mxu0 0.0
  %2173 = vmatpush1.msra.mxu0 0.0
  %2174 = vmatprep.subr.mxu0 0.0
  %2175 = vmatpush1.msra.mxu0 0.0
  %2176 = vmatprep.subr.mxu0 0.0
  %2177 = vmatpush1.msra.mxu0 0.0
  %2178 = vmatprep.subr.mxu0 0.0
  %2179 = vmatpush1.msra.mxu0 0.0
  %2180 = vmatprep.subr.mxu0 0.0
  %2181 = vmatpush1.msra.mxu0 0.0
  %2182 = vmatprep.subr.mxu0 0.0
  %2183 = vmatpush1.msra.mxu0 0.0
  %2184 = vmatprep.subr.mxu0 0.0
  %2185 = vmatpush1.msra.mxu0 0.0
  %2186 = vmatprep.subr.mxu0 0.0
  %2187 = vmatpush1.msra.mxu0 0.0
  %2188 = vmatprep.subr.mxu0 0.0
  %2189 = vmatpush1.msra.mxu0 0.0
  %2190 = vmatprep.subr.mxu0 0.0
  %2191 = vmatpush1.msra.mxu0 0.0
  %2192 = vmatprep.subr.mxu0 0.0
  %2193 = vmatpush1.msra.mxu0 0.0
  %2194 = vmatprep.subr.mxu0 0.0
  %2195 = vmatpush1.msra.mxu0 0.0
  %2196 = vmatprep.subr.mxu0 0.0
  %2197 = vmatpush1.msra.mxu0 0.0
  %2198 = vmatprep.subr.mxu0 0.0
  %2199 = vmatpush1.msra.mxu0 0.0
  %2200 = vmatprep.subr.mxu0 0.0
  %2201 = vmatpush1.msra.mxu0 0.0
  %2202 = vmatprep.subr.mxu0 0.0
  %2203 = vmatpush1.msra.mxu0 0.0
  %2204 = vmatprep.subr.mxu0 0.0
  %2205 = vmatpush1.msra.mxu0 0.0
  %2206 = vmatprep.subr.mxu0 0.0
  %2207 = vmatpush1.msra.mxu0 0.0
  %2208 = vmatprep.subr.mxu0 0.0
  %2209 = vmatpush1.msra.mxu0 0.0
  %2210 = vmatprep.mubr.f32.mxu0 0.0
  %2211 = vmatmul.mubr.f32.gmra.mrb[0].mxu0 %v2141
  %v2212 = vpop.f32.mrb[0].mxu0
  %v2213 = vadd.f32 0.0, %v2212
  %v2214 = vpop.f32.mrb[0].mxu0
  %v2215 = vadd.f32 0.0, %v2214
  %2216 = vmatprep.mubr.f32.mxu0 0.0
  %2217 = vmatmul.mubr.f32.gmra.mrb[0].mxu0 %v2144
  %v2218 = vpop.f32.mrb[0].mxu0
  %v2219 = vadd.f32 0.0, %v2218
  %v2220 = vpop.f32.mrb[0].mxu0
  %v2221 = vadd.f32 0.0, %v2220
  %2222 = vdwg.mxu0
  %v2224 = vsel %vm189, %v2120, 0
  %v2227 = vsel %vm189, %v2121, 0
  %2229 = vmatprep.subr.mxu0 %v2125
  %2230 = vmatpush1.msra.mxu0 %v2124
  %2231 = vmatprep.subr.mxu0 %v2127
  %2232 = vmatpush1.msra.mxu0 %v2126
  %2233 = vmatprep.subr.mxu0 %v2129
  %2234 = vmatpush1.msra.mxu0 %v2128
  %2235 = vmatprep.subr.mxu0 %v2131
  %2236 = vmatpush1.msra.mxu0 %v2130
  %2237 = vmatprep.subr.mxu0 0.0
  %2238 = vmatpush1.msra.mxu0 0.0
  %2239 = vmatprep.subr.mxu0 0.0
  %2240 = vmatpush1.msra.mxu0 0.0
  %2241 = vmatprep.subr.mxu0 0.0
  %2242 = vmatpush1.msra.mxu0 0.0
  %2243 = vmatprep.subr.mxu0 0.0
  %2244 = vmatpush1.msra.mxu0 0.0
  %2245 = vmatprep.subr.mxu0 0.0
  %2246 = vmatpush1.msra.mxu0 0.0
  %2247 = vmatprep.subr.mxu0 0.0
  %2248 = vmatpush1.msra.mxu0 0.0
  %2249 = vmatprep.subr.mxu0 0.0
  %2250 = vmatpush1.msra.mxu0 0.0
  %2251 = vmatprep.subr.mxu0 0.0
  %2252 = vmatpush1.msra.mxu0 0.0
  %2253 = vmatprep.subr.mxu0 0.0
  %2254 = vmatpush1.msra.mxu0 0.0
  %2255 = vmatprep.subr.mxu0 0.0
  %2256 = vmatpush1.msra.mxu0 0.0
  %2257 = vmatprep.subr.mxu0 0.0
  %2258 = vmatpush1.msra.mxu0 0.0
  %2259 = vmatprep.subr.mxu0 0.0
  %2260 = vmatpush1.msra.mxu0 0.0
  %2261 = vmatprep.subr.mxu0 0.0
  %2262 = vmatpush1.msra.mxu0 0.0
  %2263 = vmatprep.subr.mxu0 0.0
  %2264 = vmatpush1.msra.mxu0 0.0
  %2265 = vmatprep.subr.mxu0 0.0
  %2266 = vmatpush1.msra.mxu0 0.0
  %2267 = vmatprep.subr.mxu0 0.0
  %2268 = vmatpush1.msra.mxu0 0.0
  %2269 = vmatprep.subr.mxu0 0.0
  %2270 = vmatpush1.msra.mxu0 0.0
  %2271 = vmatprep.subr.mxu0 0.0
  %2272 = vmatpush1.msra.mxu0 0.0
  %2273 = vmatprep.subr.mxu0 0.0
  %2274 = vmatpush1.msra.mxu0 0.0
  %2275 = vmatprep.subr.mxu0 0.0
  %2276 = vmatpush1.msra.mxu0 0.0
  %2277 = vmatprep.subr.mxu0 0.0
  %2278 = vmatpush1.msra.mxu0 0.0
  %2279 = vmatprep.subr.mxu0 0.0
  %2280 = vmatpush1.msra.mxu0 0.0
  %2281 = vmatprep.subr.mxu0 0.0
  %2282 = vmatpush1.msra.mxu0 0.0
  %2283 = vmatprep.subr.mxu0 0.0
  %2284 = vmatpush1.msra.mxu0 0.0
  %2285 = vmatprep.subr.mxu0 0.0
  %2286 = vmatpush1.msra.mxu0 0.0
  %2287 = vmatprep.subr.mxu0 0.0
  %2288 = vmatpush1.msra.mxu0 0.0
  %2289 = vmatprep.subr.mxu0 0.0
  %2290 = vmatpush1.msra.mxu0 0.0
  %2291 = vmatprep.subr.mxu0 0.0
  %2292 = vmatpush1.msra.mxu0 0.0
  %2293 = vmatprep.mubr.f32.mxu0 0.0
  %2294 = vmatmul.mubr.f32.gmra.mrb[0].mxu0 %v2224
  %v2295 = vpop.f32.mrb[0].mxu0
  %v2296 = vadd.f32 %v2213, %v2295
  %v2297 = vpop.f32.mrb[0].mxu0
  %v2298 = vadd.f32 %v2215, %v2297
  %2299 = vmatprep.mubr.f32.mxu0 0.0
  %2300 = vmatmul.mubr.f32.gmra.mrb[0].mxu0 %v2227
  %v2301 = vpop.f32.mrb[0].mxu0
  %v2302 = vadd.f32 %v2219, %v2301
  %v2303 = vpop.f32.mrb[0].mxu0
  %v2304 = vadd.f32 %v2221, %v2303
  %2305 = vdwg.mxu0
  %v2306 = vld [vmem:[%s16] sm:$0x3]
  %v2308 = vlaneseq
  %v2309 = vshrl.u32 %v2308, 7
  %v2310 = vsub.s32 0, %v2309
  %v2311 = vrot.slane %v2306, %v2310
  %v2312 = vlaneseq
  %v2313 = vshrl.u32 %v2312, 7
  %v2314 = vsub.s32 1, %v2313
  %v2315 = vrot.slane %v2306, %v2314
  %v2318 = vadd.f32 %v2296, %v2311
  %v2319 = vadd.f32 %v2298, %v2315
  %v2320 = vadd.f32 %v2302, %v2311
  %v2321 = vadd.f32 %v2304, %v2315
  %v2322 = vld [vmem:[%s14] sm:$0xff]
  %v2323 = vld [vmem:[%s14 + $0x8] sm:$0xff]
  %v2324 = vld [vmem:[%s14 + $0x10] sm:$0xff]
  %v2325 = vld [vmem:[%s14 + $0x18] sm:$0xff]
  %v2326 = vld [vmem:[%s15] sm:$0xff]
  %v2327 = vld [vmem:[%s15 + $0x8] sm:$0xff]
  %v2328 = vld [vmem:[%s15 + $0x10] sm:$0xff]
  %v2329 = vld [vmem:[%s15 + $0x18] sm:$0xff]
  %2330 = vmatprep.subr.mxu0 0.0
  %2331 = vmatpush1.msra.mxu0 %v2322
  %2332 = vmatprep.subr.mxu0 0.0
  %2333 = vmatpush1.msra.mxu0 %v2323
  %2334 = vmatprep.subr.mxu0 0.0
  %2335 = vmatpush1.msra.mxu0 %v2324
  %2336 = vmatprep.subr.mxu0 0.0
  %2337 = vmatpush1.msra.mxu0 %v2325
  %2338 = vmatprep.subr.mxu0 0.0
  %2339 = vmatpush1.msra.mxu0 0.0
  %2340 = vmatprep.subr.mxu0 0.0
  %2341 = vmatpush1.msra.mxu0 0.0
  %2342 = vmatprep.subr.mxu0 0.0
  %2343 = vmatpush1.msra.mxu0 0.0
  %2344 = vmatprep.subr.mxu0 0.0
  %2345 = vmatpush1.msra.mxu0 0.0
  %2346 = vmatprep.subr.mxu0 0.0
  %2347 = vmatpush1.msra.mxu0 0.0
  %2348 = vmatprep.subr.mxu0 0.0
  %2349 = vmatpush1.msra.mxu0 0.0
  %2350 = vmatprep.subr.mxu0 0.0
  %2351 = vmatpush1.msra.mxu0 0.0
  %2352 = vmatprep.subr.mxu0 0.0
  %2353 = vmatpush1.msra.mxu0 0.0
  %2354 = vmatprep.subr.mxu0 0.0
  %2355 = vmatpush1.msra.mxu0 0.0
  %2356 = vmatprep.subr.mxu0 0.0
  %2357 = vmatpush1.msra.mxu0 0.0
  %2358 = vmatprep.subr.mxu0 0.0
  %2359 = vmatpush1.msra.mxu0 0.0
  %2360 = vmatprep.subr.mxu0 0.0
  %2361 = vmatpush1.msra.mxu0 0.0
  %2362 = vmatprep.subr.mxu0 0.0
  %2363 = vmatpush1.msra.mxu0 0.0
  %2364 = vmatprep.subr.mxu0 0.0
  %2365 = vmatpush1.msra.mxu0 0.0
  %2366 = vmatprep.subr.mxu0 0.0
  %2367 = vmatpush1.msra.mxu0 0.0
  %2368 = vmatprep.subr.mxu0 0.0
  %2369 = vmatpush1.msra.mxu0 0.0
  %2370 = vmatprep.subr.mxu0 0.0
  %2371 = vmatpush1.msra.mxu0 0.0
  %2372 = vmatprep.subr.mxu0 0.0
  %2373 = vmatpush1.msra.mxu0 0.0
  %2374 = vmatprep.subr.mxu0 0.0
  %2375 = vmatpush1.msra.mxu0 0.0
  %2376 = vmatprep.subr.mxu0 0.0
  %2377 = vmatpush1.msra.mxu0 0.0
  %2378 = vmatprep.subr.mxu0 0.0
  %2379 = vmatpush1.msra.mxu0 0.0
  %2380 = vmatprep.subr.mxu0 0.0
  %2381 = vmatpush1.msra.mxu0 0.0
  %2382 = vmatprep.subr.mxu0 0.0
  %2383 = vmatpush1.msra.mxu0 0.0
  %2384 = vmatprep.subr.mxu0 0.0
  %2385 = vmatpush1.msra.mxu0 0.0
  %2386 = vmatprep.subr.mxu0 0.0
  %2387 = vmatpush1.msra.mxu0 0.0
  %2388 = vmatprep.subr.mxu0 0.0
  %2389 = vmatpush1.msra.mxu0 0.0
  %2390 = vmatprep.subr.mxu0 0.0
  %2391 = vmatpush1.msra.mxu0 0.0
  %2392 = vmatprep.subr.mxu0 0.0
  %2393 = vmatpush1.msra.mxu0 0.0
  %2394 = vmatprep.mubr.f32.mxu0 0.0
  %2395 = vmatmul.mubr.f32.gmra.mrb[0].mxu0 %v190
  %v2396 = vpop.f32.mrb[0].mxu0
  %v2397 = vadd.f32 0.0, %v2396
  %v2398 = vpop.f32.mrb[0].mxu0
  %2399 = vdwg.mxu0
  %v2400 = vadd.f32 %v2318, %v2397
  %v2401 = vsub.f32 0.0, %v2400
  %v2402 = vmul.f32 %v2401, 1.442695
  %v2403 = vpow.pop %v2402
  %v2404 = vadd.f32 %v2403, 1.0
  %v2405 = vrcp.pop %v2404
  %v2406 = vmul.f32 1.0, %v2405
  %v2407 = vtanh.pop %v2400
  %v2408 = vmul.f32 %v2406, %v271
  %2410 = vrot.lane.b32.xlu0 %v2407, 32
  %v2411 = vpop.permute.xlu0 %2410
  %v2413 = vmul.f32 %v2406, %v2411
  %2415 = vrot.lane.b32.xlu0 %v2413, 32
  %v2416 = vpop.permute.xlu0 %2415
  %v2418 = vadd.f32 %v2408, %v2416
  %v2419 = vtanh.pop %v2418
  %2421 = vrot.lane.b32.xlu0 %v2419, 32
  %v2422 = vpop.permute.xlu0 %2421
  %v2424 = vmul.f32 %v2406, %v2422
  %v2425 = vsel %vm294, %v2424, %v296
  %v2426 = vsel %vm294, %v2418, %v271
  %v2427 = vsel %vm294, %v2424, 0.0
  %2429 = vrot.lane.b32.xlu0 %v2427, 64
  %v2430 = vpop.permute.xlu0 %2429
  %2432 = vst.msk [vmem:[#allocation4] sm:$0x3] %vm305, %v2430
  %2433 = vmatprep.subr.mxu0 0.0
  %2434 = vmatpush1.msra.mxu0 %v2326
  %2435 = vmatprep.subr.mxu0 0.0
  %2436 = vmatpush1.msra.mxu0 %v2327
  %2437 = vmatprep.subr.mxu0 0.0
  %2438 = vmatpush1.msra.mxu0 %v2328
  %2439 = vmatprep.subr.mxu0 0.0
  %2440 = vmatpush1.msra.mxu0 %v2329
  %2441 = vmatprep.subr.mxu0 0.0
  %2442 = vmatpush1.msra.mxu0 0.0
  %2443 = vmatprep.subr.mxu0 0.0
  %2444 = vmatpush1.msra.mxu0 0.0
  %2445 = vmatprep.subr.mxu0 0.0
  %2446 = vmatpush1.msra.mxu0 0.0
  %2447 = vmatprep.subr.mxu0 0.0
  %2448 = vmatpush1.msra.mxu0 0.0
  %2449 = vmatprep.subr.mxu0 0.0
  %2450 = vmatpush1.msra.mxu0 0.0
  %2451 = vmatprep.subr.mxu0 0.0
  %2452 = vmatpush1.msra.mxu0 0.0
  %2453 = vmatprep.subr.mxu0 0.0
  %2454 = vmatpush1.msra.mxu0 0.0
  %2455 = vmatprep.subr.mxu0 0.0
  %2456 = vmatpush1.msra.mxu0 0.0
  %2457 = vmatprep.subr.mxu0 0.0
  %2458 = vmatpush1.msra.mxu0 0.0
  %2459 = vmatprep.subr.mxu0 0.0
  %2460 = vmatpush1.msra.mxu0 0.0
  %2461 = vmatprep.subr.mxu0 0.0
  %2462 = vmatpush1.msra.mxu0 0.0
  %2463 = vmatprep.subr.mxu0 0.0
  %2464 = vmatpush1.msra.mxu0 0.0
  %2465 = vmatprep.subr.mxu0 0.0
  %2466 = vmatpush1.msra.mxu0 0.0
  %2467 = vmatprep.subr.mxu0 0.0
  %2468 = vmatpush1.msra.mxu0 0.0
  %2469 = vmatprep.subr.mxu0 0.0
  %2470 = vmatpush1.msra.mxu0 0.0
  %2471 = vmatprep.subr.mxu0 0.0
  %2472 = vmatpush1.msra.mxu0 0.0
  %2473 = vmatprep.subr.mxu0 0.0
  %2474 = vmatpush1.msra.mxu0 0.0
  %2475 = vmatprep.subr.mxu0 0.0
  %2476 = vmatpush1.msra.mxu0 0.0
  %2477 = vmatprep.subr.mxu0 0.0
  %2478 = vmatpush1.msra.mxu0 0.0
  %2479 = vmatprep.subr.mxu0 0.0
  %2480 = vmatpush1.msra.mxu0 0.0
  %2481 = vmatprep.subr.mxu0 0.0
  %2482 = vmatpush1.msra.mxu0 0.0
  %2483 = vmatprep.subr.mxu0 0.0
  %2484 = vmatpush1.msra.mxu0 0.0
  %2485 = vmatprep.subr.mxu0 0.0
  %2486 = vmatpush1.msra.mxu0 0.0
  %2487 = vmatprep.subr.mxu0 0.0
  %2488 = vmatpush1.msra.mxu0 0.0
  %2489 = vmatprep.subr.mxu0 0.0
  %2490 = vmatpush1.msra.mxu0 0.0
  %2491 = vmatprep.subr.mxu0 0.0
  %2492 = vmatpush1.msra.mxu0 0.0
  %2493 = vmatprep.subr.mxu0 0.0
  %2494 = vmatpush1.msra.mxu0 0.0
  %2495 = vmatprep.subr.mxu0 0.0
  %2496 = vmatpush1.msra.mxu0 0.0
  %2497 = vmatprep.mubr.f32.mxu0 0.0
  %2498 = vmatmul.mubr.f32.gmra.mrb[0].mxu0 %v190
  %v2499 = vpop.f32.mrb[0].mxu0
  %v2500 = vadd.f32 0.0, %v2499
  %v2501 = vpop.f32.mrb[0].mxu0
  %2502 = vdwg.mxu0
  %v2504 = vrot.slane %v2500, 2
  %v2506 = vadd.f32 %v2321, %v2504
  %v2507 = vsub.f32 0.0, %v2506
  %v2508 = vmul.f32 %v2507, 1.442695
  %v2509 = vpow.pop %v2508
  %v2510 = vadd.f32 %v2509, 1.0
  %v2511 = vrcp.pop %v2510
  %v2512 = vmul.f32 1.0, %v2511
  %v2513 = vtanh.pop %v2506
  %v2514 = vmul.f32 %v2512, %v271
  %2516 = vrot.lane.b32.xlu0 %v2513, 32
  %v2517 = vpop.permute.xlu0 %2516
  %v2519 = vmul.f32 %v2512, %v2517
  %2521 = vrot.lane.b32.xlu0 %v2519, 32
  %v2522 = vpop.permute.xlu0 %2521
  %v2524 = vadd.f32 %v2514, %v2522
  %v2525 = vtanh.pop %v2524
  %2527 = vrot.lane.b32.xlu0 %v2525, 32
  %v2528 = vpop.permute.xlu0 %2527
  %v2530 = vmul.f32 %v2512, %v2528
  %v2532 = vrot.slane %v2530, 6
  %2533 = vrot.lane.b32.xlu0 %v2532, 64
  %v2534 = vpop.permute.xlu0 %2533
  %v2536 = vsel %vm410, %v2534, %v76
  %v2538 = vrot.slane %v2524, 6
  %2539 = vrot.lane.b32.xlu0 %v2538, 96
  %v2540 = vpop.permute.xlu0 %2539
  %v2542 = vsel %vm410, %v2540, %v76
  %v2543 = vsel %vm410, %v2534, 0.0
  %2544 = vst.msk [vmem:[#allocation5 + $0xe] sm:$0x3] %vm305, %v2543
  %2546 = vrot.lane.b32.xlu0 %v2425, 64
  %v2547 = vpop.permute.xlu0 %2546
  %v2548 = vsel %vm189, %v2547, 0
  %2550 = vmatprep.subr.mxu0 0.0
  %2551 = vmatpush1.msra.mxu0 %v2322
  %2552 = vmatprep.subr.mxu0 0.0
  %2553 = vmatpush1.msra.mxu0 %v2323
  %2554 = vmatprep.subr.mxu0 0.0
  %2555 = vmatpush1.msra.mxu0 %v2324
  %2556 = vmatprep.subr.mxu0 0.0
  %2557 = vmatpush1.msra.mxu0 %v2325
  %2558 = vmatprep.subr.mxu0 0.0
  %2559 = vmatpush1.msra.mxu0 0.0
  %2560 = vmatprep.subr.mxu0 0.0
  %2561 = vmatpush1.msra.mxu0 0.0
  %2562 = vmatprep.subr.mxu0 0.0
  %2563 = vmatpush1.msra.mxu0 0.0
  %2564 = vmatprep.subr.mxu0 0.0
  %2565 = vmatpush1.msra.mxu0 0.0
  %2566 = vmatprep.subr.mxu0 0.0
  %2567 = vmatpush1.msra.mxu0 0.0
  %2568 = vmatprep.subr.mxu0 0.0
  %2569 = vmatpush1.msra.mxu0 0.0
  %2570 = vmatprep.subr.mxu0 0.0
  %2571 = vmatpush1.msra.mxu0 0.0
  %2572 = vmatprep.subr.mxu0 0.0
  %2573 = vmatpush1.msra.mxu0 0.0
  %2574 = vmatprep.subr.mxu0 0.0
  %2575 = vmatpush1.msra.mxu0 0.0
  %2576 = vmatprep.subr.mxu0 0.0
  %2577 = vmatpush1.msra.mxu0 0.0
  %2578 = vmatprep.subr.mxu0 0.0
  %2579 = vmatpush1.msra.mxu0 0.0
  %2580 = vmatprep.subr.mxu0 0.0
  %2581 = vmatpush1.msra.mxu0 0.0
  %2582 = vmatprep.subr.mxu0 0.0
  %2583 = vmatpush1.msra.mxu0 0.0
  %2584 = vmatprep.subr.mxu0 0.0
  %2585 = vmatpush1.msra.mxu0 0.0
  %2586 = vmatprep.subr.mxu0 0.0
  %2587 = vmatpush1.msra.mxu0 0.0
  %2588 = vmatprep.subr.mxu0 0.0
  %2589 = vmatpush1.msra.mxu0 0.0
  %2590 = vmatprep.subr.mxu0 0.0
  %2591 = vmatpush1.msra.mxu0 0.0
  %2592 = vmatprep.subr.mxu0 0.0
  %2593 = vmatpush1.msra.mxu0 0.0
  %2594 = vmatprep.subr.mxu0 0.0
  %2595 = vmatpush1.msra.mxu0 0.0
  %2596 = vmatprep.subr.mxu0 0.0
  %2597 = vmatpush1.msra.mxu0 0.0
  %2598 = vmatprep.subr.mxu0 0.0
  %2599 = vmatpush1.msra.mxu0 0.0
  %2600 = vmatprep.subr.mxu0 0.0
  %2601 = vmatpush1.msra.mxu0 0.0
  %2602 = vmatprep.subr.mxu0 0.0
  %2603 = vmatpush1.msra.mxu0 0.0
  %2604 = vmatprep.subr.mxu0 0.0
  %2605 = vmatpush1.msra.mxu0 0.0
  %2606 = vmatprep.subr.mxu0 0.0
  %2607 = vmatpush1.msra.mxu0 0.0
  %2608 = vmatprep.subr.mxu0 0.0
  %2609 = vmatpush1.msra.mxu0 0.0
  %2610 = vmatprep.subr.mxu0 0.0
  %2611 = vmatpush1.msra.mxu0 0.0
  %2612 = vmatprep.subr.mxu0 0.0
  %2613 = vmatpush1.msra.mxu0 0.0
  %2614 = vmatprep.mubr.f32.mxu0 0.0
  %2615 = vmatmul.mubr.f32.gmra.mrb[0].mxu0 %v2548
  %v2616 = vpop.f32.mrb[0].mxu0
  %v2617 = vadd.f32 0.0, %v2616
  %v2618 = vpop.f32.mrb[0].mxu0
  %2619 = vdwg.mxu0
  %v2621 = vrot.slane %v2617, 6
  %v2623 = vadd.f32 %v2318, %v2621
  %v2624 = vsub.f32 0.0, %v2623
  %v2625 = vmul.f32 %v2624, 1.442695
  %v2626 = vpow.pop %v2625
  %v2627 = vadd.f32 %v2626, 1.0
  %v2628 = vrcp.pop %v2627
  %v2629 = vmul.f32 1.0, %v2628
  %v2630 = vtanh.pop %v2623
  %v2632 = vrot.slane %v2426, 6
  %v2634 = vmul.f32 %v2629, %v2632
  %2636 = vrot.lane.b32.xlu0 %v2630, 32
  %v2637 = vpop.permute.xlu0 %2636
  %v2639 = vmul.f32 %v2629, %v2637
  %2641 = vrot.lane.b32.xlu0 %v2639, 32
  %v2642 = vpop.permute.xlu0 %2641
  %v2644 = vadd.f32 %v2634, %v2642
  %v2645 = vtanh.pop %v2644
  %2647 = vrot.lane.b32.xlu0 %v2645, 32
  %v2648 = vpop.permute.xlu0 %2647
  %v2650 = vmul.f32 %v2629, %v2648
  %v2652 = vrot.slane %v2650, 2
  %2653 = vrot.lane.b32.xlu0 %v2652, 64
  %v2654 = vpop.permute.xlu0 %2653
  %v2657 = vsel %vm536, %v2654, %v2547
  %v2659 = vrot.slane %v2644, 2
  %2660 = vrot.lane.b32.xlu0 %v2659, 96
  %v2661 = vpop.permute.xlu0 %2660
  %2663 = vrot.lane.b32.xlu0 %v2426, 96
  %v2664 = vpop.permute.xlu0 %2663
  %v2666 = vsel %vm536, %v2661, %v2664
  %v2667 = vsel %vm536, %v2654, 0.0
  %2668 = vst.msk [vmem:[#allocation4 + $0x2] sm:$0x3] %vm305, %v2667
  %v2670 = vsel %vm189, %v2536, 0
  %2672 = vmatprep.subr.mxu0 0.0
  %2673 = vmatpush1.msra.mxu0 %v2326
  %2674 = vmatprep.subr.mxu0 0.0
  %2675 = vmatpush1.msra.mxu0 %v2327
  %2676 = vmatprep.subr.mxu0 0.0
  %2677 = vmatpush1.msra.mxu0 %v2328
  %2678 = vmatprep.subr.mxu0 0.0
  %2679 = vmatpush1.msra.mxu0 %v2329
  %2680 = vmatprep.subr.mxu0 0.0
  %2681 = vmatpush1.msra.mxu0 0.0
  %2682 = vmatprep.subr.mxu0 0.0
  %2683 = vmatpush1.msra.mxu0 0.0
  %2684 = vmatprep.subr.mxu0 0.0
  %2685 = vmatpush1.msra.mxu0 0.0
  %2686 = vmatprep.subr.mxu0 0.0
  %2687 = vmatpush1.msra.mxu0 0.0
  %2688 = vmatprep.subr.mxu0 0.0
  %2689 = vmatpush1.msra.mxu0 0.0
  %2690 = vmatprep.subr.mxu0 0.0
  %2691 = vmatpush1.msra.mxu0 0.0
  %2692 = vmatprep.subr.mxu0 0.0
  %2693 = vmatpush1.msra.mxu0 0.0
  %2694 = vmatprep.subr.mxu0 0.0
  %2695 = vmatpush1.msra.mxu0 0.0
  %2696 = vmatprep.subr.mxu0 0.0
  %2697 = vmatpush1.msra.mxu0 0.0
  %2698 = vmatprep.subr.mxu0 0.0
  %2699 = vmatpush1.msra.mxu0 0.0
  %2700 = vmatprep.subr.mxu0 0.0
  %2701 = vmatpush1.msra.mxu0 0.0
  %2702 = vmatprep.subr.mxu0 0.0
  %2703 = vmatpush1.msra.mxu0 0.0
  %2704 = vmatprep.subr.mxu0 0.0
  %2705 = vmatpush1.msra.mxu0 0.0
  %2706 = vmatprep.subr.mxu0 0.0
  %2707 = vmatpush1.msra.mxu0 0.0
  %2708 = vmatprep.subr.mxu0 0.0
  %2709 = vmatpush1.msra.mxu0 0.0
  %2710 = vmatprep.subr.mxu0 0.0
  %2711 = vmatpush1.msra.mxu0 0.0
  %2712 = vmatprep.subr.mxu0 0.0
  %2713 = vmatpush1.msra.mxu0 0.0
  %2714 = vmatprep.subr.mxu0 0.0
  %2715 = vmatpush1.msra.mxu0 0.0
  %2716 = vmatprep.subr.mxu0 0.0
  %2717 = vmatpush1.msra.mxu0 0.0
  %2718 = vmatprep.subr.mxu0 0.0
  %2719 = vmatpush1.msra.mxu0 0.0
  %2720 = vmatprep.subr.mxu0 0.0
  %2721 = vmatpush1.msra.mxu0 0.0
  %2722 = vmatprep.subr.mxu0 0.0
  %2723 = vmatpush1.msra.mxu0 0.0
  %2724 = vmatprep.subr.mxu0 0.0
  %2725 = vmatpush1.msra.mxu0 0.0
  %2726 = vmatprep.subr.mxu0 0.0
  %2727 = vmatpush1.msra.mxu0 0.0
  %2728 = vmatprep.subr.mxu0 0.0
  %2729 = vmatpush1.msra.mxu0 0.0
  %2730 = vmatprep.subr.mxu0 0.0
  %2731 = vmatpush1.msra.mxu0 0.0
  %2732 = vmatprep.subr.mxu0 0.0
  %2733 = vmatpush1.msra.mxu0 0.0
  %2734 = vmatprep.subr.mxu0 0.0
  %2735 = vmatpush1.msra.mxu0 0.0
  %2736 = vmatprep.mubr.f32.mxu0 0.0
  %2737 = vmatmul.mubr.f32.gmra.mrb[0].mxu0 %v2670
  %v2738 = vpop.f32.mrb[0].mxu0
  %v2739 = vadd.f32 0.0, %v2738
  %v2740 = vpop.f32.mrb[0].mxu0
  %2741 = vdwg.mxu0
  %v2743 = vrot.slane %v2739, 4
  %v2745 = vadd.f32 %v2321, %v2743
  %v2746 = vsub.f32 0.0, %v2745
  %v2747 = vmul.f32 %v2746, 1.442695
  %v2748 = vpow.pop %v2747
  %v2749 = vadd.f32 %v2748, 1.0
  %v2750 = vrcp.pop %v2749
  %v2751 = vmul.f32 1.0, %v2750
  %v2752 = vtanh.pop %v2745
  %v2754 = vrot.slane %v2542, 4
  %2755 = vrot.lane.b32.xlu0 %v2754, 32
  %v2756 = vpop.permute.xlu0 %2755
  %v2758 = vmul.f32 %v2751, %v2756
  %2760 = vrot.lane.b32.xlu0 %v2752, 32
  %v2761 = vpop.permute.xlu0 %2760
  %v2763 = vmul.f32 %v2751, %v2761
  %2765 = vrot.lane.b32.xlu0 %v2763, 32
  %v2766 = vpop.permute.xlu0 %2765
  %v2768 = vadd.f32 %v2758, %v2766
  %v2769 = vtanh.pop %v2768
  %2771 = vrot.lane.b32.xlu0 %v2769, 32
  %v2772 = vpop.permute.xlu0 %2771
  %v2774 = vmul.f32 %v2751, %v2772
  %v2776 = vrot.slane %v2774, 4
  %2777 = vrot.lane.b32.xlu0 %v2776, 64
  %v2778 = vpop.permute.xlu0 %2777
  %v2780 = vsel %vm666, %v2778, %v2536
  %v2782 = vrot.slane %v2768, 4
  %2783 = vrot.lane.b32.xlu0 %v2782, 96
  %v2784 = vpop.permute.xlu0 %2783
  %v2786 = vsel %vm666, %v2784, %v2542
  %v2787 = vsel %vm666, %v2778, 0.0
  %2788 = vst.msk [vmem:[#allocation5 + $0xc] sm:$0x3] %vm305, %v2787
  %v2790 = vsel %vm189, %v2657, 0
  %2792 = vmatprep.subr.mxu0 0.0
  %2793 = vmatpush1.msra.mxu0 %v2322
  %2794 = vmatprep.subr.mxu0 0.0
  %2795 = vmatpush1.msra.mxu0 %v2323
  %2796 = vmatprep.subr.mxu0 0.0
  %2797 = vmatpush1.msra.mxu0 %v2324
  %2798 = vmatprep.subr.mxu0 0.0
  %2799 = vmatpush1.msra.mxu0 %v2325
  %2800 = vmatprep.subr.mxu0 0.0
  %2801 = vmatpush1.msra.mxu0 0.0
  %2802 = vmatprep.subr.mxu0 0.0
  %2803 = vmatpush1.msra.mxu0 0.0
  %2804 = vmatprep.subr.mxu0 0.0
  %2805 = vmatpush1.msra.mxu0 0.0
  %2806 = vmatprep.subr.mxu0 0.0
  %2807 = vmatpush1.msra.mxu0 0.0
  %2808 = vmatprep.subr.mxu0 0.0
  %2809 = vmatpush1.msra.mxu0 0.0
  %2810 = vmatprep.subr.mxu0 0.0
  %2811 = vmatpush1.msra.mxu0 0.0
  %2812 = vmatprep.subr.mxu0 0.0
  %2813 = vmatpush1.msra.mxu0 0.0
  %2814 = vmatprep.subr.mxu0 0.0
  %2815 = vmatpush1.msra.mxu0 0.0
  %2816 = vmatprep.subr.mxu0 0.0
  %2817 = vmatpush1.msra.mxu0 0.0
  %2818 = vmatprep.subr.mxu0 0.0
  %2819 = vmatpush1.msra.mxu0 0.0
  %2820 = vmatprep.subr.mxu0 0.0
  %2821 = vmatpush1.msra.mxu0 0.0
  %2822 = vmatprep.subr.mxu0 0.0
  %2823 = vmatpush1.msra.mxu0 0.0
  %2824 = vmatprep.subr.mxu0 0.0
  %2825 = vmatpush1.msra.mxu0 0.0
  %2826 = vmatprep.subr.mxu0 0.0
  %2827 = vmatpush1.msra.mxu0 0.0
  %2828 = vmatprep.subr.mxu0 0.0
  %2829 = vmatpush1.msra.mxu0 0.0
  %2830 = vmatprep.subr.mxu0 0.0
  %2831 = vmatpush1.msra.mxu0 0.0
  %2832 = vmatprep.subr.mxu0 0.0
  %2833 = vmatpush1.msra.mxu0 0.0
  %2834 = vmatprep.subr.mxu0 0.0
  %2835 = vmatpush1.msra.mxu0 0.0
  %2836 = vmatprep.subr.mxu0 0.0
  %2837 = vmatpush1.msra.mxu0 0.0
  %2838 = vmatprep.subr.mxu0 0.0
  %2839 = vmatpush1.msra.mxu0 0.0
  %2840 = vmatprep.subr.mxu0 0.0
  %2841 = vmatpush1.msra.mxu0 0.0
  %2842 = vmatprep.subr.mxu0 0.0
  %2843 = vmatpush1.msra.mxu0 0.0
  %2844 = vmatprep.subr.mxu0 0.0
  %2845 = vmatpush1.msra.mxu0 0.0
  %2846 = vmatprep.subr.mxu0 0.0
  %2847 = vmatpush1.msra.mxu0 0.0
  %2848 = vmatprep.subr.mxu0 0.0
  %2849 = vmatpush1.msra.mxu0 0.0
  %2850 = vmatprep.subr.mxu0 0.0
  %2851 = vmatpush1.msra.mxu0 0.0
  %2852 = vmatprep.subr.mxu0 0.0
  %2853 = vmatpush1.msra.mxu0 0.0
  %2854 = vmatprep.subr.mxu0 0.0
  %2855 = vmatpush1.msra.mxu0 0.0
  %2856 = vmatprep.mubr.f32.mxu0 0.0
  %2857 = vmatmul.mubr.f32.gmra.mrb[0].mxu0 %v2790
  %v2858 = vpop.f32.mrb[0].mxu0
  %v2859 = vadd.f32 0.0, %v2858
  %v2860 = vpop.f32.mrb[0].mxu0
  %2861 = vdwg.mxu0
  %v2863 = vrot.slane %v2859, 4
  %v2865 = vadd.f32 %v2318, %v2863
  %v2866 = vsub.f32 0.0, %v2865
  %v2867 = vmul.f32 %v2866, 1.442695
  %v2868 = vpow.pop %v2867
  %v2869 = vadd.f32 %v2868, 1.0
  %v2870 = vrcp.pop %v2869
  %v2871 = vmul.f32 1.0, %v2870
  %v2872 = vtanh.pop %v2865
  %v2874 = vrot.slane %v2666, 4
  %2875 = vrot.lane.b32.xlu0 %v2874, 32
  %v2876 = vpop.permute.xlu0 %2875
  %v2878 = vmul.f32 %v2871, %v2876
  %2880 = vrot.lane.b32.xlu0 %v2872, 32
  %v2881 = vpop.permute.xlu0 %2880
  %v2883 = vmul.f32 %v2871, %v2881
  %2885 = vrot.lane.b32.xlu0 %v2883, 32
  %v2886 = vpop.permute.xlu0 %2885
  %v2888 = vadd.f32 %v2878, %v2886
  %v2889 = vtanh.pop %v2888
  %2891 = vrot.lane.b32.xlu0 %v2889, 32
  %v2892 = vpop.permute.xlu0 %2891
  %v2894 = vmul.f32 %v2871, %v2892
  %v2896 = vrot.slane %v2894, 4
  %2897 = vrot.lane.b32.xlu0 %v2896, 64
  %v2898 = vpop.permute.xlu0 %2897
  %v2900 = vsel %vm792, %v2898, %v2657
  %v2902 = vrot.slane %v2888, 4
  %2903 = vrot.lane.b32.xlu0 %v2902, 96
  %v2904 = vpop.permute.xlu0 %2903
  %v2906 = vsel %vm792, %v2904, %v2666
  %v2907 = vsel %vm792, %v2898, 0.0
  %2908 = vst.msk [vmem:[#allocation4 + $0x4] sm:$0x3] %vm305, %v2907
  %v2910 = vsel %vm189, %v2780, 0
  %2912 = vmatprep.subr.mxu0 0.0
  %2913 = vmatpush1.msra.mxu0 %v2326
  %2914 = vmatprep.subr.mxu0 0.0
  %2915 = vmatpush1.msra.mxu0 %v2327
  %2916 = vmatprep.subr.mxu0 0.0
  %2917 = vmatpush1.msra.mxu0 %v2328
  %2918 = vmatprep.subr.mxu0 0.0
  %2919 = vmatpush1.msra.mxu0 %v2329
  %2920 = vmatprep.subr.mxu0 0.0
  %2921 = vmatpush1.msra.mxu0 0.0
  %2922 = vmatprep.subr.mxu0 0.0
  %2923 = vmatpush1.msra.mxu0 0.0
  %2924 = vmatprep.subr.mxu0 0.0
  %2925 = vmatpush1.msra.mxu0 0.0
  %2926 = vmatprep.subr.mxu0 0.0
  %2927 = vmatpush1.msra.mxu0 0.0
  %2928 = vmatprep.subr.mxu0 0.0
  %2929 = vmatpush1.msra.mxu0 0.0
  %2930 = vmatprep.subr.mxu0 0.0
  %2931 = vmatpush1.msra.mxu0 0.0
  %2932 = vmatprep.subr.mxu0 0.0
  %2933 = vmatpush1.msra.mxu0 0.0
  %2934 = vmatprep.subr.mxu0 0.0
  %2935 = vmatpush1.msra.mxu0 0.0
  %2936 = vmatprep.subr.mxu0 0.0
  %2937 = vmatpush1.msra.mxu0 0.0
  %2938 = vmatprep.subr.mxu0 0.0
  %2939 = vmatpush1.msra.mxu0 0.0
  %2940 = vmatprep.subr.mxu0 0.0
  %2941 = vmatpush1.msra.mxu0 0.0
  %2942 = vmatprep.subr.mxu0 0.0
  %2943 = vmatpush1.msra.mxu0 0.0
  %2944 = vmatprep.subr.mxu0 0.0
  %2945 = vmatpush1.msra.mxu0 0.0
  %2946 = vmatprep.subr.mxu0 0.0
  %2947 = vmatpush1.msra.mxu0 0.0
  %2948 = vmatprep.subr.mxu0 0.0
  %2949 = vmatpush1.msra.mxu0 0.0
  %2950 = vmatprep.subr.mxu0 0.0
  %2951 = vmatpush1.msra.mxu0 0.0
  %2952 = vmatprep.subr.mxu0 0.0
  %2953 = vmatpush1.msra.mxu0 0.0
  %2954 = vmatprep.subr.mxu0 0.0
  %2955 = vmatpush1.msra.mxu0 0.0
  %2956 = vmatprep.subr.mxu0 0.0
  %2957 = vmatpush1.msra.mxu0 0.0
  %2958 = vmatprep.subr.mxu0 0.0
  %2959 = vmatpush1.msra.mxu0 0.0
  %2960 = vmatprep.subr.mxu0 0.0
  %2961 = vmatpush1.msra.mxu0 0.0
  %2962 = vmatprep.subr.mxu0 0.0
  %2963 = vmatpush1.msra.mxu0 0.0
  %2964 = vmatprep.subr.mxu0 0.0
  %2965 = vmatpush1.msra.mxu0 0.0
  %2966 = vmatprep.subr.mxu0 0.0
  %2967 = vmatpush1.msra.mxu0 0.0
  %2968 = vmatprep.subr.mxu0 0.0
  %2969 = vmatpush1.msra.mxu0 0.0
  %2970 = vmatprep.subr.mxu0 0.0
  %2971 = vmatpush1.msra.mxu0 0.0
  %2972 = vmatprep.subr.mxu0 0.0
  %2973 = vmatpush1.msra.mxu0 0.0
  %2974 = vmatprep.subr.mxu0 0.0
  %2975 = vmatpush1.msra.mxu0 0.0
  %2976 = vmatprep.mubr.f32.mxu0 0.0
  %2977 = vmatmul.mubr.f32.gmra.mrb[0].mxu0 %v2910
  %v2978 = vpop.f32.mrb[0].mxu0
  %v2979 = vadd.f32 0.0, %v2978
  %v2980 = vpop.f32.mrb[0].mxu0
  %2981 = vdwg.mxu0
  %v2983 = vrot.slane %v2979, 6
  %v2985 = vadd.f32 %v2321, %v2983
  %v2986 = vsub.f32 0.0, %v2985
  %v2987 = vmul.f32 %v2986, 1.442695
  %v2988 = vpow.pop %v2987
  %v2989 = vadd.f32 %v2988, 1.0
  %v2990 = vrcp.pop %v2989
  %v2991 = vmul.f32 1.0, %v2990
  %v2992 = vtanh.pop %v2985
  %v2994 = vrot.slane %v2786, 6
  %2995 = vrot.lane.b32.xlu0 %v2994, 32
  %v2996 = vpop.permute.xlu0 %2995
  %v2998 = vmul.f32 %v2991, %v2996
  %3000 = vrot.lane.b32.xlu0 %v2992, 32
  %v3001 = vpop.permute.xlu0 %3000
  %v3003 = vmul.f32 %v2991, %v3001
  %3005 = vrot.lane.b32.xlu0 %v3003, 32
  %v3006 = vpop.permute.xlu0 %3005
  %v3008 = vadd.f32 %v2998, %v3006
  %v3009 = vtanh.pop %v3008
  %3011 = vrot.lane.b32.xlu0 %v3009, 32
  %v3012 = vpop.permute.xlu0 %3011
  %v3014 = vmul.f32 %v2991, %v3012
  %v3016 = vrot.slane %v3014, 2
  %3017 = vrot.lane.b32.xlu0 %v3016, 64
  %v3018 = vpop.permute.xlu0 %3017
  %v3020 = vsel %vm918, %v3018, %v2780
  %v3022 = vrot.slane %v3008, 2
  %3023 = vrot.lane.b32.xlu0 %v3022, 96
  %v3024 = vpop.permute.xlu0 %3023
  %v3026 = vsel %vm918, %v3024, %v2786
  %v3027 = vsel %vm918, %v3018, 0.0
  %3028 = vst.msk [vmem:[#allocation5 + $0xa] sm:$0x3] %vm305, %v3027
  %v3030 = vsel %vm189, %v2900, 0
  %3032 = vmatprep.subr.mxu0 0.0
  %3033 = vmatpush1.msra.mxu0 %v2322
  %3034 = vmatprep.subr.mxu0 0.0
  %3035 = vmatpush1.msra.mxu0 %v2323
  %3036 = vmatprep.subr.mxu0 0.0
  %3037 = vmatpush1.msra.mxu0 %v2324
  %3038 = vmatprep.subr.mxu0 0.0
  %3039 = vmatpush1.msra.mxu0 %v2325
  %3040 = vmatprep.subr.mxu0 0.0
  %3041 = vmatpush1.msra.mxu0 0.0
  %3042 = vmatprep.subr.mxu0 0.0
  %3043 = vmatpush1.msra.mxu0 0.0
  %3044 = vmatprep.subr.mxu0 0.0
  %3045 = vmatpush1.msra.mxu0 0.0
  %3046 = vmatprep.subr.mxu0 0.0
  %3047 = vmatpush1.msra.mxu0 0.0
  %3048 = vmatprep.subr.mxu0 0.0
  %3049 = vmatpush1.msra.mxu0 0.0
  %3050 = vmatprep.subr.mxu0 0.0
  %3051 = vmatpush1.msra.mxu0 0.0
  %3052 = vmatprep.subr.mxu0 0.0
  %3053 = vmatpush1.msra.mxu0 0.0
  %3054 = vmatprep.subr.mxu0 0.0
  %3055 = vmatpush1.msra.mxu0 0.0
  %3056 = vmatprep.subr.mxu0 0.0
  %3057 = vmatpush1.msra.mxu0 0.0
  %3058 = vmatprep.subr.mxu0 0.0
  %3059 = vmatpush1.msra.mxu0 0.0
  %3060 = vmatprep.subr.mxu0 0.0
  %3061 = vmatpush1.msra.mxu0 0.0
  %3062 = vmatprep.subr.mxu0 0.0
  %3063 = vmatpush1.msra.mxu0 0.0
  %3064 = vmatprep.subr.mxu0 0.0
  %3065 = vmatpush1.msra.mxu0 0.0
  %3066 = vmatprep.subr.mxu0 0.0
  %3067 = vmatpush1.msra.mxu0 0.0
  %3068 = vmatprep.subr.mxu0 0.0
  %3069 = vmatpush1.msra.mxu0 0.0
  %3070 = vmatprep.subr.mxu0 0.0
  %3071 = vmatpush1.msra.mxu0 0.0
  %3072 = vmatprep.subr.mxu0 0.0
  %3073 = vmatpush1.msra.mxu0 0.0
  %3074 = vmatprep.subr.mxu0 0.0
  %3075 = vmatpush1.msra.mxu0 0.0
  %3076 = vmatprep.subr.mxu0 0.0
  %3077 = vmatpush1.msra.mxu0 0.0
  %3078 = vmatprep.subr.mxu0 0.0
  %3079 = vmatpush1.msra.mxu0 0.0
  %3080 = vmatprep.subr.mxu0 0.0
  %3081 = vmatpush1.msra.mxu0 0.0
  %3082 = vmatprep.subr.mxu0 0.0
  %3083 = vmatpush1.msra.mxu0 0.0
  %3084 = vmatprep.subr.mxu0 0.0
  %3085 = vmatpush1.msra.mxu0 0.0
  %3086 = vmatprep.subr.mxu0 0.0
  %3087 = vmatpush1.msra.mxu0 0.0
  %3088 = vmatprep.subr.mxu0 0.0
  %3089 = vmatpush1.msra.mxu0 0.0
  %3090 = vmatprep.subr.mxu0 0.0
  %3091 = vmatpush1.msra.mxu0 0.0
  %3092 = vmatprep.subr.mxu0 0.0
  %3093 = vmatpush1.msra.mxu0 0.0
  %3094 = vmatprep.subr.mxu0 0.0
  %3095 = vmatpush1.msra.mxu0 0.0
  %3096 = vmatprep.mubr.f32.mxu0 0.0
  %3097 = vmatmul.mubr.f32.gmra.mrb[0].mxu0 %v3030
  %v3098 = vpop.f32.mrb[0].mxu0
  %v3099 = vadd.f32 0.0, %v3098
  %v3100 = vpop.f32.mrb[0].mxu0
  %3101 = vdwg.mxu0
  %v3103 = vrot.slane %v3099, 2
  %v3105 = vadd.f32 %v2318, %v3103
  %v3106 = vsub.f32 0.0, %v3105
  %v3107 = vmul.f32 %v3106, 1.442695
  %v3108 = vpow.pop %v3107
  %v3109 = vadd.f32 %v3108, 1.0
  %v3110 = vrcp.pop %v3109
  %v3111 = vmul.f32 1.0, %v3110
  %v3112 = vtanh.pop %v3105
  %v3114 = vrot.slane %v2906, 2
  %3115 = vrot.lane.b32.xlu0 %v3114, 32
  %v3116 = vpop.permute.xlu0 %3115
  %v3118 = vmul.f32 %v3111, %v3116
  %3120 = vrot.lane.b32.xlu0 %v3112, 32
  %v3121 = vpop.permute.xlu0 %3120
  %v3123 = vmul.f32 %v3111, %v3121
  %3125 = vrot.lane.b32.xlu0 %v3123, 32
  %v3126 = vpop.permute.xlu0 %3125
  %v3128 = vadd.f32 %v3118, %v3126
  %v3129 = vtanh.pop %v3128
  %3131 = vrot.lane.b32.xlu0 %v3129, 32
  %v3132 = vpop.permute.xlu0 %3131
  %v3134 = vmul.f32 %v3111, %v3132
  %v3136 = vrot.slane %v3134, 6
  %3137 = vrot.lane.b32.xlu0 %v3136, 64
  %v3138 = vpop.permute.xlu0 %3137
  %v3140 = vsel %vm1044, %v3138, %v2900
  %v3142 = vrot.slane %v3128, 6
  %3143 = vrot.lane.b32.xlu0 %v3142, 96
  %v3144 = vpop.permute.xlu0 %3143
  %v3146 = vsel %vm1044, %v3144, %v2906
  %v3147 = vsel %vm1044, %v3138, 0.0
  %3148 = vst.msk [vmem:[#allocation4 + $0x6] sm:$0x3] %vm305, %v3147
  %v3150 = vsel %vm189, %v3020, 0
  %3152 = vmatprep.subr.mxu0 0.0
  %3153 = vmatpush1.msra.mxu0 %v2326
  %3154 = vmatprep.subr.mxu0 0.0
  %3155 = vmatpush1.msra.mxu0 %v2327
  %3156 = vmatprep.subr.mxu0 0.0
  %3157 = vmatpush1.msra.mxu0 %v2328
  %3158 = vmatprep.subr.mxu0 0.0
  %3159 = vmatpush1.msra.mxu0 %v2329
  %3160 = vmatprep.subr.mxu0 0.0
  %3161 = vmatpush1.msra.mxu0 0.0
  %3162 = vmatprep.subr.mxu0 0.0
  %3163 = vmatpush1.msra.mxu0 0.0
  %3164 = vmatprep.subr.mxu0 0.0
  %3165 = vmatpush1.msra.mxu0 0.0
  %3166 = vmatprep.subr.mxu0 0.0
  %3167 = vmatpush1.msra.mxu0 0.0
  %3168 = vmatprep.subr.mxu0 0.0
  %3169 = vmatpush1.msra.mxu0 0.0
  %3170 = vmatprep.subr.mxu0 0.0
  %3171 = vmatpush1.msra.mxu0 0.0
  %3172 = vmatprep.subr.mxu0 0.0
  %3173 = vmatpush1.msra.mxu0 0.0
  %3174 = vmatprep.subr.mxu0 0.0
  %3175 = vmatpush1.msra.mxu0 0.0
  %3176 = vmatprep.subr.mxu0 0.0
  %3177 = vmatpush1.msra.mxu0 0.0
  %3178 = vmatprep.subr.mxu0 0.0
  %3179 = vmatpush1.msra.mxu0 0.0
  %3180 = vmatprep.subr.mxu0 0.0
  %3181 = vmatpush1.msra.mxu0 0.0
  %3182 = vmatprep.subr.mxu0 0.0
  %3183 = vmatpush1.msra.mxu0 0.0
  %3184 = vmatprep.subr.mxu0 0.0
  %3185 = vmatpush1.msra.mxu0 0.0
  %3186 = vmatprep.subr.mxu0 0.0
  %3187 = vmatpush1.msra.mxu0 0.0
  %3188 = vmatprep.subr.mxu0 0.0
  %3189 = vmatpush1.msra.mxu0 0.0
  %3190 = vmatprep.subr.mxu0 0.0
  %3191 = vmatpush1.msra.mxu0 0.0
  %3192 = vmatprep.subr.mxu0 0.0
  %3193 = vmatpush1.msra.mxu0 0.0
  %3194 = vmatprep.subr.mxu0 0.0
  %3195 = vmatpush1.msra.mxu0 0.0
  %3196 = vmatprep.subr.mxu0 0.0
  %3197 = vmatpush1.msra.mxu0 0.0
  %3198 = vmatprep.subr.mxu0 0.0
  %3199 = vmatpush1.msra.mxu0 0.0
  %3200 = vmatprep.subr.mxu0 0.0
  %3201 = vmatpush1.msra.mxu0 0.0
  %3202 = vmatprep.subr.mxu0 0.0
  %3203 = vmatpush1.msra.mxu0 0.0
  %3204 = vmatprep.subr.mxu0 0.0
  %3205 = vmatpush1.msra.mxu0 0.0
  %3206 = vmatprep.subr.mxu0 0.0
  %3207 = vmatpush1.msra.mxu0 0.0
  %3208 = vmatprep.subr.mxu0 0.0
  %3209 = vmatpush1.msra.mxu0 0.0
  %3210 = vmatprep.subr.mxu0 0.0
  %3211 = vmatpush1.msra.mxu0 0.0
  %3212 = vmatprep.subr.mxu0 0.0
  %3213 = vmatpush1.msra.mxu0 0.0
  %3214 = vmatprep.subr.mxu0 0.0
  %3215 = vmatpush1.msra.mxu0 0.0
  %3216 = vmatprep.mubr.f32.mxu0 0.0
  %3217 = vmatmul.mubr.f32.gmra.mrb[0].mxu0 %v3150
  %v3218 = vpop.f32.mrb[0].mxu0
  %v3219 = vadd.f32 0.0, %v3218
  %v3220 = vpop.f32.mrb[0].mxu0
  %3221 = vdwg.mxu0
  %v3222 = vadd.f32 %v2321, %v3219
  %v3223 = vsub.f32 0.0, %v3222
  %v3224 = vmul.f32 %v3223, 1.442695
  %v3225 = vpow.pop %v3224
  %v3226 = vadd.f32 %v3225, 1.0
  %v3227 = vrcp.pop %v3226
  %v3228 = vmul.f32 1.0, %v3227
  %v3229 = vtanh.pop %v3222
  %3231 = vrot.lane.b32.xlu0 %v3026, 32
  %v3232 = vpop.permute.xlu0 %3231
  %v3234 = vmul.f32 %v3228, %v3232
  %3236 = vrot.lane.b32.xlu0 %v3229, 32
  %v3237 = vpop.permute.xlu0 %3236
  %v3239 = vmul.f32 %v3228, %v3237
  %3241 = vrot.lane.b32.xlu0 %v3239, 32
  %v3242 = vpop.permute.xlu0 %3241
  %v3244 = vadd.f32 %v3234, %v3242
  %v3245 = vtanh.pop %v3244
  %3247 = vrot.lane.b32.xlu0 %v3245, 32
  %v3248 = vpop.permute.xlu0 %3247
  %v3250 = vmul.f32 %v3228, %v3248
  %3251 = vrot.lane.b32.xlu0 %v3020, 64
  %v3252 = vpop.permute.xlu0 %3251
  %v3254 = vsel %vm1166, %v3250, %v3252
  %v3255 = vsel %vm1166, %v3244, %v3232
  %v3256 = vsel %vm1166, %v3250, 0.0
  %3258 = vrot.lane.b32.xlu0 %v3256, 64
  %v3259 = vpop.permute.xlu0 %3258
  %3261 = vst.msk [vmem:[#allocation5 + $0x8] sm:$0x3] %vm305, %v3259
  %v3263 = vsel %vm189, %v3140, 0
  %3265 = vmatprep.subr.mxu0 0.0
  %3266 = vmatpush1.msra.mxu0 %v2322
  %3267 = vmatprep.subr.mxu0 0.0
  %3268 = vmatpush1.msra.mxu0 %v2323
  %3269 = vmatprep.subr.mxu0 0.0
  %3270 = vmatpush1.msra.mxu0 %v2324
  %3271 = vmatprep.subr.mxu0 0.0
  %3272 = vmatpush1.msra.mxu0 %v2325
  %3273 = vmatprep.subr.mxu0 0.0
  %3274 = vmatpush1.msra.mxu0 0.0
  %3275 = vmatprep.subr.mxu0 0.0
  %3276 = vmatpush1.msra.mxu0 0.0
  %3277 = vmatprep.subr.mxu0 0.0
  %3278 = vmatpush1.msra.mxu0 0.0
  %3279 = vmatprep.subr.mxu0 0.0
  %3280 = vmatpush1.msra.mxu0 0.0
  %3281 = vmatprep.subr.mxu0 0.0
  %3282 = vmatpush1.msra.mxu0 0.0
  %3283 = vmatprep.subr.mxu0 0.0
  %3284 = vmatpush1.msra.mxu0 0.0
  %3285 = vmatprep.subr.mxu0 0.0
  %3286 = vmatpush1.msra.mxu0 0.0
  %3287 = vmatprep.subr.mxu0 0.0
  %3288 = vmatpush1.msra.mxu0 0.0
  %3289 = vmatprep.subr.mxu0 0.0
  %3290 = vmatpush1.msra.mxu0 0.0
  %3291 = vmatprep.subr.mxu0 0.0
  %3292 = vmatpush1.msra.mxu0 0.0
  %3293 = vmatprep.subr.mxu0 0.0
  %3294 = vmatpush1.msra.mxu0 0.0
  %3295 = vmatprep.subr.mxu0 0.0
  %3296 = vmatpush1.msra.mxu0 0.0
  %3297 = vmatprep.subr.mxu0 0.0
  %3298 = vmatpush1.msra.mxu0 0.0
  %3299 = vmatprep.subr.mxu0 0.0
  %3300 = vmatpush1.msra.mxu0 0.0
  %3301 = vmatprep.subr.mxu0 0.0
  %3302 = vmatpush1.msra.mxu0 0.0
  %3303 = vmatprep.subr.mxu0 0.0
  %3304 = vmatpush1.msra.mxu0 0.0
  %3305 = vmatprep.subr.mxu0 0.0
  %3306 = vmatpush1.msra.mxu0 0.0
  %3307 = vmatprep.subr.mxu0 0.0
  %3308 = vmatpush1.msra.mxu0 0.0
  %3309 = vmatprep.subr.mxu0 0.0
  %3310 = vmatpush1.msra.mxu0 0.0
  %3311 = vmatprep.subr.mxu0 0.0
  %3312 = vmatpush1.msra.mxu0 0.0
  %3313 = vmatprep.subr.mxu0 0.0
  %3314 = vmatpush1.msra.mxu0 0.0
  %3315 = vmatprep.subr.mxu0 0.0
  %3316 = vmatpush1.msra.mxu0 0.0
  %3317 = vmatprep.subr.mxu0 0.0
  %3318 = vmatpush1.msra.mxu0 0.0
  %3319 = vmatprep.subr.mxu0 0.0
  %3320 = vmatpush1.msra.mxu0 0.0
  %3321 = vmatprep.subr.mxu0 0.0
  %3322 = vmatpush1.msra.mxu0 0.0
  %3323 = vmatprep.subr.mxu0 0.0
  %3324 = vmatpush1.msra.mxu0 0.0
  %3325 = vmatprep.subr.mxu0 0.0
  %3326 = vmatpush1.msra.mxu0 0.0
  %3327 = vmatprep.subr.mxu0 0.0
  %3328 = vmatpush1.msra.mxu0 0.0
  %3329 = vmatprep.mubr.f32.mxu0 0.0
  %3330 = vmatmul.mubr.f32.gmra.mrb[0].mxu0 %v3263
  %v3331 = vpop.f32.mrb[0].mxu0
  %v3332 = vadd.f32 0.0, %v3331
  %v3333 = vpop.f32.mrb[0].mxu0
  %3334 = vdwg.mxu0
  %v3335 = vadd.f32 %v2320, %v3332
  %v3336 = vsub.f32 0.0, %v3335
  %v3337 = vmul.f32 %v3336, 1.442695
  %v3338 = vpow.pop %v3337
  %v3339 = vadd.f32 %v3338, 1.0
  %v3340 = vrcp.pop %v3339
  %v3341 = vmul.f32 1.0, %v3340
  %v3342 = vtanh.pop %v3335
  %3344 = vrot.lane.b32.xlu0 %v3146, 32
  %v3345 = vpop.permute.xlu0 %3344
  %v3347 = vmul.f32 %v3341, %v3345
  %3349 = vrot.lane.b32.xlu0 %v3342, 32
  %v3350 = vpop.permute.xlu0 %3349
  %v3352 = vmul.f32 %v3341, %v3350
  %3354 = vrot.lane.b32.xlu0 %v3352, 32
  %v3355 = vpop.permute.xlu0 %3354
  %v3357 = vadd.f32 %v3347, %v3355
  %v3358 = vtanh.pop %v3357
  %3360 = vrot.lane.b32.xlu0 %v3358, 32
  %v3361 = vpop.permute.xlu0 %3360
  %v3363 = vmul.f32 %v3341, %v3361
  %3364 = vrot.lane.b32.xlu0 %v3140, 64
  %v3365 = vpop.permute.xlu0 %3364
  %v3367 = vsel %vm1166, %v3363, %v3365
  %v3368 = vsel %vm1166, %v3357, %v3345
  %v3369 = vsel %vm1166, %v3363, 0.0
  %3371 = vrot.lane.b32.xlu0 %v3369, 64
  %v3372 = vpop.permute.xlu0 %3371
  %3374 = vst.msk [vmem:[#allocation4 + $0x8] sm:$0x3] %vm305, %v3372
  %3376 = vrot.lane.b32.xlu0 %v3254, 64
  %v3377 = vpop.permute.xlu0 %3376
  %v3378 = vsel %vm189, %v3377, 0
  %3380 = vmatprep.subr.mxu0 0.0
  %3381 = vmatpush1.msra.mxu0 %v2326
  %3382 = vmatprep.subr.mxu0 0.0
  %3383 = vmatpush1.msra.mxu0 %v2327
  %3384 = vmatprep.subr.mxu0 0.0
  %3385 = vmatpush1.msra.mxu0 %v2328
  %3386 = vmatprep.subr.mxu0 0.0
  %3387 = vmatpush1.msra.mxu0 %v2329
  %3388 = vmatprep.subr.mxu0 0.0
  %3389 = vmatpush1.msra.mxu0 0.0
  %3390 = vmatprep.subr.mxu0 0.0
  %3391 = vmatpush1.msra.mxu0 0.0
  %3392 = vmatprep.subr.mxu0 0.0
  %3393 = vmatpush1.msra.mxu0 0.0
  %3394 = vmatprep.subr.mxu0 0.0
  %3395 = vmatpush1.msra.mxu0 0.0
  %3396 = vmatprep.subr.mxu0 0.0
  %3397 = vmatpush1.msra.mxu0 0.0
  %3398 = vmatprep.subr.mxu0 0.0
  %3399 = vmatpush1.msra.mxu0 0.0
  %3400 = vmatprep.subr.mxu0 0.0
  %3401 = vmatpush1.msra.mxu0 0.0
  %3402 = vmatprep.subr.mxu0 0.0
  %3403 = vmatpush1.msra.mxu0 0.0
  %3404 = vmatprep.subr.mxu0 0.0
  %3405 = vmatpush1.msra.mxu0 0.0
  %3406 = vmatprep.subr.mxu0 0.0
  %3407 = vmatpush1.msra.mxu0 0.0
  %3408 = vmatprep.subr.mxu0 0.0
  %3409 = vmatpush1.msra.mxu0 0.0
  %3410 = vmatprep.subr.mxu0 0.0
  %3411 = vmatpush1.msra.mxu0 0.0
  %3412 = vmatprep.subr.mxu0 0.0
  %3413 = vmatpush1.msra.mxu0 0.0
  %3414 = vmatprep.subr.mxu0 0.0
  %3415 = vmatpush1.msra.mxu0 0.0
  %3416 = vmatprep.subr.mxu0 0.0
  %3417 = vmatpush1.msra.mxu0 0.0
  %3418 = vmatprep.subr.mxu0 0.0
  %3419 = vmatpush1.msra.mxu0 0.0
  %3420 = vmatprep.subr.mxu0 0.0
  %3421 = vmatpush1.msra.mxu0 0.0
  %3422 = vmatprep.subr.mxu0 0.0
  %3423 = vmatpush1.msra.mxu0 0.0
  %3424 = vmatprep.subr.mxu0 0.0
  %3425 = vmatpush1.msra.mxu0 0.0
  %3426 = vmatprep.subr.mxu0 0.0
  %3427 = vmatpush1.msra.mxu0 0.0
  %3428 = vmatprep.subr.mxu0 0.0
  %3429 = vmatpush1.msra.mxu0 0.0
  %3430 = vmatprep.subr.mxu0 0.0
  %3431 = vmatpush1.msra.mxu0 0.0
  %3432 = vmatprep.subr.mxu0 0.0
  %3433 = vmatpush1.msra.mxu0 0.0
  %3434 = vmatprep.subr.mxu0 0.0
  %3435 = vmatpush1.msra.mxu0 0.0
  %3436 = vmatprep.subr.mxu0 0.0
  %3437 = vmatpush1.msra.mxu0 0.0
  %3438 = vmatprep.subr.mxu0 0.0
  %3439 = vmatpush1.msra.mxu0 0.0
  %3440 = vmatprep.subr.mxu0 0.0
  %3441 = vmatpush1.msra.mxu0 0.0
  %3442 = vmatprep.subr.mxu0 0.0
  %3443 = vmatpush1.msra.mxu0 0.0
  %3444 = vmatprep.mubr.f32.mxu0 0.0
  %3445 = vmatmul.mubr.f32.gmra.mrb[0].mxu0 %v3378
  %v3446 = vpop.f32.mrb[0].mxu0
  %v3447 = vadd.f32 0.0, %v3446
  %v3448 = vpop.f32.mrb[0].mxu0
  %3449 = vdwg.mxu0
  %v3451 = vrot.slane %v3447, 2
  %v3453 = vadd.f32 %v2319, %v3451
  %v3454 = vsub.f32 0.0, %v3453
  %v3455 = vmul.f32 %v3454, 1.442695
  %v3456 = vpow.pop %v3455
  %v3457 = vadd.f32 %v3456, 1.0
  %v3458 = vrcp.pop %v3457
  %v3459 = vmul.f32 1.0, %v3458
  %v3460 = vtanh.pop %v3453
  %v3462 = vrot.slane %v3255, 2
  %v3464 = vmul.f32 %v3459, %v3462
  %3466 = vrot.lane.b32.xlu0 %v3460, 32
  %v3467 = vpop.permute.xlu0 %3466
  %v3469 = vmul.f32 %v3459, %v3467
  %3471 = vrot.lane.b32.xlu0 %v3469, 32
  %v3472 = vpop.permute.xlu0 %3471
  %v3474 = vadd.f32 %v3464, %v3472
  %v3475 = vtanh.pop %v3474
  %3477 = vrot.lane.b32.xlu0 %v3475, 32
  %v3478 = vpop.permute.xlu0 %3477
  %v3480 = vmul.f32 %v3459, %v3478
  %v3482 = vrot.slane %v3480, 6
  %3483 = vrot.lane.b32.xlu0 %v3482, 64
  %v3484 = vpop.permute.xlu0 %3483
  %v3487 = vsel %vm1044, %v3484, %v3377
  %v3489 = vrot.slane %v3474, 6
  %3490 = vrot.lane.b32.xlu0 %v3489, 96
  %v3491 = vpop.permute.xlu0 %3490
  %3493 = vrot.lane.b32.xlu0 %v3255, 96
  %v3494 = vpop.permute.xlu0 %3493
  %v3496 = vsel %vm1044, %v3491, %v3494
  %v3497 = vsel %vm1044, %v3484, 0.0
  %3498 = vst.msk [vmem:[#allocation5 + $0x6] sm:$0x3] %vm305, %v3497
  %3500 = vrot.lane.b32.xlu0 %v3367, 64
  %v3501 = vpop.permute.xlu0 %3500
  %v3502 = vsel %vm189, %v3501, 0
  %3504 = vmatprep.subr.mxu0 0.0
  %3505 = vmatpush1.msra.mxu0 %v2322
  %3506 = vmatprep.subr.mxu0 0.0
  %3507 = vmatpush1.msra.mxu0 %v2323
  %3508 = vmatprep.subr.mxu0 0.0
  %3509 = vmatpush1.msra.mxu0 %v2324
  %3510 = vmatprep.subr.mxu0 0.0
  %3511 = vmatpush1.msra.mxu0 %v2325
  %3512 = vmatprep.subr.mxu0 0.0
  %3513 = vmatpush1.msra.mxu0 0.0
  %3514 = vmatprep.subr.mxu0 0.0
  %3515 = vmatpush1.msra.mxu0 0.0
  %3516 = vmatprep.subr.mxu0 0.0
  %3517 = vmatpush1.msra.mxu0 0.0
  %3518 = vmatprep.subr.mxu0 0.0
  %3519 = vmatpush1.msra.mxu0 0.0
  %3520 = vmatprep.subr.mxu0 0.0
  %3521 = vmatpush1.msra.mxu0 0.0
  %3522 = vmatprep.subr.mxu0 0.0
  %3523 = vmatpush1.msra.mxu0 0.0
  %3524 = vmatprep.subr.mxu0 0.0
  %3525 = vmatpush1.msra.mxu0 0.0
  %3526 = vmatprep.subr.mxu0 0.0
  %3527 = vmatpush1.msra.mxu0 0.0
  %3528 = vmatprep.subr.mxu0 0.0
  %3529 = vmatpush1.msra.mxu0 0.0
  %3530 = vmatprep.subr.mxu0 0.0
  %3531 = vmatpush1.msra.mxu0 0.0
  %3532 = vmatprep.subr.mxu0 0.0
  %3533 = vmatpush1.msra.mxu0 0.0
  %3534 = vmatprep.subr.mxu0 0.0
  %3535 = vmatpush1.msra.mxu0 0.0
  %3536 = vmatprep.subr.mxu0 0.0
  %3537 = vmatpush1.msra.mxu0 0.0
  %3538 = vmatprep.subr.mxu0 0.0
  %3539 = vmatpush1.msra.mxu0 0.0
  %3540 = vmatprep.subr.mxu0 0.0
  %3541 = vmatpush1.msra.mxu0 0.0
  %3542 = vmatprep.subr.mxu0 0.0
  %3543 = vmatpush1.msra.mxu0 0.0
  %3544 = vmatprep.subr.mxu0 0.0
  %3545 = vmatpush1.msra.mxu0 0.0
  %3546 = vmatprep.subr.mxu0 0.0
  %3547 = vmatpush1.msra.mxu0 0.0
  %3548 = vmatprep.subr.mxu0 0.0
  %3549 = vmatpush1.msra.mxu0 0.0
  %3550 = vmatprep.subr.mxu0 0.0
  %3551 = vmatpush1.msra.mxu0 0.0
  %3552 = vmatprep.subr.mxu0 0.0
  %3553 = vmatpush1.msra.mxu0 0.0
  %3554 = vmatprep.subr.mxu0 0.0
  %3555 = vmatpush1.msra.mxu0 0.0
  %3556 = vmatprep.subr.mxu0 0.0
  %3557 = vmatpush1.msra.mxu0 0.0
  %3558 = vmatprep.subr.mxu0 0.0
  %3559 = vmatpush1.msra.mxu0 0.0
  %3560 = vmatprep.subr.mxu0 0.0
  %3561 = vmatpush1.msra.mxu0 0.0
  %3562 = vmatprep.subr.mxu0 0.0
  %3563 = vmatpush1.msra.mxu0 0.0
  %3564 = vmatprep.subr.mxu0 0.0
  %3565 = vmatpush1.msra.mxu0 0.0
  %3566 = vmatprep.subr.mxu0 0.0
  %3567 = vmatpush1.msra.mxu0 0.0
  %3568 = vmatprep.mubr.f32.mxu0 0.0
  %3569 = vmatmul.mubr.f32.gmra.mrb[0].mxu0 %v3502
  %v3570 = vpop.f32.mrb[0].mxu0
  %v3571 = vadd.f32 0.0, %v3570
  %v3572 = vpop.f32.mrb[0].mxu0
  %3573 = vdwg.mxu0
  %v3575 = vrot.slane %v3571, 6
  %v3577 = vadd.f32 %v2320, %v3575
  %v3578 = vsub.f32 0.0, %v3577
  %v3579 = vmul.f32 %v3578, 1.442695
  %v3580 = vpow.pop %v3579
  %v3581 = vadd.f32 %v3580, 1.0
  %v3582 = vrcp.pop %v3581
  %v3583 = vmul.f32 1.0, %v3582
  %v3584 = vtanh.pop %v3577
  %v3586 = vrot.slane %v3368, 6
  %v3588 = vmul.f32 %v3583, %v3586
  %3590 = vrot.lane.b32.xlu0 %v3584, 32
  %v3591 = vpop.permute.xlu0 %3590
  %v3593 = vmul.f32 %v3583, %v3591
  %3595 = vrot.lane.b32.xlu0 %v3593, 32
  %v3596 = vpop.permute.xlu0 %3595
  %v3598 = vadd.f32 %v3588, %v3596
  %v3599 = vtanh.pop %v3598
  %3601 = vrot.lane.b32.xlu0 %v3599, 32
  %v3602 = vpop.permute.xlu0 %3601
  %v3604 = vmul.f32 %v3583, %v3602
  %v3606 = vrot.slane %v3604, 2
  %3607 = vrot.lane.b32.xlu0 %v3606, 64
  %v3608 = vpop.permute.xlu0 %3607
  %v3611 = vsel %vm918, %v3608, %v3501
  %v3613 = vrot.slane %v3598, 2
  %3614 = vrot.lane.b32.xlu0 %v3613, 96
  %v3615 = vpop.permute.xlu0 %3614
  %3617 = vrot.lane.b32.xlu0 %v3368, 96
  %v3618 = vpop.permute.xlu0 %3617
  %v3620 = vsel %vm918, %v3615, %v3618
  %v3621 = vsel %vm918, %v3608, 0.0
  %3622 = vst.msk [vmem:[#allocation4 + $0xa] sm:$0x3] %vm305, %v3621
  %v3624 = vsel %vm189, %v3487, 0
  %3626 = vmatprep.subr.mxu0 0.0
  %3627 = vmatpush1.msra.mxu0 %v2326
  %3628 = vmatprep.subr.mxu0 0.0
  %3629 = vmatpush1.msra.mxu0 %v2327
  %3630 = vmatprep.subr.mxu0 0.0
  %3631 = vmatpush1.msra.mxu0 %v2328
  %3632 = vmatprep.subr.mxu0 0.0
  %3633 = vmatpush1.msra.mxu0 %v2329
  %3634 = vmatprep.subr.mxu0 0.0
  %3635 = vmatpush1.msra.mxu0 0.0
  %3636 = vmatprep.subr.mxu0 0.0
  %3637 = vmatpush1.msra.mxu0 0.0
  %3638 = vmatprep.subr.mxu0 0.0
  %3639 = vmatpush1.msra.mxu0 0.0
  %3640 = vmatprep.subr.mxu0 0.0
  %3641 = vmatpush1.msra.mxu0 0.0
  %3642 = vmatprep.subr.mxu0 0.0
  %3643 = vmatpush1.msra.mxu0 0.0
  %3644 = vmatprep.subr.mxu0 0.0
  %3645 = vmatpush1.msra.mxu0 0.0
  %3646 = vmatprep.subr.mxu0 0.0
  %3647 = vmatpush1.msra.mxu0 0.0
  %3648 = vmatprep.subr.mxu0 0.0
  %3649 = vmatpush1.msra.mxu0 0.0
  %3650 = vmatprep.subr.mxu0 0.0
  %3651 = vmatpush1.msra.mxu0 0.0
  %3652 = vmatprep.subr.mxu0 0.0
  %3653 = vmatpush1.msra.mxu0 0.0
  %3654 = vmatprep.subr.mxu0 0.0
  %3655 = vmatpush1.msra.mxu0 0.0
  %3656 = vmatprep.subr.mxu0 0.0
  %3657 = vmatpush1.msra.mxu0 0.0
  %3658 = vmatprep.subr.mxu0 0.0
  %3659 = vmatpush1.msra.mxu0 0.0
  %3660 = vmatprep.subr.mxu0 0.0
  %3661 = vmatpush1.msra.mxu0 0.0
  %3662 = vmatprep.subr.mxu0 0.0
  %3663 = vmatpush1.msra.mxu0 0.0
  %3664 = vmatprep.subr.mxu0 0.0
  %3665 = vmatpush1.msra.mxu0 0.0
  %3666 = vmatprep.subr.mxu0 0.0
  %3667 = vmatpush1.msra.mxu0 0.0
  %3668 = vmatprep.subr.mxu0 0.0
  %3669 = vmatpush1.msra.mxu0 0.0
  %3670 = vmatprep.subr.mxu0 0.0
  %3671 = vmatpush1.msra.mxu0 0.0
  %3672 = vmatprep.subr.mxu0 0.0
  %3673 = vmatpush1.msra.mxu0 0.0
  %3674 = vmatprep.subr.mxu0 0.0
  %3675 = vmatpush1.msra.mxu0 0.0
  %3676 = vmatprep.subr.mxu0 0.0
  %3677 = vmatpush1.msra.mxu0 0.0
  %3678 = vmatprep.subr.mxu0 0.0
  %3679 = vmatpush1.msra.mxu0 0.0
  %3680 = vmatprep.subr.mxu0 0.0
  %3681 = vmatpush1.msra.mxu0 0.0
  %3682 = vmatprep.subr.mxu0 0.0
  %3683 = vmatpush1.msra.mxu0 0.0
  %3684 = vmatprep.subr.mxu0 0.0
  %3685 = vmatpush1.msra.mxu0 0.0
  %3686 = vmatprep.subr.mxu0 0.0
  %3687 = vmatpush1.msra.mxu0 0.0
  %3688 = vmatprep.subr.mxu0 0.0
  %3689 = vmatpush1.msra.mxu0 0.0
  %3690 = vmatprep.mubr.f32.mxu0 0.0
  %3691 = vmatmul.mubr.f32.gmra.mrb[0].mxu0 %v3624
  %v3692 = vpop.f32.mrb[0].mxu0
  %v3693 = vadd.f32 0.0, %v3692
  %v3694 = vpop.f32.mrb[0].mxu0
  %3695 = vdwg.mxu0
  %v3697 = vrot.slane %v3693, 4
  %v3699 = vadd.f32 %v2319, %v3697
  %v3700 = vsub.f32 0.0, %v3699
  %v3701 = vmul.f32 %v3700, 1.442695
  %v3702 = vpow.pop %v3701
  %v3703 = vadd.f32 %v3702, 1.0
  %v3704 = vrcp.pop %v3703
  %v3705 = vmul.f32 1.0, %v3704
  %v3706 = vtanh.pop %v3699
  %v3708 = vrot.slane %v3496, 4
  %3709 = vrot.lane.b32.xlu0 %v3708, 32
  %v3710 = vpop.permute.xlu0 %3709
  %v3712 = vmul.f32 %v3705, %v3710
  %3714 = vrot.lane.b32.xlu0 %v3706, 32
  %v3715 = vpop.permute.xlu0 %3714
  %v3717 = vmul.f32 %v3705, %v3715
  %3719 = vrot.lane.b32.xlu0 %v3717, 32
  %v3720 = vpop.permute.xlu0 %3719
  %v3722 = vadd.f32 %v3712, %v3720
  %v3723 = vtanh.pop %v3722
  %3725 = vrot.lane.b32.xlu0 %v3723, 32
  %v3726 = vpop.permute.xlu0 %3725
  %v3728 = vmul.f32 %v3705, %v3726
  %v3730 = vrot.slane %v3728, 4
  %3731 = vrot.lane.b32.xlu0 %v3730, 64
  %v3732 = vpop.permute.xlu0 %3731
  %v3734 = vsel %vm792, %v3732, %v3487
  %v3736 = vrot.slane %v3722, 4
  %3737 = vrot.lane.b32.xlu0 %v3736, 96
  %v3738 = vpop.permute.xlu0 %3737
  %v3740 = vsel %vm792, %v3738, %v3496
  %v3741 = vsel %vm792, %v3732, 0.0
  %3742 = vst.msk [vmem:[#allocation5 + $0x4] sm:$0x3] %vm305, %v3741
  %v3744 = vsel %vm189, %v3611, 0
  %3746 = vmatprep.subr.mxu0 0.0
  %3747 = vmatpush1.msra.mxu0 %v2322
  %3748 = vmatprep.subr.mxu0 0.0
  %3749 = vmatpush1.msra.mxu0 %v2323
  %3750 = vmatprep.subr.mxu0 0.0
  %3751 = vmatpush1.msra.mxu0 %v2324
  %3752 = vmatprep.subr.mxu0 0.0
  %3753 = vmatpush1.msra.mxu0 %v2325
  %3754 = vmatprep.subr.mxu0 0.0
  %3755 = vmatpush1.msra.mxu0 0.0
  %3756 = vmatprep.subr.mxu0 0.0
  %3757 = vmatpush1.msra.mxu0 0.0
  %3758 = vmatprep.subr.mxu0 0.0
  %3759 = vmatpush1.msra.mxu0 0.0
  %3760 = vmatprep.subr.mxu0 0.0
  %3761 = vmatpush1.msra.mxu0 0.0
  %3762 = vmatprep.subr.mxu0 0.0
  %3763 = vmatpush1.msra.mxu0 0.0
  %3764 = vmatprep.subr.mxu0 0.0
  %3765 = vmatpush1.msra.mxu0 0.0
  %3766 = vmatprep.subr.mxu0 0.0
  %3767 = vmatpush1.msra.mxu0 0.0
  %3768 = vmatprep.subr.mxu0 0.0
  %3769 = vmatpush1.msra.mxu0 0.0
  %3770 = vmatprep.subr.mxu0 0.0
  %3771 = vmatpush1.msra.mxu0 0.0
  %3772 = vmatprep.subr.mxu0 0.0
  %3773 = vmatpush1.msra.mxu0 0.0
  %3774 = vmatprep.subr.mxu0 0.0
  %3775 = vmatpush1.msra.mxu0 0.0
  %3776 = vmatprep.subr.mxu0 0.0
  %3777 = vmatpush1.msra.mxu0 0.0
  %3778 = vmatprep.subr.mxu0 0.0
  %3779 = vmatpush1.msra.mxu0 0.0
  %3780 = vmatprep.subr.mxu0 0.0
  %3781 = vmatpush1.msra.mxu0 0.0
  %3782 = vmatprep.subr.mxu0 0.0
  %3783 = vmatpush1.msra.mxu0 0.0
  %3784 = vmatprep.subr.mxu0 0.0
  %3785 = vmatpush1.msra.mxu0 0.0
  %3786 = vmatprep.subr.mxu0 0.0
  %3787 = vmatpush1.msra.mxu0 0.0
  %3788 = vmatprep.subr.mxu0 0.0
  %3789 = vmatpush1.msra.mxu0 0.0
  %3790 = vmatprep.subr.mxu0 0.0
  %3791 = vmatpush1.msra.mxu0 0.0
  %3792 = vmatprep.subr.mxu0 0.0
  %3793 = vmatpush1.msra.mxu0 0.0
  %3794 = vmatprep.subr.mxu0 0.0
  %3795 = vmatpush1.msra.mxu0 0.0
  %3796 = vmatprep.subr.mxu0 0.0
  %3797 = vmatpush1.msra.mxu0 0.0
  %3798 = vmatprep.subr.mxu0 0.0
  %3799 = vmatpush1.msra.mxu0 0.0
  %3800 = vmatprep.subr.mxu0 0.0
  %3801 = vmatpush1.msra.mxu0 0.0
  %3802 = vmatprep.subr.mxu0 0.0
  %3803 = vmatpush1.msra.mxu0 0.0
  %3804 = vmatprep.subr.mxu0 0.0
  %3805 = vmatpush1.msra.mxu0 0.0
  %3806 = vmatprep.subr.mxu0 0.0
  %3807 = vmatpush1.msra.mxu0 0.0
  %3808 = vmatprep.subr.mxu0 0.0
  %3809 = vmatpush1.msra.mxu0 0.0
  %3810 = vmatprep.mubr.f32.mxu0 0.0
  %3811 = vmatmul.mubr.f32.gmra.mrb[0].mxu0 %v3744
  %v3812 = vpop.f32.mrb[0].mxu0
  %v3813 = vadd.f32 0.0, %v3812
  %v3814 = vpop.f32.mrb[0].mxu0
  %3815 = vdwg.mxu0
  %v3817 = vrot.slane %v3813, 4
  %v3819 = vadd.f32 %v2320, %v3817
  %v3820 = vsub.f32 0.0, %v3819
  %v3821 = vmul.f32 %v3820, 1.442695
  %v3822 = vpow.pop %v3821
  %v3823 = vadd.f32 %v3822, 1.0
  %v3824 = vrcp.pop %v3823
  %v3825 = vmul.f32 1.0, %v3824
  %v3826 = vtanh.pop %v3819
  %v3828 = vrot.slane %v3620, 4
  %3829 = vrot.lane.b32.xlu0 %v3828, 32
  %v3830 = vpop.permute.xlu0 %3829
  %v3832 = vmul.f32 %v3825, %v3830
  %3834 = vrot.lane.b32.xlu0 %v3826, 32
  %v3835 = vpop.permute.xlu0 %3834
  %v3837 = vmul.f32 %v3825, %v3835
  %3839 = vrot.lane.b32.xlu0 %v3837, 32
  %v3840 = vpop.permute.xlu0 %3839
  %v3842 = vadd.f32 %v3832, %v3840
  %v3843 = vtanh.pop %v3842
  %3845 = vrot.lane.b32.xlu0 %v3843, 32
  %v3846 = vpop.permute.xlu0 %3845
  %v3848 = vmul.f32 %v3825, %v3846
  %v3850 = vrot.slane %v3848, 4
  %3851 = vrot.lane.b32.xlu0 %v3850, 64
  %v3852 = vpop.permute.xlu0 %3851
  %v3854 = vsel %vm666, %v3852, %v3611
  %v3856 = vrot.slane %v3842, 4
  %3857 = vrot.lane.b32.xlu0 %v3856, 96
  %v3858 = vpop.permute.xlu0 %3857
  %v3860 = vsel %vm666, %v3858, %v3620
  %v3861 = vsel %vm666, %v3852, 0.0
  %3862 = vst.msk [vmem:[#allocation4 + $0xc] sm:$0x3] %vm305, %v3861
  %v3864 = vsel %vm189, %v3734, 0
  %3866 = vmatprep.subr.mxu0 0.0
  %3867 = vmatpush1.msra.mxu0 %v2326
  %3868 = vmatprep.subr.mxu0 0.0
  %3869 = vmatpush1.msra.mxu0 %v2327
  %3870 = vmatprep.subr.mxu0 0.0
  %3871 = vmatpush1.msra.mxu0 %v2328
  %3872 = vmatprep.subr.mxu0 0.0
  %3873 = vmatpush1.msra.mxu0 %v2329
  %3874 = vmatprep.subr.mxu0 0.0
  %3875 = vmatpush1.msra.mxu0 0.0
  %3876 = vmatprep.subr.mxu0 0.0
  %3877 = vmatpush1.msra.mxu0 0.0
  %3878 = vmatprep.subr.mxu0 0.0
  %3879 = vmatpush1.msra.mxu0 0.0
  %3880 = vmatprep.subr.mxu0 0.0
  %3881 = vmatpush1.msra.mxu0 0.0
  %3882 = vmatprep.subr.mxu0 0.0
  %3883 = vmatpush1.msra.mxu0 0.0
  %3884 = vmatprep.subr.mxu0 0.0
  %3885 = vmatpush1.msra.mxu0 0.0
  %3886 = vmatprep.subr.mxu0 0.0
  %3887 = vmatpush1.msra.mxu0 0.0
  %3888 = vmatprep.subr.mxu0 0.0
  %3889 = vmatpush1.msra.mxu0 0.0
  %3890 = vmatprep.subr.mxu0 0.0
  %3891 = vmatpush1.msra.mxu0 0.0
  %3892 = vmatprep.subr.mxu0 0.0
  %3893 = vmatpush1.msra.mxu0 0.0
  %3894 = vmatprep.subr.mxu0 0.0
  %3895 = vmatpush1.msra.mxu0 0.0
  %3896 = vmatprep.subr.mxu0 0.0
  %3897 = vmatpush1.msra.mxu0 0.0
  %3898 = vmatprep.subr.mxu0 0.0
  %3899 = vmatpush1.msra.mxu0 0.0
  %3900 = vmatprep.subr.mxu0 0.0
  %3901 = vmatpush1.msra.mxu0 0.0
  %3902 = vmatprep.subr.mxu0 0.0
  %3903 = vmatpush1.msra.mxu0 0.0
  %3904 = vmatprep.subr.mxu0 0.0
  %3905 = vmatpush1.msra.mxu0 0.0
  %3906 = vmatprep.subr.mxu0 0.0
  %3907 = vmatpush1.msra.mxu0 0.0
  %3908 = vmatprep.subr.mxu0 0.0
  %3909 = vmatpush1.msra.mxu0 0.0
  %3910 = vmatprep.subr.mxu0 0.0
  %3911 = vmatpush1.msra.mxu0 0.0
  %3912 = vmatprep.subr.mxu0 0.0
  %3913 = vmatpush1.msra.mxu0 0.0
  %3914 = vmatprep.subr.mxu0 0.0
  %3915 = vmatpush1.msra.mxu0 0.0
  %3916 = vmatprep.subr.mxu0 0.0
  %3917 = vmatpush1.msra.mxu0 0.0
  %3918 = vmatprep.subr.mxu0 0.0
  %3919 = vmatpush1.msra.mxu0 0.0
  %3920 = vmatprep.subr.mxu0 0.0
  %3921 = vmatpush1.msra.mxu0 0.0
  %3922 = vmatprep.subr.mxu0 0.0
  %3923 = vmatpush1.msra.mxu0 0.0
  %3924 = vmatprep.subr.mxu0 0.0
  %3925 = vmatpush1.msra.mxu0 0.0
  %3926 = vmatprep.subr.mxu0 0.0
  %3927 = vmatpush1.msra.mxu0 0.0
  %3928 = vmatprep.subr.mxu0 0.0
  %3929 = vmatpush1.msra.mxu0 0.0
  %3930 = vmatprep.mubr.f32.mxu0 0.0
  %3931 = vmatmul.mubr.f32.gmra.mrb[0].mxu0 %v3864
  %v3932 = vpop.f32.mrb[0].mxu0
  %v3933 = vadd.f32 0.0, %v3932
  %v3934 = vpop.f32.mrb[0].mxu0
  %3935 = vdwg.mxu0
  %v3937 = vrot.slane %v3933, 6
  %v3939 = vadd.f32 %v2319, %v3937
  %v3940 = vsub.f32 0.0, %v3939
  %v3941 = vmul.f32 %v3940, 1.442695
  %v3942 = vpow.pop %v3941
  %v3943 = vadd.f32 %v3942, 1.0
  %v3944 = vrcp.pop %v3943
  %v3945 = vmul.f32 1.0, %v3944
  %v3946 = vtanh.pop %v3939
  %v3948 = vrot.slane %v3740, 6
  %3949 = vrot.lane.b32.xlu0 %v3948, 32
  %v3950 = vpop.permute.xlu0 %3949
  %v3952 = vmul.f32 %v3945, %v3950
  %3954 = vrot.lane.b32.xlu0 %v3946, 32
  %v3955 = vpop.permute.xlu0 %3954
  %v3957 = vmul.f32 %v3945, %v3955
  %3959 = vrot.lane.b32.xlu0 %v3957, 32
  %v3960 = vpop.permute.xlu0 %3959
  %v3962 = vadd.f32 %v3952, %v3960
  %v3963 = vtanh.pop %v3962
  %3965 = vrot.lane.b32.xlu0 %v3963, 32
  %v3966 = vpop.permute.xlu0 %3965
  %v3968 = vmul.f32 %v3945, %v3966
  %v3970 = vrot.slane %v3968, 2
  %3971 = vrot.lane.b32.xlu0 %v3970, 64
  %v3972 = vpop.permute.xlu0 %3971
  %v3974 = vsel %vm536, %v3972, %v3734
  %v3976 = vrot.slane %v3962, 2
  %3977 = vrot.lane.b32.xlu0 %v3976, 96
  %v3978 = vpop.permute.xlu0 %3977
  %v3980 = vsel %vm536, %v3978, %v3740
  %v3981 = vsel %vm536, %v3972, 0.0
  %3982 = vst.msk [vmem:[#allocation5 + $0x2] sm:$0x3] %vm305, %v3981
  %v3984 = vsel %vm189, %v3854, 0
  %3986 = vmatprep.subr.mxu0 0.0
  %3987 = vmatpush1.msra.mxu0 %v2322
  %3988 = vmatprep.subr.mxu0 0.0
  %3989 = vmatpush1.msra.mxu0 %v2323
  %3990 = vmatprep.subr.mxu0 0.0
  %3991 = vmatpush1.msra.mxu0 %v2324
  %3992 = vmatprep.subr.mxu0 0.0
  %3993 = vmatpush1.msra.mxu0 %v2325
  %3994 = vmatprep.subr.mxu0 0.0
  %3995 = vmatpush1.msra.mxu0 0.0
  %3996 = vmatprep.subr.mxu0 0.0
  %3997 = vmatpush1.msra.mxu0 0.0
  %3998 = vmatprep.subr.mxu0 0.0
  %3999 = vmatpush1.msra.mxu0 0.0
  %4000 = vmatprep.subr.mxu0 0.0
  %4001 = vmatpush1.msra.mxu0 0.0
  %4002 = vmatprep.subr.mxu0 0.0
  %4003 = vmatpush1.msra.mxu0 0.0
  %4004 = vmatprep.subr.mxu0 0.0
  %4005 = vmatpush1.msra.mxu0 0.0
  %4006 = vmatprep.subr.mxu0 0.0
  %4007 = vmatpush1.msra.mxu0 0.0
  %4008 = vmatprep.subr.mxu0 0.0
  %4009 = vmatpush1.msra.mxu0 0.0
  %4010 = vmatprep.subr.mxu0 0.0
  %4011 = vmatpush1.msra.mxu0 0.0
  %4012 = vmatprep.subr.mxu0 0.0
  %4013 = vmatpush1.msra.mxu0 0.0
  %4014 = vmatprep.subr.mxu0 0.0
  %4015 = vmatpush1.msra.mxu0 0.0
  %4016 = vmatprep.subr.mxu0 0.0
  %4017 = vmatpush1.msra.mxu0 0.0
  %4018 = vmatprep.subr.mxu0 0.0
  %4019 = vmatpush1.msra.mxu0 0.0
  %4020 = vmatprep.subr.mxu0 0.0
  %4021 = vmatpush1.msra.mxu0 0.0
  %4022 = vmatprep.subr.mxu0 0.0
  %4023 = vmatpush1.msra.mxu0 0.0
  %4024 = vmatprep.subr.mxu0 0.0
  %4025 = vmatpush1.msra.mxu0 0.0
  %4026 = vmatprep.subr.mxu0 0.0
  %4027 = vmatpush1.msra.mxu0 0.0
  %4028 = vmatprep.subr.mxu0 0.0
  %4029 = vmatpush1.msra.mxu0 0.0
  %4030 = vmatprep.subr.mxu0 0.0
  %4031 = vmatpush1.msra.mxu0 0.0
  %4032 = vmatprep.subr.mxu0 0.0
  %4033 = vmatpush1.msra.mxu0 0.0
  %4034 = vmatprep.subr.mxu0 0.0
  %4035 = vmatpush1.msra.mxu0 0.0
  %4036 = vmatprep.subr.mxu0 0.0
  %4037 = vmatpush1.msra.mxu0 0.0
  %4038 = vmatprep.subr.mxu0 0.0
  %4039 = vmatpush1.msra.mxu0 0.0
  %4040 = vmatprep.subr.mxu0 0.0
  %4041 = vmatpush1.msra.mxu0 0.0
  %4042 = vmatprep.subr.mxu0 0.0
  %4043 = vmatpush1.msra.mxu0 0.0
  %4044 = vmatprep.subr.mxu0 0.0
  %4045 = vmatpush1.msra.mxu0 0.0
  %4046 = vmatprep.subr.mxu0 0.0
  %4047 = vmatpush1.msra.mxu0 0.0
  %4048 = vmatprep.subr.mxu0 0.0
  %4049 = vmatpush1.msra.mxu0 0.0
  %4050 = vmatprep.mubr.f32.mxu0 0.0
  %4051 = vmatmul.mubr.f32.gmra.mrb[0].mxu0 %v3984
  %v4052 = vpop.f32.mrb[0].mxu0
  %v4053 = vadd.f32 0.0, %v4052
  %v4054 = vpop.f32.mrb[0].mxu0
  %4055 = vdwg.mxu0
  %v4057 = vrot.slane %v4053, 2
  %v4059 = vadd.f32 %v2320, %v4057
  %v4060 = vsub.f32 0.0, %v4059
  %v4061 = vmul.f32 %v4060, 1.442695
  %v4062 = vpow.pop %v4061
  %v4063 = vadd.f32 %v4062, 1.0
  %v4064 = vrcp.pop %v4063
  %v4065 = vmul.f32 1.0, %v4064
  %v4066 = vtanh.pop %v4059
  %v4068 = vrot.slane %v3860, 2
  %4069 = vrot.lane.b32.xlu0 %v4068, 32
  %v4070 = vpop.permute.xlu0 %4069
  %v4072 = vmul.f32 %v4065, %v4070
  %4074 = vrot.lane.b32.xlu0 %v4066, 32
  %v4075 = vpop.permute.xlu0 %4074
  %v4077 = vmul.f32 %v4065, %v4075
  %4079 = vrot.lane.b32.xlu0 %v4077, 32
  %v4080 = vpop.permute.xlu0 %4079
  %v4082 = vadd.f32 %v4072, %v4080
  %v4083 = vtanh.pop %v4082
  %4085 = vrot.lane.b32.xlu0 %v4083, 32
  %v4086 = vpop.permute.xlu0 %4085
  %v4088 = vmul.f32 %v4065, %v4086
  %v4090 = vrot.slane %v4088, 6
  %4091 = vrot.lane.b32.xlu0 %v4090, 64
  %v4092 = vpop.permute.xlu0 %4091
  %v4094 = vsel %vm410, %v4092, 0.0
  %4095 = vst.msk [vmem:[#allocation4 + $0xe] sm:$0x3] %vm305, %v4094
  %v4097 = vsel %vm189, %v3974, 0
  %4099 = vmatprep.subr.mxu0 0.0
  %4100 = vmatpush1.msra.mxu0 %v2326
  %4101 = vmatprep.subr.mxu0 0.0
  %4102 = vmatpush1.msra.mxu0 %v2327
  %4103 = vmatprep.subr.mxu0 0.0
  %4104 = vmatpush1.msra.mxu0 %v2328
  %4105 = vmatprep.subr.mxu0 0.0
  %4106 = vmatpush1.msra.mxu0 %v2329
  %4107 = vmatprep.subr.mxu0 0.0
  %4108 = vmatpush1.msra.mxu0 0.0
  %4109 = vmatprep.subr.mxu0 0.0
  %4110 = vmatpush1.msra.mxu0 0.0
  %4111 = vmatprep.subr.mxu0 0.0
  %4112 = vmatpush1.msra.mxu0 0.0
  %4113 = vmatprep.subr.mxu0 0.0
  %4114 = vmatpush1.msra.mxu0 0.0
  %4115 = vmatprep.subr.mxu0 0.0
  %4116 = vmatpush1.msra.mxu0 0.0
  %4117 = vmatprep.subr.mxu0 0.0
  %4118 = vmatpush1.msra.mxu0 0.0
  %4119 = vmatprep.subr.mxu0 0.0
  %4120 = vmatpush1.msra.mxu0 0.0
  %4121 = vmatprep.subr.mxu0 0.0
  %4122 = vmatpush1.msra.mxu0 0.0
  %4123 = vmatprep.subr.mxu0 0.0
  %4124 = vmatpush1.msra.mxu0 0.0
  %4125 = vmatprep.subr.mxu0 0.0
  %4126 = vmatpush1.msra.mxu0 0.0
  %4127 = vmatprep.subr.mxu0 0.0
  %4128 = vmatpush1.msra.mxu0 0.0
  %4129 = vmatprep.subr.mxu0 0.0
  %4130 = vmatpush1.msra.mxu0 0.0
  %4131 = vmatprep.subr.mxu0 0.0
  %4132 = vmatpush1.msra.mxu0 0.0
  %4133 = vmatprep.subr.mxu0 0.0
  %4134 = vmatpush1.msra.mxu0 0.0
  %4135 = vmatprep.subr.mxu0 0.0
  %4136 = vmatpush1.msra.mxu0 0.0
  %4137 = vmatprep.subr.mxu0 0.0
  %4138 = vmatpush1.msra.mxu0 0.0
  %4139 = vmatprep.subr.mxu0 0.0
  %4140 = vmatpush1.msra.mxu0 0.0
  %4141 = vmatprep.subr.mxu0 0.0
  %4142 = vmatpush1.msra.mxu0 0.0
  %4143 = vmatprep.subr.mxu0 0.0
  %4144 = vmatpush1.msra.mxu0 0.0
  %4145 = vmatprep.subr.mxu0 0.0
  %4146 = vmatpush1.msra.mxu0 0.0
  %4147 = vmatprep.subr.mxu0 0.0
  %4148 = vmatpush1.msra.mxu0 0.0
  %4149 = vmatprep.subr.mxu0 0.0
  %4150 = vmatpush1.msra.mxu0 0.0
  %4151 = vmatprep.subr.mxu0 0.0
  %4152 = vmatpush1.msra.mxu0 0.0
  %4153 = vmatprep.subr.mxu0 0.0
  %4154 = vmatpush1.msra.mxu0 0.0
  %4155 = vmatprep.subr.mxu0 0.0
  %4156 = vmatpush1.msra.mxu0 0.0
  %4157 = vmatprep.subr.mxu0 0.0
  %4158 = vmatpush1.msra.mxu0 0.0
  %4159 = vmatprep.subr.mxu0 0.0
  %4160 = vmatpush1.msra.mxu0 0.0
  %4161 = vmatprep.subr.mxu0 0.0
  %4162 = vmatpush1.msra.mxu0 0.0
  %4163 = vmatprep.mubr.f32.mxu0 0.0
  %4164 = vmatmul.mubr.f32.gmra.mrb[0].mxu0 %v4097
  %v4165 = vpop.f32.mrb[0].mxu0
  %v4166 = vadd.f32 0.0, %v4165
  %v4167 = vpop.f32.mrb[0].mxu0
  %4168 = vdwg.mxu0
  %v4169 = vadd.f32 %v2319, %v4166
  %v4170 = vsub.f32 0.0, %v4169
  %v4171 = vmul.f32 %v4170, 1.442695
  %v4172 = vpow.pop %v4171
  %v4173 = vadd.f32 %v4172, 1.0
  %v4174 = vrcp.pop %v4173
  %v4175 = vmul.f32 1.0, %v4174
  %v4176 = vtanh.pop %v4169
  %4178 = vrot.lane.b32.xlu0 %v3980, 32
  %v4179 = vpop.permute.xlu0 %4178
  %v4181 = vmul.f32 %v4175, %v4179
  %4183 = vrot.lane.b32.xlu0 %v4176, 32
  %v4184 = vpop.permute.xlu0 %4183
  %v4186 = vmul.f32 %v4175, %v4184
  %4188 = vrot.lane.b32.xlu0 %v4186, 32
  %v4189 = vpop.permute.xlu0 %4188
  %v4191 = vadd.f32 %v4181, %v4189
  %v4192 = vtanh.pop %v4191
  %4194 = vrot.lane.b32.xlu0 %v4192, 32
  %v4195 = vpop.permute.xlu0 %4194
  %v4197 = vmul.f32 %v4175, %v4195
  %v4198 = vsel %vm294, %v4197, 0.0
  %4200 = vrot.lane.b32.xlu0 %v4198, 64
  %v4201 = vpop.permute.xlu0 %4200
  %4203 = vst.msk [vmem:[#allocation5] sm:$0x3] %vm305, %v4201
  %v4204 = vld [vmem:[#allocation4] sm:$0xff]
  %v4205 = vld [vmem:[#allocation4 + $0x8] sm:$0xff]
  %v4206 = vld [vmem:[#allocation5] sm:$0xff]
  %v4207 = vld [vmem:[#allocation5 + $0x8] sm:$0xff]
  %v4208 = vld [vmem:[%s3] sm:$0xff]
  %v4209 = vld [vmem:[%s3 + $0x8] sm:$0xff]
  %vm4210 = vcmp.gt.s32.totalorder %v4208, 0
  %vm4211 = vcmp.gt.s32.totalorder %v4209, 0
  %v4212 = vsel %vm4210, 1, 0
  %v4213 = vsel %vm4211, 1, 0
  %4214 = vset.pattern.permute.xlu0 0
  %4215 = vperm.xlu0 %4214, %v4212
  %v4216 = vpop.permute.xlu0 %4215
  %4217 = vset.pattern.permute.xlu0 0
  %4218 = vperm.xlu0 %4217, %v4213
  %v4219 = vpop.permute.xlu0 %4218
  %vm4220 = vcmp.eq.s32.totalorder %v4216, 1
  %vm4221 = vcmp.eq.s32.totalorder %v4219, 1
  %v4222 = vsel %vm4220, %v76, %v4204
  %v4223 = vsel %vm4221, %v76, %v4205
  %v4224 = vld [vmem:[%s7] sm:$0xff]
  %v4225 = vld [vmem:[%s7 + $0x8] sm:$0xff]
  %vm4226 = vcmask 130048
  %v4228 = vsel %vm4226, %v4224, 0
  %v4231 = vsel %vm4226, %v4225, 0
  %4233 = vmatprep.subr.mxu0 0.0
  %4234 = vmatpush1.msra.mxu0 %v4206
  %4235 = vmatprep.subr.mxu0 0.0
  %4236 = vmatpush1.msra.mxu0 %v4207
  %4237 = vmatprep.subr.mxu0 0.0
  %4238 = vmatpush1.msra.mxu0 0.0
  %4239 = vmatprep.subr.mxu0 0.0
  %4240 = vmatpush1.msra.mxu0 0.0
  %4241 = vmatprep.subr.mxu0 0.0
  %4242 = vmatpush1.msra.mxu0 0.0
  %4243 = vmatprep.subr.mxu0 0.0
  %4244 = vmatpush1.msra.mxu0 0.0
  %4245 = vmatprep.subr.mxu0 0.0
  %4246 = vmatpush1.msra.mxu0 0.0
  %4247 = vmatprep.subr.mxu0 0.0
  %4248 = vmatpush1.msra.mxu0 0.0
  %4249 = vmatprep.subr.mxu0 0.0
  %4250 = vmatpush1.msra.mxu0 0.0
  %4251 = vmatprep.subr.mxu0 0.0
  %4252 = vmatpush1.msra.mxu0 0.0
  %4253 = vmatprep.subr.mxu0 0.0
  %4254 = vmatpush1.msra.mxu0 0.0
  %4255 = vmatprep.subr.mxu0 0.0
  %4256 = vmatpush1.msra.mxu0 0.0
  %4257 = vmatprep.subr.mxu0 0.0
  %4258 = vmatpush1.msra.mxu0 0.0
  %4259 = vmatprep.subr.mxu0 0.0
  %4260 = vmatpush1.msra.mxu0 0.0
  %4261 = vmatprep.subr.mxu0 0.0
  %4262 = vmatpush1.msra.mxu0 0.0
  %4263 = vmatprep.subr.mxu0 0.0
  %4264 = vmatpush1.msra.mxu0 0.0
  %4265 = vmatprep.subr.mxu0 0.0
  %4266 = vmatpush1.msra.mxu0 0.0
  %4267 = vmatprep.subr.mxu0 0.0
  %4268 = vmatpush1.msra.mxu0 0.0
  %4269 = vmatprep.subr.mxu0 0.0
  %4270 = vmatpush1.msra.mxu0 0.0
  %4271 = vmatprep.subr.mxu0 0.0
  %4272 = vmatpush1.msra.mxu0 0.0
  %4273 = vmatprep.subr.mxu0 0.0
  %4274 = vmatpush1.msra.mxu0 0.0
  %4275 = vmatprep.subr.mxu0 0.0
  %4276 = vmatpush1.msra.mxu0 0.0
  %4277 = vmatprep.subr.mxu0 0.0
  %4278 = vmatpush1.msra.mxu0 0.0
  %4279 = vmatprep.subr.mxu0 0.0
  %4280 = vmatpush1.msra.mxu0 0.0
  %4281 = vmatprep.subr.mxu0 0.0
  %4282 = vmatpush1.msra.mxu0 0.0
  %4283 = vmatprep.subr.mxu0 0.0
  %4284 = vmatpush1.msra.mxu0 0.0
  %4285 = vmatprep.subr.mxu0 0.0
  %4286 = vmatpush1.msra.mxu0 0.0
  %4287 = vmatprep.subr.mxu0 0.0
  %4288 = vmatpush1.msra.mxu0 0.0
  %4289 = vmatprep.subr.mxu0 0.0
  %4290 = vmatpush1.msra.mxu0 0.0
  %4291 = vmatprep.subr.mxu0 0.0
  %4292 = vmatpush1.msra.mxu0 0.0
  %4293 = vmatprep.subr.mxu0 0.0
  %4294 = vmatpush1.msra.mxu0 0.0
  %4295 = vmatprep.subr.mxu0 0.0
  %4296 = vmatpush1.msra.mxu0 0.0
  %4297 = vmatprep.mubr.f32.mxu0 0.0
  %4298 = vmatmul.mubr.f32.gmra.mrb[0].mxu0 %v4228
  %v4299 = vpop.f32.mrb[0].mxu0
  %v4300 = vadd.f32 0.0, %v4299
  %v4301 = vpop.f32.mrb[0].mxu0
  %4302 = vmatprep.mubr.f32.mxu0 0.0
  %4303 = vmatmul.mubr.f32.gmra.mrb[0].mxu0 %v4231
  %v4304 = vpop.f32.mrb[0].mxu0
  %v4305 = vadd.f32 0.0, %v4304
  %v4306 = vpop.f32.mrb[0].mxu0
  %4307 = vdwg.mxu0
  %v4308 = vld [vmem:[%s4] sm:$0xff]
  %v4309 = vld [vmem:[%s4 + $0x8] sm:$0xff]
  %vm4310 = vcmp.gt.s32.totalorder %v4308, 0
  %vm4311 = vcmp.gt.s32.totalorder %v4309, 0
  %v4312 = vsel %vm4310, 1, 0
  %v4313 = vsel %vm4311, 1, 0
  %4314 = vset.pattern.permute.xlu0 0
  %4315 = vperm.xlu0 %4314, %v4312
  %v4316 = vpop.permute.xlu0 %4315
  %4317 = vset.pattern.permute.xlu0 0
  %4318 = vperm.xlu0 %4317, %v4313
  %v4319 = vpop.permute.xlu0 %4318
  %vm4320 = vcmp.eq.s32.totalorder %v4316, 1
  %vm4321 = vcmp.eq.s32.totalorder %v4319, 1
  %v4322 = vsel %vm4320, %v76, %v4300
  %v4323 = vsel %vm4321, %v76, %v4305
  %v4324 = vld [vmem:[%s17] sm:$0xff]
  %v4325 = vld [vmem:[%s17 + $0x8] sm:$0xff]
  %v4326 = vld [vmem:[%s17 + $0x10] sm:$0xff]
  %v4327 = vld [vmem:[%s17 + $0x18] sm:$0xff]
  %v4328 = vld [vmem:[%s18] sm:$0xff]
  %v4329 = vld [vmem:[%s18 + $0x8] sm:$0xff]
  %v4330 = vld [vmem:[%s18 + $0x10] sm:$0xff]
  %4331 = vmatprep.subr.mxu0 0.0
  %4332 = vmatpush1.msra.mxu0 %v4328
  %4333 = vmatprep.subr.mxu0 0.0
  %4334 = vmatpush1.msra.mxu0 %v4329
  %4335 = vmatprep.subr.mxu0 0.0
  %4336 = vmatpush1.msra.mxu0 %v4330
  %4337 = vmatprep.subr.mxu0 0.0
  %4338 = vmatpush1.msra.mxu0 0.0
  %4339 = vmatprep.subr.mxu0 0.0
  %4340 = vmatpush1.msra.mxu0 0.0
  %4341 = vmatprep.subr.mxu0 0.0
  %4342 = vmatpush1.msra.mxu0 0.0
  %4343 = vmatprep.subr.mxu0 0.0
  %4344 = vmatpush1.msra.mxu0 0.0
  %4345 = vmatprep.subr.mxu0 0.0
  %4346 = vmatpush1.msra.mxu0 0.0
  %4347 = vmatprep.subr.mxu0 0.0
  %4348 = vmatpush1.msra.mxu0 0.0
  %4349 = vmatprep.subr.mxu0 0.0
  %4350 = vmatpush1.msra.mxu0 0.0
  %4351 = vmatprep.subr.mxu0 0.0
  %4352 = vmatpush1.msra.mxu0 0.0
  %4353 = vmatprep.subr.mxu0 0.0
  %4354 = vmatpush1.msra.mxu0 0.0
  %4355 = vmatprep.subr.mxu0 0.0
  %4356 = vmatpush1.msra.mxu0 0.0
  %4357 = vmatprep.subr.mxu0 0.0
  %4358 = vmatpush1.msra.mxu0 0.0
  %4359 = vmatprep.subr.mxu0 0.0
  %4360 = vmatpush1.msra.mxu0 0.0
  %4361 = vmatprep.subr.mxu0 0.0
  %4362 = vmatpush1.msra.mxu0 0.0
  %4363 = vmatprep.subr.mxu0 0.0
  %4364 = vmatpush1.msra.mxu0 0.0
  %4365 = vmatprep.subr.mxu0 0.0
  %4366 = vmatpush1.msra.mxu0 0.0
  %4367 = vmatprep.subr.mxu0 0.0
  %4368 = vmatpush1.msra.mxu0 0.0
  %4369 = vmatprep.subr.mxu0 0.0
  %4370 = vmatpush1.msra.mxu0 0.0
  %4371 = vmatprep.subr.mxu0 0.0
  %4372 = vmatpush1.msra.mxu0 0.0
  %4373 = vmatprep.subr.mxu0 0.0
  %4374 = vmatpush1.msra.mxu0 0.0
  %4375 = vmatprep.subr.mxu0 0.0
  %4376 = vmatpush1.msra.mxu0 0.0
  %4377 = vmatprep.subr.mxu0 0.0
  %4378 = vmatpush1.msra.mxu0 0.0
  %4379 = vmatprep.subr.mxu0 0.0
  %4380 = vmatpush1.msra.mxu0 0.0
  %4381 = vmatprep.subr.mxu0 0.0
  %4382 = vmatpush1.msra.mxu0 0.0
  %4383 = vmatprep.subr.mxu0 0.0
  %4384 = vmatpush1.msra.mxu0 0.0
  %4385 = vmatprep.subr.mxu0 0.0
  %4386 = vmatpush1.msra.mxu0 0.0
  %4387 = vmatprep.subr.mxu0 0.0
  %4388 = vmatpush1.msra.mxu0 0.0
  %4389 = vmatprep.subr.mxu0 0.0
  %4390 = vmatpush1.msra.mxu0 0.0
  %4391 = vmatprep.subr.mxu0 0.0
  %4392 = vmatpush1.msra.mxu0 0.0
  %4393 = vmatprep.subr.mxu0 0.0
  %4394 = vmatpush1.msra.mxu0 0.0
  %4395 = vmatprep.mubr.f32.mxu0 0.0
  %4396 = vmatmul.mubr.f32.gmra.mrb[0].mxu0 %v98
  %v4397 = vpop.f32.mrb[0].mxu0
  %v4398 = vadd.f32 0.0, %v4397
  %v4399 = vpop.f32.mrb[0].mxu0
  %4400 = vmatprep.mubr.f32.mxu0 0.0
  %4401 = vmatmul.mubr.f32.gmra.mrb[0].mxu0 %v101
  %v4402 = vpop.f32.mrb[0].mxu0
  %v4403 = vadd.f32 0.0, %v4402
  %v4404 = vpop.f32.mrb[0].mxu0
  %4405 = vdwg.mxu0
  %v4407 = vsel %vm189, %v4222, 0
  %v4410 = vsel %vm189, %v4223, 0
  %4412 = vmatprep.subr.mxu0 0.0
  %4413 = vmatpush1.msra.mxu0 %v4324
  %4414 = vmatprep.subr.mxu0 0.0
  %4415 = vmatpush1.msra.mxu0 %v4325
  %4416 = vmatprep.subr.mxu0 0.0
  %4417 = vmatpush1.msra.mxu0 %v4326
  %4418 = vmatprep.subr.mxu0 0.0
  %4419 = vmatpush1.msra.mxu0 %v4327
  %4420 = vmatprep.subr.mxu0 0.0
  %4421 = vmatpush1.msra.mxu0 0.0
  %4422 = vmatprep.subr.mxu0 0.0
  %4423 = vmatpush1.msra.mxu0 0.0
  %4424 = vmatprep.subr.mxu0 0.0
  %4425 = vmatpush1.msra.mxu0 0.0
  %4426 = vmatprep.subr.mxu0 0.0
  %4427 = vmatpush1.msra.mxu0 0.0
  %4428 = vmatprep.subr.mxu0 0.0
  %4429 = vmatpush1.msra.mxu0 0.0
  %4430 = vmatprep.subr.mxu0 0.0
  %4431 = vmatpush1.msra.mxu0 0.0
  %4432 = vmatprep.subr.mxu0 0.0
  %4433 = vmatpush1.msra.mxu0 0.0
  %4434 = vmatprep.subr.mxu0 0.0
  %4435 = vmatpush1.msra.mxu0 0.0
  %4436 = vmatprep.subr.mxu0 0.0
  %4437 = vmatpush1.msra.mxu0 0.0
  %4438 = vmatprep.subr.mxu0 0.0
  %4439 = vmatpush1.msra.mxu0 0.0
  %4440 = vmatprep.subr.mxu0 0.0
  %4441 = vmatpush1.msra.mxu0 0.0
  %4442 = vmatprep.subr.mxu0 0.0
  %4443 = vmatpush1.msra.mxu0 0.0
  %4444 = vmatprep.subr.mxu0 0.0
  %4445 = vmatpush1.msra.mxu0 0.0
  %4446 = vmatprep.subr.mxu0 0.0
  %4447 = vmatpush1.msra.mxu0 0.0
  %4448 = vmatprep.subr.mxu0 0.0
  %4449 = vmatpush1.msra.mxu0 0.0
  %4450 = vmatprep.subr.mxu0 0.0
  %4451 = vmatpush1.msra.mxu0 0.0
  %4452 = vmatprep.subr.mxu0 0.0
  %4453 = vmatpush1.msra.mxu0 0.0
  %4454 = vmatprep.subr.mxu0 0.0
  %4455 = vmatpush1.msra.mxu0 0.0
  %4456 = vmatprep.subr.mxu0 0.0
  %4457 = vmatpush1.msra.mxu0 0.0
  %4458 = vmatprep.subr.mxu0 0.0
  %4459 = vmatpush1.msra.mxu0 0.0
  %4460 = vmatprep.subr.mxu0 0.0
  %4461 = vmatpush1.msra.mxu0 0.0
  %4462 = vmatprep.subr.mxu0 0.0
  %4463 = vmatpush1.msra.mxu0 0.0
  %4464 = vmatprep.subr.mxu0 0.0
  %4465 = vmatpush1.msra.mxu0 0.0
  %4466 = vmatprep.subr.mxu0 0.0
  %4467 = vmatpush1.msra.mxu0 0.0
  %4468 = vmatprep.subr.mxu0 0.0
  %4469 = vmatpush1.msra.mxu0 0.0
  %4470 = vmatprep.subr.mxu0 0.0
  %4471 = vmatpush1.msra.mxu0 0.0
  %4472 = vmatprep.subr.mxu0 0.0
  %4473 = vmatpush1.msra.mxu0 0.0
  %4474 = vmatprep.subr.mxu0 0.0
  %4475 = vmatpush1.msra.mxu0 0.0
  %4476 = vmatprep.mubr.f32.mxu0 0.0
  %4477 = vmatmul.mubr.f32.gmra.mrb[0].mxu0 %v4407
  %v4478 = vpop.f32.mrb[0].mxu0
  %v4479 = vadd.f32 %v4398, %v4478
  %v4480 = vpop.f32.mrb[0].mxu0
  %4481 = vmatprep.mubr.f32.mxu0 0.0
  %4482 = vmatmul.mubr.f32.gmra.mrb[0].mxu0 %v4410
  %v4483 = vpop.f32.mrb[0].mxu0
  %v4484 = vadd.f32 %v4403, %v4483
  %v4485 = vpop.f32.mrb[0].mxu0
  %4486 = vdwg.mxu0
  %v4487 = vld [vmem:[%s19] sm:$0xff]
  %v4488 = vld [vmem:[%s19 + $0x8] sm:$0xff]
  %v4489 = vld [vmem:[%s19 + $0x10] sm:$0xff]
  %v4490 = vld [vmem:[%s19 + $0x18] sm:$0xff]
  %v4492 = vsel %vm189, %v4322, 0
  %v4495 = vsel %vm189, %v4323, 0
  %4497 = vmatprep.subr.mxu0 0.0
  %4498 = vmatpush1.msra.mxu0 %v4487
  %4499 = vmatprep.subr.mxu0 0.0
  %4500 = vmatpush1.msra.mxu0 %v4488
  %4501 = vmatprep.subr.mxu0 0.0
  %4502 = vmatpush1.msra.mxu0 %v4489
  %4503 = vmatprep.subr.mxu0 0.0
  %4504 = vmatpush1.msra.mxu0 %v4490
  %4505 = vmatprep.subr.mxu0 0.0
  %4506 = vmatpush1.msra.mxu0 0.0
  %4507 = vmatprep.subr.mxu0 0.0
  %4508 = vmatpush1.msra.mxu0 0.0
  %4509 = vmatprep.subr.mxu0 0.0
  %4510 = vmatpush1.msra.mxu0 0.0
  %4511 = vmatprep.subr.mxu0 0.0
  %4512 = vmatpush1.msra.mxu0 0.0
  %4513 = vmatprep.subr.mxu0 0.0
  %4514 = vmatpush1.msra.mxu0 0.0
  %4515 = vmatprep.subr.mxu0 0.0
  %4516 = vmatpush1.msra.mxu0 0.0
  %4517 = vmatprep.subr.mxu0 0.0
  %4518 = vmatpush1.msra.mxu0 0.0
  %4519 = vmatprep.subr.mxu0 0.0
  %4520 = vmatpush1.msra.mxu0 0.0
  %4521 = vmatprep.subr.mxu0 0.0
  %4522 = vmatpush1.msra.mxu0 0.0
  %4523 = vmatprep.subr.mxu0 0.0
  %4524 = vmatpush1.msra.mxu0 0.0
  %4525 = vmatprep.subr.mxu0 0.0
  %4526 = vmatpush1.msra.mxu0 0.0
  %4527 = vmatprep.subr.mxu0 0.0
  %4528 = vmatpush1.msra.mxu0 0.0
  %4529 = vmatprep.subr.mxu0 0.0
  %4530 = vmatpush1.msra.mxu0 0.0
  %4531 = vmatprep.subr.mxu0 0.0
  %4532 = vmatpush1.msra.mxu0 0.0
  %4533 = vmatprep.subr.mxu0 0.0
  %4534 = vmatpush1.msra.mxu0 0.0
  %4535 = vmatprep.subr.mxu0 0.0
  %4536 = vmatpush1.msra.mxu0 0.0
  %4537 = vmatprep.subr.mxu0 0.0
  %4538 = vmatpush1.msra.mxu0 0.0
  %4539 = vmatprep.subr.mxu0 0.0
  %4540 = vmatpush1.msra.mxu0 0.0
  %4541 = vmatprep.subr.mxu0 0.0
  %4542 = vmatpush1.msra.mxu0 0.0
  %4543 = vmatprep.subr.mxu0 0.0
  %4544 = vmatpush1.msra.mxu0 0.0
  %4545 = vmatprep.subr.mxu0 0.0
  %4546 = vmatpush1.msra.mxu0 0.0
  %4547 = vmatprep.subr.mxu0 0.0
  %4548 = vmatpush1.msra.mxu0 0.0
  %4549 = vmatprep.subr.mxu0 0.0
  %4550 = vmatpush1.msra.mxu0 0.0
  %4551 = vmatprep.subr.mxu0 0.0
  %4552 = vmatpush1.msra.mxu0 0.0
  %4553 = vmatprep.subr.mxu0 0.0
  %4554 = vmatpush1.msra.mxu0 0.0
  %4555 = vmatprep.subr.mxu0 0.0
  %4556 = vmatpush1.msra.mxu0 0.0
  %4557 = vmatprep.subr.mxu0 0.0
  %4558 = vmatpush1.msra.mxu0 0.0
  %4559 = vmatprep.subr.mxu0 0.0
  %4560 = vmatpush1.msra.mxu0 0.0
  %4561 = vmatprep.mubr.f32.mxu0 0.0
  %4562 = vmatmul.mubr.f32.gmra.mrb[0].mxu0 %v4492
  %v4563 = vpop.f32.mrb[0].mxu0
  %v4564 = vadd.f32 0.0, %v4563
  %v4565 = vpop.f32.mrb[0].mxu0
  %4566 = vmatprep.mubr.f32.mxu0 0.0
  %4567 = vmatmul.mubr.f32.gmra.mrb[0].mxu0 %v4495
  %v4568 = vpop.f32.mrb[0].mxu0
  %v4569 = vadd.f32 0.0, %v4568
  %v4570 = vpop.f32.mrb[0].mxu0
  %4571 = vdwg.mxu0
  %v4572 = vadd.f32 %v4479, %v4564
  %v4573 = vadd.f32 %v4484, %v4569
  %v4574 = vld [vmem:[%s20] sm:$0x1]
  %v4576 = vlaneseq
  %v4577 = vshrl.u32 %v4576, 7
  %v4578 = vsub.s32 0, %v4577
  %v4579 = vrot.slane %v4574, %v4578
  %v4581 = vadd.f32 %v4572, %v4579
  %v4582 = vadd.f32 %v4573, %v4579
  %v4583 = vtanh.pop %v4581
  %v4584 = vtanh.pop %v4582
  %v4585 = vld [vmem:[%s5] sm:$0xff]
  %v4586 = vld [vmem:[%s5 + $0x8] sm:$0xff]
  %v4587 = vld [vmem:[%s6] sm:$0xff]
  %v4588 = vld [vmem:[%s6 + $0x8] sm:$0xff]
  %vm4589 = vcmp.gt.s32.totalorder %v4587, 0
  %vm4590 = vcmp.gt.s32.totalorder %v4588, 0
  %vm4591 = vcmp.eq.s32.totalorder %v4585, 0
  %vm4592 = vcmp.eq.s32.totalorder %v4586, 0
  %vm4593 = vmand %vm4591, %vm4589
  %vm4594 = vmand %vm4592, %vm4590
  %v4595 = vsel %vm4593, 1, 0
  %v4596 = vsel %vm4594, 1, 0
  %4597 = vset.pattern.permute.xlu0 0
  %4598 = vperm.xlu0 %4597, %v4595
  %v4599 = vpop.permute.xlu0 %4598
  %4600 = vset.pattern.permute.xlu0 0
  %4601 = vperm.xlu0 %4600, %v4596
  %v4602 = vpop.permute.xlu0 %4601
  %vm4603 = vcmp.eq.s32.totalorder %v4599, 1
  %vm4604 = vcmp.eq.s32.totalorder %v4602, 1
  %v4605 = vsel %vm4603, %v4583, -inf
  %v4606 = vsel %vm4604, %v4584, -inf
  %v4607 = vmax.f32 %v4605, %v4606
  %v4608 = vrot.slane %v4607, 4
  %v4609 = vmax.f32 %v4607, %v4608
  %v4610 = vrot.slane %v4609, 2
  %v4611 = vmax.f32 %v4609, %v4610
  %v4612 = vrot.slane %v4611, 1
  %v4613 = vmax.f32 %v4611, %v4612
  %4614 = vst [vmem:[%s21] sm:$0x1] %v4613
  %vm4615 = vcmp.eq.s32.totalorder %v4585, 1
  %vm4616 = vcmp.eq.s32.totalorder %v4586, 1
  %vm4617 = vmand %vm4615, %vm4589
  %vm4618 = vmand %vm4616, %vm4590
  %v4619 = vsel %vm4617, 1, 0
  %v4620 = vsel %vm4618, 1, 0
  %4621 = vset.pattern.permute.xlu0 0
  %4622 = vperm.xlu0 %4621, %v4619
  %v4623 = vpop.permute.xlu0 %4622
  %4624 = vset.pattern.permute.xlu0 0
  %4625 = vperm.xlu0 %4624, %v4620
  %v4626 = vpop.permute.xlu0 %4625
  %vm4627 = vcmp.eq.s32.totalorder %v4623, 1
  %vm4628 = vcmp.eq.s32.totalorder %v4626, 1
  %v4629 = vsel %vm4627, %v4583, -inf
  %v4630 = vsel %vm4628, %v4584, -inf
  %v4631 = vmax.f32 %v4629, %v4630
  %v4632 = vrot.slane %v4631, 4
  %v4633 = vmax.f32 %v4631, %v4632
  %v4634 = vrot.slane %v4633, 2
  %v4635 = vmax.f32 %v4633, %v4634
  %v4636 = vrot.slane %v4635, 1
  %v4637 = vmax.f32 %v4635, %v4636
  %4638 = vst [vmem:[%s21 + $0x1] sm:$0x1] %v4637
  // Predicated region
  $region86: #{scrcnn_forward.1} parent=0 // pred_check
    _
  $region87: #{scrcnn_forward.1} parent=0 // pred_check_branch
    %4640 = sbr.rel (0) target = $region89
  $region88: #{scrcnn_forward.1} parent=0 // pred_region
    _
  $region89: #{scrcnn_forward.1} parent=0 // pred_fallthru
    _
  // Predicated region
  $region90: #{scrcnn_forward.1} parent=0 // pred_check
    _
  $region91: #{scrcnn_forward.1} parent=0 // pred_check_branch
    %4642 = sbr.rel (0) target = $region93
  $region92: #{scrcnn_forward.1} parent=0 // pred_region
    _
  $region93: #{scrcnn_forward.1} parent=0 // pred_fallthru
    _

</llo_original>
